<compile_context>
chip_gen: v7x
topology: tpu7x:2x2x1
jax: 0.10.0
libtpu: 0.0.40
codegen_flags: <defaults>
</compile_context>

<pallas_src>
import jax
import jax.numpy as jnp
from jax.experimental import pallas as pl
from jax.experimental.pallas import tpu as pltpu

BN_EPS = 1e-5
LANE = 128
TM_TARGET = 512                     # <=512 keeps double-buffered VMEM well under v7x's budget
VMEM_LIMIT = 48 * 1024 * 1024


def _round_up(x, m):
    return (x + m - 1) // m * m


def _tile_plan(m):
    """Pick the M-tile: TM multiple of 8 (sublane), target 512 rows."""
    tm = TM_TARGET if m >= TM_TARGET else max(8, _round_up(m, 8))
    mp = _round_up(m, tm)
    return tm, mp, mp // tm


# ----------------------------------------------------------------------------
# Pallas kernels
# ----------------------------------------------------------------------------
def _mm_stats_kernel(p_ref, w_ref, y_ref, st_ref):
    """bf16 matmul (f32 acc) + per-tile per-channel sum / sum-of-squares."""
    y = jnp.dot(p_ref[...], w_ref[...], preferred_element_type=jnp.float32)
    y_ref[...] = y
    s1 = jnp.sum(y, axis=0, keepdims=True)          # (1, Cp)
    s2 = jnp.sum(y * y, axis=0, keepdims=True)      # (1, Cp)
    st_ref[0, :, :] = jnp.concatenate([s1, s2], axis=0)


def _mm_bias_kernel(p_ref, w_ref, b_ref, y_ref):
    """bf16 matmul (f32 acc) + bias (no BN / activation)."""
    y_ref[...] = jnp.dot(p_ref[...], w_ref[...],
                         preferred_element_type=jnp.float32) + b_ref[...]


def _scale_shift_relu_kernel(y_ref, sc_ref, sh_ref, o_ref):
    """Apply BN as per-channel affine (scale/shift precomputed) + ReLU."""
    o_ref[...] = jnp.maximum(y_ref[...] * sc_ref[...] + sh_ref[...], 0.0)


# ----------------------------------------------------------------------------
# Pallas wrappers (tiled over M, K/Cout padded to lane multiples, bf16 inputs)
# ----------------------------------------------------------------------------
def matmul_padded(patches, w_mat, bias=None, *, compute_stats):
    m, k = patches.shape
    cout = w_mat.shape[1]
    kp = _round_up(k, LANE)
    cp = _round_up(cout, LANE)
    tm, mp, ntiles = _tile_plan(m)

    # zero padding keeps BN statistics exact (padded rows/cols contribute 0)
    p = jnp.pad(patches, ((0, mp - m), (0, kp - k))).astype(jnp.bfloat16)
    w = jnp.pad(w_mat, ((0, kp - k), (0, cp - cout))).astype(jnp.bfloat16)

    cparams = pltpu.CompilerParams(dimension_semantics=("parallel",),
                                   vmem_limit_bytes=VMEM_LIMIT)
    if compute_stats:
        y_pad, stats = pl.pallas_call(
            _mm_stats_kernel,
            out_shape=(jax.ShapeDtypeStruct((mp, cp), jnp.float32),
                       jax.ShapeDtypeStruct((ntiles, 2, cp), jnp.float32)),
            grid=(ntiles,),
            in_specs=[pl.BlockSpec((tm, kp), lambda i: (i, 0)),
                      pl.BlockSpec((kp, cp), lambda i: (0, 0))],
            out_specs=[pl.BlockSpec((tm, cp), lambda i: (i, 0)),
                       pl.BlockSpec((1, 2, cp), lambda i: (i, 0, 0))],
            compiler_params=cparams,
        )(p, w)
        return y_pad, stats, (m, cp, tm, ntiles)

    b = jnp.pad(bias.astype(jnp.float32), (0, cp - cout)).reshape(1, cp)
    y_pad = pl.pallas_call(
        _mm_bias_kernel,
        out_shape=jax.ShapeDtypeStruct((mp, cp), jnp.float32),
        grid=(ntiles,),
        in_specs=[pl.BlockSpec((tm, kp), lambda i: (i, 0)),
                  pl.BlockSpec((kp, cp), lambda i: (0, 0)),
                  pl.BlockSpec((1, cp), lambda i: (0, 0))],
        out_specs=pl.BlockSpec((tm, cp), lambda i: (i, 0)),
        compiler_params=cparams,
    )(p, w, b)
    return y_pad, None, (m, cp, tm, ntiles)


def scale_shift_relu(y_pad, scale_cols, shift_cols, tm, ntiles):
    mp, cp = y_pad.shape
    sc = scale_cols.reshape(1, cp).astype(jnp.float32)
    sh = shift_cols.reshape(1, cp).astype(jnp.float32)
    return pl.pallas_call(
        _scale_shift_relu_kernel,
        out_shape=jax.ShapeDtypeStruct((mp, cp), jnp.float32),
        grid=(ntiles,),
        in_specs=[pl.BlockSpec((tm, cp), lambda i: (i, 0)),
                  pl.BlockSpec((1, cp), lambda i: (0, 0)),
                  pl.BlockSpec((1, cp), lambda i: (0, 0))],
        out_specs=pl.BlockSpec((tm, cp), lambda i: (i, 0)),
        compiler_params=pltpu.CompilerParams(dimension_semantics=("parallel",),
                                             vmem_limit_bytes=VMEM_LIMIT),
    )(y_pad, sc, sh)


# ----------------------------------------------------------------------------
# im2col / sub-pixel deconv glue (plain JAX; layout plumbing only)
# TODO(synk): build the im2col patch tiles in-kernel via manual make_async_copy from
#             an HBM-resident activation (memory_space=pl.ANY) to avoid materializing
#             the 9x-expanded patch matrix in HBM at high resolution.
# ----------------------------------------------------------------------------
def im2col(x, k, s, p):
    """x: (N, H, W, C) -> (N*Ho*Wo, k*k*C), patch column order (kh, kw, C)."""
    if p > 0:
        x = jnp.pad(x, ((0, 0), (p, p), (p, p), (0, 0)))
    n, hp, wp, c = x.shape
    ho = (hp - k) // s + 1
    wo = (wp - k) // s + 1
    cols = []
    for i in range(k):
        for j in range(k):
            cols.append(x[:, i:i + s * (ho - 1) + 1:s, j:j + s * (wo - 1) + 1:s, :])
    patches = jnp.stack(cols, axis=3)                    # (N, Ho, Wo, k*k, C)
    return patches.reshape(n * ho * wo, k * k * c), (n, ho, wo)


def _subpixel_weight(w):
    """ConvTranspose2d(k=4,s=2,p=1) weight (Cin,Cout,4,4) -> combined (9*Cin, 4*Cout).

    Output phase (r, c) of the transposed conv equals a 2x2 stride-1 correlation over
    the input; embedded into the shared 3x3 window the tap at (kh, kw) uses the flipped
    kernel element (3+r-2*kh, 3+c-2*kw) for kh in {r, r+1}, kw in {c, c+1}.
    """
    cin, cout = w.shape[0], w.shape[1]
    wc = jnp.zeros((3, 3, cin, 2, 2, cout), w.dtype)
    for r in range(2):
        for c in range(2):
            for kh in (r, r + 1):
                for kw in (c, c + 1):
                    wc = wc.at[kh, kw, :, r, c, :].set(
                        w[:, :, 3 + r - 2 * kh, 3 + c - 2 * kw])
    return wc.reshape(9 * cin, 4 * cout)


def _bn_affine(col_sum, col_sq, count, gamma, beta):
    mean = col_sum / count
    var = jnp.maximum(col_sq / count - mean * mean, 0.0)   # biased variance (training BN)
    inv = jax.lax.rsqrt(var + BN_EPS)
    scale = gamma * inv
    shift = beta - mean * scale
    return scale, shift


# ----------------------------------------------------------------------------
# Layers
# ----------------------------------------------------------------------------
def conv_bn_relu(x, w, gamma, beta, *, k, s, p):
    """Conv2d(k,s,p) + BatchNorm(train) + ReLU.  Conv bias dropped (cancelled by BN)."""
    patches, (n, ho, wo) = im2col(x, k, s, p)
    cout = w.shape[0]
    w_mat = jnp.transpose(w, (2, 3, 1, 0)).reshape(-1, cout)     # (k*k*Cin, Cout)
    y_pad, stats, (m, cp, tm, ntiles) = matmul_padded(patches, w_mat, compute_stats=True)

    col_sum = jnp.sum(stats[:, 0, :cout], axis=0)
    col_sq = jnp.sum(stats[:, 1, :cout], axis=0)
    scale, shift = _bn_affine(col_sum, col_sq, float(m), gamma, beta)

    out_pad = scale_shift_relu(y_pad,
                               jnp.pad(scale, (0, cp - cout)),
                               jnp.pad(shift, (0, cp - cout)), tm, ntiles)
    return out_pad[:m, :cout].reshape(n, ho, wo, cout)


def deconv_bn_relu(x, w, gamma, beta):
    """ConvTranspose2d(4, 2, 1) + BatchNorm(train) + ReLU via sub-pixel decomposition."""
    n, h, wid, cin = x.shape
    cout = w.shape[1]
    xp = jnp.pad(x, ((0, 0), (1, 1), (1, 1), (0, 0)))
    patches, _ = im2col(xp, 3, 1, 0)                              # (N*H*W, 9*Cin)
    w_mat = _subpixel_weight(w)                                   # (9*Cin, 4*Cout)
    y_pad, stats, (m, cp, tm, ntiles) = matmul_padded(patches, w_mat, compute_stats=True)

    c4 = 4 * cout
    col_sum = jnp.sum(stats[:, 0, :c4], axis=0).reshape(4, cout)  # per (phase, channel)
    col_sq = jnp.sum(stats[:, 1, :c4], axis=0).reshape(4, cout)
    scale, shift = _bn_affine(jnp.sum(col_sum, axis=0), jnp.sum(col_sq, axis=0),
                              float(4 * m), gamma, beta)

    out_pad = scale_shift_relu(y_pad,
                               jnp.pad(jnp.tile(scale, 4), (0, cp - c4)),
                               jnp.pad(jnp.tile(shift, 4), (0, cp - c4)), tm, ntiles)
    y4 = out_pad[:m, :c4].reshape(n, h, wid, 2, 2, cout)          # (..., r, c, Cout)
    return y4.transpose(0, 1, 3, 2, 4, 5).reshape(n, 2 * h, 2 * wid, cout)


def conv_plain(x, w, b, *, k, s, p):
    """Conv2d(k,s,p) + bias, no BN / activation (final layer)."""
    patches, (n, ho, wo) = im2col(x, k, s, p)
    cout = w.shape[0]
    w_mat = jnp.transpose(w, (2, 3, 1, 0)).reshape(-1, cout)
    y_pad, _, (m, _, _, _) = matmul_padded(patches, w_mat, bias=b, compute_stats=False)
    return y_pad[:m, :cout].reshape(n, ho, wo, cout)


# ----------------------------------------------------------------------------
# Parameters (deterministic init, PyTorch-like shapes)
# ----------------------------------------------------------------------------
ENC_CFG = [(1, 32), (32, 64), (64, 128), (128, 256)]    # Conv2d k=3 s=2 p=1 + BN + ReLU
DEC_CFG = [(256, 128), (128, 64), (64, 32), (32, 32)]   # ConvTranspose2d k=4 s=2 p=1 + BN + ReLU
FINAL_CFG = (32, 1)                                     # Conv2d k=3 s=1 p=1, no act


def init_params(key):
    params = {"enc": [], "dec": [], "final": None}
    keys = jax.random.split(key, 2 * (len(ENC_CFG) + len(DEC_CFG) + 1))
    ki = 0
    for cin, cout in ENC_CFG:
        bound = 1.0 / (cin * 9) ** 0.5
        w = jax.random.uniform(keys[ki], (cout, cin, 3, 3), jnp.float32, -bound, bound); ki += 1
        b = jax.random.uniform(keys[ki], (cout,), jnp.float32, -bound, bound); ki += 1
        params["enc"].append(dict(w=w, b=b,
                                  gamma=jnp.ones((cout,), jnp.float32),
                                  beta=jnp.zeros((cout,), jnp.float32)))
    for cin, cout in DEC_CFG:
        bound = 1.0 / (cin * 16) ** 0.5
        w = jax.random.uniform(keys[ki], (cin, cout, 4, 4), jnp.float32, -bound, bound); ki += 1
        b = jax.random.uniform(keys[ki], (cout,), jnp.float32, -bound, bound); ki += 1
        params["dec"].append(dict(w=w, b=b,
                                  gamma=jnp.ones((cout,), jnp.float32),
                                  beta=jnp.zeros((cout,), jnp.float32)))
    cin, cout = FINAL_CFG
    bound = 1.0 / (cin * 9) ** 0.5
    w = jax.random.uniform(keys[ki], (cout, cin, 3, 3), jnp.float32, -bound, bound); ki += 1
    b = jax.random.uniform(keys[ki], (cout,), jnp.float32, -bound, bound); ki += 1
    params["final"] = dict(w=w, b=b)
    return params


# ----------------------------------------------------------------------------
# Autoencoder forward: returns (y, x_enc) just like the PyTorch module
# ----------------------------------------------------------------------------
# TODO(synk): the bottleneck layers (enc3/enc4/dec1, M <= 32) could be fused into a
#             single pallas_call to amortize per-call overhead; kept separate for clarity.
@jax.jit
def autoencoder_forward(x_nchw, params):
    x = jnp.transpose(x_nchw, (0, 2, 3, 1)).astype(jnp.float32)   # NCHW -> NHWC

    h = x
    for layer in params["enc"]:
        h = conv_bn_relu(h, layer["w"], layer["gamma"], layer["beta"], k=3, s=2, p=1)
    z = h                                                          # encoder output

    for layer in params["dec"]:
        h = deconv_bn_relu(h, layer["w"], layer["gamma"], layer["beta"])

    fin = params["final"]
    y = conv_plain(h, fin["w"], fin["b"], k=3, s=1, p=1)

    return jnp.transpose(y, (0, 3, 1, 2)), jnp.transpose(z, (0, 3, 1, 2))


if __name__ == "__main__":
    key = jax.random.PRNGKey(0)
    kp, kx = jax.random.split(key)
    params = init_params(kp)

    # Input: batch=2, 1 channel, 16x16 spatial (NCHW like PyTorch).
    x = jax.random.normal(kx, (2, 1, 16, 16), jnp.float32)

    y, z = autoencoder_forward(x, params)
    y = jax.block_until_ready(y)
    z = jax.block_until_ready(z)

    assert y.shape == (2, 1, 16, 16), y.shape     # decoder reconstructs input resolution
    assert z.shape == (2, 256, 1, 1), z.shape     # 16 -> 8 -> 4 -> 2 -> 1 bottleneck
    assert jnp.all(jnp.isfinite(y)) and jnp.all(jnp.isfinite(z))

    print("KERNEL_OK")
</pallas_src>

<mosaic_0001>
module attributes {stable_mosaic.version = 11 : i64} {
  func.func @_mm_stats_kernel(%arg0: i32, %arg1: memref<128x128xbf16, #tpu.memory_space<vmem>>, %arg2: memref<128x128xbf16, #tpu.memory_space<vmem>>, %arg3: memref<128x128xf32, #tpu.memory_space<vmem>>, %arg4: memref<1x2x128xf32, #tpu.memory_space<vmem>>) attributes {dimension_semantics = [#tpu.dimension_semantics<parallel>], iteration_bounds = array<i64: 1>, scalar_prefetch = 0 : i64, scratch_operands = 0 : i64, tpu.core_type = #tpu.core_type<tc>, window_params = [{transform_indices = @transform_0, window_bounds = array<i64: 128, 128>}, {pipeline_mode = #tpu.pipeline_mode<synchronous>, transform_indices = @transform_1, window_bounds = array<i64: 128, 128>}, {transform_indices = @transform_2, window_bounds = array<i64: 128, 128>}, {transform_indices = @transform_3, window_bounds = array<i64: 1, 2, 128>}]} {
    %c0 = arith.constant 0 : index
    %c0_0 = arith.constant 0 : index
    %0 = vector.load %arg1[%c0, %c0_0] : memref<128x128xbf16, #tpu.memory_space<vmem>>, vector<128x128xbf16>
    %c0_1 = arith.constant 0 : index
    %c0_2 = arith.constant 0 : index
    %1 = vector.load %arg2[%c0_1, %c0_2] : memref<128x128xbf16, #tpu.memory_space<vmem>>, vector<128x128xbf16>
    %cst = arith.constant dense<0.000000e+00> : vector<128x128xf32>
    %2 = tpu.matmul %0, %1, %cst {dimension_numbers = #tpu.dot_dimension_numbers<[1], [0], [0], [1], [0, 0, 1, 1], [], []>} : vector<128x128xbf16>, vector<128x128xbf16>, vector<128x128xf32> -> vector<128x128xf32>
    %c0_3 = arith.constant 0 : index
    %c0_4 = arith.constant 0 : index
    %3 = vector.load %arg3[%c0_3, %c0_4] : memref<128x128xf32, #tpu.memory_space<vmem>>, vector<128x128xf32>
    tpu.vector_store %arg3[%c0_3, %c0_4], %2 {strides = array<i32>} : memref<128x128xf32, #tpu.memory_space<vmem>>, vector<128x128xf32>,
    %cst_5 = arith.constant dense<0.000000e+00> : vector<128xf32>
    %4 = vector.multi_reduction <add>, %2, %cst_5 [0] : vector<128x128xf32> to vector<128xf32>
    %5 = vector.shape_cast %4 : vector<128xf32> to vector<1x128xf32>
    %6 = arith.mulf %2, %2 : vector<128x128xf32>
    %cst_6 = arith.constant dense<0.000000e+00> : vector<128xf32>
    %7 = vector.multi_reduction <add>, %6, %cst_6 [0] : vector<128x128xf32> to vector<128xf32>
    %8 = vector.shape_cast %7 : vector<128xf32> to vector<1x128xf32>
    %9 = tpu.concatenate %5, %8 in 0 : vector<1x128xf32>, vector<1x128xf32> -> vector<2x128xf32>
    %c0_7 = arith.constant 0 : index
    %c0_8 = arith.constant 0 : index
    %c0_9 = arith.constant 0 : index
    %10 = vector.load %arg4[%c0_7, %c0_8, %c0_9] : memref<1x2x128xf32, #tpu.memory_space<vmem>>, vector<1x2x128xf32>
    %11 = vector.shape_cast %10 : vector<1x2x128xf32> to vector<2x128xf32>
    %12 = vector.shape_cast %9 : vector<2x128xf32> to vector<1x2x128xf32>
    tpu.vector_store %arg4[%c0_7, %c0_8, %c0_9], %12 {strides = array<i32>} : memref<1x2x128xf32, #tpu.memory_space<vmem>>, vector<1x2x128xf32>,
    return
  }
  func.func @transform_0(%arg0: i32) -> (i32, i32) {
    %c0_i32 = arith.constant 0 : i32
    %c0_i32_0 = arith.constant 0 : i32
    return %arg0, %c0_i32 : i32, i32
  }
  func.func @transform_1(%arg0: i32) -> (i32, i32) {
    %c0_i32 = arith.constant 0 : i32
    %c0_i32_0 = arith.constant 0 : i32
    %c0_i32_1 = arith.constant 0 : i32
    return %c0_i32, %c0_i32_0 : i32, i32
  }
  func.func @transform_2(%arg0: i32) -> (i32, i32) {
    %c0_i32 = arith.constant 0 : i32
    %c0_i32_0 = arith.constant 0 : i32
    return %arg0, %c0_i32 : i32, i32
  }
  func.func @transform_3(%arg0: i32) -> (i32, i32, i32) {
    %c0_i32 = arith.constant 0 : i32
    %c0_i32_0 = arith.constant 0 : i32
    %c0_i32_1 = arith.constant 0 : i32
    return %arg0, %c0_i32, %c0_i32_0 : i32, i32, i32
  }
}

module attributes {stable_mosaic.version = 11 : i64} {
  func.func @_scale_shift_relu_kernel(%arg0: i32, %arg1: memref<128x128xf32, #tpu.memory_space<vmem>>, %arg2: memref<1x128xf32, #tpu.memory_space<vmem>>, %arg3: memref<1x128xf32, #tpu.memory_space<vmem>>, %arg4: memref<128x128xf32, #tpu.memory_space<vmem>>) attributes {dimension_semantics = [#tpu.dimension_semantics<parallel>], iteration_bounds = array<i64: 1>, scalar_prefetch = 0 : i64, scratch_operands = 0 : i64, tpu.core_type = #tpu.core_type<tc>, window_params = [{transform_indices = @transform_0, window_bounds = array<i64: 128, 128>}, {pipeline_mode = #tpu.pipeline_mode<synchronous>, transform_indices = @transform_1, window_bounds = array<i64: 1, 128>}, {pipeline_mode = #tpu.pipeline_mode<synchronous>, transform_indices = @transform_2, window_bounds = array<i64: 1, 128>}, {transform_indices = @transform_3, window_bounds = array<i64: 128, 128>}]} {
    %c0 = arith.constant 0 : index
    %c0_0 = arith.constant 0 : index
    %0 = vector.load %arg1[%c0, %c0_0] : memref<128x128xf32, #tpu.memory_space<vmem>>, vector<128x128xf32>
    %c0_1 = arith.constant 0 : index
    %c0_2 = arith.constant 0 : index
    %1 = vector.load %arg2[%c0_1, %c0_2] : memref<1x128xf32, #tpu.memory_space<vmem>>, vector<1x128xf32>
    %2 = vector.broadcast %1 : vector<1x128xf32> to vector<128x128xf32>
    %3 = arith.mulf %0, %2 : vector<128x128xf32>
    %c0_3 = arith.constant 0 : index
    %c0_4 = arith.constant 0 : index
    %4 = vector.load %arg3[%c0_3, %c0_4] : memref<1x128xf32, #tpu.memory_space<vmem>>, vector<1x128xf32>
    %5 = vector.broadcast %4 : vector<1x128xf32> to vector<128x128xf32>
    %6 = arith.addf %3, %5 : vector<128x128xf32>
    %cst = arith.constant 0.000000e+00 : f32
    %7 = vector.broadcast %cst : f32 to vector<128x128xf32>
    %8 = arith.maximumf %6, %7 : vector<128x128xf32>
    %c0_5 = arith.constant 0 : index
    %c0_6 = arith.constant 0 : index
    %9 = vector.load %arg4[%c0_5, %c0_6] : memref<128x128xf32, #tpu.memory_space<vmem>>, vector<128x128xf32>
    tpu.vector_store %arg4[%c0_5, %c0_6], %8 {strides = array<i32>} : memref<128x128xf32, #tpu.memory_space<vmem>>, vector<128x128xf32>,
    return
  }
  func.func @transform_0(%arg0: i32) -> (i32, i32) {
    %c0_i32 = arith.constant 0 : i32
    %c0_i32_0 = arith.constant 0 : i32
    return %arg0, %c0_i32 : i32, i32
  }
  func.func @transform_1(%arg0: i32) -> (i32, i32) {
    %c0_i32 = arith.constant 0 : i32
    %c0_i32_0 = arith.constant 0 : i32
    %c0_i32_1 = arith.constant 0 : i32
    return %c0_i32, %c0_i32_0 : i32, i32
  }
  func.func @transform_2(%arg0: i32) -> (i32, i32) {
    %c0_i32 = arith.constant 0 : i32
    %c0_i32_0 = arith.constant 0 : i32
    %c0_i32_1 = arith.constant 0 : i32
    return %c0_i32, %c0_i32_0 : i32, i32
  }
  func.func @transform_3(%arg0: i32) -> (i32, i32) {
    %c0_i32 = arith.constant 0 : i32
    %c0_i32_0 = arith.constant 0 : i32
    return %arg0, %c0_i32 : i32, i32
  }
}

module attributes {stable_mosaic.version = 11 : i64} {
  func.func @_scale_shift_relu_kernel(%arg0: i32, %arg1: memref<32x128xf32, #tpu.memory_space<vmem>>, %arg2: memref<1x128xf32, #tpu.memory_space<vmem>>, %arg3: memref<1x128xf32, #tpu.memory_space<vmem>>, %arg4: memref<32x128xf32, #tpu.memory_space<vmem>>) attributes {dimension_semantics = [#tpu.dimension_semantics<parallel>], iteration_bounds = array<i64: 1>, scalar_prefetch = 0 : i64, scratch_operands = 0 : i64, tpu.core_type = #tpu.core_type<tc>, window_params = [{transform_indices = @transform_0, window_bounds = array<i64: 32, 128>}, {pipeline_mode = #tpu.pipeline_mode<synchronous>, transform_indices = @transform_1, window_bounds = array<i64: 1, 128>}, {pipeline_mode = #tpu.pipeline_mode<synchronous>, transform_indices = @transform_2, window_bounds = array<i64: 1, 128>}, {transform_indices = @transform_3, window_bounds = array<i64: 32, 128>}]} {
    %c0 = arith.constant 0 : index
    %c0_0 = arith.constant 0 : index
    %0 = vector.load %arg1[%c0, %c0_0] : memref<32x128xf32, #tpu.memory_space<vmem>>, vector<32x128xf32>
    %c0_1 = arith.constant 0 : index
    %c0_2 = arith.constant 0 : index
    %1 = vector.load %arg2[%c0_1, %c0_2] : memref<1x128xf32, #tpu.memory_space<vmem>>, vector<1x128xf32>
    %2 = vector.broadcast %1 : vector<1x128xf32> to vector<32x128xf32>
    %3 = arith.mulf %0, %2 : vector<32x128xf32>
    %c0_3 = arith.constant 0 : index
    %c0_4 = arith.constant 0 : index
    %4 = vector.load %arg3[%c0_3, %c0_4] : memref<1x128xf32, #tpu.memory_space<vmem>>, vector<1x128xf32>
    %5 = vector.broadcast %4 : vector<1x128xf32> to vector<32x128xf32>
    %6 = arith.addf %3, %5 : vector<32x128xf32>
    %cst = arith.constant 0.000000e+00 : f32
    %7 = vector.broadcast %cst : f32 to vector<32x128xf32>
    %8 = arith.maximumf %6, %7 : vector<32x128xf32>
    %c0_5 = arith.constant 0 : index
    %c0_6 = arith.constant 0 : index
    %9 = vector.load %arg4[%c0_5, %c0_6] : memref<32x128xf32, #tpu.memory_space<vmem>>, vector<32x128xf32>
    tpu.vector_store %arg4[%c0_5, %c0_6], %8 {strides = array<i32>} : memref<32x128xf32, #tpu.memory_space<vmem>>, vector<32x128xf32>,
    return
  }
  func.func @transform_0(%arg0: i32) -> (i32, i32) {
    %c0_i32 = arith.constant 0 : i32
    %c0_i32_0 = arith.constant 0 : i32
    return %arg0, %c0_i32 : i32, i32
  }
  func.func @transform_1(%arg0: i32) -> (i32, i32) {
    %c0_i32 = arith.constant 0 : i32
    %c0_i32_0 = arith.constant 0 : i32
    %c0_i32_1 = arith.constant 0 : i32
    return %c0_i32, %c0_i32_0 : i32, i32
  }
  func.func @transform_2(%arg0: i32) -> (i32, i32) {
    %c0_i32 = arith.constant 0 : i32
    %c0_i32_0 = arith.constant 0 : i32
    %c0_i32_1 = arith.constant 0 : i32
    return %c0_i32, %c0_i32_0 : i32, i32
  }
  func.func @transform_3(%arg0: i32) -> (i32, i32) {
    %c0_i32 = arith.constant 0 : i32
    %c0_i32_0 = arith.constant 0 : i32
    return %arg0, %c0_i32 : i32, i32
  }
}

module attributes {stable_mosaic.version = 11 : i64} {
  func.func @_mm_stats_kernel(%arg0: i32, %arg1: memref<32x384xbf16, #tpu.memory_space<vmem>>, %arg2: memref<384x128xbf16, #tpu.memory_space<vmem>>, %arg3: memref<32x128xf32, #tpu.memory_space<vmem>>, %arg4: memref<1x2x128xf32, #tpu.memory_space<vmem>>) attributes {dimension_semantics = [#tpu.dimension_semantics<parallel>], iteration_bounds = array<i64: 1>, scalar_prefetch = 0 : i64, scratch_operands = 0 : i64, tpu.core_type = #tpu.core_type<tc>, window_params = [{transform_indices = @transform_0, window_bounds = array<i64: 32, 384>}, {pipeline_mode = #tpu.pipeline_mode<synchronous>, transform_indices = @transform_1, window_bounds = array<i64: 384, 128>}, {transform_indices = @transform_2, window_bounds = array<i64: 32, 128>}, {transform_indices = @transform_3, window_bounds = array<i64: 1, 2, 128>}]} {
    %c0 = arith.constant 0 : index
    %c0_0 = arith.constant 0 : index
    %0 = vector.load %arg1[%c0, %c0_0] : memref<32x384xbf16, #tpu.memory_space<vmem>>, vector<32x384xbf16>
    %c0_1 = arith.constant 0 : index
    %c0_2 = arith.constant 0 : index
    %1 = vector.load %arg2[%c0_1, %c0_2] : memref<384x128xbf16, #tpu.memory_space<vmem>>, vector<384x128xbf16>
    %cst = arith.constant dense<0.000000e+00> : vector<32x128xf32>
    %2 = tpu.matmul %0, %1, %cst {dimension_numbers = #tpu.dot_dimension_numbers<[1], [0], [0], [1], [0, 0, 1, 1], [], []>} : vector<32x384xbf16>, vector<384x128xbf16>, vector<32x128xf32> -> vector<32x128xf32>
    %c0_3 = arith.constant 0 : index
    %c0_4 = arith.constant 0 : index
    %3 = vector.load %arg3[%c0_3, %c0_4] : memref<32x128xf32, #tpu.memory_space<vmem>>, vector<32x128xf32>
    tpu.vector_store %arg3[%c0_3, %c0_4], %2 {strides = array<i32>} : memref<32x128xf32, #tpu.memory_space<vmem>>, vector<32x128xf32>,
    %cst_5 = arith.constant dense<0.000000e+00> : vector<128xf32>
    %4 = vector.multi_reduction <add>, %2, %cst_5 [0] : vector<32x128xf32> to vector<128xf32>
    %5 = vector.shape_cast %4 : vector<128xf32> to vector<1x128xf32>
    %6 = arith.mulf %2, %2 : vector<32x128xf32>
    %cst_6 = arith.constant dense<0.000000e+00> : vector<128xf32>
    %7 = vector.multi_reduction <add>, %6, %cst_6 [0] : vector<32x128xf32> to vector<128xf32>
    %8 = vector.shape_cast %7 : vector<128xf32> to vector<1x128xf32>
    %9 = tpu.concatenate %5, %8 in 0 : vector<1x128xf32>, vector<1x128xf32> -> vector<2x128xf32>
    %c0_7 = arith.constant 0 : index
    %c0_8 = arith.constant 0 : index
    %c0_9 = arith.constant 0 : index
    %10 = vector.load %arg4[%c0_7, %c0_8, %c0_9] : memref<1x2x128xf32, #tpu.memory_space<vmem>>, vector<1x2x128xf32>
    %11 = vector.shape_cast %10 : vector<1x2x128xf32> to vector<2x128xf32>
    %12 = vector.shape_cast %9 : vector<2x128xf32> to vector<1x2x128xf32>
    tpu.vector_store %arg4[%c0_7, %c0_8, %c0_9], %12 {strides = array<i32>} : memref<1x2x128xf32, #tpu.memory_space<vmem>>, vector<1x2x128xf32>,
    return
  }
  func.func @transform_0(%arg0: i32) -> (i32, i32) {
    %c0_i32 = arith.constant 0 : i32
    %c0_i32_0 = arith.constant 0 : i32
    return %arg0, %c0_i32 : i32, i32
  }
  func.func @transform_1(%arg0: i32) -> (i32, i32) {
    %c0_i32 = arith.constant 0 : i32
    %c0_i32_0 = arith.constant 0 : i32
    %c0_i32_1 = arith.constant 0 : i32
    return %c0_i32, %c0_i32_0 : i32, i32
  }
  func.func @transform_2(%arg0: i32) -> (i32, i32) {
    %c0_i32 = arith.constant 0 : i32
    %c0_i32_0 = arith.constant 0 : i32
    return %arg0, %c0_i32 : i32, i32
  }
  func.func @transform_3(%arg0: i32) -> (i32, i32, i32) {
    %c0_i32 = arith.constant 0 : i32
    %c0_i32_0 = arith.constant 0 : i32
    %c0_i32_1 = arith.constant 0 : i32
    return %arg0, %c0_i32, %c0_i32_0 : i32, i32, i32
  }
}

module attributes {stable_mosaic.version = 11 : i64} {
  func.func @_mm_stats_kernel(%arg0: i32, %arg1: memref<8x640xbf16, #tpu.memory_space<vmem>>, %arg2: memref<640x128xbf16, #tpu.memory_space<vmem>>, %arg3: memref<8x128xf32, #tpu.memory_space<vmem>>, %arg4: memref<1x2x128xf32, #tpu.memory_space<vmem>>) attributes {dimension_semantics = [#tpu.dimension_semantics<parallel>], iteration_bounds = array<i64: 1>, scalar_prefetch = 0 : i64, scratch_operands = 0 : i64, tpu.core_type = #tpu.core_type<tc>, window_params = [{transform_indices = @transform_0, window_bounds = array<i64: 8, 640>}, {pipeline_mode = #tpu.pipeline_mode<synchronous>, transform_indices = @transform_1, window_bounds = array<i64: 640, 128>}, {transform_indices = @transform_2, window_bounds = array<i64: 8, 128>}, {transform_indices = @transform_3, window_bounds = array<i64: 1, 2, 128>}]} {
    %c0 = arith.constant 0 : index
    %c0_0 = arith.constant 0 : index
    %0 = vector.load %arg1[%c0, %c0_0] : memref<8x640xbf16, #tpu.memory_space<vmem>>, vector<8x640xbf16>
    %c0_1 = arith.constant 0 : index
    %c0_2 = arith.constant 0 : index
    %1 = vector.load %arg2[%c0_1, %c0_2] : memref<640x128xbf16, #tpu.memory_space<vmem>>, vector<640x128xbf16>
    %cst = arith.constant dense<0.000000e+00> : vector<8x128xf32>
    %2 = tpu.matmul %0, %1, %cst {dimension_numbers = #tpu.dot_dimension_numbers<[1], [0], [0], [1], [0, 0, 1, 1], [], []>} : vector<8x640xbf16>, vector<640x128xbf16>, vector<8x128xf32> -> vector<8x128xf32>
    %c0_3 = arith.constant 0 : index
    %c0_4 = arith.constant 0 : index
    %3 = vector.load %arg3[%c0_3, %c0_4] : memref<8x128xf32, #tpu.memory_space<vmem>>, vector<8x128xf32>
    tpu.vector_store %arg3[%c0_3, %c0_4], %2 {strides = array<i32>} : memref<8x128xf32, #tpu.memory_space<vmem>>, vector<8x128xf32>,
    %cst_5 = arith.constant dense<0.000000e+00> : vector<128xf32>
    %4 = vector.multi_reduction <add>, %2, %cst_5 [0] : vector<8x128xf32> to vector<128xf32>
    %5 = vector.shape_cast %4 : vector<128xf32> to vector<1x128xf32>
    %6 = arith.mulf %2, %2 : vector<8x128xf32>
    %cst_6 = arith.constant dense<0.000000e+00> : vector<128xf32>
    %7 = vector.multi_reduction <add>, %6, %cst_6 [0] : vector<8x128xf32> to vector<128xf32>
    %8 = vector.shape_cast %7 : vector<128xf32> to vector<1x128xf32>
    %9 = tpu.concatenate %5, %8 in 0 : vector<1x128xf32>, vector<1x128xf32> -> vector<2x128xf32>
    %c0_7 = arith.constant 0 : index
    %c0_8 = arith.constant 0 : index
    %c0_9 = arith.constant 0 : index
    %10 = vector.load %arg4[%c0_7, %c0_8, %c0_9] : memref<1x2x128xf32, #tpu.memory_space<vmem>>, vector<1x2x128xf32>
    %11 = vector.shape_cast %10 : vector<1x2x128xf32> to vector<2x128xf32>
    %12 = vector.shape_cast %9 : vector<2x128xf32> to vector<1x2x128xf32>
    tpu.vector_store %arg4[%c0_7, %c0_8, %c0_9], %12 {strides = array<i32>} : memref<1x2x128xf32, #tpu.memory_space<vmem>>, vector<1x2x128xf32>,
    return
  }
  func.func @transform_0(%arg0: i32) -> (i32, i32) {
    %c0_i32 = arith.constant 0 : i32
    %c0_i32_0 = arith.constant 0 : i32
    return %arg0, %c0_i32 : i32, i32
  }
  func.func @transform_1(%arg0: i32) -> (i32, i32) {
    %c0_i32 = arith.constant 0 : i32
    %c0_i32_0 = arith.constant 0 : i32
    %c0_i32_1 = arith.constant 0 : i32
    return %c0_i32, %c0_i32_0 : i32, i32
  }
  func.func @transform_2(%arg0: i32) -> (i32, i32) {
    %c0_i32 = arith.constant 0 : i32
    %c0_i32_0 = arith.constant 0 : i32
    return %arg0, %c0_i32 : i32, i32
  }
  func.func @transform_3(%arg0: i32) -> (i32, i32, i32) {
    %c0_i32 = arith.constant 0 : i32
    %c0_i32_0 = arith.constant 0 : i32
    %c0_i32_1 = arith.constant 0 : i32
    return %arg0, %c0_i32, %c0_i32_0 : i32, i32, i32
  }
}

module attributes {stable_mosaic.version = 11 : i64} {
  func.func @_scale_shift_relu_kernel(%arg0: i32, %arg1: memref<8x128xf32, #tpu.memory_space<vmem>>, %arg2: memref<1x128xf32, #tpu.memory_space<vmem>>, %arg3: memref<1x128xf32, #tpu.memory_space<vmem>>, %arg4: memref<8x128xf32, #tpu.memory_space<vmem>>) attributes {dimension_semantics = [#tpu.dimension_semantics<parallel>], iteration_bounds = array<i64: 1>, scalar_prefetch = 0 : i64, scratch_operands = 0 : i64, tpu.core_type = #tpu.core_type<tc>, window_params = [{transform_indices = @transform_0, window_bounds = array<i64: 8, 128>}, {pipeline_mode = #tpu.pipeline_mode<synchronous>, transform_indices = @transform_1, window_bounds = array<i64: 1, 128>}, {pipeline_mode = #tpu.pipeline_mode<synchronous>, transform_indices = @transform_2, window_bounds = array<i64: 1, 128>}, {transform_indices = @transform_3, window_bounds = array<i64: 8, 128>}]} {
    %c0 = arith.constant 0 : index
    %c0_0 = arith.constant 0 : index
    %0 = vector.load %arg1[%c0, %c0_0] : memref<8x128xf32, #tpu.memory_space<vmem>>, vector<8x128xf32>
    %c0_1 = arith.constant 0 : index
    %c0_2 = arith.constant 0 : index
    %1 = vector.load %arg2[%c0_1, %c0_2] : memref<1x128xf32, #tpu.memory_space<vmem>>, vector<1x128xf32>
    %2 = vector.broadcast %1 : vector<1x128xf32> to vector<8x128xf32>
    %3 = arith.mulf %0, %2 : vector<8x128xf32>
    %c0_3 = arith.constant 0 : index
    %c0_4 = arith.constant 0 : index
    %4 = vector.load %arg3[%c0_3, %c0_4] : memref<1x128xf32, #tpu.memory_space<vmem>>, vector<1x128xf32>
    %5 = vector.broadcast %4 : vector<1x128xf32> to vector<8x128xf32>
    %6 = arith.addf %3, %5 : vector<8x128xf32>
    %cst = arith.constant 0.000000e+00 : f32
    %7 = vector.broadcast %cst : f32 to vector<8x128xf32>
    %8 = arith.maximumf %6, %7 : vector<8x128xf32>
    %c0_5 = arith.constant 0 : index
    %c0_6 = arith.constant 0 : index
    %9 = vector.load %arg4[%c0_5, %c0_6] : memref<8x128xf32, #tpu.memory_space<vmem>>, vector<8x128xf32>
    tpu.vector_store %arg4[%c0_5, %c0_6], %8 {strides = array<i32>} : memref<8x128xf32, #tpu.memory_space<vmem>>, vector<8x128xf32>,
    return
  }
  func.func @transform_0(%arg0: i32) -> (i32, i32) {
    %c0_i32 = arith.constant 0 : i32
    %c0_i32_0 = arith.constant 0 : i32
    return %arg0, %c0_i32 : i32, i32
  }
  func.func @transform_1(%arg0: i32) -> (i32, i32) {
    %c0_i32 = arith.constant 0 : i32
    %c0_i32_0 = arith.constant 0 : i32
    %c0_i32_1 = arith.constant 0 : i32
    return %c0_i32, %c0_i32_0 : i32, i32
  }
  func.func @transform_2(%arg0: i32) -> (i32, i32) {
    %c0_i32 = arith.constant 0 : i32
    %c0_i32_0 = arith.constant 0 : i32
    %c0_i32_1 = arith.constant 0 : i32
    return %c0_i32, %c0_i32_0 : i32, i32
  }
  func.func @transform_3(%arg0: i32) -> (i32, i32) {
    %c0_i32 = arith.constant 0 : i32
    %c0_i32_0 = arith.constant 0 : i32
    return %arg0, %c0_i32 : i32, i32
  }
}

module attributes {stable_mosaic.version = 11 : i64} {
  func.func @_mm_stats_kernel(%arg0: i32, %arg1: memref<8x1152xbf16, #tpu.memory_space<vmem>>, %arg2: memref<1152x256xbf16, #tpu.memory_space<vmem>>, %arg3: memref<8x256xf32, #tpu.memory_space<vmem>>, %arg4: memref<1x2x256xf32, #tpu.memory_space<vmem>>) attributes {dimension_semantics = [#tpu.dimension_semantics<parallel>], iteration_bounds = array<i64: 1>, scalar_prefetch = 0 : i64, scratch_operands = 0 : i64, tpu.core_type = #tpu.core_type<tc>, window_params = [{transform_indices = @transform_0, window_bounds = array<i64: 8, 1152>}, {pipeline_mode = #tpu.pipeline_mode<synchronous>, transform_indices = @transform_1, window_bounds = array<i64: 1152, 256>}, {transform_indices = @transform_2, window_bounds = array<i64: 8, 256>}, {transform_indices = @transform_3, window_bounds = array<i64: 1, 2, 256>}]} {
    %c0 = arith.constant 0 : index
    %c0_0 = arith.constant 0 : index
    %0 = vector.load %arg1[%c0, %c0_0] : memref<8x1152xbf16, #tpu.memory_space<vmem>>, vector<8x1152xbf16>
    %c0_1 = arith.constant 0 : index
    %c0_2 = arith.constant 0 : index
    %1 = vector.load %arg2[%c0_1, %c0_2] : memref<1152x256xbf16, #tpu.memory_space<vmem>>, vector<1152x256xbf16>
    %cst = arith.constant dense<0.000000e+00> : vector<8x256xf32>
    %2 = tpu.matmul %0, %1, %cst {dimension_numbers = #tpu.dot_dimension_numbers<[1], [0], [0], [1], [0, 0, 1, 1], [], []>} : vector<8x1152xbf16>, vector<1152x256xbf16>, vector<8x256xf32> -> vector<8x256xf32>
    %c0_3 = arith.constant 0 : index
    %c0_4 = arith.constant 0 : index
    %3 = vector.load %arg3[%c0_3, %c0_4] : memref<8x256xf32, #tpu.memory_space<vmem>>, vector<8x256xf32>
    tpu.vector_store %arg3[%c0_3, %c0_4], %2 {strides = array<i32>} : memref<8x256xf32, #tpu.memory_space<vmem>>, vector<8x256xf32>,
    %cst_5 = arith.constant dense<0.000000e+00> : vector<256xf32>
    %4 = vector.multi_reduction <add>, %2, %cst_5 [0] : vector<8x256xf32> to vector<256xf32>
    %5 = vector.shape_cast %4 : vector<256xf32> to vector<1x256xf32>
    %6 = arith.mulf %2, %2 : vector<8x256xf32>
    %cst_6 = arith.constant dense<0.000000e+00> : vector<256xf32>
    %7 = vector.multi_reduction <add>, %6, %cst_6 [0] : vector<8x256xf32> to vector<256xf32>
    %8 = vector.shape_cast %7 : vector<256xf32> to vector<1x256xf32>
    %9 = tpu.concatenate %5, %8 in 0 : vector<1x256xf32>, vector<1x256xf32> -> vector<2x256xf32>
    %c0_7 = arith.constant 0 : index
    %c0_8 = arith.constant 0 : index
    %c0_9 = arith.constant 0 : index
    %10 = vector.load %arg4[%c0_7, %c0_8, %c0_9] : memref<1x2x256xf32, #tpu.memory_space<vmem>>, vector<1x2x256xf32>
    %11 = vector.shape_cast %10 : vector<1x2x256xf32> to vector<2x256xf32>
    %12 = vector.shape_cast %9 : vector<2x256xf32> to vector<1x2x256xf32>
    tpu.vector_store %arg4[%c0_7, %c0_8, %c0_9], %12 {strides = array<i32>} : memref<1x2x256xf32, #tpu.memory_space<vmem>>, vector<1x2x256xf32>,
    return
  }
  func.func @transform_0(%arg0: i32) -> (i32, i32) {
    %c0_i32 = arith.constant 0 : i32
    %c0_i32_0 = arith.constant 0 : i32
    return %arg0, %c0_i32 : i32, i32
  }
  func.func @transform_1(%arg0: i32) -> (i32, i32) {
    %c0_i32 = arith.constant 0 : i32
    %c0_i32_0 = arith.constant 0 : i32
    %c0_i32_1 = arith.constant 0 : i32
    return %c0_i32, %c0_i32_0 : i32, i32
  }
  func.func @transform_2(%arg0: i32) -> (i32, i32) {
    %c0_i32 = arith.constant 0 : i32
    %c0_i32_0 = arith.constant 0 : i32
    return %arg0, %c0_i32 : i32, i32
  }
  func.func @transform_3(%arg0: i32) -> (i32, i32, i32) {
    %c0_i32 = arith.constant 0 : i32
    %c0_i32_0 = arith.constant 0 : i32
    %c0_i32_1 = arith.constant 0 : i32
    return %arg0, %c0_i32, %c0_i32_0 : i32, i32, i32
  }
}

module attributes {stable_mosaic.version = 11 : i64} {
  func.func @_scale_shift_relu_kernel(%arg0: i32, %arg1: memref<8x256xf32, #tpu.memory_space<vmem>>, %arg2: memref<1x256xf32, #tpu.memory_space<vmem>>, %arg3: memref<1x256xf32, #tpu.memory_space<vmem>>, %arg4: memref<8x256xf32, #tpu.memory_space<vmem>>) attributes {dimension_semantics = [#tpu.dimension_semantics<parallel>], iteration_bounds = array<i64: 1>, scalar_prefetch = 0 : i64, scratch_operands = 0 : i64, tpu.core_type = #tpu.core_type<tc>, window_params = [{transform_indices = @transform_0, window_bounds = array<i64: 8, 256>}, {pipeline_mode = #tpu.pipeline_mode<synchronous>, transform_indices = @transform_1, window_bounds = array<i64: 1, 256>}, {pipeline_mode = #tpu.pipeline_mode<synchronous>, transform_indices = @transform_2, window_bounds = array<i64: 1, 256>}, {transform_indices = @transform_3, window_bounds = array<i64: 8, 256>}]} {
    %c0 = arith.constant 0 : index
    %c0_0 = arith.constant 0 : index
    %0 = vector.load %arg1[%c0, %c0_0] : memref<8x256xf32, #tpu.memory_space<vmem>>, vector<8x256xf32>
    %c0_1 = arith.constant 0 : index
    %c0_2 = arith.constant 0 : index
    %1 = vector.load %arg2[%c0_1, %c0_2] : memref<1x256xf32, #tpu.memory_space<vmem>>, vector<1x256xf32>
    %2 = vector.broadcast %1 : vector<1x256xf32> to vector<8x256xf32>
    %3 = arith.mulf %0, %2 : vector<8x256xf32>
    %c0_3 = arith.constant 0 : index
    %c0_4 = arith.constant 0 : index
    %4 = vector.load %arg3[%c0_3, %c0_4] : memref<1x256xf32, #tpu.memory_space<vmem>>, vector<1x256xf32>
    %5 = vector.broadcast %4 : vector<1x256xf32> to vector<8x256xf32>
    %6 = arith.addf %3, %5 : vector<8x256xf32>
    %cst = arith.constant 0.000000e+00 : f32
    %7 = vector.broadcast %cst : f32 to vector<8x256xf32>
    %8 = arith.maximumf %6, %7 : vector<8x256xf32>
    %c0_5 = arith.constant 0 : index
    %c0_6 = arith.constant 0 : index
    %9 = vector.load %arg4[%c0_5, %c0_6] : memref<8x256xf32, #tpu.memory_space<vmem>>, vector<8x256xf32>
    tpu.vector_store %arg4[%c0_5, %c0_6], %8 {strides = array<i32>} : memref<8x256xf32, #tpu.memory_space<vmem>>, vector<8x256xf32>,
    return
  }
  func.func @transform_0(%arg0: i32) -> (i32, i32) {
    %c0_i32 = arith.constant 0 : i32
    %c0_i32_0 = arith.constant 0 : i32
    return %arg0, %c0_i32 : i32, i32
  }
  func.func @transform_1(%arg0: i32) -> (i32, i32) {
    %c0_i32 = arith.constant 0 : i32
    %c0_i32_0 = arith.constant 0 : i32
    %c0_i32_1 = arith.constant 0 : i32
    return %c0_i32, %c0_i32_0 : i32, i32
  }
  func.func @transform_2(%arg0: i32) -> (i32, i32) {
    %c0_i32 = arith.constant 0 : i32
    %c0_i32_0 = arith.constant 0 : i32
    %c0_i32_1 = arith.constant 0 : i32
    return %c0_i32, %c0_i32_0 : i32, i32
  }
  func.func @transform_3(%arg0: i32) -> (i32, i32) {
    %c0_i32 = arith.constant 0 : i32
    %c0_i32_0 = arith.constant 0 : i32
    return %arg0, %c0_i32 : i32, i32
  }
}

module attributes {stable_mosaic.version = 11 : i64} {
  func.func @_mm_stats_kernel(%arg0: i32, %arg1: memref<8x2304xbf16, #tpu.memory_space<vmem>>, %arg2: memref<2304x512xbf16, #tpu.memory_space<vmem>>, %arg3: memref<8x512xf32, #tpu.memory_space<vmem>>, %arg4: memref<1x2x512xf32, #tpu.memory_space<vmem>>) attributes {dimension_semantics = [#tpu.dimension_semantics<parallel>], iteration_bounds = array<i64: 1>, scalar_prefetch = 0 : i64, scratch_operands = 0 : i64, tpu.core_type = #tpu.core_type<tc>, window_params = [{transform_indices = @transform_0, window_bounds = array<i64: 8, 2304>}, {pipeline_mode = #tpu.pipeline_mode<synchronous>, transform_indices = @transform_1, window_bounds = array<i64: 2304, 512>}, {transform_indices = @transform_2, window_bounds = array<i64: 8, 512>}, {transform_indices = @transform_3, window_bounds = array<i64: 1, 2, 512>}]} {
    %c0 = arith.constant 0 : index
    %c0_0 = arith.constant 0 : index
    %0 = vector.load %arg1[%c0, %c0_0] : memref<8x2304xbf16, #tpu.memory_space<vmem>>, vector<8x2304xbf16>
    %c0_1 = arith.constant 0 : index
    %c0_2 = arith.constant 0 : index
    %1 = vector.load %arg2[%c0_1, %c0_2] : memref<2304x512xbf16, #tpu.memory_space<vmem>>, vector<2304x512xbf16>
    %cst = arith.constant dense<0.000000e+00> : vector<8x512xf32>
    %2 = tpu.matmul %0, %1, %cst {dimension_numbers = #tpu.dot_dimension_numbers<[1], [0], [0], [1], [0, 0, 1, 1], [], []>} : vector<8x2304xbf16>, vector<2304x512xbf16>, vector<8x512xf32> -> vector<8x512xf32>
    %c0_3 = arith.constant 0 : index
    %c0_4 = arith.constant 0 : index
    %3 = vector.load %arg3[%c0_3, %c0_4] : memref<8x512xf32, #tpu.memory_space<vmem>>, vector<8x512xf32>
    tpu.vector_store %arg3[%c0_3, %c0_4], %2 {strides = array<i32>} : memref<8x512xf32, #tpu.memory_space<vmem>>, vector<8x512xf32>,
    %cst_5 = arith.constant dense<0.000000e+00> : vector<512xf32>
    %4 = vector.multi_reduction <add>, %2, %cst_5 [0] : vector<8x512xf32> to vector<512xf32>
    %5 = vector.shape_cast %4 : vector<512xf32> to vector<1x512xf32>
    %6 = arith.mulf %2, %2 : vector<8x512xf32>
    %cst_6 = arith.constant dense<0.000000e+00> : vector<512xf32>
    %7 = vector.multi_reduction <add>, %6, %cst_6 [0] : vector<8x512xf32> to vector<512xf32>
    %8 = vector.shape_cast %7 : vector<512xf32> to vector<1x512xf32>
    %9 = tpu.concatenate %5, %8 in 0 : vector<1x512xf32>, vector<1x512xf32> -> vector<2x512xf32>
    %c0_7 = arith.constant 0 : index
    %c0_8 = arith.constant 0 : index
    %c0_9 = arith.constant 0 : index
    %10 = vector.load %arg4[%c0_7, %c0_8, %c0_9] : memref<1x2x512xf32, #tpu.memory_space<vmem>>, vector<1x2x512xf32>
    %11 = vector.shape_cast %10 : vector<1x2x512xf32> to vector<2x512xf32>
    %12 = vector.shape_cast %9 : vector<2x512xf32> to vector<1x2x512xf32>
    tpu.vector_store %arg4[%c0_7, %c0_8, %c0_9], %12 {strides = array<i32>} : memref<1x2x512xf32, #tpu.memory_space<vmem>>, vector<1x2x512xf32>,
    return
  }
  func.func @transform_0(%arg0: i32) -> (i32, i32) {
    %c0_i32 = arith.constant 0 : i32
    %c0_i32_0 = arith.constant 0 : i32
    return %arg0, %c0_i32 : i32, i32
  }
  func.func @transform_1(%arg0: i32) -> (i32, i32) {
    %c0_i32 = arith.constant 0 : i32
    %c0_i32_0 = arith.constant 0 : i32
    %c0_i32_1 = arith.constant 0 : i32
    return %c0_i32, %c0_i32_0 : i32, i32
  }
  func.func @transform_2(%arg0: i32) -> (i32, i32) {
    %c0_i32 = arith.constant 0 : i32
    %c0_i32_0 = arith.constant 0 : i32
    return %arg0, %c0_i32 : i32, i32
  }
  func.func @transform_3(%arg0: i32) -> (i32, i32, i32) {
    %c0_i32 = arith.constant 0 : i32
    %c0_i32_0 = arith.constant 0 : i32
    %c0_i32_1 = arith.constant 0 : i32
    return %arg0, %c0_i32, %c0_i32_0 : i32, i32, i32
  }
}

module attributes {stable_mosaic.version = 11 : i64} {
  func.func @_scale_shift_relu_kernel(%arg0: i32, %arg1: memref<8x512xf32, #tpu.memory_space<vmem>>, %arg2: memref<1x512xf32, #tpu.memory_space<vmem>>, %arg3: memref<1x512xf32, #tpu.memory_space<vmem>>, %arg4: memref<8x512xf32, #tpu.memory_space<vmem>>) attributes {dimension_semantics = [#tpu.dimension_semantics<parallel>], iteration_bounds = array<i64: 1>, scalar_prefetch = 0 : i64, scratch_operands = 0 : i64, tpu.core_type = #tpu.core_type<tc>, window_params = [{transform_indices = @transform_0, window_bounds = array<i64: 8, 512>}, {pipeline_mode = #tpu.pipeline_mode<synchronous>, transform_indices = @transform_1, window_bounds = array<i64: 1, 512>}, {pipeline_mode = #tpu.pipeline_mode<synchronous>, transform_indices = @transform_2, window_bounds = array<i64: 1, 512>}, {transform_indices = @transform_3, window_bounds = array<i64: 8, 512>}]} {
    %c0 = arith.constant 0 : index
    %c0_0 = arith.constant 0 : index
    %0 = vector.load %arg1[%c0, %c0_0] : memref<8x512xf32, #tpu.memory_space<vmem>>, vector<8x512xf32>
    %c0_1 = arith.constant 0 : index
    %c0_2 = arith.constant 0 : index
    %1 = vector.load %arg2[%c0_1, %c0_2] : memref<1x512xf32, #tpu.memory_space<vmem>>, vector<1x512xf32>
    %2 = vector.broadcast %1 : vector<1x512xf32> to vector<8x512xf32>
    %3 = arith.mulf %0, %2 : vector<8x512xf32>
    %c0_3 = arith.constant 0 : index
    %c0_4 = arith.constant 0 : index
    %4 = vector.load %arg3[%c0_3, %c0_4] : memref<1x512xf32, #tpu.memory_space<vmem>>, vector<1x512xf32>
    %5 = vector.broadcast %4 : vector<1x512xf32> to vector<8x512xf32>
    %6 = arith.addf %3, %5 : vector<8x512xf32>
    %cst = arith.constant 0.000000e+00 : f32
    %7 = vector.broadcast %cst : f32 to vector<8x512xf32>
    %8 = arith.maximumf %6, %7 : vector<8x512xf32>
    %c0_5 = arith.constant 0 : index
    %c0_6 = arith.constant 0 : index
    %9 = vector.load %arg4[%c0_5, %c0_6] : memref<8x512xf32, #tpu.memory_space<vmem>>, vector<8x512xf32>
    tpu.vector_store %arg4[%c0_5, %c0_6], %8 {strides = array<i32>} : memref<8x512xf32, #tpu.memory_space<vmem>>, vector<8x512xf32>,
    return
  }
  func.func @transform_0(%arg0: i32) -> (i32, i32) {
    %c0_i32 = arith.constant 0 : i32
    %c0_i32_0 = arith.constant 0 : i32
    return %arg0, %c0_i32 : i32, i32
  }
  func.func @transform_1(%arg0: i32) -> (i32, i32) {
    %c0_i32 = arith.constant 0 : i32
    %c0_i32_0 = arith.constant 0 : i32
    %c0_i32_1 = arith.constant 0 : i32
    return %c0_i32, %c0_i32_0 : i32, i32
  }
  func.func @transform_2(%arg0: i32) -> (i32, i32) {
    %c0_i32 = arith.constant 0 : i32
    %c0_i32_0 = arith.constant 0 : i32
    %c0_i32_1 = arith.constant 0 : i32
    return %c0_i32, %c0_i32_0 : i32, i32
  }
  func.func @transform_3(%arg0: i32) -> (i32, i32) {
    %c0_i32 = arith.constant 0 : i32
    %c0_i32_0 = arith.constant 0 : i32
    return %arg0, %c0_i32 : i32, i32
  }
}

module attributes {stable_mosaic.version = 11 : i64} {
  func.func @_mm_stats_kernel(%arg0: i32, %arg1: memref<32x640xbf16, #tpu.memory_space<vmem>>, %arg2: memref<640x128xbf16, #tpu.memory_space<vmem>>, %arg3: memref<32x128xf32, #tpu.memory_space<vmem>>, %arg4: memref<1x2x128xf32, #tpu.memory_space<vmem>>) attributes {dimension_semantics = [#tpu.dimension_semantics<parallel>], iteration_bounds = array<i64: 1>, scalar_prefetch = 0 : i64, scratch_operands = 0 : i64, tpu.core_type = #tpu.core_type<tc>, window_params = [{transform_indices = @transform_0, window_bounds = array<i64: 32, 640>}, {pipeline_mode = #tpu.pipeline_mode<synchronous>, transform_indices = @transform_1, window_bounds = array<i64: 640, 128>}, {transform_indices = @transform_2, window_bounds = array<i64: 32, 128>}, {transform_indices = @transform_3, window_bounds = array<i64: 1, 2, 128>}]} {
    %c0 = arith.constant 0 : index
    %c0_0 = arith.constant 0 : index
    %0 = vector.load %arg1[%c0, %c0_0] : memref<32x640xbf16, #tpu.memory_space<vmem>>, vector<32x640xbf16>
    %c0_1 = arith.constant 0 : index
    %c0_2 = arith.constant 0 : index
    %1 = vector.load %arg2[%c0_1, %c0_2] : memref<640x128xbf16, #tpu.memory_space<vmem>>, vector<640x128xbf16>
    %cst = arith.constant dense<0.000000e+00> : vector<32x128xf32>
    %2 = tpu.matmul %0, %1, %cst {dimension_numbers = #tpu.dot_dimension_numbers<[1], [0], [0], [1], [0, 0, 1, 1], [], []>} : vector<32x640xbf16>, vector<640x128xbf16>, vector<32x128xf32> -> vector<32x128xf32>
    %c0_3 = arith.constant 0 : index
    %c0_4 = arith.constant 0 : index
    %3 = vector.load %arg3[%c0_3, %c0_4] : memref<32x128xf32, #tpu.memory_space<vmem>>, vector<32x128xf32>
    tpu.vector_store %arg3[%c0_3, %c0_4], %2 {strides = array<i32>} : memref<32x128xf32, #tpu.memory_space<vmem>>, vector<32x128xf32>,
    %cst_5 = arith.constant dense<0.000000e+00> : vector<128xf32>
    %4 = vector.multi_reduction <add>, %2, %cst_5 [0] : vector<32x128xf32> to vector<128xf32>
    %5 = vector.shape_cast %4 : vector<128xf32> to vector<1x128xf32>
    %6 = arith.mulf %2, %2 : vector<32x128xf32>
    %cst_6 = arith.constant dense<0.000000e+00> : vector<128xf32>
    %7 = vector.multi_reduction <add>, %6, %cst_6 [0] : vector<32x128xf32> to vector<128xf32>
    %8 = vector.shape_cast %7 : vector<128xf32> to vector<1x128xf32>
    %9 = tpu.concatenate %5, %8 in 0 : vector<1x128xf32>, vector<1x128xf32> -> vector<2x128xf32>
    %c0_7 = arith.constant 0 : index
    %c0_8 = arith.constant 0 : index
    %c0_9 = arith.constant 0 : index
    %10 = vector.load %arg4[%c0_7, %c0_8, %c0_9] : memref<1x2x128xf32, #tpu.memory_space<vmem>>, vector<1x2x128xf32>
    %11 = vector.shape_cast %10 : vector<1x2x128xf32> to vector<2x128xf32>
    %12 = vector.shape_cast %9 : vector<2x128xf32> to vector<1x2x128xf32>
    tpu.vector_store %arg4[%c0_7, %c0_8, %c0_9], %12 {strides = array<i32>} : memref<1x2x128xf32, #tpu.memory_space<vmem>>, vector<1x2x128xf32>,
    return
  }
  func.func @transform_0(%arg0: i32) -> (i32, i32) {
    %c0_i32 = arith.constant 0 : i32
    %c0_i32_0 = arith.constant 0 : i32
    return %arg0, %c0_i32 : i32, i32
  }
  func.func @transform_1(%arg0: i32) -> (i32, i32) {
    %c0_i32 = arith.constant 0 : i32
    %c0_i32_0 = arith.constant 0 : i32
    %c0_i32_1 = arith.constant 0 : i32
    return %c0_i32, %c0_i32_0 : i32, i32
  }
  func.func @transform_2(%arg0: i32) -> (i32, i32) {
    %c0_i32 = arith.constant 0 : i32
    %c0_i32_0 = arith.constant 0 : i32
    return %arg0, %c0_i32 : i32, i32
  }
  func.func @transform_3(%arg0: i32) -> (i32, i32, i32) {
    %c0_i32 = arith.constant 0 : i32
    %c0_i32_0 = arith.constant 0 : i32
    %c0_i32_1 = arith.constant 0 : i32
    return %arg0, %c0_i32, %c0_i32_0 : i32, i32, i32
  }
}

module attributes {stable_mosaic.version = 11 : i64} {
  func.func @_mm_stats_kernel(%arg0: i32, %arg1: memref<128x384xbf16, #tpu.memory_space<vmem>>, %arg2: memref<384x128xbf16, #tpu.memory_space<vmem>>, %arg3: memref<128x128xf32, #tpu.memory_space<vmem>>, %arg4: memref<1x2x128xf32, #tpu.memory_space<vmem>>) attributes {dimension_semantics = [#tpu.dimension_semantics<parallel>], iteration_bounds = array<i64: 1>, scalar_prefetch = 0 : i64, scratch_operands = 0 : i64, tpu.core_type = #tpu.core_type<tc>, window_params = [{transform_indices = @transform_0, window_bounds = array<i64: 128, 384>}, {pipeline_mode = #tpu.pipeline_mode<synchronous>, transform_indices = @transform_1, window_bounds = array<i64: 384, 128>}, {transform_indices = @transform_2, window_bounds = array<i64: 128, 128>}, {transform_indices = @transform_3, window_bounds = array<i64: 1, 2, 128>}]} {
    %c0 = arith.constant 0 : index
    %c0_0 = arith.constant 0 : index
    %0 = vector.load %arg1[%c0, %c0_0] : memref<128x384xbf16, #tpu.memory_space<vmem>>, vector<128x384xbf16>
    %c0_1 = arith.constant 0 : index
    %c0_2 = arith.constant 0 : index
    %1 = vector.load %arg2[%c0_1, %c0_2] : memref<384x128xbf16, #tpu.memory_space<vmem>>, vector<384x128xbf16>
    %cst = arith.constant dense<0.000000e+00> : vector<128x128xf32>
    %2 = tpu.matmul %0, %1, %cst {dimension_numbers = #tpu.dot_dimension_numbers<[1], [0], [0], [1], [0, 0, 1, 1], [], []>} : vector<128x384xbf16>, vector<384x128xbf16>, vector<128x128xf32> -> vector<128x128xf32>
    %c0_3 = arith.constant 0 : index
    %c0_4 = arith.constant 0 : index
    %3 = vector.load %arg3[%c0_3, %c0_4] : memref<128x128xf32, #tpu.memory_space<vmem>>, vector<128x128xf32>
    tpu.vector_store %arg3[%c0_3, %c0_4], %2 {strides = array<i32>} : memref<128x128xf32, #tpu.memory_space<vmem>>, vector<128x128xf32>,
    %cst_5 = arith.constant dense<0.000000e+00> : vector<128xf32>
    %4 = vector.multi_reduction <add>, %2, %cst_5 [0] : vector<128x128xf32> to vector<128xf32>
    %5 = vector.shape_cast %4 : vector<128xf32> to vector<1x128xf32>
    %6 = arith.mulf %2, %2 : vector<128x128xf32>
    %cst_6 = arith.constant dense<0.000000e+00> : vector<128xf32>
    %7 = vector.multi_reduction <add>, %6, %cst_6 [0] : vector<128x128xf32> to vector<128xf32>
    %8 = vector.shape_cast %7 : vector<128xf32> to vector<1x128xf32>
    %9 = tpu.concatenate %5, %8 in 0 : vector<1x128xf32>, vector<1x128xf32> -> vector<2x128xf32>
    %c0_7 = arith.constant 0 : index
    %c0_8 = arith.constant 0 : index
    %c0_9 = arith.constant 0 : index
    %10 = vector.load %arg4[%c0_7, %c0_8, %c0_9] : memref<1x2x128xf32, #tpu.memory_space<vmem>>, vector<1x2x128xf32>
    %11 = vector.shape_cast %10 : vector<1x2x128xf32> to vector<2x128xf32>
    %12 = vector.shape_cast %9 : vector<2x128xf32> to vector<1x2x128xf32>
    tpu.vector_store %arg4[%c0_7, %c0_8, %c0_9], %12 {strides = array<i32>} : memref<1x2x128xf32, #tpu.memory_space<vmem>>, vector<1x2x128xf32>,
    return
  }
  func.func @transform_0(%arg0: i32) -> (i32, i32) {
    %c0_i32 = arith.constant 0 : i32
    %c0_i32_0 = arith.constant 0 : i32
    return %arg0, %c0_i32 : i32, i32
  }
  func.func @transform_1(%arg0: i32) -> (i32, i32) {
    %c0_i32 = arith.constant 0 : i32
    %c0_i32_0 = arith.constant 0 : i32
    %c0_i32_1 = arith.constant 0 : i32
    return %c0_i32, %c0_i32_0 : i32, i32
  }
  func.func @transform_2(%arg0: i32) -> (i32, i32) {
    %c0_i32 = arith.constant 0 : i32
    %c0_i32_0 = arith.constant 0 : i32
    return %arg0, %c0_i32 : i32, i32
  }
  func.func @transform_3(%arg0: i32) -> (i32, i32, i32) {
    %c0_i32 = arith.constant 0 : i32
    %c0_i32_0 = arith.constant 0 : i32
    %c0_i32_1 = arith.constant 0 : i32
    return %arg0, %c0_i32, %c0_i32_0 : i32, i32, i32
  }
}

module attributes {stable_mosaic.version = 11 : i64} {
  func.func @_mm_bias_kernel(%arg0: i32, %arg1: memref<512x384xbf16, #tpu.memory_space<vmem>>, %arg2: memref<384x128xbf16, #tpu.memory_space<vmem>>, %arg3: memref<1x128xf32, #tpu.memory_space<vmem>>, %arg4: memref<512x128xf32, #tpu.memory_space<vmem>>) attributes {dimension_semantics = [#tpu.dimension_semantics<parallel>], iteration_bounds = array<i64: 1>, scalar_prefetch = 0 : i64, scratch_operands = 0 : i64, tpu.core_type = #tpu.core_type<tc>, window_params = [{transform_indices = @transform_0, window_bounds = array<i64: 512, 384>}, {pipeline_mode = #tpu.pipeline_mode<synchronous>, transform_indices = @transform_1, window_bounds = array<i64: 384, 128>}, {pipeline_mode = #tpu.pipeline_mode<synchronous>, transform_indices = @transform_2, window_bounds = array<i64: 1, 128>}, {transform_indices = @transform_3, window_bounds = array<i64: 512, 128>}]} {
    %c0 = arith.constant 0 : index
    %c0_0 = arith.constant 0 : index
    %0 = vector.load %arg1[%c0, %c0_0] : memref<512x384xbf16, #tpu.memory_space<vmem>>, vector<512x384xbf16>
    %c0_1 = arith.constant 0 : index
    %c0_2 = arith.constant 0 : index
    %1 = vector.load %arg2[%c0_1, %c0_2] : memref<384x128xbf16, #tpu.memory_space<vmem>>, vector<384x128xbf16>
    %cst = arith.constant dense<0.000000e+00> : vector<512x128xf32>
    %2 = tpu.matmul %0, %1, %cst {dimension_numbers = #tpu.dot_dimension_numbers<[1], [0], [0], [1], [0, 0, 1, 1], [], []>} : vector<512x384xbf16>, vector<384x128xbf16>, vector<512x128xf32> -> vector<512x128xf32>
    %c0_3 = arith.constant 0 : index
    %c0_4 = arith.constant 0 : index
    %3 = vector.load %arg3[%c0_3, %c0_4] : memref<1x128xf32, #tpu.memory_space<vmem>>, vector<1x128xf32>
    %4 = vector.broadcast %3 : vector<1x128xf32> to vector<512x128xf32>
    %5 = arith.addf %2, %4 : vector<512x128xf32>
    %c0_5 = arith.constant 0 : index
    %c0_6 = arith.constant 0 : index
    %6 = vector.load %arg4[%c0_5, %c0_6] : memref<512x128xf32, #tpu.memory_space<vmem>>, vector<512x128xf32>
    tpu.vector_store %arg4[%c0_5, %c0_6], %5 {strides = array<i32>} : memref<512x128xf32, #tpu.memory_space<vmem>>, vector<512x128xf32>,
    return
  }
  func.func @transform_0(%arg0: i32) -> (i32, i32) {
    %c0_i32 = arith.constant 0 : i32
    %c0_i32_0 = arith.constant 0 : i32
    return %arg0, %c0_i32 : i32, i32
  }
  func.func @transform_1(%arg0: i32) -> (i32, i32) {
    %c0_i32 = arith.constant 0 : i32
    %c0_i32_0 = arith.constant 0 : i32
    %c0_i32_1 = arith.constant 0 : i32
    return %c0_i32, %c0_i32_0 : i32, i32
  }
  func.func @transform_2(%arg0: i32) -> (i32, i32) {
    %c0_i32 = arith.constant 0 : i32
    %c0_i32_0 = arith.constant 0 : i32
    %c0_i32_1 = arith.constant 0 : i32
    return %c0_i32, %c0_i32_0 : i32, i32
  }
  func.func @transform_3(%arg0: i32) -> (i32, i32) {
    %c0_i32 = arith.constant 0 : i32
    %c0_i32_0 = arith.constant 0 : i32
    return %arg0, %c0_i32 : i32, i32
  }
}

</mosaic_0001>

<llo_original>
// kernel: autoencoder_forward.18
$region0: #{autoencoder_forward.18}
  #allocation0 [shape = 'u32[]', space=smem, size = 0x4, offset = 0x4, fixed_abs, tag = 'smem constant byte address 0x4 - core index']
  #allocation1 [shape = 'u32[144,128]{1,0:T(1,128)}', space=vmem, size = 0x12000, scoped, tag = 'internal scratch']
  %s0 = inlined_call_operand.vmem [shape: f32[128,128], index: 0, kind: input, shape index: {}]
  %s1 = inlined_call_operand.vmem [shape: f32[1,128], index: 1, kind: input, shape index: {}]
  %s2 = inlined_call_operand.vmem [shape: f32[1,128], index: 2, kind: input, shape index: {}]
  %s3 = inlined_call_operand.vmem [shape: f32[128,128], index: 3, kind: output, shape index: {}]
  %s4 = sld [smem:[#allocation0]]
  $region22: #{autoencoder_forward.18} parent=0
    _
  %s6 = ssub.s32 1, %s4
  %s7 = scalar_select 0, %s6, %s4
  // Predicated region
  $region2: #{autoencoder_forward.18} parent=0 // pred_check
    _
  $region3: #{autoencoder_forward.18} parent=0 // pred_check_branch
    %9 = sbr.rel (0) target = $region5
  $region4: #{autoencoder_forward.18} parent=0 // pred_region
    _
  $region5: #{autoencoder_forward.18} parent=0 // pred_fallthru
    _
  // Predicated region
  $region6: #{autoencoder_forward.18} parent=0 // pred_check
    _
  $region7: #{autoencoder_forward.18} parent=0 // pred_check_branch
    %11 = sbr.rel (0) target = $region9
  $region8: #{autoencoder_forward.18} parent=0 // pred_region
    _
  $region9: #{autoencoder_forward.18} parent=0 // pred_fallthru
    _
  // Predicated region
  $region10: #{autoencoder_forward.18} parent=0 // pred_check
    _
  $region11: #{autoencoder_forward.18} parent=0 // pred_check_branch
    %13 = sbr.rel (0) target = $region13
  $region12: #{autoencoder_forward.18} parent=0 // pred_region
    _
  $region13: #{autoencoder_forward.18} parent=0 // pred_fallthru
    _
  %v14 = vld [vmem:[%s0] sm:$0xff]
  %v15 = vld [vmem:[%s0 + $0x8] sm:$0xff]
  %v16 = vld [vmem:[%s0 + $0x10] sm:$0xff]
  %v17 = vld [vmem:[%s0 + $0x18] sm:$0xff]
  %v18 = vld [vmem:[%s0 + $0x20] sm:$0xff]
  %v19 = vld [vmem:[%s0 + $0x28] sm:$0xff]
  %v20 = vld [vmem:[%s0 + $0x30] sm:$0xff]
  %v21 = vld [vmem:[%s0 + $0x38] sm:$0xff]
  %v22 = vld [vmem:[%s0 + $0x40] sm:$0xff]
  %v23 = vld [vmem:[%s0 + $0x48] sm:$0xff]
  %v24 = vld [vmem:[%s0 + $0x50] sm:$0xff]
  %v25 = vld [vmem:[%s0 + $0x58] sm:$0xff]
  %v26 = vld [vmem:[%s0 + $0x60] sm:$0xff]
  %v27 = vld [vmem:[%s0 + $0x68] sm:$0xff]
  %v28 = vld [vmem:[%s0 + $0x70] sm:$0xff]
  %v29 = vld [vmem:[%s0 + $0x78] sm:$0xff]
  %v30 = vld [vmem:[%s1] sm:$0x1]
  %v32 = vlaneseq
  %v33 = vshrl.u32 %v32, 7
  %v34 = vsub.s32 0, %v33
  %v35 = vrot.slane %v30, %v34
  %v37 = vmul.f32 %v14, %v35
  %v38 = vmul.f32 %v15, %v35
  %v39 = vmul.f32 %v16, %v35
  %v40 = vmul.f32 %v17, %v35
  %v41 = vmul.f32 %v18, %v35
  %v42 = vmul.f32 %v19, %v35
  %v43 = vmul.f32 %v20, %v35
  %v44 = vmul.f32 %v21, %v35
  %v45 = vmul.f32 %v22, %v35
  %v46 = vmul.f32 %v23, %v35
  %v47 = vmul.f32 %v24, %v35
  %v48 = vmul.f32 %v25, %v35
  %v49 = vmul.f32 %v26, %v35
  %v50 = vmul.f32 %v27, %v35
  %v51 = vmul.f32 %v28, %v35
  %v52 = vmul.f32 %v29, %v35
  %v53 = vld [vmem:[%s2] sm:$0x1]
  %v55 = vlaneseq
  %v56 = vshrl.u32 %v55, 7
  %v57 = vsub.s32 0, %v56
  %v58 = vrot.slane %v53, %v57
  %v60 = vadd.f32 %v37, %v58
  %v61 = vadd.f32 %v38, %v58
  %v62 = vadd.f32 %v39, %v58
  %v63 = vadd.f32 %v40, %v58
  %v64 = vadd.f32 %v41, %v58
  %v65 = vadd.f32 %v42, %v58
  %v66 = vadd.f32 %v43, %v58
  %v67 = vadd.f32 %v44, %v58
  %v68 = vadd.f32 %v45, %v58
  %v69 = vadd.f32 %v46, %v58
  %v70 = vadd.f32 %v47, %v58
  %v71 = vadd.f32 %v48, %v58
  %v72 = vadd.f32 %v49, %v58
  %v73 = vadd.f32 %v50, %v58
  %v74 = vadd.f32 %v51, %v58
  %v75 = vadd.f32 %v52, %v58
  %v76 = vmax.f32 %v60, 0.0
  %v77 = vmax.f32 %v61, 0.0
  %v78 = vmax.f32 %v62, 0.0
  %v79 = vmax.f32 %v63, 0.0
  %v80 = vmax.f32 %v64, 0.0
  %v81 = vmax.f32 %v65, 0.0
  %v82 = vmax.f32 %v66, 0.0
  %v83 = vmax.f32 %v67, 0.0
  %v84 = vmax.f32 %v68, 0.0
  %v85 = vmax.f32 %v69, 0.0
  %v86 = vmax.f32 %v70, 0.0
  %v87 = vmax.f32 %v71, 0.0
  %v88 = vmax.f32 %v72, 0.0
  %v89 = vmax.f32 %v73, 0.0
  %v90 = vmax.f32 %v74, 0.0
  %v91 = vmax.f32 %v75, 0.0
  %92 = vst [vmem:[%s3] sm:$0xff] %v76
  %93 = vst [vmem:[%s3 + $0x8] sm:$0xff] %v77
  %94 = vst [vmem:[%s3 + $0x10] sm:$0xff] %v78
  %95 = vst [vmem:[%s3 + $0x18] sm:$0xff] %v79
  %96 = vst [vmem:[%s3 + $0x20] sm:$0xff] %v80
  %97 = vst [vmem:[%s3 + $0x28] sm:$0xff] %v81
  %98 = vst [vmem:[%s3 + $0x30] sm:$0xff] %v82
  %99 = vst [vmem:[%s3 + $0x38] sm:$0xff] %v83
  %100 = vst [vmem:[%s3 + $0x40] sm:$0xff] %v84
  %101 = vst [vmem:[%s3 + $0x48] sm:$0xff] %v85
  %102 = vst [vmem:[%s3 + $0x50] sm:$0xff] %v86
  %103 = vst [vmem:[%s3 + $0x58] sm:$0xff] %v87
  %104 = vst [vmem:[%s3 + $0x60] sm:$0xff] %v88
  %105 = vst [vmem:[%s3 + $0x68] sm:$0xff] %v89
  %106 = vst [vmem:[%s3 + $0x70] sm:$0xff] %v90
  %107 = vst [vmem:[%s3 + $0x78] sm:$0xff] %v91
  // Predicated region
  $region14: #{autoencoder_forward.18} parent=0 // pred_check
    _
  $region15: #{autoencoder_forward.18} parent=0 // pred_check_branch
    %109 = sbr.rel (0) target = $region17
  $region16: #{autoencoder_forward.18} parent=0 // pred_region
    _
  $region17: #{autoencoder_forward.18} parent=0 // pred_fallthru
    _
  // Predicated region
  $region18: #{autoencoder_forward.18} parent=0 // pred_check
    _
  $region19: #{autoencoder_forward.18} parent=0 // pred_check_branch
    %111 = sbr.rel (0) target = $region21
  $region20: #{autoencoder_forward.18} parent=0 // pred_region
    _
  $region21: #{autoencoder_forward.18} parent=0 // pred_fallthru
    _

// kernel: autoencoder_forward.17
$region0: #{autoencoder_forward.17}
  #allocation0 [shape = 'u32[]', space=smem, size = 0x4, offset = 0x4, fixed_abs, tag = 'smem constant byte address 0x4 - core index']
  #allocation1 [shape = 'u32[144,128]{1,0:T(1,128)}', space=vmem, size = 0x12000, scoped, tag = 'internal scratch']
  %s0 = inlined_call_operand.vmem [shape: bf16[128,128], index: 0, kind: input, shape index: {}]
  %s1 = inlined_call_operand.vmem [shape: bf16[128,128], index: 1, kind: input, shape index: {}]
  %s2 = inlined_call_operand.vmem [shape: f32[128,128], index: 2, kind: output, shape index: {0}]
  %s3 = inlined_call_operand.vmem [shape: f32[1,2,128], index: 3, kind: output, shape index: {1}]
  %4 = xla_tuple %s2, %s3
  %s5 = sld [smem:[#allocation0]]
  $region26: #{autoencoder_forward.17} parent=0
    _
  %s7 = ssub.s32 1, %s5
  %s8 = scalar_select 0, %s7, %s5
  // Predicated region
  $region2: #{autoencoder_forward.17} parent=0 // pred_check
    _
  $region3: #{autoencoder_forward.17} parent=0 // pred_check_branch
    %10 = sbr.rel (0) target = $region5
  $region4: #{autoencoder_forward.17} parent=0 // pred_region
    _
  $region5: #{autoencoder_forward.17} parent=0 // pred_fallthru
    _
  // Predicated region
  $region6: #{autoencoder_forward.17} parent=0 // pred_check
    _
  $region7: #{autoencoder_forward.17} parent=0 // pred_check_branch
    %12 = sbr.rel (0) target = $region9
  $region8: #{autoencoder_forward.17} parent=0 // pred_region
    _
  $region9: #{autoencoder_forward.17} parent=0 // pred_fallthru
    _
  %v14 = vld [vmem:[%s0] sm:$0xf]
  %v15 = vld [vmem:[%s0 + $0x4] sm:$0xf]
  %v16 = vld [vmem:[%s0 + $0x8] sm:$0xf]
  %v17 = vld [vmem:[%s0 + $0xc] sm:$0xf]
  %v18 = vld [vmem:[%s0 + $0x10] sm:$0xf]
  %v19 = vld [vmem:[%s0 + $0x14] sm:$0xf]
  %v20 = vld [vmem:[%s0 + $0x18] sm:$0xf]
  %v21 = vld [vmem:[%s0 + $0x1c] sm:$0xf]
  %v22 = vld [vmem:[%s0 + $0x20] sm:$0xf]
  %v23 = vld [vmem:[%s0 + $0x24] sm:$0xf]
  %v24 = vld [vmem:[%s0 + $0x28] sm:$0xf]
  %v25 = vld [vmem:[%s0 + $0x2c] sm:$0xf]
  %v26 = vld [vmem:[%s0 + $0x30] sm:$0xf]
  %v27 = vld [vmem:[%s0 + $0x34] sm:$0xf]
  %v28 = vld [vmem:[%s0 + $0x38] sm:$0xf]
  %v29 = vld [vmem:[%s0 + $0x3c] sm:$0xf]
  %v30 = vld [vmem:[%s1] sm:$0xf]
  %v31 = vld [vmem:[%s1 + $0x4] sm:$0xf]
  %v32 = vld [vmem:[%s1 + $0x8] sm:$0xf]
  %v33 = vld [vmem:[%s1 + $0xc] sm:$0xf]
  %v34 = vld [vmem:[%s1 + $0x10] sm:$0xf]
  %v35 = vld [vmem:[%s1 + $0x14] sm:$0xf]
  %v36 = vld [vmem:[%s1 + $0x18] sm:$0xf]
  %v37 = vld [vmem:[%s1 + $0x1c] sm:$0xf]
  %v38 = vld [vmem:[%s1 + $0x20] sm:$0xf]
  %v39 = vld [vmem:[%s1 + $0x24] sm:$0xf]
  %v40 = vld [vmem:[%s1 + $0x28] sm:$0xf]
  %v41 = vld [vmem:[%s1 + $0x2c] sm:$0xf]
  %v42 = vld [vmem:[%s1 + $0x30] sm:$0xf]
  %v43 = vld [vmem:[%s1 + $0x34] sm:$0xf]
  %v44 = vld [vmem:[%s1 + $0x38] sm:$0xf]
  %v45 = vld [vmem:[%s1 + $0x3c] sm:$0xf]
  %v62 = vunpack.c.l.b16 %v14
  %v63 = vunpack.c.l.b16 %v15
  %v64 = vunpack.c.l.b16 %v16
  %v65 = vunpack.c.l.b16 %v17
  %v66 = vunpack.c.l.b16 %v18
  %v67 = vunpack.c.l.b16 %v19
  %v68 = vunpack.c.l.b16 %v20
  %v69 = vunpack.c.l.b16 %v21
  %v70 = vunpack.c.l.b16 %v22
  %v71 = vunpack.c.l.b16 %v23
  %v72 = vunpack.c.l.b16 %v24
  %v73 = vunpack.c.l.b16 %v25
  %v74 = vunpack.c.l.b16 %v26
  %v75 = vunpack.c.l.b16 %v27
  %v76 = vunpack.c.l.b16 %v28
  %v77 = vunpack.c.l.b16 %v29
  %v78 = vpack.c.b16 %v63, %v62
  %v79 = vpack.c.b16 %v65, %v64
  %v80 = vpack.c.b16 %v67, %v66
  %v81 = vpack.c.b16 %v69, %v68
  %v82 = vpack.c.b16 %v71, %v70
  %v83 = vpack.c.b16 %v73, %v72
  %v84 = vpack.c.b16 %v75, %v74
  %v85 = vpack.c.b16 %v77, %v76
  %v110 = vunpack.c.l.b16 %v30
  %v111 = vunpack.c.l.b16 %v31
  %v112 = vunpack.c.l.b16 %v32
  %v113 = vunpack.c.l.b16 %v33
  %v114 = vunpack.c.l.b16 %v34
  %v115 = vunpack.c.l.b16 %v35
  %v116 = vunpack.c.l.b16 %v36
  %v117 = vunpack.c.l.b16 %v37
  %v118 = vunpack.c.l.b16 %v38
  %v119 = vunpack.c.l.b16 %v39
  %v120 = vunpack.c.l.b16 %v40
  %v121 = vunpack.c.l.b16 %v41
  %v122 = vunpack.c.l.b16 %v42
  %v123 = vunpack.c.l.b16 %v43
  %v124 = vunpack.c.l.b16 %v44
  %v125 = vunpack.c.l.b16 %v45
  %v126 = vpack.c.b16 %v111, %v110
  %v127 = vpack.c.b16 %v113, %v112
  %v128 = vpack.c.b16 %v115, %v114
  %v129 = vpack.c.b16 %v117, %v116
  %v130 = vpack.c.b16 %v119, %v118
  %v131 = vpack.c.b16 %v121, %v120
  %v132 = vpack.c.b16 %v123, %v122
  %v133 = vpack.c.b16 %v125, %v124
  %142 = vmatprep.subr.bf16.mxu0 0
  %143 = vmatpush1.bf16.msra.mxu0 %v126
  %144 = vmatprep.subr.bf16.mxu0 0
  %145 = vmatpush1.bf16.msra.mxu0 %v127
  %146 = vmatprep.subr.bf16.mxu0 0
  %147 = vmatpush1.bf16.msra.mxu0 %v128
  %148 = vmatprep.subr.bf16.mxu0 0
  %149 = vmatpush1.bf16.msra.mxu0 %v129
  %150 = vmatprep.subr.bf16.mxu0 0
  %151 = vmatpush1.bf16.msra.mxu0 %v130
  %152 = vmatprep.subr.bf16.mxu0 0
  %153 = vmatpush1.bf16.msra.mxu0 %v131
  %154 = vmatprep.subr.bf16.mxu0 0
  %155 = vmatpush1.bf16.msra.mxu0 %v132
  %156 = vmatprep.subr.bf16.mxu0 0
  %157 = vmatpush1.bf16.msra.mxu0 %v133
  %158 = vmatprep.subr.bf16.mxu0 0
  %159 = vmatpush1.bf16.msra.mxu0 0
  %160 = vmatprep.subr.bf16.mxu0 0
  %161 = vmatpush1.bf16.msra.mxu0 0
  %162 = vmatprep.subr.bf16.mxu0 0
  %163 = vmatpush1.bf16.msra.mxu0 0
  %164 = vmatprep.subr.bf16.mxu0 0
  %165 = vmatpush1.bf16.msra.mxu0 0
  %166 = vmatprep.subr.bf16.mxu0 0
  %167 = vmatpush1.bf16.msra.mxu0 0
  %168 = vmatprep.subr.bf16.mxu0 0
  %169 = vmatpush1.bf16.msra.mxu0 0
  %170 = vmatprep.subr.bf16.mxu0 0
  %171 = vmatpush1.bf16.msra.mxu0 0
  %172 = vmatprep.subr.bf16.mxu0 0
  %173 = vmatpush1.bf16.msra.mxu0 0
  %174 = vmatprep.mubr.bf16.mxu0 0
  %175 = vmatmul.mubr.bf16.gmra.mrb[0].mxu0 %v78
  %v176 = vpop.f32.mrb[0].mxu0
  %v177 = vadd.f32 0.0, %v176
  %v178 = vpop.f32.mrb[0].mxu0
  %v179 = vpop.f32.mrb[0].mxu0
  %v180 = vadd.f32 0.0, %v179
  %v181 = vpop.f32.mrb[0].mxu0
  %182 = vmatprep.mubr.bf16.mxu0 0
  %183 = vmatmul.mubr.bf16.gmra.mrb[0].mxu0 %v79
  %v184 = vpop.f32.mrb[0].mxu0
  %v185 = vadd.f32 0.0, %v184
  %v186 = vpop.f32.mrb[0].mxu0
  %v187 = vpop.f32.mrb[0].mxu0
  %v188 = vadd.f32 0.0, %v187
  %v189 = vpop.f32.mrb[0].mxu0
  %190 = vmatprep.mubr.bf16.mxu0 0
  %191 = vmatmul.mubr.bf16.gmra.mrb[0].mxu0 %v80
  %v192 = vpop.f32.mrb[0].mxu0
  %v193 = vadd.f32 0.0, %v192
  %v194 = vpop.f32.mrb[0].mxu0
  %v195 = vpop.f32.mrb[0].mxu0
  %v196 = vadd.f32 0.0, %v195
  %v197 = vpop.f32.mrb[0].mxu0
  %198 = vmatprep.mubr.bf16.mxu0 0
  %199 = vmatmul.mubr.bf16.gmra.mrb[0].mxu0 %v81
  %v200 = vpop.f32.mrb[0].mxu0
  %v201 = vadd.f32 0.0, %v200
  %v202 = vpop.f32.mrb[0].mxu0
  %v203 = vpop.f32.mrb[0].mxu0
  %v204 = vadd.f32 0.0, %v203
  %v205 = vpop.f32.mrb[0].mxu0
  %206 = vmatprep.mubr.bf16.mxu0 0
  %207 = vmatmul.mubr.bf16.gmra.mrb[0].mxu0 %v82
  %v208 = vpop.f32.mrb[0].mxu0
  %v209 = vadd.f32 0.0, %v208
  %v210 = vpop.f32.mrb[0].mxu0
  %v211 = vpop.f32.mrb[0].mxu0
  %v212 = vadd.f32 0.0, %v211
  %v213 = vpop.f32.mrb[0].mxu0
  %214 = vmatprep.mubr.bf16.mxu0 0
  %215 = vmatmul.mubr.bf16.gmra.mrb[0].mxu0 %v83
  %v216 = vpop.f32.mrb[0].mxu0
  %v217 = vadd.f32 0.0, %v216
  %v218 = vpop.f32.mrb[0].mxu0
  %v219 = vpop.f32.mrb[0].mxu0
  %v220 = vadd.f32 0.0, %v219
  %v221 = vpop.f32.mrb[0].mxu0
  %222 = vmatprep.mubr.bf16.mxu0 0
  %223 = vmatmul.mubr.bf16.gmra.mrb[0].mxu0 %v84
  %v224 = vpop.f32.mrb[0].mxu0
  %v225 = vadd.f32 0.0, %v224
  %v226 = vpop.f32.mrb[0].mxu0
  %v227 = vpop.f32.mrb[0].mxu0
  %v228 = vadd.f32 0.0, %v227
  %v229 = vpop.f32.mrb[0].mxu0
  %230 = vmatprep.mubr.bf16.mxu0 0
  %231 = vmatmul.mubr.bf16.gmra.mrb[0].mxu0 %v85
  %v232 = vpop.f32.mrb[0].mxu0
  %v233 = vadd.f32 0.0, %v232
  %v234 = vpop.f32.mrb[0].mxu0
  %v235 = vpop.f32.mrb[0].mxu0
  %v236 = vadd.f32 0.0, %v235
  %v237 = vpop.f32.mrb[0].mxu0
  %238 = vdwg.mxu0
  %239 = vst [vmem:[%s2] sm:$0xff] %v177
  %240 = vst [vmem:[%s2 + $0x8] sm:$0xff] %v180
  %241 = vst [vmem:[%s2 + $0x10] sm:$0xff] %v185
  %242 = vst [vmem:[%s2 + $0x18] sm:$0xff] %v188
  %243 = vst [vmem:[%s2 + $0x20] sm:$0xff] %v193
  %244 = vst [vmem:[%s2 + $0x28] sm:$0xff] %v196
  %245 = vst [vmem:[%s2 + $0x30] sm:$0xff] %v201
  %246 = vst [vmem:[%s2 + $0x38] sm:$0xff] %v204
  %247 = vst [vmem:[%s2 + $0x40] sm:$0xff] %v209
  %248 = vst [vmem:[%s2 + $0x48] sm:$0xff] %v212
  %249 = vst [vmem:[%s2 + $0x50] sm:$0xff] %v217
  %250 = vst [vmem:[%s2 + $0x58] sm:$0xff] %v220
  %251 = vst [vmem:[%s2 + $0x60] sm:$0xff] %v225
  %252 = vst [vmem:[%s2 + $0x68] sm:$0xff] %v228
  %253 = vst [vmem:[%s2 + $0x70] sm:$0xff] %v233
  %254 = vst [vmem:[%s2 + $0x78] sm:$0xff] %v236
  %v255 = vadd.f32 %v177, %v180
  %v256 = vadd.f32 %v255, %v185
  %v257 = vadd.f32 %v256, %v188
  %v258 = vadd.f32 %v257, %v193
  %v259 = vadd.f32 %v258, %v196
  %v260 = vadd.f32 %v259, %v201
  %v261 = vadd.f32 %v260, %v204
  %v262 = vadd.f32 %v261, %v209
  %v263 = vadd.f32 %v262, %v212
  %v264 = vadd.f32 %v263, %v217
  %v265 = vadd.f32 %v264, %v220
  %v266 = vadd.f32 %v265, %v225
  %v267 = vadd.f32 %v266, %v228
  %v268 = vadd.f32 %v267, %v233
  %v269 = vadd.f32 %v268, %v236
  %v270 = vrot.slane %v269, 4
  %v271 = vadd.f32 %v269, %v270
  %v272 = vrot.slane %v271, 2
  %v273 = vadd.f32 %v271, %v272
  %v274 = vrot.slane %v273, 1
  %v275 = vadd.f32 %v273, %v274
  %v276 = vmul.f32 %v177, %v177
  %v277 = vmul.f32 %v180, %v180
  %v278 = vmul.f32 %v185, %v185
  %v279 = vmul.f32 %v188, %v188
  %v280 = vmul.f32 %v193, %v193
  %v281 = vmul.f32 %v196, %v196
  %v282 = vmul.f32 %v201, %v201
  %v283 = vmul.f32 %v204, %v204
  %v284 = vmul.f32 %v209, %v209
  %v285 = vmul.f32 %v212, %v212
  %v286 = vmul.f32 %v217, %v217
  %v287 = vmul.f32 %v220, %v220
  %v288 = vmul.f32 %v225, %v225
  %v289 = vmul.f32 %v228, %v228
  %v290 = vmul.f32 %v233, %v233
  %v291 = vmul.f32 %v236, %v236
  %v292 = vadd.f32 %v276, %v277
  %v293 = vadd.f32 %v292, %v278
  %v294 = vadd.f32 %v293, %v279
  %v295 = vadd.f32 %v294, %v280
  %v296 = vadd.f32 %v295, %v281
  %v297 = vadd.f32 %v296, %v282
  %v298 = vadd.f32 %v297, %v283
  %v299 = vadd.f32 %v298, %v284
  %v300 = vadd.f32 %v299, %v285
  %v301 = vadd.f32 %v300, %v286
  %v302 = vadd.f32 %v301, %v287
  %v303 = vadd.f32 %v302, %v288
  %v304 = vadd.f32 %v303, %v289
  %v305 = vadd.f32 %v304, %v290
  %v306 = vadd.f32 %v305, %v291
  %v307 = vrot.slane %v306, 4
  %v308 = vadd.f32 %v306, %v307
  %v309 = vrot.slane %v308, 2
  %v310 = vadd.f32 %v308, %v309
  %v311 = vrot.slane %v310, 1
  %v312 = vadd.f32 %v310, %v311
  %vm313 = vcmask 1040384
  %v314 = vsel %vm313, %v275, %v312
  %315 = vst [vmem:[%s3] sm:$0x3] %v314
  // Predicated region
  $region10: #{autoencoder_forward.17} parent=0 // pred_check
    _
  $region11: #{autoencoder_forward.17} parent=0 // pred_check_branch
    %317 = sbr.rel (0) target = $region13
  $region12: #{autoencoder_forward.17} parent=0 // pred_region
    _
  $region13: #{autoencoder_forward.17} parent=0 // pred_fallthru
    _
  // Predicated region
  $region14: #{autoencoder_forward.17} parent=0 // pred_check
    _
  $region15: #{autoencoder_forward.17} parent=0 // pred_check_branch
    %319 = sbr.rel (0) target = $region17
  $region16: #{autoencoder_forward.17} parent=0 // pred_region
    _
  $region17: #{autoencoder_forward.17} parent=0 // pred_fallthru
    _
  // Predicated region
  $region18: #{autoencoder_forward.17} parent=0 // pred_check
    _
  $region19: #{autoencoder_forward.17} parent=0 // pred_check_branch
    %321 = sbr.rel (0) target = $region21
  $region20: #{autoencoder_forward.17} parent=0 // pred_region
    _
  $region21: #{autoencoder_forward.17} parent=0 // pred_fallthru
    _
  // Predicated region
  $region22: #{autoencoder_forward.17} parent=0 // pred_check
    _
  $region23: #{autoencoder_forward.17} parent=0 // pred_check_branch
    %323 = sbr.rel (0) target = $region25
  $region24: #{autoencoder_forward.17} parent=0 // pred_region
    _
  $region25: #{autoencoder_forward.17} parent=0 // pred_fallthru
    _

// kernel: autoencoder_forward.20
$region0: #{autoencoder_forward.20}
  #allocation0 [shape = 'u32[]', space=smem, size = 0x4, offset = 0x4, fixed_abs, tag = 'smem constant byte address 0x4 - core index']
  #allocation1 [shape = 'u32[144,128]{1,0:T(1,128)}', space=vmem, size = 0x12000, scoped, tag = 'internal scratch']
  %s0 = inlined_call_operand.vmem [shape: f32[32,128], index: 0, kind: input, shape index: {}]
  %s1 = inlined_call_operand.vmem [shape: f32[1,128], index: 1, kind: input, shape index: {}]
  %s2 = inlined_call_operand.vmem [shape: f32[1,128], index: 2, kind: input, shape index: {}]
  %s3 = inlined_call_operand.vmem [shape: f32[32,128], index: 3, kind: output, shape index: {}]
  %s4 = sld [smem:[#allocation0]]
  $region22: #{autoencoder_forward.20} parent=0
    _
  %s6 = ssub.s32 1, %s4
  %s7 = scalar_select 0, %s6, %s4
  // Predicated region
  $region2: #{autoencoder_forward.20} parent=0 // pred_check
    _
  $region3: #{autoencoder_forward.20} parent=0 // pred_check_branch
    %9 = sbr.rel (0) target = $region5
  $region4: #{autoencoder_forward.20} parent=0 // pred_region
    _
  $region5: #{autoencoder_forward.20} parent=0 // pred_fallthru
    _
  // Predicated region
  $region6: #{autoencoder_forward.20} parent=0 // pred_check
    _
  $region7: #{autoencoder_forward.20} parent=0 // pred_check_branch
    %11 = sbr.rel (0) target = $region9
  $region8: #{autoencoder_forward.20} parent=0 // pred_region
    _
  $region9: #{autoencoder_forward.20} parent=0 // pred_fallthru
    _
  // Predicated region
  $region10: #{autoencoder_forward.20} parent=0 // pred_check
    _
  $region11: #{autoencoder_forward.20} parent=0 // pred_check_branch
    %13 = sbr.rel (0) target = $region13
  $region12: #{autoencoder_forward.20} parent=0 // pred_region
    _
  $region13: #{autoencoder_forward.20} parent=0 // pred_fallthru
    _
  %v14 = vld [vmem:[%s0] sm:$0xff]
  %v15 = vld [vmem:[%s0 + $0x8] sm:$0xff]
  %v16 = vld [vmem:[%s0 + $0x10] sm:$0xff]
  %v17 = vld [vmem:[%s0 + $0x18] sm:$0xff]
  %v18 = vld [vmem:[%s1] sm:$0x1]
  %v20 = vlaneseq
  %v21 = vshrl.u32 %v20, 7
  %v22 = vsub.s32 0, %v21
  %v23 = vrot.slane %v18, %v22
  %v25 = vmul.f32 %v14, %v23
  %v26 = vmul.f32 %v15, %v23
  %v27 = vmul.f32 %v16, %v23
  %v28 = vmul.f32 %v17, %v23
  %v29 = vld [vmem:[%s2] sm:$0x1]
  %v31 = vlaneseq
  %v32 = vshrl.u32 %v31, 7
  %v33 = vsub.s32 0, %v32
  %v34 = vrot.slane %v29, %v33
  %v36 = vadd.f32 %v25, %v34
  %v37 = vadd.f32 %v26, %v34
  %v38 = vadd.f32 %v27, %v34
  %v39 = vadd.f32 %v28, %v34
  %v40 = vmax.f32 %v36, 0.0
  %v41 = vmax.f32 %v37, 0.0
  %v42 = vmax.f32 %v38, 0.0
  %v43 = vmax.f32 %v39, 0.0
  %44 = vst [vmem:[%s3] sm:$0xff] %v40
  %45 = vst [vmem:[%s3 + $0x8] sm:$0xff] %v41
  %46 = vst [vmem:[%s3 + $0x10] sm:$0xff] %v42
  %47 = vst [vmem:[%s3 + $0x18] sm:$0xff] %v43
  // Predicated region
  $region14: #{autoencoder_forward.20} parent=0 // pred_check
    _
  $region15: #{autoencoder_forward.20} parent=0 // pred_check_branch
    %49 = sbr.rel (0) target = $region17
  $region16: #{autoencoder_forward.20} parent=0 // pred_region
    _
  $region17: #{autoencoder_forward.20} parent=0 // pred_fallthru
    _
  // Predicated region
  $region18: #{autoencoder_forward.20} parent=0 // pred_check
    _
  $region19: #{autoencoder_forward.20} parent=0 // pred_check_branch
    %51 = sbr.rel (0) target = $region21
  $region20: #{autoencoder_forward.20} parent=0 // pred_region
    _
  $region21: #{autoencoder_forward.20} parent=0 // pred_fallthru
    _

// kernel: autoencoder_forward.19
$region0: #{autoencoder_forward.19}
  #allocation0 [shape = 'u32[]', space=smem, size = 0x4, offset = 0x4, fixed_abs, tag = 'smem constant byte address 0x4 - core index']
  #allocation1 [shape = 'u32[144,128]{1,0:T(1,128)}', space=vmem, size = 0x12000, scoped, tag = 'internal scratch']
  %s0 = inlined_call_operand.vmem [shape: bf16[32,384], index: 0, kind: input, shape index: {}]
  %s1 = inlined_call_operand.vmem [shape: bf16[384,128], index: 1, kind: input, shape index: {}]
  %s2 = inlined_call_operand.vmem [shape: f32[32,128], index: 2, kind: output, shape index: {0}]
  %s3 = inlined_call_operand.vmem [shape: f32[1,2,128], index: 3, kind: output, shape index: {1}]
  %4 = xla_tuple %s2, %s3
  %s5 = sld [smem:[#allocation0]]
  $region26: #{autoencoder_forward.19} parent=0
    _
  %s7 = ssub.s32 1, %s5
  %s8 = scalar_select 0, %s7, %s5
  // Predicated region
  $region2: #{autoencoder_forward.19} parent=0 // pred_check
    _
  $region3: #{autoencoder_forward.19} parent=0 // pred_check_branch
    %10 = sbr.rel (0) target = $region5
  $region4: #{autoencoder_forward.19} parent=0 // pred_region
    _
  $region5: #{autoencoder_forward.19} parent=0 // pred_fallthru
    _
  // Predicated region
  $region6: #{autoencoder_forward.19} parent=0 // pred_check
    _
  $region7: #{autoencoder_forward.19} parent=0 // pred_check_branch
    %12 = sbr.rel (0) target = $region9
  $region8: #{autoencoder_forward.19} parent=0 // pred_region
    _
  $region9: #{autoencoder_forward.19} parent=0 // pred_fallthru
    _
  %v14 = vld [vmem:[%s0] sm:$0xff]
  %v15 = vld [vmem:[%s0 + $0x8] sm:$0xf]
  %v16 = vld [vmem:[%s0 + $0xc] sm:$0xff]
  %v17 = vld [vmem:[%s0 + $0x14] sm:$0xf]
  %v18 = vld [vmem:[%s0 + $0x18] sm:$0xff]
  %v19 = vld [vmem:[%s0 + $0x20] sm:$0xf]
  %v20 = vld [vmem:[%s0 + $0x24] sm:$0xff]
  %v21 = vld [vmem:[%s0 + $0x2c] sm:$0xf]
  %v22 = vld [vmem:[%s1] sm:$0xf]
  %v23 = vld [vmem:[%s1 + $0x4] sm:$0xf]
  %v24 = vld [vmem:[%s1 + $0x8] sm:$0xf]
  %v25 = vld [vmem:[%s1 + $0xc] sm:$0xf]
  %v26 = vld [vmem:[%s1 + $0x10] sm:$0xf]
  %v27 = vld [vmem:[%s1 + $0x14] sm:$0xf]
  %v28 = vld [vmem:[%s1 + $0x18] sm:$0xf]
  %v29 = vld [vmem:[%s1 + $0x1c] sm:$0xf]
  %v30 = vld [vmem:[%s1 + $0x20] sm:$0xf]
  %v31 = vld [vmem:[%s1 + $0x24] sm:$0xf]
  %v32 = vld [vmem:[%s1 + $0x28] sm:$0xf]
  %v33 = vld [vmem:[%s1 + $0x2c] sm:$0xf]
  %v34 = vld [vmem:[%s1 + $0x30] sm:$0xf]
  %v35 = vld [vmem:[%s1 + $0x34] sm:$0xf]
  %v36 = vld [vmem:[%s1 + $0x38] sm:$0xf]
  %v37 = vld [vmem:[%s1 + $0x3c] sm:$0xf]
  %v38 = vld [vmem:[%s1 + $0x40] sm:$0xf]
  %v39 = vld [vmem:[%s1 + $0x44] sm:$0xf]
  %v40 = vld [vmem:[%s1 + $0x48] sm:$0xf]
  %v41 = vld [vmem:[%s1 + $0x4c] sm:$0xf]
  %v42 = vld [vmem:[%s1 + $0x50] sm:$0xf]
  %v43 = vld [vmem:[%s1 + $0x54] sm:$0xf]
  %v44 = vld [vmem:[%s1 + $0x58] sm:$0xf]
  %v45 = vld [vmem:[%s1 + $0x5c] sm:$0xf]
  %v46 = vld [vmem:[%s1 + $0x60] sm:$0xf]
  %v47 = vld [vmem:[%s1 + $0x64] sm:$0xf]
  %v48 = vld [vmem:[%s1 + $0x68] sm:$0xf]
  %v49 = vld [vmem:[%s1 + $0x6c] sm:$0xf]
  %v50 = vld [vmem:[%s1 + $0x70] sm:$0xf]
  %v51 = vld [vmem:[%s1 + $0x74] sm:$0xf]
  %v52 = vld [vmem:[%s1 + $0x78] sm:$0xf]
  %v53 = vld [vmem:[%s1 + $0x7c] sm:$0xf]
  %v54 = vld [vmem:[%s1 + $0x80] sm:$0xf]
  %v55 = vld [vmem:[%s1 + $0x84] sm:$0xf]
  %v56 = vld [vmem:[%s1 + $0x88] sm:$0xf]
  %v57 = vld [vmem:[%s1 + $0x8c] sm:$0xf]
  %v58 = vld [vmem:[%s1 + $0x90] sm:$0xf]
  %v59 = vld [vmem:[%s1 + $0x94] sm:$0xf]
  %v60 = vld [vmem:[%s1 + $0x98] sm:$0xf]
  %v61 = vld [vmem:[%s1 + $0x9c] sm:$0xf]
  %v62 = vld [vmem:[%s1 + $0xa0] sm:$0xf]
  %v63 = vld [vmem:[%s1 + $0xa4] sm:$0xf]
  %v64 = vld [vmem:[%s1 + $0xa8] sm:$0xf]
  %v65 = vld [vmem:[%s1 + $0xac] sm:$0xf]
  %v66 = vld [vmem:[%s1 + $0xb0] sm:$0xf]
  %v67 = vld [vmem:[%s1 + $0xb4] sm:$0xf]
  %v68 = vld [vmem:[%s1 + $0xb8] sm:$0xf]
  %v69 = vld [vmem:[%s1 + $0xbc] sm:$0xf]
  %v78 = vunpack.c.l.b16 %v14
  %v79 = vunpack.c.h.b16 %v14
  %v80 = vunpack.c.l.b16 %v15
  %v81 = vunpack.c.l.b16 %v16
  %v82 = vunpack.c.h.b16 %v16
  %v83 = vunpack.c.l.b16 %v17
  %v84 = vunpack.c.l.b16 %v18
  %v85 = vunpack.c.h.b16 %v18
  %v86 = vunpack.c.l.b16 %v19
  %v87 = vunpack.c.l.b16 %v20
  %v88 = vunpack.c.h.b16 %v20
  %v89 = vunpack.c.l.b16 %v21
  %v90 = vpack.c.b16 %v81, %v78
  %v91 = vpack.c.b16 %v82, %v79
  %v92 = vpack.c.b16 %v83, %v80
  %v93 = vpack.c.b16 %v87, %v84
  %v94 = vpack.c.b16 %v88, %v85
  %v95 = vpack.c.b16 %v89, %v86
  %v150 = vunpack.c.l.b16 %v22
  %v151 = vunpack.c.l.b16 %v23
  %v152 = vunpack.c.l.b16 %v24
  %v153 = vunpack.c.l.b16 %v25
  %v154 = vunpack.c.l.b16 %v26
  %v155 = vunpack.c.l.b16 %v27
  %v156 = vunpack.c.l.b16 %v28
  %v157 = vunpack.c.l.b16 %v29
  %v158 = vunpack.c.l.b16 %v30
  %v159 = vunpack.c.l.b16 %v31
  %v160 = vunpack.c.l.b16 %v32
  %v161 = vunpack.c.l.b16 %v33
  %v162 = vunpack.c.l.b16 %v34
  %v163 = vunpack.c.l.b16 %v35
  %v164 = vunpack.c.l.b16 %v36
  %v165 = vunpack.c.l.b16 %v37
  %v166 = vunpack.c.l.b16 %v38
  %v167 = vunpack.c.l.b16 %v39
  %v168 = vunpack.c.l.b16 %v40
  %v169 = vunpack.c.l.b16 %v41
  %v170 = vunpack.c.l.b16 %v42
  %v171 = vunpack.c.l.b16 %v43
  %v172 = vunpack.c.l.b16 %v44
  %v173 = vunpack.c.l.b16 %v45
  %v174 = vunpack.c.l.b16 %v46
  %v175 = vunpack.c.l.b16 %v47
  %v176 = vunpack.c.l.b16 %v48
  %v177 = vunpack.c.l.b16 %v49
  %v178 = vunpack.c.l.b16 %v50
  %v179 = vunpack.c.l.b16 %v51
  %v180 = vunpack.c.l.b16 %v52
  %v181 = vunpack.c.l.b16 %v53
  %v182 = vunpack.c.l.b16 %v54
  %v183 = vunpack.c.l.b16 %v55
  %v184 = vunpack.c.l.b16 %v56
  %v185 = vunpack.c.l.b16 %v57
  %v186 = vunpack.c.l.b16 %v58
  %v187 = vunpack.c.l.b16 %v59
  %v188 = vunpack.c.l.b16 %v60
  %v189 = vunpack.c.l.b16 %v61
  %v190 = vunpack.c.l.b16 %v62
  %v191 = vunpack.c.l.b16 %v63
  %v192 = vunpack.c.l.b16 %v64
  %v193 = vunpack.c.l.b16 %v65
  %v194 = vunpack.c.l.b16 %v66
  %v195 = vunpack.c.l.b16 %v67
  %v196 = vunpack.c.l.b16 %v68
  %v197 = vunpack.c.l.b16 %v69
  %v198 = vpack.c.b16 %v151, %v150
  %v199 = vpack.c.b16 %v153, %v152
  %v200 = vpack.c.b16 %v155, %v154
  %v201 = vpack.c.b16 %v157, %v156
  %v202 = vpack.c.b16 %v159, %v158
  %v203 = vpack.c.b16 %v161, %v160
  %v204 = vpack.c.b16 %v163, %v162
  %v205 = vpack.c.b16 %v165, %v164
  %v206 = vpack.c.b16 %v167, %v166
  %v207 = vpack.c.b16 %v169, %v168
  %v208 = vpack.c.b16 %v171, %v170
  %v209 = vpack.c.b16 %v173, %v172
  %v210 = vpack.c.b16 %v175, %v174
  %v211 = vpack.c.b16 %v177, %v176
  %v212 = vpack.c.b16 %v179, %v178
  %v213 = vpack.c.b16 %v181, %v180
  %v214 = vpack.c.b16 %v183, %v182
  %v215 = vpack.c.b16 %v185, %v184
  %v216 = vpack.c.b16 %v187, %v186
  %v217 = vpack.c.b16 %v189, %v188
  %v218 = vpack.c.b16 %v191, %v190
  %v219 = vpack.c.b16 %v193, %v192
  %v220 = vpack.c.b16 %v195, %v194
  %v221 = vpack.c.b16 %v197, %v196
  %246 = vmatprep.subr.bf16.mxu0 0
  %247 = vmatpush1.bf16.msra.mxu0 %v198
  %248 = vmatprep.subr.bf16.mxu0 0
  %249 = vmatpush1.bf16.msra.mxu0 %v199
  %250 = vmatprep.subr.bf16.mxu0 0
  %251 = vmatpush1.bf16.msra.mxu0 %v200
  %252 = vmatprep.subr.bf16.mxu0 0
  %253 = vmatpush1.bf16.msra.mxu0 %v201
  %254 = vmatprep.subr.bf16.mxu0 0
  %255 = vmatpush1.bf16.msra.mxu0 %v202
  %256 = vmatprep.subr.bf16.mxu0 0
  %257 = vmatpush1.bf16.msra.mxu0 %v203
  %258 = vmatprep.subr.bf16.mxu0 0
  %259 = vmatpush1.bf16.msra.mxu0 %v204
  %260 = vmatprep.subr.bf16.mxu0 0
  %261 = vmatpush1.bf16.msra.mxu0 %v205
  %262 = vmatprep.subr.bf16.mxu0 0
  %263 = vmatpush1.bf16.msra.mxu0 %v206
  %264 = vmatprep.subr.bf16.mxu0 0
  %265 = vmatpush1.bf16.msra.mxu0 %v207
  %266 = vmatprep.subr.bf16.mxu0 0
  %267 = vmatpush1.bf16.msra.mxu0 %v208
  %268 = vmatprep.subr.bf16.mxu0 0
  %269 = vmatpush1.bf16.msra.mxu0 %v209
  %270 = vmatprep.subr.bf16.mxu0 0
  %271 = vmatpush1.bf16.msra.mxu0 %v210
  %272 = vmatprep.subr.bf16.mxu0 0
  %273 = vmatpush1.bf16.msra.mxu0 %v211
  %274 = vmatprep.subr.bf16.mxu0 0
  %275 = vmatpush1.bf16.msra.mxu0 %v212
  %276 = vmatprep.subr.bf16.mxu0 0
  %277 = vmatpush1.bf16.msra.mxu0 %v213
  %278 = vmatprep.mubr.bf16.mxu0 %v91
  %279 = vmatmul.mubr.bf16.gmra.mrb[0].mxu0 %v90
  %v280 = vpop.f32.mrb[0].mxu0
  %v281 = vadd.f32 0.0, %v280
  %v282 = vpop.f32.mrb[0].mxu0
  %v283 = vpop.f32.mrb[0].mxu0
  %v284 = vadd.f32 0.0, %v283
  %v285 = vpop.f32.mrb[0].mxu0
  %286 = vmatprep.mubr.bf16.mxu0 %v94
  %287 = vmatmul.mubr.bf16.gmra.mrb[0].mxu0 %v93
  %v288 = vpop.f32.mrb[0].mxu0
  %v289 = vadd.f32 0.0, %v288
  %v290 = vpop.f32.mrb[0].mxu0
  %v291 = vpop.f32.mrb[0].mxu0
  %v292 = vadd.f32 0.0, %v291
  %v293 = vpop.f32.mrb[0].mxu0
  %294 = vdwg.mxu0
  %295 = vmatprep.subr.bf16.mxu0 0
  %296 = vmatpush1.bf16.msra.mxu0 %v214
  %297 = vmatprep.subr.bf16.mxu0 0
  %298 = vmatpush1.bf16.msra.mxu0 %v215
  %299 = vmatprep.subr.bf16.mxu0 0
  %300 = vmatpush1.bf16.msra.mxu0 %v216
  %301 = vmatprep.subr.bf16.mxu0 0
  %302 = vmatpush1.bf16.msra.mxu0 %v217
  %303 = vmatprep.subr.bf16.mxu0 0
  %304 = vmatpush1.bf16.msra.mxu0 %v218
  %305 = vmatprep.subr.bf16.mxu0 0
  %306 = vmatpush1.bf16.msra.mxu0 %v219
  %307 = vmatprep.subr.bf16.mxu0 0
  %308 = vmatpush1.bf16.msra.mxu0 %v220
  %309 = vmatprep.subr.bf16.mxu0 0
  %310 = vmatpush1.bf16.msra.mxu0 %v221
  %311 = vmatprep.subr.bf16.mxu0 0
  %312 = vmatpush1.bf16.msra.mxu0 0
  %313 = vmatprep.subr.bf16.mxu0 0
  %314 = vmatpush1.bf16.msra.mxu0 0
  %315 = vmatprep.subr.bf16.mxu0 0
  %316 = vmatpush1.bf16.msra.mxu0 0
  %317 = vmatprep.subr.bf16.mxu0 0
  %318 = vmatpush1.bf16.msra.mxu0 0
  %319 = vmatprep.subr.bf16.mxu0 0
  %320 = vmatpush1.bf16.msra.mxu0 0
  %321 = vmatprep.subr.bf16.mxu0 0
  %322 = vmatpush1.bf16.msra.mxu0 0
  %323 = vmatprep.subr.bf16.mxu0 0
  %324 = vmatpush1.bf16.msra.mxu0 0
  %325 = vmatprep.subr.bf16.mxu0 0
  %326 = vmatpush1.bf16.msra.mxu0 0
  %327 = vmatprep.mubr.bf16.mxu0 0
  %328 = vmatmul.mubr.bf16.gmra.mrb[0].mxu0 %v92
  %v329 = vpop.f32.mrb[0].mxu0
  %v330 = vadd.f32 %v281, %v329
  %v331 = vpop.f32.mrb[0].mxu0
  %v332 = vpop.f32.mrb[0].mxu0
  %v333 = vadd.f32 %v284, %v332
  %v334 = vpop.f32.mrb[0].mxu0
  %335 = vmatprep.mubr.bf16.mxu0 0
  %336 = vmatmul.mubr.bf16.gmra.mrb[0].mxu0 %v95
  %v337 = vpop.f32.mrb[0].mxu0
  %v338 = vadd.f32 %v289, %v337
  %v339 = vpop.f32.mrb[0].mxu0
  %v340 = vpop.f32.mrb[0].mxu0
  %v341 = vadd.f32 %v292, %v340
  %v342 = vpop.f32.mrb[0].mxu0
  %343 = vdwg.mxu0
  %344 = vst [vmem:[%s2] sm:$0xff] %v330
  %345 = vst [vmem:[%s2 + $0x8] sm:$0xff] %v333
  %346 = vst [vmem:[%s2 + $0x10] sm:$0xff] %v338
  %347 = vst [vmem:[%s2 + $0x18] sm:$0xff] %v341
  %v348 = vadd.f32 %v330, %v333
  %v349 = vadd.f32 %v348, %v338
  %v350 = vadd.f32 %v349, %v341
  %v351 = vrot.slane %v350, 4
  %v352 = vadd.f32 %v350, %v351
  %v353 = vrot.slane %v352, 2
  %v354 = vadd.f32 %v352, %v353
  %v355 = vrot.slane %v354, 1
  %v356 = vadd.f32 %v354, %v355
  %v357 = vmul.f32 %v330, %v330
  %v358 = vmul.f32 %v333, %v333
  %v359 = vmul.f32 %v338, %v338
  %v360 = vmul.f32 %v341, %v341
  %v361 = vadd.f32 %v357, %v358
  %v362 = vadd.f32 %v361, %v359
  %v363 = vadd.f32 %v362, %v360
  %v364 = vrot.slane %v363, 4
  %v365 = vadd.f32 %v363, %v364
  %v366 = vrot.slane %v365, 2
  %v367 = vadd.f32 %v365, %v366
  %v368 = vrot.slane %v367, 1
  %v369 = vadd.f32 %v367, %v368
  %vm370 = vcmask 1040384
  %v371 = vsel %vm370, %v356, %v369
  %372 = vst [vmem:[%s3] sm:$0x3] %v371
  // Predicated region
  $region10: #{autoencoder_forward.19} parent=0 // pred_check
    _
  $region11: #{autoencoder_forward.19} parent=0 // pred_check_branch
    %374 = sbr.rel (0) target = $region13
  $region12: #{autoencoder_forward.19} parent=0 // pred_region
    _
  $region13: #{autoencoder_forward.19} parent=0 // pred_fallthru
    _
  // Predicated region
  $region14: #{autoencoder_forward.19} parent=0 // pred_check
    _
  $region15: #{autoencoder_forward.19} parent=0 // pred_check_branch
    %376 = sbr.rel (0) target = $region17
  $region16: #{autoencoder_forward.19} parent=0 // pred_region
    _
  $region17: #{autoencoder_forward.19} parent=0 // pred_fallthru
    _
  // Predicated region
  $region18: #{autoencoder_forward.19} parent=0 // pred_check
    _
  $region19: #{autoencoder_forward.19} parent=0 // pred_check_branch
    %378 = sbr.rel (0) target = $region21
  $region20: #{autoencoder_forward.19} parent=0 // pred_region
    _
  $region21: #{autoencoder_forward.19} parent=0 // pred_fallthru
    _
  // Predicated region
  $region22: #{autoencoder_forward.19} parent=0 // pred_check
    _
  $region23: #{autoencoder_forward.19} parent=0 // pred_check_branch
    %380 = sbr.rel (0) target = $region25
  $region24: #{autoencoder_forward.19} parent=0 // pred_region
    _
  $region25: #{autoencoder_forward.19} parent=0 // pred_fallthru
    _

// kernel: autoencoder_forward.22
$region0: #{autoencoder_forward.22}
  #allocation0 [shape = 'u32[]', space=smem, size = 0x4, offset = 0x4, fixed_abs, tag = 'smem constant byte address 0x4 - core index']
  #allocation1 [shape = 'u32[144,128]{1,0:T(1,128)}', space=vmem, size = 0x12000, scoped, tag = 'internal scratch']
  %s0 = inlined_call_operand.vmem [shape: f32[8,128], index: 0, kind: input, shape index: {}]
  %s1 = inlined_call_operand.vmem [shape: f32[1,128], index: 1, kind: input, shape index: {}]
  %s2 = inlined_call_operand.vmem [shape: f32[1,128], index: 2, kind: input, shape index: {}]
  %s3 = inlined_call_operand.vmem [shape: f32[8,128], index: 3, kind: output, shape index: {}]
  %s4 = sld [smem:[#allocation0]]
  $region22: #{autoencoder_forward.22} parent=0
    _
  %s6 = ssub.s32 1, %s4
  %s7 = scalar_select 0, %s6, %s4
  // Predicated region
  $region2: #{autoencoder_forward.22} parent=0 // pred_check
    _
  $region3: #{autoencoder_forward.22} parent=0 // pred_check_branch
    %9 = sbr.rel (0) target = $region5
  $region4: #{autoencoder_forward.22} parent=0 // pred_region
    _
  $region5: #{autoencoder_forward.22} parent=0 // pred_fallthru
    _
  // Predicated region
  $region6: #{autoencoder_forward.22} parent=0 // pred_check
    _
  $region7: #{autoencoder_forward.22} parent=0 // pred_check_branch
    %11 = sbr.rel (0) target = $region9
  $region8: #{autoencoder_forward.22} parent=0 // pred_region
    _
  $region9: #{autoencoder_forward.22} parent=0 // pred_fallthru
    _
  // Predicated region
  $region10: #{autoencoder_forward.22} parent=0 // pred_check
    _
  $region11: #{autoencoder_forward.22} parent=0 // pred_check_branch
    %13 = sbr.rel (0) target = $region13
  $region12: #{autoencoder_forward.22} parent=0 // pred_region
    _
  $region13: #{autoencoder_forward.22} parent=0 // pred_fallthru
    _
  %v14 = vld [vmem:[%s0] sm:$0xff]
  %v15 = vld [vmem:[%s1] sm:$0x1]
  %v17 = vlaneseq
  %v18 = vshrl.u32 %v17, 7
  %v19 = vsub.s32 0, %v18
  %v20 = vrot.slane %v15, %v19
  %v22 = vmul.f32 %v14, %v20
  %v23 = vld [vmem:[%s2] sm:$0x1]
  %v25 = vlaneseq
  %v26 = vshrl.u32 %v25, 7
  %v27 = vsub.s32 0, %v26
  %v28 = vrot.slane %v23, %v27
  %v30 = vadd.f32 %v22, %v28
  %v31 = vmax.f32 %v30, 0.0
  %32 = vst [vmem:[%s3] sm:$0xff] %v31
  // Predicated region
  $region14: #{autoencoder_forward.22} parent=0 // pred_check
    _
  $region15: #{autoencoder_forward.22} parent=0 // pred_check_branch
    %34 = sbr.rel (0) target = $region17
  $region16: #{autoencoder_forward.22} parent=0 // pred_region
    _
  $region17: #{autoencoder_forward.22} parent=0 // pred_fallthru
    _
  // Predicated region
  $region18: #{autoencoder_forward.22} parent=0 // pred_check
    _
  $region19: #{autoencoder_forward.22} parent=0 // pred_check_branch
    %36 = sbr.rel (0) target = $region21
  $region20: #{autoencoder_forward.22} parent=0 // pred_region
    _
  $region21: #{autoencoder_forward.22} parent=0 // pred_fallthru
    _

// kernel: autoencoder_forward.21
$region0: #{autoencoder_forward.21}
  #allocation0 [shape = 'u32[]', space=smem, size = 0x4, offset = 0x4, fixed_abs, tag = 'smem constant byte address 0x4 - core index']
  #allocation1 [shape = 'u32[144,128]{1,0:T(1,128)}', space=vmem, size = 0x12000, scoped, tag = 'internal scratch']
  %s0 = inlined_call_operand.vmem [shape: bf16[8,640], index: 0, kind: input, shape index: {}]
  %s1 = inlined_call_operand.vmem [shape: bf16[640,128], index: 1, kind: input, shape index: {}]
  %s2 = inlined_call_operand.vmem [shape: f32[8,128], index: 2, kind: output, shape index: {0}]
  %s3 = inlined_call_operand.vmem [shape: f32[1,2,128], index: 3, kind: output, shape index: {1}]
  %4 = xla_tuple %s2, %s3
  %s5 = sld [smem:[#allocation0]]
  $region26: #{autoencoder_forward.21} parent=0
    _
  %s7 = ssub.s32 1, %s5
  %s8 = scalar_select 0, %s7, %s5
  // Predicated region
  $region2: #{autoencoder_forward.21} parent=0 // pred_check
    _
  $region3: #{autoencoder_forward.21} parent=0 // pred_check_branch
    %10 = sbr.rel (0) target = $region5
  $region4: #{autoencoder_forward.21} parent=0 // pred_region
    _
  $region5: #{autoencoder_forward.21} parent=0 // pred_fallthru
    _
  // Predicated region
  $region6: #{autoencoder_forward.21} parent=0 // pred_check
    _
  $region7: #{autoencoder_forward.21} parent=0 // pred_check_branch
    %12 = sbr.rel (0) target = $region9
  $region8: #{autoencoder_forward.21} parent=0 // pred_region
    _
  $region9: #{autoencoder_forward.21} parent=0 // pred_fallthru
    _
  %v14 = vld [vmem:[%s0] sm:$0xff]
  %v15 = vld [vmem:[%s0 + $0x8] sm:$0xff]
  %v16 = vld [vmem:[%s0 + $0x10] sm:$0xf]
  %v17 = vld [vmem:[%s1] sm:$0xf]
  %v18 = vld [vmem:[%s1 + $0x4] sm:$0xf]
  %v19 = vld [vmem:[%s1 + $0x8] sm:$0xf]
  %v20 = vld [vmem:[%s1 + $0xc] sm:$0xf]
  %v21 = vld [vmem:[%s1 + $0x10] sm:$0xf]
  %v22 = vld [vmem:[%s1 + $0x14] sm:$0xf]
  %v23 = vld [vmem:[%s1 + $0x18] sm:$0xf]
  %v24 = vld [vmem:[%s1 + $0x1c] sm:$0xf]
  %v25 = vld [vmem:[%s1 + $0x20] sm:$0xf]
  %v26 = vld [vmem:[%s1 + $0x24] sm:$0xf]
  %v27 = vld [vmem:[%s1 + $0x28] sm:$0xf]
  %v28 = vld [vmem:[%s1 + $0x2c] sm:$0xf]
  %v29 = vld [vmem:[%s1 + $0x30] sm:$0xf]
  %v30 = vld [vmem:[%s1 + $0x34] sm:$0xf]
  %v31 = vld [vmem:[%s1 + $0x38] sm:$0xf]
  %v32 = vld [vmem:[%s1 + $0x3c] sm:$0xf]
  %v33 = vld [vmem:[%s1 + $0x40] sm:$0xf]
  %v34 = vld [vmem:[%s1 + $0x44] sm:$0xf]
  %v35 = vld [vmem:[%s1 + $0x48] sm:$0xf]
  %v36 = vld [vmem:[%s1 + $0x4c] sm:$0xf]
  %v37 = vld [vmem:[%s1 + $0x50] sm:$0xf]
  %v38 = vld [vmem:[%s1 + $0x54] sm:$0xf]
  %v39 = vld [vmem:[%s1 + $0x58] sm:$0xf]
  %v40 = vld [vmem:[%s1 + $0x5c] sm:$0xf]
  %v41 = vld [vmem:[%s1 + $0x60] sm:$0xf]
  %v42 = vld [vmem:[%s1 + $0x64] sm:$0xf]
  %v43 = vld [vmem:[%s1 + $0x68] sm:$0xf]
  %v44 = vld [vmem:[%s1 + $0x6c] sm:$0xf]
  %v45 = vld [vmem:[%s1 + $0x70] sm:$0xf]
  %v46 = vld [vmem:[%s1 + $0x74] sm:$0xf]
  %v47 = vld [vmem:[%s1 + $0x78] sm:$0xf]
  %v48 = vld [vmem:[%s1 + $0x7c] sm:$0xf]
  %v49 = vld [vmem:[%s1 + $0x80] sm:$0xf]
  %v50 = vld [vmem:[%s1 + $0x84] sm:$0xf]
  %v51 = vld [vmem:[%s1 + $0x88] sm:$0xf]
  %v52 = vld [vmem:[%s1 + $0x8c] sm:$0xf]
  %v53 = vld [vmem:[%s1 + $0x90] sm:$0xf]
  %v54 = vld [vmem:[%s1 + $0x94] sm:$0xf]
  %v55 = vld [vmem:[%s1 + $0x98] sm:$0xf]
  %v56 = vld [vmem:[%s1 + $0x9c] sm:$0xf]
  %v57 = vld [vmem:[%s1 + $0xa0] sm:$0xf]
  %v58 = vld [vmem:[%s1 + $0xa4] sm:$0xf]
  %v59 = vld [vmem:[%s1 + $0xa8] sm:$0xf]
  %v60 = vld [vmem:[%s1 + $0xac] sm:$0xf]
  %v61 = vld [vmem:[%s1 + $0xb0] sm:$0xf]
  %v62 = vld [vmem:[%s1 + $0xb4] sm:$0xf]
  %v63 = vld [vmem:[%s1 + $0xb8] sm:$0xf]
  %v64 = vld [vmem:[%s1 + $0xbc] sm:$0xf]
  %v65 = vld [vmem:[%s1 + $0xc0] sm:$0xf]
  %v66 = vld [vmem:[%s1 + $0xc4] sm:$0xf]
  %v67 = vld [vmem:[%s1 + $0xc8] sm:$0xf]
  %v68 = vld [vmem:[%s1 + $0xcc] sm:$0xf]
  %v69 = vld [vmem:[%s1 + $0xd0] sm:$0xf]
  %v70 = vld [vmem:[%s1 + $0xd4] sm:$0xf]
  %v71 = vld [vmem:[%s1 + $0xd8] sm:$0xf]
  %v72 = vld [vmem:[%s1 + $0xdc] sm:$0xf]
  %v73 = vld [vmem:[%s1 + $0xe0] sm:$0xf]
  %v74 = vld [vmem:[%s1 + $0xe4] sm:$0xf]
  %v75 = vld [vmem:[%s1 + $0xe8] sm:$0xf]
  %v76 = vld [vmem:[%s1 + $0xec] sm:$0xf]
  %v77 = vld [vmem:[%s1 + $0xf0] sm:$0xf]
  %v78 = vld [vmem:[%s1 + $0xf4] sm:$0xf]
  %v79 = vld [vmem:[%s1 + $0xf8] sm:$0xf]
  %v80 = vld [vmem:[%s1 + $0xfc] sm:$0xf]
  %v81 = vld [vmem:[%s1 + $0x100] sm:$0xf]
  %v82 = vld [vmem:[%s1 + $0x104] sm:$0xf]
  %v83 = vld [vmem:[%s1 + $0x108] sm:$0xf]
  %v84 = vld [vmem:[%s1 + $0x10c] sm:$0xf]
  %v85 = vld [vmem:[%s1 + $0x110] sm:$0xf]
  %v86 = vld [vmem:[%s1 + $0x114] sm:$0xf]
  %v87 = vld [vmem:[%s1 + $0x118] sm:$0xf]
  %v88 = vld [vmem:[%s1 + $0x11c] sm:$0xf]
  %v89 = vld [vmem:[%s1 + $0x120] sm:$0xf]
  %v90 = vld [vmem:[%s1 + $0x124] sm:$0xf]
  %v91 = vld [vmem:[%s1 + $0x128] sm:$0xf]
  %v92 = vld [vmem:[%s1 + $0x12c] sm:$0xf]
  %v93 = vld [vmem:[%s1 + $0x130] sm:$0xf]
  %v94 = vld [vmem:[%s1 + $0x134] sm:$0xf]
  %v95 = vld [vmem:[%s1 + $0x138] sm:$0xf]
  %v96 = vld [vmem:[%s1 + $0x13c] sm:$0xf]
  %v100 = vunpack.c.l.b16 %v14
  %v101 = vunpack.c.h.b16 %v14
  %v102 = vunpack.c.l.b16 %v15
  %v103 = vunpack.c.h.b16 %v15
  %v104 = vunpack.c.l.b16 %v16
  %v105 = vpack.c.b16 %v100, %v100
  %v106 = vpack.c.b16 %v101, %v101
  %v107 = vpack.c.b16 %v102, %v102
  %v108 = vpack.c.b16 %v103, %v103
  %v109 = vpack.c.b16 %v104, %v104
  %v195 = vunpack.c.l.b16 %v17
  %v196 = vunpack.c.l.b16 %v18
  %v197 = vunpack.c.l.b16 %v19
  %v198 = vunpack.c.l.b16 %v20
  %v199 = vunpack.c.l.b16 %v21
  %v200 = vunpack.c.l.b16 %v22
  %v201 = vunpack.c.l.b16 %v23
  %v202 = vunpack.c.l.b16 %v24
  %v203 = vunpack.c.l.b16 %v25
  %v204 = vunpack.c.l.b16 %v26
  %v205 = vunpack.c.l.b16 %v27
  %v206 = vunpack.c.l.b16 %v28
  %v207 = vunpack.c.l.b16 %v29
  %v208 = vunpack.c.l.b16 %v30
  %v209 = vunpack.c.l.b16 %v31
  %v210 = vunpack.c.l.b16 %v32
  %v211 = vunpack.c.l.b16 %v33
  %v212 = vunpack.c.l.b16 %v34
  %v213 = vunpack.c.l.b16 %v35
  %v214 = vunpack.c.l.b16 %v36
  %v215 = vunpack.c.l.b16 %v37
  %v216 = vunpack.c.l.b16 %v38
  %v217 = vunpack.c.l.b16 %v39
  %v218 = vunpack.c.l.b16 %v40
  %v219 = vunpack.c.l.b16 %v41
  %v220 = vunpack.c.l.b16 %v42
  %v221 = vunpack.c.l.b16 %v43
  %v222 = vunpack.c.l.b16 %v44
  %v223 = vunpack.c.l.b16 %v45
  %v224 = vunpack.c.l.b16 %v46
  %v225 = vunpack.c.l.b16 %v47
  %v226 = vunpack.c.l.b16 %v48
  %v227 = vunpack.c.l.b16 %v49
  %v228 = vunpack.c.l.b16 %v50
  %v229 = vunpack.c.l.b16 %v51
  %v230 = vunpack.c.l.b16 %v52
  %v231 = vunpack.c.l.b16 %v53
  %v232 = vunpack.c.l.b16 %v54
  %v233 = vunpack.c.l.b16 %v55
  %v234 = vunpack.c.l.b16 %v56
  %v235 = vunpack.c.l.b16 %v57
  %v236 = vunpack.c.l.b16 %v58
  %v237 = vunpack.c.l.b16 %v59
  %v238 = vunpack.c.l.b16 %v60
  %v239 = vunpack.c.l.b16 %v61
  %v240 = vunpack.c.l.b16 %v62
  %v241 = vunpack.c.l.b16 %v63
  %v242 = vunpack.c.l.b16 %v64
  %v243 = vunpack.c.l.b16 %v65
  %v244 = vunpack.c.l.b16 %v66
  %v245 = vunpack.c.l.b16 %v67
  %v246 = vunpack.c.l.b16 %v68
  %v247 = vunpack.c.l.b16 %v69
  %v248 = vunpack.c.l.b16 %v70
  %v249 = vunpack.c.l.b16 %v71
  %v250 = vunpack.c.l.b16 %v72
  %v251 = vunpack.c.l.b16 %v73
  %v252 = vunpack.c.l.b16 %v74
  %v253 = vunpack.c.l.b16 %v75
  %v254 = vunpack.c.l.b16 %v76
  %v255 = vunpack.c.l.b16 %v77
  %v256 = vunpack.c.l.b16 %v78
  %v257 = vunpack.c.l.b16 %v79
  %v258 = vunpack.c.l.b16 %v80
  %v259 = vunpack.c.l.b16 %v81
  %v260 = vunpack.c.l.b16 %v82
  %v261 = vunpack.c.l.b16 %v83
  %v262 = vunpack.c.l.b16 %v84
  %v263 = vunpack.c.l.b16 %v85
  %v264 = vunpack.c.l.b16 %v86
  %v265 = vunpack.c.l.b16 %v87
  %v266 = vunpack.c.l.b16 %v88
  %v267 = vunpack.c.l.b16 %v89
  %v268 = vunpack.c.l.b16 %v90
  %v269 = vunpack.c.l.b16 %v91
  %v270 = vunpack.c.l.b16 %v92
  %v271 = vunpack.c.l.b16 %v93
  %v272 = vunpack.c.l.b16 %v94
  %v273 = vunpack.c.l.b16 %v95
  %v274 = vunpack.c.l.b16 %v96
  %v275 = vpack.c.b16 %v196, %v195
  %v276 = vpack.c.b16 %v198, %v197
  %v277 = vpack.c.b16 %v200, %v199
  %v278 = vpack.c.b16 %v202, %v201
  %v279 = vpack.c.b16 %v204, %v203
  %v280 = vpack.c.b16 %v206, %v205
  %v281 = vpack.c.b16 %v208, %v207
  %v282 = vpack.c.b16 %v210, %v209
  %v283 = vpack.c.b16 %v212, %v211
  %v284 = vpack.c.b16 %v214, %v213
  %v285 = vpack.c.b16 %v216, %v215
  %v286 = vpack.c.b16 %v218, %v217
  %v287 = vpack.c.b16 %v220, %v219
  %v288 = vpack.c.b16 %v222, %v221
  %v289 = vpack.c.b16 %v224, %v223
  %v290 = vpack.c.b16 %v226, %v225
  %v291 = vpack.c.b16 %v228, %v227
  %v292 = vpack.c.b16 %v230, %v229
  %v293 = vpack.c.b16 %v232, %v231
  %v294 = vpack.c.b16 %v234, %v233
  %v295 = vpack.c.b16 %v236, %v235
  %v296 = vpack.c.b16 %v238, %v237
  %v297 = vpack.c.b16 %v240, %v239
  %v298 = vpack.c.b16 %v242, %v241
  %v299 = vpack.c.b16 %v244, %v243
  %v300 = vpack.c.b16 %v246, %v245
  %v301 = vpack.c.b16 %v248, %v247
  %v302 = vpack.c.b16 %v250, %v249
  %v303 = vpack.c.b16 %v252, %v251
  %v304 = vpack.c.b16 %v254, %v253
  %v305 = vpack.c.b16 %v256, %v255
  %v306 = vpack.c.b16 %v258, %v257
  %v307 = vpack.c.b16 %v260, %v259
  %v308 = vpack.c.b16 %v262, %v261
  %v309 = vpack.c.b16 %v264, %v263
  %v310 = vpack.c.b16 %v266, %v265
  %v311 = vpack.c.b16 %v268, %v267
  %v312 = vpack.c.b16 %v270, %v269
  %v313 = vpack.c.b16 %v272, %v271
  %v314 = vpack.c.b16 %v274, %v273
  %355 = vmatprep.subr.bf16.mxu0 0
  %356 = vmatpush1.bf16.msra.mxu0 %v275
  %357 = vmatprep.subr.bf16.mxu0 0
  %358 = vmatpush1.bf16.msra.mxu0 %v276
  %359 = vmatprep.subr.bf16.mxu0 0
  %360 = vmatpush1.bf16.msra.mxu0 %v277
  %361 = vmatprep.subr.bf16.mxu0 0
  %362 = vmatpush1.bf16.msra.mxu0 %v278
  %363 = vmatprep.subr.bf16.mxu0 0
  %364 = vmatpush1.bf16.msra.mxu0 %v279
  %365 = vmatprep.subr.bf16.mxu0 0
  %366 = vmatpush1.bf16.msra.mxu0 %v280
  %367 = vmatprep.subr.bf16.mxu0 0
  %368 = vmatpush1.bf16.msra.mxu0 %v281
  %369 = vmatprep.subr.bf16.mxu0 0
  %370 = vmatpush1.bf16.msra.mxu0 %v282
  %371 = vmatprep.subr.bf16.mxu0 0
  %372 = vmatpush1.bf16.msra.mxu0 %v283
  %373 = vmatprep.subr.bf16.mxu0 0
  %374 = vmatpush1.bf16.msra.mxu0 %v284
  %375 = vmatprep.subr.bf16.mxu0 0
  %376 = vmatpush1.bf16.msra.mxu0 %v285
  %377 = vmatprep.subr.bf16.mxu0 0
  %378 = vmatpush1.bf16.msra.mxu0 %v286
  %379 = vmatprep.subr.bf16.mxu0 0
  %380 = vmatpush1.bf16.msra.mxu0 %v287
  %381 = vmatprep.subr.bf16.mxu0 0
  %382 = vmatpush1.bf16.msra.mxu0 %v288
  %383 = vmatprep.subr.bf16.mxu0 0
  %384 = vmatpush1.bf16.msra.mxu0 %v289
  %385 = vmatprep.subr.bf16.mxu0 0
  %386 = vmatpush1.bf16.msra.mxu0 %v290
  %387 = vmatprep.mubr.bf16.mxu0 %v106
  %388 = vmatmul.mubr.bf16.gmra.mrb[0].mxu0 %v105
  %v389 = vpop.f32.mrb[0].mxu0
  %v390 = vadd.f32 0.0, %v389
  %v391 = vpop.f32.mrb[0].mxu0
  %v392 = vpop.f32.mrb[0].mxu0
  %v393 = vpop.f32.mrb[0].mxu0
  %394 = vdwg.mxu0
  %395 = vmatprep.subr.bf16.mxu0 0
  %396 = vmatpush1.bf16.msra.mxu0 %v291
  %397 = vmatprep.subr.bf16.mxu0 0
  %398 = vmatpush1.bf16.msra.mxu0 %v292
  %399 = vmatprep.subr.bf16.mxu0 0
  %400 = vmatpush1.bf16.msra.mxu0 %v293
  %401 = vmatprep.subr.bf16.mxu0 0
  %402 = vmatpush1.bf16.msra.mxu0 %v294
  %403 = vmatprep.subr.bf16.mxu0 0
  %404 = vmatpush1.bf16.msra.mxu0 %v295
  %405 = vmatprep.subr.bf16.mxu0 0
  %406 = vmatpush1.bf16.msra.mxu0 %v296
  %407 = vmatprep.subr.bf16.mxu0 0
  %408 = vmatpush1.bf16.msra.mxu0 %v297
  %409 = vmatprep.subr.bf16.mxu0 0
  %410 = vmatpush1.bf16.msra.mxu0 %v298
  %411 = vmatprep.subr.bf16.mxu0 0
  %412 = vmatpush1.bf16.msra.mxu0 %v299
  %413 = vmatprep.subr.bf16.mxu0 0
  %414 = vmatpush1.bf16.msra.mxu0 %v300
  %415 = vmatprep.subr.bf16.mxu0 0
  %416 = vmatpush1.bf16.msra.mxu0 %v301
  %417 = vmatprep.subr.bf16.mxu0 0
  %418 = vmatpush1.bf16.msra.mxu0 %v302
  %419 = vmatprep.subr.bf16.mxu0 0
  %420 = vmatpush1.bf16.msra.mxu0 %v303
  %421 = vmatprep.subr.bf16.mxu0 0
  %422 = vmatpush1.bf16.msra.mxu0 %v304
  %423 = vmatprep.subr.bf16.mxu0 0
  %424 = vmatpush1.bf16.msra.mxu0 %v305
  %425 = vmatprep.subr.bf16.mxu0 0
  %426 = vmatpush1.bf16.msra.mxu0 %v306
  %427 = vmatprep.mubr.bf16.mxu0 %v108
  %428 = vmatmul.mubr.bf16.gmra.mrb[0].mxu0 %v107
  %v429 = vpop.f32.mrb[0].mxu0
  %v430 = vadd.f32 %v390, %v429
  %v431 = vpop.f32.mrb[0].mxu0
  %v432 = vpop.f32.mrb[0].mxu0
  %v433 = vpop.f32.mrb[0].mxu0
  %434 = vdwg.mxu0
  %435 = vmatprep.subr.bf16.mxu0 0
  %436 = vmatpush1.bf16.msra.mxu0 %v307
  %437 = vmatprep.subr.bf16.mxu0 0
  %438 = vmatpush1.bf16.msra.mxu0 %v308
  %439 = vmatprep.subr.bf16.mxu0 0
  %440 = vmatpush1.bf16.msra.mxu0 %v309
  %441 = vmatprep.subr.bf16.mxu0 0
  %442 = vmatpush1.bf16.msra.mxu0 %v310
  %443 = vmatprep.subr.bf16.mxu0 0
  %444 = vmatpush1.bf16.msra.mxu0 %v311
  %445 = vmatprep.subr.bf16.mxu0 0
  %446 = vmatpush1.bf16.msra.mxu0 %v312
  %447 = vmatprep.subr.bf16.mxu0 0
  %448 = vmatpush1.bf16.msra.mxu0 %v313
  %449 = vmatprep.subr.bf16.mxu0 0
  %450 = vmatpush1.bf16.msra.mxu0 %v314
  %451 = vmatprep.subr.bf16.mxu0 0
  %452 = vmatpush1.bf16.msra.mxu0 0
  %453 = vmatprep.subr.bf16.mxu0 0
  %454 = vmatpush1.bf16.msra.mxu0 0
  %455 = vmatprep.subr.bf16.mxu0 0
  %456 = vmatpush1.bf16.msra.mxu0 0
  %457 = vmatprep.subr.bf16.mxu0 0
  %458 = vmatpush1.bf16.msra.mxu0 0
  %459 = vmatprep.subr.bf16.mxu0 0
  %460 = vmatpush1.bf16.msra.mxu0 0
  %461 = vmatprep.subr.bf16.mxu0 0
  %462 = vmatpush1.bf16.msra.mxu0 0
  %463 = vmatprep.subr.bf16.mxu0 0
  %464 = vmatpush1.bf16.msra.mxu0 0
  %465 = vmatprep.subr.bf16.mxu0 0
  %466 = vmatpush1.bf16.msra.mxu0 0
  %467 = vmatprep.mubr.bf16.mxu0 0
  %468 = vmatmul.mubr.bf16.gmra.mrb[0].mxu0 %v109
  %v469 = vpop.f32.mrb[0].mxu0
  %v470 = vadd.f32 %v430, %v469
  %v471 = vpop.f32.mrb[0].mxu0
  %v472 = vpop.f32.mrb[0].mxu0
  %v473 = vpop.f32.mrb[0].mxu0
  %474 = vdwg.mxu0
  %475 = vst [vmem:[%s2] sm:$0xff] %v470
  %v476 = vrot.slane %v470, 4
  %v477 = vadd.f32 %v470, %v476
  %v478 = vrot.slane %v477, 2
  %v479 = vadd.f32 %v477, %v478
  %v480 = vrot.slane %v479, 1
  %v481 = vadd.f32 %v479, %v480
  %v482 = vmul.f32 %v470, %v470
  %v483 = vrot.slane %v482, 4
  %v484 = vadd.f32 %v482, %v483
  %v485 = vrot.slane %v484, 2
  %v486 = vadd.f32 %v484, %v485
  %v487 = vrot.slane %v486, 1
  %v488 = vadd.f32 %v486, %v487
  %vm489 = vcmask 1040384
  %v490 = vsel %vm489, %v481, %v488
  %491 = vst [vmem:[%s3] sm:$0x3] %v490
  // Predicated region
  $region10: #{autoencoder_forward.21} parent=0 // pred_check
    _
  $region11: #{autoencoder_forward.21} parent=0 // pred_check_branch
    %493 = sbr.rel (0) target = $region13
  $region12: #{autoencoder_forward.21} parent=0 // pred_region
    _
  $region13: #{autoencoder_forward.21} parent=0 // pred_fallthru
    _
  // Predicated region
  $region14: #{autoencoder_forward.21} parent=0 // pred_check
    _
  $region15: #{autoencoder_forward.21} parent=0 // pred_check_branch
    %495 = sbr.rel (0) target = $region17
  $region16: #{autoencoder_forward.21} parent=0 // pred_region
    _
  $region17: #{autoencoder_forward.21} parent=0 // pred_fallthru
    _
  // Predicated region
  $region18: #{autoencoder_forward.21} parent=0 // pred_check
    _
  $region19: #{autoencoder_forward.21} parent=0 // pred_check_branch
    %497 = sbr.rel (0) target = $region21
  $region20: #{autoencoder_forward.21} parent=0 // pred_region
    _
  $region21: #{autoencoder_forward.21} parent=0 // pred_fallthru
    _
  // Predicated region
  $region22: #{autoencoder_forward.21} parent=0 // pred_check
    _
  $region23: #{autoencoder_forward.21} parent=0 // pred_check_branch
    %499 = sbr.rel (0) target = $region25
  $region24: #{autoencoder_forward.21} parent=0 // pred_region
    _
  $region25: #{autoencoder_forward.21} parent=0 // pred_fallthru
    _

// kernel: autoencoder_forward.24
$region0: #{autoencoder_forward.24}
  #allocation0 [shape = 'u32[]', space=smem, size = 0x4, offset = 0x4, fixed_abs, tag = 'smem constant byte address 0x4 - core index']
  #allocation1 [shape = 'u32[144,128]{1,0:T(1,128)}', space=vmem, size = 0x12000, scoped, tag = 'internal scratch']
  %s0 = inlined_call_operand.vmem [shape: f32[8,256], index: 0, kind: input, shape index: {}]
  %s1 = inlined_call_operand.vmem [shape: f32[1,256], index: 1, kind: input, shape index: {}]
  %s2 = inlined_call_operand.vmem [shape: f32[1,256], index: 2, kind: input, shape index: {}]
  %s3 = inlined_call_operand.vmem [shape: f32[8,256], index: 3, kind: output, shape index: {}]
  %s4 = sld [smem:[#allocation0]]
  $region22: #{autoencoder_forward.24} parent=0
    _
  %s6 = ssub.s32 1, %s4
  %s7 = scalar_select 0, %s6, %s4
  // Predicated region
  $region2: #{autoencoder_forward.24} parent=0 // pred_check
    _
  $region3: #{autoencoder_forward.24} parent=0 // pred_check_branch
    %9 = sbr.rel (0) target = $region5
  $region4: #{autoencoder_forward.24} parent=0 // pred_region
    _
  $region5: #{autoencoder_forward.24} parent=0 // pred_fallthru
    _
  // Predicated region
  $region6: #{autoencoder_forward.24} parent=0 // pred_check
    _
  $region7: #{autoencoder_forward.24} parent=0 // pred_check_branch
    %11 = sbr.rel (0) target = $region9
  $region8: #{autoencoder_forward.24} parent=0 // pred_region
    _
  $region9: #{autoencoder_forward.24} parent=0 // pred_fallthru
    _
  // Predicated region
  $region10: #{autoencoder_forward.24} parent=0 // pred_check
    _
  $region11: #{autoencoder_forward.24} parent=0 // pred_check_branch
    %13 = sbr.rel (0) target = $region13
  $region12: #{autoencoder_forward.24} parent=0 // pred_region
    _
  $region13: #{autoencoder_forward.24} parent=0 // pred_fallthru
    _
  %v14 = vld [vmem:[%s0] sm:$0xff]
  %v15 = vld [vmem:[%s0 + $0x8] sm:$0xff]
  %v16 = vld [vmem:[%s1] sm:$0x3]
  %v18 = vlaneseq
  %v19 = vshrl.u32 %v18, 7
  %v20 = vsub.s32 0, %v19
  %v21 = vrot.slane %v16, %v20
  %v22 = vlaneseq
  %v23 = vshrl.u32 %v22, 7
  %v24 = vsub.s32 1, %v23
  %v25 = vrot.slane %v16, %v24
  %v28 = vmul.f32 %v14, %v21
  %v29 = vmul.f32 %v15, %v25
  %v30 = vld [vmem:[%s2] sm:$0x3]
  %v32 = vlaneseq
  %v33 = vshrl.u32 %v32, 7
  %v34 = vsub.s32 0, %v33
  %v35 = vrot.slane %v30, %v34
  %v36 = vlaneseq
  %v37 = vshrl.u32 %v36, 7
  %v38 = vsub.s32 1, %v37
  %v39 = vrot.slane %v30, %v38
  %v42 = vadd.f32 %v28, %v35
  %v43 = vadd.f32 %v29, %v39
  %v44 = vmax.f32 %v42, 0.0
  %v45 = vmax.f32 %v43, 0.0
  %46 = vst [vmem:[%s3] sm:$0xff] %v44
  %47 = vst [vmem:[%s3 + $0x8] sm:$0xff] %v45
  // Predicated region
  $region14: #{autoencoder_forward.24} parent=0 // pred_check
    _
  $region15: #{autoencoder_forward.24} parent=0 // pred_check_branch
    %49 = sbr.rel (0) target = $region17
  $region16: #{autoencoder_forward.24} parent=0 // pred_region
    _
  $region17: #{autoencoder_forward.24} parent=0 // pred_fallthru
    _
  // Predicated region
  $region18: #{autoencoder_forward.24} parent=0 // pred_check
    _
  $region19: #{autoencoder_forward.24} parent=0 // pred_check_branch
    %51 = sbr.rel (0) target = $region21
  $region20: #{autoencoder_forward.24} parent=0 // pred_region
    _
  $region21: #{autoencoder_forward.24} parent=0 // pred_fallthru
    _

// kernel: autoencoder_forward.23
$region0: #{autoencoder_forward.23}
  #allocation0 [shape = 'u32[]', space=smem, size = 0x4, offset = 0x4, fixed_abs, tag = 'smem constant byte address 0x4 - core index']
  #allocation1 [shape = 'u32[144,128]{1,0:T(1,128)}', space=vmem, size = 0x12000, scoped, tag = 'internal scratch']
  %s0 = inlined_call_operand.vmem [shape: bf16[8,1152], index: 0, kind: input, shape index: {}]
  %s1 = inlined_call_operand.vmem [shape: bf16[1152,256], index: 1, kind: input, shape index: {}]
  %s2 = inlined_call_operand.vmem [shape: f32[8,256], index: 2, kind: output, shape index: {0}]
  %s3 = inlined_call_operand.vmem [shape: f32[1,2,256], index: 3, kind: output, shape index: {1}]
  %4 = xla_tuple %s2, %s3
  %s5 = sld [smem:[#allocation0]]
  $region26: #{autoencoder_forward.23} parent=0
    _
  %s7 = ssub.s32 1, %s5
  %s8 = scalar_select 0, %s7, %s5
  // Predicated region
  $region2: #{autoencoder_forward.23} parent=0 // pred_check
    _
  $region3: #{autoencoder_forward.23} parent=0 // pred_check_branch
    %10 = sbr.rel (0) target = $region5
  $region4: #{autoencoder_forward.23} parent=0 // pred_region
    _
  $region5: #{autoencoder_forward.23} parent=0 // pred_fallthru
    _
  // Predicated region
  $region6: #{autoencoder_forward.23} parent=0 // pred_check
    _
  $region7: #{autoencoder_forward.23} parent=0 // pred_check_branch
    %12 = sbr.rel (0) target = $region9
  $region8: #{autoencoder_forward.23} parent=0 // pred_region
    _
  $region9: #{autoencoder_forward.23} parent=0 // pred_fallthru
    _
  %v14 = vld [vmem:[%s0] sm:$0xff]
  %v15 = vld [vmem:[%s0 + $0x8] sm:$0xff]
  %v16 = vld [vmem:[%s0 + $0x10] sm:$0xff]
  %v17 = vld [vmem:[%s0 + $0x18] sm:$0xff]
  %v18 = vld [vmem:[%s0 + $0x20] sm:$0xf]
  %v19 = vld [vmem:[%s1] sm:$0xff]
  %v20 = vld [vmem:[%s1 + $0x8] sm:$0xff]
  %v21 = vld [vmem:[%s1 + $0x10] sm:$0xff]
  %v22 = vld [vmem:[%s1 + $0x18] sm:$0xff]
  %v23 = vld [vmem:[%s1 + $0x20] sm:$0xff]
  %v24 = vld [vmem:[%s1 + $0x28] sm:$0xff]
  %v25 = vld [vmem:[%s1 + $0x30] sm:$0xff]
  %v26 = vld [vmem:[%s1 + $0x38] sm:$0xff]
  %v27 = vld [vmem:[%s1 + $0x40] sm:$0xff]
  %v28 = vld [vmem:[%s1 + $0x48] sm:$0xff]
  %v29 = vld [vmem:[%s1 + $0x50] sm:$0xff]
  %v30 = vld [vmem:[%s1 + $0x58] sm:$0xff]
  %v31 = vld [vmem:[%s1 + $0x60] sm:$0xff]
  %v32 = vld [vmem:[%s1 + $0x68] sm:$0xff]
  %v33 = vld [vmem:[%s1 + $0x70] sm:$0xff]
  %v34 = vld [vmem:[%s1 + $0x78] sm:$0xff]
  %v35 = vld [vmem:[%s1 + $0x80] sm:$0xff]
  %v36 = vld [vmem:[%s1 + $0x88] sm:$0xff]
  %v37 = vld [vmem:[%s1 + $0x90] sm:$0xff]
  %v38 = vld [vmem:[%s1 + $0x98] sm:$0xff]
  %v39 = vld [vmem:[%s1 + $0xa0] sm:$0xff]
  %v40 = vld [vmem:[%s1 + $0xa8] sm:$0xff]
  %v41 = vld [vmem:[%s1 + $0xb0] sm:$0xff]
  %v42 = vld [vmem:[%s1 + $0xb8] sm:$0xff]
  %v43 = vld [vmem:[%s1 + $0xc0] sm:$0xff]
  %v44 = vld [vmem:[%s1 + $0xc8] sm:$0xff]
  %v45 = vld [vmem:[%s1 + $0xd0] sm:$0xff]
  %v46 = vld [vmem:[%s1 + $0xd8] sm:$0xff]
  %v47 = vld [vmem:[%s1 + $0xe0] sm:$0xff]
  %v48 = vld [vmem:[%s1 + $0xe8] sm:$0xff]
  %v49 = vld [vmem:[%s1 + $0xf0] sm:$0xff]
  %v50 = vld [vmem:[%s1 + $0xf8] sm:$0xff]
  %v51 = vld [vmem:[%s1 + $0x100] sm:$0xff]
  %v52 = vld [vmem:[%s1 + $0x108] sm:$0xff]
  %v53 = vld [vmem:[%s1 + $0x110] sm:$0xff]
  %v54 = vld [vmem:[%s1 + $0x118] sm:$0xff]
  %v55 = vld [vmem:[%s1 + $0x120] sm:$0xff]
  %v56 = vld [vmem:[%s1 + $0x128] sm:$0xff]
  %v57 = vld [vmem:[%s1 + $0x130] sm:$0xff]
  %v58 = vld [vmem:[%s1 + $0x138] sm:$0xff]
  %v59 = vld [vmem:[%s1 + $0x140] sm:$0xff]
  %v60 = vld [vmem:[%s1 + $0x148] sm:$0xff]
  %v61 = vld [vmem:[%s1 + $0x150] sm:$0xff]
  %v62 = vld [vmem:[%s1 + $0x158] sm:$0xff]
  %v63 = vld [vmem:[%s1 + $0x160] sm:$0xff]
  %v64 = vld [vmem:[%s1 + $0x168] sm:$0xff]
  %v65 = vld [vmem:[%s1 + $0x170] sm:$0xff]
  %v66 = vld [vmem:[%s1 + $0x178] sm:$0xff]
  %v67 = vld [vmem:[%s1 + $0x180] sm:$0xff]
  %v68 = vld [vmem:[%s1 + $0x188] sm:$0xff]
  %v69 = vld [vmem:[%s1 + $0x190] sm:$0xff]
  %v70 = vld [vmem:[%s1 + $0x198] sm:$0xff]
  %v71 = vld [vmem:[%s1 + $0x1a0] sm:$0xff]
  %v72 = vld [vmem:[%s1 + $0x1a8] sm:$0xff]
  %v73 = vld [vmem:[%s1 + $0x1b0] sm:$0xff]
  %v74 = vld [vmem:[%s1 + $0x1b8] sm:$0xff]
  %v75 = vld [vmem:[%s1 + $0x1c0] sm:$0xff]
  %v76 = vld [vmem:[%s1 + $0x1c8] sm:$0xff]
  %v77 = vld [vmem:[%s1 + $0x1d0] sm:$0xff]
  %v78 = vld [vmem:[%s1 + $0x1d8] sm:$0xff]
  %v79 = vld [vmem:[%s1 + $0x1e0] sm:$0xff]
  %v80 = vld [vmem:[%s1 + $0x1e8] sm:$0xff]
  %v81 = vld [vmem:[%s1 + $0x1f0] sm:$0xff]
  %v82 = vld [vmem:[%s1 + $0x1f8] sm:$0xff]
  %v83 = vld [vmem:[%s1 + $0x200] sm:$0xff]
  %v84 = vld [vmem:[%s1 + $0x208] sm:$0xff]
  %v85 = vld [vmem:[%s1 + $0x210] sm:$0xff]
  %v86 = vld [vmem:[%s1 + $0x218] sm:$0xff]
  %v87 = vld [vmem:[%s1 + $0x220] sm:$0xff]
  %v88 = vld [vmem:[%s1 + $0x228] sm:$0xff]
  %v89 = vld [vmem:[%s1 + $0x230] sm:$0xff]
  %v90 = vld [vmem:[%s1 + $0x238] sm:$0xff]
  %v91 = vld [vmem:[%s1 + $0x240] sm:$0xff]
  %v92 = vld [vmem:[%s1 + $0x248] sm:$0xff]
  %v93 = vld [vmem:[%s1 + $0x250] sm:$0xff]
  %v94 = vld [vmem:[%s1 + $0x258] sm:$0xff]
  %v95 = vld [vmem:[%s1 + $0x260] sm:$0xff]
  %v96 = vld [vmem:[%s1 + $0x268] sm:$0xff]
  %v97 = vld [vmem:[%s1 + $0x270] sm:$0xff]
  %v98 = vld [vmem:[%s1 + $0x278] sm:$0xff]
  %v99 = vld [vmem:[%s1 + $0x280] sm:$0xff]
  %v100 = vld [vmem:[%s1 + $0x288] sm:$0xff]
  %v101 = vld [vmem:[%s1 + $0x290] sm:$0xff]
  %v102 = vld [vmem:[%s1 + $0x298] sm:$0xff]
  %v103 = vld [vmem:[%s1 + $0x2a0] sm:$0xff]
  %v104 = vld [vmem:[%s1 + $0x2a8] sm:$0xff]
  %v105 = vld [vmem:[%s1 + $0x2b0] sm:$0xff]
  %v106 = vld [vmem:[%s1 + $0x2b8] sm:$0xff]
  %v107 = vld [vmem:[%s1 + $0x2c0] sm:$0xff]
  %v108 = vld [vmem:[%s1 + $0x2c8] sm:$0xff]
  %v109 = vld [vmem:[%s1 + $0x2d0] sm:$0xff]
  %v110 = vld [vmem:[%s1 + $0x2d8] sm:$0xff]
  %v111 = vld [vmem:[%s1 + $0x2e0] sm:$0xff]
  %v112 = vld [vmem:[%s1 + $0x2e8] sm:$0xff]
  %v113 = vld [vmem:[%s1 + $0x2f0] sm:$0xff]
  %v114 = vld [vmem:[%s1 + $0x2f8] sm:$0xff]
  %v115 = vld [vmem:[%s1 + $0x300] sm:$0xff]
  %v116 = vld [vmem:[%s1 + $0x308] sm:$0xff]
  %v117 = vld [vmem:[%s1 + $0x310] sm:$0xff]
  %v118 = vld [vmem:[%s1 + $0x318] sm:$0xff]
  %v119 = vld [vmem:[%s1 + $0x320] sm:$0xff]
  %v120 = vld [vmem:[%s1 + $0x328] sm:$0xff]
  %v121 = vld [vmem:[%s1 + $0x330] sm:$0xff]
  %v122 = vld [vmem:[%s1 + $0x338] sm:$0xff]
  %v123 = vld [vmem:[%s1 + $0x340] sm:$0xff]
  %v124 = vld [vmem:[%s1 + $0x348] sm:$0xff]
  %v125 = vld [vmem:[%s1 + $0x350] sm:$0xff]
  %v126 = vld [vmem:[%s1 + $0x358] sm:$0xff]
  %v127 = vld [vmem:[%s1 + $0x360] sm:$0xff]
  %v128 = vld [vmem:[%s1 + $0x368] sm:$0xff]
  %v129 = vld [vmem:[%s1 + $0x370] sm:$0xff]
  %v130 = vld [vmem:[%s1 + $0x378] sm:$0xff]
  %v131 = vld [vmem:[%s1 + $0x380] sm:$0xff]
  %v132 = vld [vmem:[%s1 + $0x388] sm:$0xff]
  %v133 = vld [vmem:[%s1 + $0x390] sm:$0xff]
  %v134 = vld [vmem:[%s1 + $0x398] sm:$0xff]
  %v135 = vld [vmem:[%s1 + $0x3a0] sm:$0xff]
  %v136 = vld [vmem:[%s1 + $0x3a8] sm:$0xff]
  %v137 = vld [vmem:[%s1 + $0x3b0] sm:$0xff]
  %v138 = vld [vmem:[%s1 + $0x3b8] sm:$0xff]
  %v139 = vld [vmem:[%s1 + $0x3c0] sm:$0xff]
  %v140 = vld [vmem:[%s1 + $0x3c8] sm:$0xff]
  %v141 = vld [vmem:[%s1 + $0x3d0] sm:$0xff]
  %v142 = vld [vmem:[%s1 + $0x3d8] sm:$0xff]
  %v143 = vld [vmem:[%s1 + $0x3e0] sm:$0xff]
  %v144 = vld [vmem:[%s1 + $0x3e8] sm:$0xff]
  %v145 = vld [vmem:[%s1 + $0x3f0] sm:$0xff]
  %v146 = vld [vmem:[%s1 + $0x3f8] sm:$0xff]
  %v147 = vld [vmem:[%s1 + $0x400] sm:$0xff]
  %v148 = vld [vmem:[%s1 + $0x408] sm:$0xff]
  %v149 = vld [vmem:[%s1 + $0x410] sm:$0xff]
  %v150 = vld [vmem:[%s1 + $0x418] sm:$0xff]
  %v151 = vld [vmem:[%s1 + $0x420] sm:$0xff]
  %v152 = vld [vmem:[%s1 + $0x428] sm:$0xff]
  %v153 = vld [vmem:[%s1 + $0x430] sm:$0xff]
  %v154 = vld [vmem:[%s1 + $0x438] sm:$0xff]
  %v155 = vld [vmem:[%s1 + $0x440] sm:$0xff]
  %v156 = vld [vmem:[%s1 + $0x448] sm:$0xff]
  %v157 = vld [vmem:[%s1 + $0x450] sm:$0xff]
  %v158 = vld [vmem:[%s1 + $0x458] sm:$0xff]
  %v159 = vld [vmem:[%s1 + $0x460] sm:$0xff]
  %v160 = vld [vmem:[%s1 + $0x468] sm:$0xff]
  %v161 = vld [vmem:[%s1 + $0x470] sm:$0xff]
  %v162 = vld [vmem:[%s1 + $0x478] sm:$0xff]
  %v168 = vunpack.c.l.b16 %v14
  %v169 = vunpack.c.h.b16 %v14
  %v170 = vunpack.c.l.b16 %v15
  %v171 = vunpack.c.h.b16 %v15
  %v172 = vunpack.c.l.b16 %v16
  %v173 = vunpack.c.h.b16 %v16
  %v174 = vunpack.c.l.b16 %v17
  %v175 = vunpack.c.h.b16 %v17
  %v176 = vunpack.c.l.b16 %v18
  %v177 = vpack.c.b16 %v168, %v168
  %v178 = vpack.c.b16 %v169, %v169
  %v179 = vpack.c.b16 %v170, %v170
  %v180 = vpack.c.b16 %v171, %v171
  %v181 = vpack.c.b16 %v172, %v172
  %v182 = vpack.c.b16 %v173, %v173
  %v183 = vpack.c.b16 %v174, %v174
  %v184 = vpack.c.b16 %v175, %v175
  %v185 = vpack.c.b16 %v176, %v176
  %v339 = vunpack.c.l.b16 %v19
  %v340 = vunpack.c.h.b16 %v19
  %v341 = vunpack.c.l.b16 %v20
  %v342 = vunpack.c.h.b16 %v20
  %v343 = vunpack.c.l.b16 %v21
  %v344 = vunpack.c.h.b16 %v21
  %v345 = vunpack.c.l.b16 %v22
  %v346 = vunpack.c.h.b16 %v22
  %v347 = vunpack.c.l.b16 %v23
  %v348 = vunpack.c.h.b16 %v23
  %v349 = vunpack.c.l.b16 %v24
  %v350 = vunpack.c.h.b16 %v24
  %v351 = vunpack.c.l.b16 %v25
  %v352 = vunpack.c.h.b16 %v25
  %v353 = vunpack.c.l.b16 %v26
  %v354 = vunpack.c.h.b16 %v26
  %v355 = vunpack.c.l.b16 %v27
  %v356 = vunpack.c.h.b16 %v27
  %v357 = vunpack.c.l.b16 %v28
  %v358 = vunpack.c.h.b16 %v28
  %v359 = vunpack.c.l.b16 %v29
  %v360 = vunpack.c.h.b16 %v29
  %v361 = vunpack.c.l.b16 %v30
  %v362 = vunpack.c.h.b16 %v30
  %v363 = vunpack.c.l.b16 %v31
  %v364 = vunpack.c.h.b16 %v31
  %v365 = vunpack.c.l.b16 %v32
  %v366 = vunpack.c.h.b16 %v32
  %v367 = vunpack.c.l.b16 %v33
  %v368 = vunpack.c.h.b16 %v33
  %v369 = vunpack.c.l.b16 %v34
  %v370 = vunpack.c.h.b16 %v34
  %v371 = vunpack.c.l.b16 %v35
  %v372 = vunpack.c.h.b16 %v35
  %v373 = vunpack.c.l.b16 %v36
  %v374 = vunpack.c.h.b16 %v36
  %v375 = vunpack.c.l.b16 %v37
  %v376 = vunpack.c.h.b16 %v37
  %v377 = vunpack.c.l.b16 %v38
  %v378 = vunpack.c.h.b16 %v38
  %v379 = vunpack.c.l.b16 %v39
  %v380 = vunpack.c.h.b16 %v39
  %v381 = vunpack.c.l.b16 %v40
  %v382 = vunpack.c.h.b16 %v40
  %v383 = vunpack.c.l.b16 %v41
  %v384 = vunpack.c.h.b16 %v41
  %v385 = vunpack.c.l.b16 %v42
  %v386 = vunpack.c.h.b16 %v42
  %v387 = vunpack.c.l.b16 %v43
  %v388 = vunpack.c.h.b16 %v43
  %v389 = vunpack.c.l.b16 %v44
  %v390 = vunpack.c.h.b16 %v44
  %v391 = vunpack.c.l.b16 %v45
  %v392 = vunpack.c.h.b16 %v45
  %v393 = vunpack.c.l.b16 %v46
  %v394 = vunpack.c.h.b16 %v46
  %v395 = vunpack.c.l.b16 %v47
  %v396 = vunpack.c.h.b16 %v47
  %v397 = vunpack.c.l.b16 %v48
  %v398 = vunpack.c.h.b16 %v48
  %v399 = vunpack.c.l.b16 %v49
  %v400 = vunpack.c.h.b16 %v49
  %v401 = vunpack.c.l.b16 %v50
  %v402 = vunpack.c.h.b16 %v50
  %v403 = vunpack.c.l.b16 %v51
  %v404 = vunpack.c.h.b16 %v51
  %v405 = vunpack.c.l.b16 %v52
  %v406 = vunpack.c.h.b16 %v52
  %v407 = vunpack.c.l.b16 %v53
  %v408 = vunpack.c.h.b16 %v53
  %v409 = vunpack.c.l.b16 %v54
  %v410 = vunpack.c.h.b16 %v54
  %v411 = vunpack.c.l.b16 %v55
  %v412 = vunpack.c.h.b16 %v55
  %v413 = vunpack.c.l.b16 %v56
  %v414 = vunpack.c.h.b16 %v56
  %v415 = vunpack.c.l.b16 %v57
  %v416 = vunpack.c.h.b16 %v57
  %v417 = vunpack.c.l.b16 %v58
  %v418 = vunpack.c.h.b16 %v58
  %v419 = vunpack.c.l.b16 %v59
  %v420 = vunpack.c.h.b16 %v59
  %v421 = vunpack.c.l.b16 %v60
  %v422 = vunpack.c.h.b16 %v60
  %v423 = vunpack.c.l.b16 %v61
  %v424 = vunpack.c.h.b16 %v61
  %v425 = vunpack.c.l.b16 %v62
  %v426 = vunpack.c.h.b16 %v62
  %v427 = vunpack.c.l.b16 %v63
  %v428 = vunpack.c.h.b16 %v63
  %v429 = vunpack.c.l.b16 %v64
  %v430 = vunpack.c.h.b16 %v64
  %v431 = vunpack.c.l.b16 %v65
  %v432 = vunpack.c.h.b16 %v65
  %v433 = vunpack.c.l.b16 %v66
  %v434 = vunpack.c.h.b16 %v66
  %v435 = vunpack.c.l.b16 %v67
  %v436 = vunpack.c.h.b16 %v67
  %v437 = vunpack.c.l.b16 %v68
  %v438 = vunpack.c.h.b16 %v68
  %v439 = vunpack.c.l.b16 %v69
  %v440 = vunpack.c.h.b16 %v69
  %v441 = vunpack.c.l.b16 %v70
  %v442 = vunpack.c.h.b16 %v70
  %v443 = vunpack.c.l.b16 %v71
  %v444 = vunpack.c.h.b16 %v71
  %v445 = vunpack.c.l.b16 %v72
  %v446 = vunpack.c.h.b16 %v72
  %v447 = vunpack.c.l.b16 %v73
  %v448 = vunpack.c.h.b16 %v73
  %v449 = vunpack.c.l.b16 %v74
  %v450 = vunpack.c.h.b16 %v74
  %v451 = vunpack.c.l.b16 %v75
  %v452 = vunpack.c.h.b16 %v75
  %v453 = vunpack.c.l.b16 %v76
  %v454 = vunpack.c.h.b16 %v76
  %v455 = vunpack.c.l.b16 %v77
  %v456 = vunpack.c.h.b16 %v77
  %v457 = vunpack.c.l.b16 %v78
  %v458 = vunpack.c.h.b16 %v78
  %v459 = vunpack.c.l.b16 %v79
  %v460 = vunpack.c.h.b16 %v79
  %v461 = vunpack.c.l.b16 %v80
  %v462 = vunpack.c.h.b16 %v80
  %v463 = vunpack.c.l.b16 %v81
  %v464 = vunpack.c.h.b16 %v81
  %v465 = vunpack.c.l.b16 %v82
  %v466 = vunpack.c.h.b16 %v82
  %v467 = vunpack.c.l.b16 %v83
  %v468 = vunpack.c.h.b16 %v83
  %v469 = vunpack.c.l.b16 %v84
  %v470 = vunpack.c.h.b16 %v84
  %v471 = vunpack.c.l.b16 %v85
  %v472 = vunpack.c.h.b16 %v85
  %v473 = vunpack.c.l.b16 %v86
  %v474 = vunpack.c.h.b16 %v86
  %v475 = vunpack.c.l.b16 %v87
  %v476 = vunpack.c.h.b16 %v87
  %v477 = vunpack.c.l.b16 %v88
  %v478 = vunpack.c.h.b16 %v88
  %v479 = vunpack.c.l.b16 %v89
  %v480 = vunpack.c.h.b16 %v89
  %v481 = vunpack.c.l.b16 %v90
  %v482 = vunpack.c.h.b16 %v90
  %v483 = vunpack.c.l.b16 %v91
  %v484 = vunpack.c.h.b16 %v91
  %v485 = vunpack.c.l.b16 %v92
  %v486 = vunpack.c.h.b16 %v92
  %v487 = vunpack.c.l.b16 %v93
  %v488 = vunpack.c.h.b16 %v93
  %v489 = vunpack.c.l.b16 %v94
  %v490 = vunpack.c.h.b16 %v94
  %v491 = vunpack.c.l.b16 %v95
  %v492 = vunpack.c.h.b16 %v95
  %v493 = vunpack.c.l.b16 %v96
  %v494 = vunpack.c.h.b16 %v96
  %v495 = vunpack.c.l.b16 %v97
  %v496 = vunpack.c.h.b16 %v97
  %v497 = vunpack.c.l.b16 %v98
  %v498 = vunpack.c.h.b16 %v98
  %v499 = vunpack.c.l.b16 %v99
  %v500 = vunpack.c.h.b16 %v99
  %v501 = vunpack.c.l.b16 %v100
  %v502 = vunpack.c.h.b16 %v100
  %v503 = vunpack.c.l.b16 %v101
  %v504 = vunpack.c.h.b16 %v101
  %v505 = vunpack.c.l.b16 %v102
  %v506 = vunpack.c.h.b16 %v102
  %v507 = vunpack.c.l.b16 %v103
  %v508 = vunpack.c.h.b16 %v103
  %v509 = vunpack.c.l.b16 %v104
  %v510 = vunpack.c.h.b16 %v104
  %v511 = vunpack.c.l.b16 %v105
  %v512 = vunpack.c.h.b16 %v105
  %v513 = vunpack.c.l.b16 %v106
  %v514 = vunpack.c.h.b16 %v106
  %v515 = vunpack.c.l.b16 %v107
  %v516 = vunpack.c.h.b16 %v107
  %v517 = vunpack.c.l.b16 %v108
  %v518 = vunpack.c.h.b16 %v108
  %v519 = vunpack.c.l.b16 %v109
  %v520 = vunpack.c.h.b16 %v109
  %v521 = vunpack.c.l.b16 %v110
  %v522 = vunpack.c.h.b16 %v110
  %v523 = vunpack.c.l.b16 %v111
  %v524 = vunpack.c.h.b16 %v111
  %v525 = vunpack.c.l.b16 %v112
  %v526 = vunpack.c.h.b16 %v112
  %v527 = vunpack.c.l.b16 %v113
  %v528 = vunpack.c.h.b16 %v113
  %v529 = vunpack.c.l.b16 %v114
  %v530 = vunpack.c.h.b16 %v114
  %v531 = vunpack.c.l.b16 %v115
  %v532 = vunpack.c.h.b16 %v115
  %v533 = vunpack.c.l.b16 %v116
  %v534 = vunpack.c.h.b16 %v116
  %v535 = vunpack.c.l.b16 %v117
  %v536 = vunpack.c.h.b16 %v117
  %v537 = vunpack.c.l.b16 %v118
  %v538 = vunpack.c.h.b16 %v118
  %v539 = vunpack.c.l.b16 %v119
  %v540 = vunpack.c.h.b16 %v119
  %v541 = vunpack.c.l.b16 %v120
  %v542 = vunpack.c.h.b16 %v120
  %v543 = vunpack.c.l.b16 %v121
  %v544 = vunpack.c.h.b16 %v121
  %v545 = vunpack.c.l.b16 %v122
  %v546 = vunpack.c.h.b16 %v122
  %v547 = vunpack.c.l.b16 %v123
  %v548 = vunpack.c.h.b16 %v123
  %v549 = vunpack.c.l.b16 %v124
  %v550 = vunpack.c.h.b16 %v124
  %v551 = vunpack.c.l.b16 %v125
  %v552 = vunpack.c.h.b16 %v125
  %v553 = vunpack.c.l.b16 %v126
  %v554 = vunpack.c.h.b16 %v126
  %v555 = vunpack.c.l.b16 %v127
  %v556 = vunpack.c.h.b16 %v127
  %v557 = vunpack.c.l.b16 %v128
  %v558 = vunpack.c.h.b16 %v128
  %v559 = vunpack.c.l.b16 %v129
  %v560 = vunpack.c.h.b16 %v129
  %v561 = vunpack.c.l.b16 %v130
  %v562 = vunpack.c.h.b16 %v130
  %v563 = vunpack.c.l.b16 %v131
  %v564 = vunpack.c.h.b16 %v131
  %v565 = vunpack.c.l.b16 %v132
  %v566 = vunpack.c.h.b16 %v132
  %v567 = vunpack.c.l.b16 %v133
  %v568 = vunpack.c.h.b16 %v133
  %v569 = vunpack.c.l.b16 %v134
  %v570 = vunpack.c.h.b16 %v134
  %v571 = vunpack.c.l.b16 %v135
  %v572 = vunpack.c.h.b16 %v135
  %v573 = vunpack.c.l.b16 %v136
  %v574 = vunpack.c.h.b16 %v136
  %v575 = vunpack.c.l.b16 %v137
  %v576 = vunpack.c.h.b16 %v137
  %v577 = vunpack.c.l.b16 %v138
  %v578 = vunpack.c.h.b16 %v138
  %v579 = vunpack.c.l.b16 %v139
  %v580 = vunpack.c.h.b16 %v139
  %v581 = vunpack.c.l.b16 %v140
  %v582 = vunpack.c.h.b16 %v140
  %v583 = vunpack.c.l.b16 %v141
  %v584 = vunpack.c.h.b16 %v141
  %v585 = vunpack.c.l.b16 %v142
  %v586 = vunpack.c.h.b16 %v142
  %v587 = vunpack.c.l.b16 %v143
  %v588 = vunpack.c.h.b16 %v143
  %v589 = vunpack.c.l.b16 %v144
  %v590 = vunpack.c.h.b16 %v144
  %v591 = vunpack.c.l.b16 %v145
  %v592 = vunpack.c.h.b16 %v145
  %v593 = vunpack.c.l.b16 %v146
  %v594 = vunpack.c.h.b16 %v146
  %v595 = vunpack.c.l.b16 %v147
  %v596 = vunpack.c.h.b16 %v147
  %v597 = vunpack.c.l.b16 %v148
  %v598 = vunpack.c.h.b16 %v148
  %v599 = vunpack.c.l.b16 %v149
  %v600 = vunpack.c.h.b16 %v149
  %v601 = vunpack.c.l.b16 %v150
  %v602 = vunpack.c.h.b16 %v150
  %v603 = vunpack.c.l.b16 %v151
  %v604 = vunpack.c.h.b16 %v151
  %v605 = vunpack.c.l.b16 %v152
  %v606 = vunpack.c.h.b16 %v152
  %v607 = vunpack.c.l.b16 %v153
  %v608 = vunpack.c.h.b16 %v153
  %v609 = vunpack.c.l.b16 %v154
  %v610 = vunpack.c.h.b16 %v154
  %v611 = vunpack.c.l.b16 %v155
  %v612 = vunpack.c.h.b16 %v155
  %v613 = vunpack.c.l.b16 %v156
  %v614 = vunpack.c.h.b16 %v156
  %v615 = vunpack.c.l.b16 %v157
  %v616 = vunpack.c.h.b16 %v157
  %v617 = vunpack.c.l.b16 %v158
  %v618 = vunpack.c.h.b16 %v158
  %v619 = vunpack.c.l.b16 %v159
  %v620 = vunpack.c.h.b16 %v159
  %v621 = vunpack.c.l.b16 %v160
  %v622 = vunpack.c.h.b16 %v160
  %v623 = vunpack.c.l.b16 %v161
  %v624 = vunpack.c.h.b16 %v161
  %v625 = vunpack.c.l.b16 %v162
  %v626 = vunpack.c.h.b16 %v162
  %v627 = vpack.c.b16 %v341, %v339
  %v628 = vpack.c.b16 %v342, %v340
  %v629 = vpack.c.b16 %v345, %v343
  %v630 = vpack.c.b16 %v346, %v344
  %v631 = vpack.c.b16 %v349, %v347
  %v632 = vpack.c.b16 %v350, %v348
  %v633 = vpack.c.b16 %v353, %v351
  %v634 = vpack.c.b16 %v354, %v352
  %v635 = vpack.c.b16 %v357, %v355
  %v636 = vpack.c.b16 %v358, %v356
  %v637 = vpack.c.b16 %v361, %v359
  %v638 = vpack.c.b16 %v362, %v360
  %v639 = vpack.c.b16 %v365, %v363
  %v640 = vpack.c.b16 %v366, %v364
  %v641 = vpack.c.b16 %v369, %v367
  %v642 = vpack.c.b16 %v370, %v368
  %v643 = vpack.c.b16 %v373, %v371
  %v644 = vpack.c.b16 %v374, %v372
  %v645 = vpack.c.b16 %v377, %v375
  %v646 = vpack.c.b16 %v378, %v376
  %v647 = vpack.c.b16 %v381, %v379
  %v648 = vpack.c.b16 %v382, %v380
  %v649 = vpack.c.b16 %v385, %v383
  %v650 = vpack.c.b16 %v386, %v384
  %v651 = vpack.c.b16 %v389, %v387
  %v652 = vpack.c.b16 %v390, %v388
  %v653 = vpack.c.b16 %v393, %v391
  %v654 = vpack.c.b16 %v394, %v392
  %v655 = vpack.c.b16 %v397, %v395
  %v656 = vpack.c.b16 %v398, %v396
  %v657 = vpack.c.b16 %v401, %v399
  %v658 = vpack.c.b16 %v402, %v400
  %v659 = vpack.c.b16 %v405, %v403
  %v660 = vpack.c.b16 %v406, %v404
  %v661 = vpack.c.b16 %v409, %v407
  %v662 = vpack.c.b16 %v410, %v408
  %v663 = vpack.c.b16 %v413, %v411
  %v664 = vpack.c.b16 %v414, %v412
  %v665 = vpack.c.b16 %v417, %v415
  %v666 = vpack.c.b16 %v418, %v416
  %v667 = vpack.c.b16 %v421, %v419
  %v668 = vpack.c.b16 %v422, %v420
  %v669 = vpack.c.b16 %v425, %v423
  %v670 = vpack.c.b16 %v426, %v424
  %v671 = vpack.c.b16 %v429, %v427
  %v672 = vpack.c.b16 %v430, %v428
  %v673 = vpack.c.b16 %v433, %v431
  %v674 = vpack.c.b16 %v434, %v432
  %v675 = vpack.c.b16 %v437, %v435
  %v676 = vpack.c.b16 %v438, %v436
  %v677 = vpack.c.b16 %v441, %v439
  %v678 = vpack.c.b16 %v442, %v440
  %v679 = vpack.c.b16 %v445, %v443
  %v680 = vpack.c.b16 %v446, %v444
  %v681 = vpack.c.b16 %v449, %v447
  %v682 = vpack.c.b16 %v450, %v448
  %v683 = vpack.c.b16 %v453, %v451
  %v684 = vpack.c.b16 %v454, %v452
  %v685 = vpack.c.b16 %v457, %v455
  %v686 = vpack.c.b16 %v458, %v456
  %v687 = vpack.c.b16 %v461, %v459
  %v688 = vpack.c.b16 %v462, %v460
  %v689 = vpack.c.b16 %v465, %v463
  %v690 = vpack.c.b16 %v466, %v464
  %v691 = vpack.c.b16 %v469, %v467
  %v692 = vpack.c.b16 %v470, %v468
  %v693 = vpack.c.b16 %v473, %v471
  %v694 = vpack.c.b16 %v474, %v472
  %v695 = vpack.c.b16 %v477, %v475
  %v696 = vpack.c.b16 %v478, %v476
  %v697 = vpack.c.b16 %v481, %v479
  %v698 = vpack.c.b16 %v482, %v480
  %v699 = vpack.c.b16 %v485, %v483
  %v700 = vpack.c.b16 %v486, %v484
  %v701 = vpack.c.b16 %v489, %v487
  %v702 = vpack.c.b16 %v490, %v488
  %v703 = vpack.c.b16 %v493, %v491
  %v704 = vpack.c.b16 %v494, %v492
  %v705 = vpack.c.b16 %v497, %v495
  %v706 = vpack.c.b16 %v498, %v496
  %v707 = vpack.c.b16 %v501, %v499
  %v708 = vpack.c.b16 %v502, %v500
  %v709 = vpack.c.b16 %v505, %v503
  %v710 = vpack.c.b16 %v506, %v504
  %v711 = vpack.c.b16 %v509, %v507
  %v712 = vpack.c.b16 %v510, %v508
  %v713 = vpack.c.b16 %v513, %v511
  %v714 = vpack.c.b16 %v514, %v512
  %v715 = vpack.c.b16 %v517, %v515
  %v716 = vpack.c.b16 %v518, %v516
  %v717 = vpack.c.b16 %v521, %v519
  %v718 = vpack.c.b16 %v522, %v520
  %v719 = vpack.c.b16 %v525, %v523
  %v720 = vpack.c.b16 %v526, %v524
  %v721 = vpack.c.b16 %v529, %v527
  %v722 = vpack.c.b16 %v530, %v528
  %v723 = vpack.c.b16 %v533, %v531
  %v724 = vpack.c.b16 %v534, %v532
  %v725 = vpack.c.b16 %v537, %v535
  %v726 = vpack.c.b16 %v538, %v536
  %v727 = vpack.c.b16 %v541, %v539
  %v728 = vpack.c.b16 %v542, %v540
  %v729 = vpack.c.b16 %v545, %v543
  %v730 = vpack.c.b16 %v546, %v544
  %v731 = vpack.c.b16 %v549, %v547
  %v732 = vpack.c.b16 %v550, %v548
  %v733 = vpack.c.b16 %v553, %v551
  %v734 = vpack.c.b16 %v554, %v552
  %v735 = vpack.c.b16 %v557, %v555
  %v736 = vpack.c.b16 %v558, %v556
  %v737 = vpack.c.b16 %v561, %v559
  %v738 = vpack.c.b16 %v562, %v560
  %v739 = vpack.c.b16 %v565, %v563
  %v740 = vpack.c.b16 %v566, %v564
  %v741 = vpack.c.b16 %v569, %v567
  %v742 = vpack.c.b16 %v570, %v568
  %v743 = vpack.c.b16 %v573, %v571
  %v744 = vpack.c.b16 %v574, %v572
  %v745 = vpack.c.b16 %v577, %v575
  %v746 = vpack.c.b16 %v578, %v576
  %v747 = vpack.c.b16 %v581, %v579
  %v748 = vpack.c.b16 %v582, %v580
  %v749 = vpack.c.b16 %v585, %v583
  %v750 = vpack.c.b16 %v586, %v584
  %v751 = vpack.c.b16 %v589, %v587
  %v752 = vpack.c.b16 %v590, %v588
  %v753 = vpack.c.b16 %v593, %v591
  %v754 = vpack.c.b16 %v594, %v592
  %v755 = vpack.c.b16 %v597, %v595
  %v756 = vpack.c.b16 %v598, %v596
  %v757 = vpack.c.b16 %v601, %v599
  %v758 = vpack.c.b16 %v602, %v600
  %v759 = vpack.c.b16 %v605, %v603
  %v760 = vpack.c.b16 %v606, %v604
  %v761 = vpack.c.b16 %v609, %v607
  %v762 = vpack.c.b16 %v610, %v608
  %v763 = vpack.c.b16 %v613, %v611
  %v764 = vpack.c.b16 %v614, %v612
  %v765 = vpack.c.b16 %v617, %v615
  %v766 = vpack.c.b16 %v618, %v616
  %v767 = vpack.c.b16 %v621, %v619
  %v768 = vpack.c.b16 %v622, %v620
  %v769 = vpack.c.b16 %v625, %v623
  %v770 = vpack.c.b16 %v626, %v624
  %915 = vmatprep.subr.bf16.mxu0 %v628
  %916 = vmatpush1.bf16.msra.mxu0 %v627
  %917 = vmatprep.subr.bf16.mxu0 %v630
  %918 = vmatpush1.bf16.msra.mxu0 %v629
  %919 = vmatprep.subr.bf16.mxu0 %v632
  %920 = vmatpush1.bf16.msra.mxu0 %v631
  %921 = vmatprep.subr.bf16.mxu0 %v634
  %922 = vmatpush1.bf16.msra.mxu0 %v633
  %923 = vmatprep.subr.bf16.mxu0 %v636
  %924 = vmatpush1.bf16.msra.mxu0 %v635
  %925 = vmatprep.subr.bf16.mxu0 %v638
  %926 = vmatpush1.bf16.msra.mxu0 %v637
  %927 = vmatprep.subr.bf16.mxu0 %v640
  %928 = vmatpush1.bf16.msra.mxu0 %v639
  %929 = vmatprep.subr.bf16.mxu0 %v642
  %930 = vmatpush1.bf16.msra.mxu0 %v641
  %931 = vmatprep.subr.bf16.mxu0 %v644
  %932 = vmatpush1.bf16.msra.mxu0 %v643
  %933 = vmatprep.subr.bf16.mxu0 %v646
  %934 = vmatpush1.bf16.msra.mxu0 %v645
  %935 = vmatprep.subr.bf16.mxu0 %v648
  %936 = vmatpush1.bf16.msra.mxu0 %v647
  %937 = vmatprep.subr.bf16.mxu0 %v650
  %938 = vmatpush1.bf16.msra.mxu0 %v649
  %939 = vmatprep.subr.bf16.mxu0 %v652
  %940 = vmatpush1.bf16.msra.mxu0 %v651
  %941 = vmatprep.subr.bf16.mxu0 %v654
  %942 = vmatpush1.bf16.msra.mxu0 %v653
  %943 = vmatprep.subr.bf16.mxu0 %v656
  %944 = vmatpush1.bf16.msra.mxu0 %v655
  %945 = vmatprep.subr.bf16.mxu0 %v658
  %946 = vmatpush1.bf16.msra.mxu0 %v657
  %947 = vmatprep.mubr.bf16.mxu0 %v178
  %948 = vmatmul.mubr.bf16.gmra.mrb[0].mxu0 %v177
  %v949 = vpop.f32.mrb[0].mxu0
  %v950 = vadd.f32 0.0, %v949
  %v951 = vpop.f32.mrb[0].mxu0
  %v952 = vadd.f32 0.0, %v951
  %v953 = vpop.f32.mrb[0].mxu0
  %v954 = vpop.f32.mrb[0].mxu0
  %955 = vdwg.mxu0
  %956 = vmatprep.subr.bf16.mxu0 %v660
  %957 = vmatpush1.bf16.msra.mxu0 %v659
  %958 = vmatprep.subr.bf16.mxu0 %v662
  %959 = vmatpush1.bf16.msra.mxu0 %v661
  %960 = vmatprep.subr.bf16.mxu0 %v664
  %961 = vmatpush1.bf16.msra.mxu0 %v663
  %962 = vmatprep.subr.bf16.mxu0 %v666
  %963 = vmatpush1.bf16.msra.mxu0 %v665
  %964 = vmatprep.subr.bf16.mxu0 %v668
  %965 = vmatpush1.bf16.msra.mxu0 %v667
  %966 = vmatprep.subr.bf16.mxu0 %v670
  %967 = vmatpush1.bf16.msra.mxu0 %v669
  %968 = vmatprep.subr.bf16.mxu0 %v672
  %969 = vmatpush1.bf16.msra.mxu0 %v671
  %970 = vmatprep.subr.bf16.mxu0 %v674
  %971 = vmatpush1.bf16.msra.mxu0 %v673
  %972 = vmatprep.subr.bf16.mxu0 %v676
  %973 = vmatpush1.bf16.msra.mxu0 %v675
  %974 = vmatprep.subr.bf16.mxu0 %v678
  %975 = vmatpush1.bf16.msra.mxu0 %v677
  %976 = vmatprep.subr.bf16.mxu0 %v680
  %977 = vmatpush1.bf16.msra.mxu0 %v679
  %978 = vmatprep.subr.bf16.mxu0 %v682
  %979 = vmatpush1.bf16.msra.mxu0 %v681
  %980 = vmatprep.subr.bf16.mxu0 %v684
  %981 = vmatpush1.bf16.msra.mxu0 %v683
  %982 = vmatprep.subr.bf16.mxu0 %v686
  %983 = vmatpush1.bf16.msra.mxu0 %v685
  %984 = vmatprep.subr.bf16.mxu0 %v688
  %985 = vmatpush1.bf16.msra.mxu0 %v687
  %986 = vmatprep.subr.bf16.mxu0 %v690
  %987 = vmatpush1.bf16.msra.mxu0 %v689
  %988 = vmatprep.mubr.bf16.mxu0 %v180
  %989 = vmatmul.mubr.bf16.gmra.mrb[0].mxu0 %v179
  %v990 = vpop.f32.mrb[0].mxu0
  %v991 = vadd.f32 %v950, %v990
  %v992 = vpop.f32.mrb[0].mxu0
  %v993 = vadd.f32 %v952, %v992
  %v994 = vpop.f32.mrb[0].mxu0
  %v995 = vpop.f32.mrb[0].mxu0
  %996 = vdwg.mxu0
  %997 = vmatprep.subr.bf16.mxu0 %v692
  %998 = vmatpush1.bf16.msra.mxu0 %v691
  %999 = vmatprep.subr.bf16.mxu0 %v694
  %1000 = vmatpush1.bf16.msra.mxu0 %v693
  %1001 = vmatprep.subr.bf16.mxu0 %v696
  %1002 = vmatpush1.bf16.msra.mxu0 %v695
  %1003 = vmatprep.subr.bf16.mxu0 %v698
  %1004 = vmatpush1.bf16.msra.mxu0 %v697
  %1005 = vmatprep.subr.bf16.mxu0 %v700
  %1006 = vmatpush1.bf16.msra.mxu0 %v699
  %1007 = vmatprep.subr.bf16.mxu0 %v702
  %1008 = vmatpush1.bf16.msra.mxu0 %v701
  %1009 = vmatprep.subr.bf16.mxu0 %v704
  %1010 = vmatpush1.bf16.msra.mxu0 %v703
  %1011 = vmatprep.subr.bf16.mxu0 %v706
  %1012 = vmatpush1.bf16.msra.mxu0 %v705
  %1013 = vmatprep.subr.bf16.mxu0 %v708
  %1014 = vmatpush1.bf16.msra.mxu0 %v707
  %1015 = vmatprep.subr.bf16.mxu0 %v710
  %1016 = vmatpush1.bf16.msra.mxu0 %v709
  %1017 = vmatprep.subr.bf16.mxu0 %v712
  %1018 = vmatpush1.bf16.msra.mxu0 %v711
  %1019 = vmatprep.subr.bf16.mxu0 %v714
  %1020 = vmatpush1.bf16.msra.mxu0 %v713
  %1021 = vmatprep.subr.bf16.mxu0 %v716
  %1022 = vmatpush1.bf16.msra.mxu0 %v715
  %1023 = vmatprep.subr.bf16.mxu0 %v718
  %1024 = vmatpush1.bf16.msra.mxu0 %v717
  %1025 = vmatprep.subr.bf16.mxu0 %v720
  %1026 = vmatpush1.bf16.msra.mxu0 %v719
  %1027 = vmatprep.subr.bf16.mxu0 %v722
  %1028 = vmatpush1.bf16.msra.mxu0 %v721
  %1029 = vmatprep.mubr.bf16.mxu0 %v182
  %1030 = vmatmul.mubr.bf16.gmra.mrb[0].mxu0 %v181
  %v1031 = vpop.f32.mrb[0].mxu0
  %v1032 = vadd.f32 %v991, %v1031
  %v1033 = vpop.f32.mrb[0].mxu0
  %v1034 = vadd.f32 %v993, %v1033
  %v1035 = vpop.f32.mrb[0].mxu0
  %v1036 = vpop.f32.mrb[0].mxu0
  %1037 = vdwg.mxu0
  %1038 = vmatprep.subr.bf16.mxu0 %v724
  %1039 = vmatpush1.bf16.msra.mxu0 %v723
  %1040 = vmatprep.subr.bf16.mxu0 %v726
  %1041 = vmatpush1.bf16.msra.mxu0 %v725
  %1042 = vmatprep.subr.bf16.mxu0 %v728
  %1043 = vmatpush1.bf16.msra.mxu0 %v727
  %1044 = vmatprep.subr.bf16.mxu0 %v730
  %1045 = vmatpush1.bf16.msra.mxu0 %v729
  %1046 = vmatprep.subr.bf16.mxu0 %v732
  %1047 = vmatpush1.bf16.msra.mxu0 %v731
  %1048 = vmatprep.subr.bf16.mxu0 %v734
  %1049 = vmatpush1.bf16.msra.mxu0 %v733
  %1050 = vmatprep.subr.bf16.mxu0 %v736
  %1051 = vmatpush1.bf16.msra.mxu0 %v735
  %1052 = vmatprep.subr.bf16.mxu0 %v738
  %1053 = vmatpush1.bf16.msra.mxu0 %v737
  %1054 = vmatprep.subr.bf16.mxu0 %v740
  %1055 = vmatpush1.bf16.msra.mxu0 %v739
  %1056 = vmatprep.subr.bf16.mxu0 %v742
  %1057 = vmatpush1.bf16.msra.mxu0 %v741
  %1058 = vmatprep.subr.bf16.mxu0 %v744
  %1059 = vmatpush1.bf16.msra.mxu0 %v743
  %1060 = vmatprep.subr.bf16.mxu0 %v746
  %1061 = vmatpush1.bf16.msra.mxu0 %v745
  %1062 = vmatprep.subr.bf16.mxu0 %v748
  %1063 = vmatpush1.bf16.msra.mxu0 %v747
  %1064 = vmatprep.subr.bf16.mxu0 %v750
  %1065 = vmatpush1.bf16.msra.mxu0 %v749
  %1066 = vmatprep.subr.bf16.mxu0 %v752
  %1067 = vmatpush1.bf16.msra.mxu0 %v751
  %1068 = vmatprep.subr.bf16.mxu0 %v754
  %1069 = vmatpush1.bf16.msra.mxu0 %v753
  %1070 = vmatprep.mubr.bf16.mxu0 %v184
  %1071 = vmatmul.mubr.bf16.gmra.mrb[0].mxu0 %v183
  %v1072 = vpop.f32.mrb[0].mxu0
  %v1073 = vadd.f32 %v1032, %v1072
  %v1074 = vpop.f32.mrb[0].mxu0
  %v1075 = vadd.f32 %v1034, %v1074
  %v1076 = vpop.f32.mrb[0].mxu0
  %v1077 = vpop.f32.mrb[0].mxu0
  %1078 = vdwg.mxu0
  %1079 = vmatprep.subr.bf16.mxu0 %v756
  %1080 = vmatpush1.bf16.msra.mxu0 %v755
  %1081 = vmatprep.subr.bf16.mxu0 %v758
  %1082 = vmatpush1.bf16.msra.mxu0 %v757
  %1083 = vmatprep.subr.bf16.mxu0 %v760
  %1084 = vmatpush1.bf16.msra.mxu0 %v759
  %1085 = vmatprep.subr.bf16.mxu0 %v762
  %1086 = vmatpush1.bf16.msra.mxu0 %v761
  %1087 = vmatprep.subr.bf16.mxu0 %v764
  %1088 = vmatpush1.bf16.msra.mxu0 %v763
  %1089 = vmatprep.subr.bf16.mxu0 %v766
  %1090 = vmatpush1.bf16.msra.mxu0 %v765
  %1091 = vmatprep.subr.bf16.mxu0 %v768
  %1092 = vmatpush1.bf16.msra.mxu0 %v767
  %1093 = vmatprep.subr.bf16.mxu0 %v770
  %1094 = vmatpush1.bf16.msra.mxu0 %v769
  %1095 = vmatprep.subr.bf16.mxu0 0
  %1096 = vmatpush1.bf16.msra.mxu0 0
  %1097 = vmatprep.subr.bf16.mxu0 0
  %1098 = vmatpush1.bf16.msra.mxu0 0
  %1099 = vmatprep.subr.bf16.mxu0 0
  %1100 = vmatpush1.bf16.msra.mxu0 0
  %1101 = vmatprep.subr.bf16.mxu0 0
  %1102 = vmatpush1.bf16.msra.mxu0 0
  %1103 = vmatprep.subr.bf16.mxu0 0
  %1104 = vmatpush1.bf16.msra.mxu0 0
  %1105 = vmatprep.subr.bf16.mxu0 0
  %1106 = vmatpush1.bf16.msra.mxu0 0
  %1107 = vmatprep.subr.bf16.mxu0 0
  %1108 = vmatpush1.bf16.msra.mxu0 0
  %1109 = vmatprep.subr.bf16.mxu0 0
  %1110 = vmatpush1.bf16.msra.mxu0 0
  %1111 = vmatprep.mubr.bf16.mxu0 0
  %1112 = vmatmul.mubr.bf16.gmra.mrb[0].mxu0 %v185
  %v1113 = vpop.f32.mrb[0].mxu0
  %v1114 = vadd.f32 %v1073, %v1113
  %v1115 = vpop.f32.mrb[0].mxu0
  %v1116 = vadd.f32 %v1075, %v1115
  %v1117 = vpop.f32.mrb[0].mxu0
  %v1118 = vpop.f32.mrb[0].mxu0
  %1119 = vdwg.mxu0
  %1120 = vst [vmem:[%s2] sm:$0xff] %v1114
  %1121 = vst [vmem:[%s2 + $0x8] sm:$0xff] %v1116
  %v1122 = vrot.slane %v1114, 4
  %v1123 = vadd.f32 %v1114, %v1122
  %v1124 = vrot.slane %v1123, 2
  %v1125 = vadd.f32 %v1123, %v1124
  %v1126 = vrot.slane %v1125, 1
  %v1127 = vadd.f32 %v1125, %v1126
  %v1128 = vrot.slane %v1116, 4
  %v1129 = vadd.f32 %v1116, %v1128
  %v1130 = vrot.slane %v1129, 2
  %v1131 = vadd.f32 %v1129, %v1130
  %v1132 = vrot.slane %v1131, 1
  %v1133 = vadd.f32 %v1131, %v1132
  %v1134 = vmul.f32 %v1114, %v1114
  %v1135 = vmul.f32 %v1116, %v1116
  %v1136 = vrot.slane %v1134, 4
  %v1137 = vadd.f32 %v1134, %v1136
  %v1138 = vrot.slane %v1137, 2
  %v1139 = vadd.f32 %v1137, %v1138
  %v1140 = vrot.slane %v1139, 1
  %v1141 = vadd.f32 %v1139, %v1140
  %v1142 = vrot.slane %v1135, 4
  %v1143 = vadd.f32 %v1135, %v1142
  %v1144 = vrot.slane %v1143, 2
  %v1145 = vadd.f32 %v1143, %v1144
  %v1146 = vrot.slane %v1145, 1
  %v1147 = vadd.f32 %v1145, %v1146
  %vm1148 = vcmask 1040384
  %v1149 = vsel %vm1148, %v1127, %v1141
  %v1150 = vsel %vm1148, %v1133, %v1147
  %v1153 = vcombine.low %v1149, %v1150
  %v1155 = vunpack.c.l.s4 1983009808
  %v1156 = vunpack.c.0.s8 %v1155
  %v1157 = vlaneseq
  %v1158 = vshrl.u32 %v1157, 7
  %v1159 = vsub.s32 %v1156, %v1158
  %v1160 = vrot.slane %v1153, %v1159
  %1162 = vst [vmem:[%s3] sm:$0xf] %v1160
  // Predicated region
  $region10: #{autoencoder_forward.23} parent=0 // pred_check
    _
  $region11: #{autoencoder_forward.23} parent=0 // pred_check_branch
    %1164 = sbr.rel (0) target = $region13
  $region12: #{autoencoder_forward.23} parent=0 // pred_region
    _
  $region13: #{autoencoder_forward.23} parent=0 // pred_fallthru
    _
  // Predicated region
  $region14: #{autoencoder_forward.23} parent=0 // pred_check
    _
  $region15: #{autoencoder_forward.23} parent=0 // pred_check_branch
    %1166 = sbr.rel (0) target = $region17
  $region16: #{autoencoder_forward.23} parent=0 // pred_region
    _
  $region17: #{autoencoder_forward.23} parent=0 // pred_fallthru
    _
  // Predicated region
  $region18: #{autoencoder_forward.23} parent=0 // pred_check
    _
  $region19: #{autoencoder_forward.23} parent=0 // pred_check_branch
    %1168 = sbr.rel (0) target = $region21
  $region20: #{autoencoder_forward.23} parent=0 // pred_region
    _
  $region21: #{autoencoder_forward.23} parent=0 // pred_fallthru
    _
  // Predicated region
  $region22: #{autoencoder_forward.23} parent=0 // pred_check
    _
  $region23: #{autoencoder_forward.23} parent=0 // pred_check_branch
    %1170 = sbr.rel (0) target = $region25
  $region24: #{autoencoder_forward.23} parent=0 // pred_region
    _
  $region25: #{autoencoder_forward.23} parent=0 // pred_fallthru
    _

// kernel: autoencoder_forward.25
$region0: #{autoencoder_forward.25}
  #allocation0 [shape = 'u32[]', space=smem, size = 0x4, offset = 0x4, fixed_abs, tag = 'smem constant byte address 0x4 - core index']
  #allocation1 [shape = 'u32[144,128]{1,0:T(1,128)}', space=vmem, size = 0x12000, scoped, tag = 'internal scratch']
  %s0 = inlined_call_operand.vmem [shape: bf16[8,2304], index: 0, kind: input, shape index: {}]
  %s1 = inlined_call_operand.vmem [shape: bf16[2304,512], index: 1, kind: input, shape index: {}]
  %s2 = inlined_call_operand.vmem [shape: f32[8,512], index: 2, kind: output, shape index: {0}]
  %s3 = inlined_call_operand.vmem [shape: f32[1,2,512], index: 3, kind: output, shape index: {1}]
  %4 = xla_tuple %s2, %s3
  %s5 = sld [smem:[#allocation0]]
  $region26: #{autoencoder_forward.25} parent=0
    _
  %s7 = ssub.s32 1, %s5
  %s8 = scalar_select 0, %s7, %s5
  // Predicated region
  $region2: #{autoencoder_forward.25} parent=0 // pred_check
    _
  $region3: #{autoencoder_forward.25} parent=0 // pred_check_branch
    %10 = sbr.rel (0) target = $region5
  $region4: #{autoencoder_forward.25} parent=0 // pred_region
    _
  $region5: #{autoencoder_forward.25} parent=0 // pred_fallthru
    _
  // Predicated region
  $region6: #{autoencoder_forward.25} parent=0 // pred_check
    _
  $region7: #{autoencoder_forward.25} parent=0 // pred_check_branch
    %12 = sbr.rel (0) target = $region9
  $region8: #{autoencoder_forward.25} parent=0 // pred_region
    _
  $region9: #{autoencoder_forward.25} parent=0 // pred_fallthru
    _
  %v13 = vld [vmem:[%s0] sm:$0xff]
  %v14 = vld [vmem:[%s0 + $0x8] sm:$0xff]
  %v15 = vld [vmem:[%s0 + $0x10] sm:$0xff]
  %v16 = vld [vmem:[%s0 + $0x18] sm:$0xff]
  %v17 = vld [vmem:[%s0 + $0x20] sm:$0xff]
  %v18 = vld [vmem:[%s0 + $0x28] sm:$0xff]
  %v19 = vld [vmem:[%s0 + $0x30] sm:$0xff]
  %v20 = vld [vmem:[%s0 + $0x38] sm:$0xff]
  %v21 = vld [vmem:[%s0 + $0x40] sm:$0xff]
  %v22 = vld [vmem:[%s1] sm:$0xff]
  %v23 = vld [vmem:[%s1 + $0x8] sm:$0xff]
  %v24 = vld [vmem:[%s1 + $0x10] sm:$0xff]
  %v25 = vld [vmem:[%s1 + $0x18] sm:$0xff]
  %v26 = vld [vmem:[%s1 + $0x20] sm:$0xff]
  %v27 = vld [vmem:[%s1 + $0x28] sm:$0xff]
  %v28 = vld [vmem:[%s1 + $0x30] sm:$0xff]
  %v29 = vld [vmem:[%s1 + $0x38] sm:$0xff]
  %v30 = vld [vmem:[%s1 + $0x40] sm:$0xff]
  %v31 = vld [vmem:[%s1 + $0x48] sm:$0xff]
  %v32 = vld [vmem:[%s1 + $0x50] sm:$0xff]
  %v33 = vld [vmem:[%s1 + $0x58] sm:$0xff]
  %v34 = vld [vmem:[%s1 + $0x60] sm:$0xff]
  %v35 = vld [vmem:[%s1 + $0x68] sm:$0xff]
  %v36 = vld [vmem:[%s1 + $0x70] sm:$0xff]
  %v37 = vld [vmem:[%s1 + $0x78] sm:$0xff]
  %v38 = vld [vmem:[%s1 + $0x80] sm:$0xff]
  %v39 = vld [vmem:[%s1 + $0x88] sm:$0xff]
  %v40 = vld [vmem:[%s1 + $0x90] sm:$0xff]
  %v41 = vld [vmem:[%s1 + $0x98] sm:$0xff]
  %v42 = vld [vmem:[%s1 + $0xa0] sm:$0xff]
  %v43 = vld [vmem:[%s1 + $0xa8] sm:$0xff]
  %v44 = vld [vmem:[%s1 + $0xb0] sm:$0xff]
  %v45 = vld [vmem:[%s1 + $0xb8] sm:$0xff]
  %v46 = vld [vmem:[%s1 + $0xc0] sm:$0xff]
  %v47 = vld [vmem:[%s1 + $0xc8] sm:$0xff]
  %v48 = vld [vmem:[%s1 + $0xd0] sm:$0xff]
  %v49 = vld [vmem:[%s1 + $0xd8] sm:$0xff]
  %v50 = vld [vmem:[%s1 + $0xe0] sm:$0xff]
  %v51 = vld [vmem:[%s1 + $0xe8] sm:$0xff]
  %v52 = vld [vmem:[%s1 + $0xf0] sm:$0xff]
  %v53 = vld [vmem:[%s1 + $0xf8] sm:$0xff]
  %v54 = vld [vmem:[%s1 + $0x100] sm:$0xff]
  %v55 = vld [vmem:[%s1 + $0x108] sm:$0xff]
  %v56 = vld [vmem:[%s1 + $0x110] sm:$0xff]
  %v57 = vld [vmem:[%s1 + $0x118] sm:$0xff]
  %v58 = vld [vmem:[%s1 + $0x120] sm:$0xff]
  %v59 = vld [vmem:[%s1 + $0x128] sm:$0xff]
  %v60 = vld [vmem:[%s1 + $0x130] sm:$0xff]
  %v61 = vld [vmem:[%s1 + $0x138] sm:$0xff]
  %v62 = vld [vmem:[%s1 + $0x140] sm:$0xff]
  %v63 = vld [vmem:[%s1 + $0x148] sm:$0xff]
  %v64 = vld [vmem:[%s1 + $0x150] sm:$0xff]
  %v65 = vld [vmem:[%s1 + $0x158] sm:$0xff]
  %v66 = vld [vmem:[%s1 + $0x160] sm:$0xff]
  %v67 = vld [vmem:[%s1 + $0x168] sm:$0xff]
  %v68 = vld [vmem:[%s1 + $0x170] sm:$0xff]
  %v69 = vld [vmem:[%s1 + $0x178] sm:$0xff]
  %v70 = vld [vmem:[%s1 + $0x180] sm:$0xff]
  %v71 = vld [vmem:[%s1 + $0x188] sm:$0xff]
  %v72 = vld [vmem:[%s1 + $0x190] sm:$0xff]
  %v73 = vld [vmem:[%s1 + $0x198] sm:$0xff]
  %v74 = vld [vmem:[%s1 + $0x1a0] sm:$0xff]
  %v75 = vld [vmem:[%s1 + $0x1a8] sm:$0xff]
  %v76 = vld [vmem:[%s1 + $0x1b0] sm:$0xff]
  %v77 = vld [vmem:[%s1 + $0x1b8] sm:$0xff]
  %v78 = vld [vmem:[%s1 + $0x1c0] sm:$0xff]
  %v79 = vld [vmem:[%s1 + $0x1c8] sm:$0xff]
  %v80 = vld [vmem:[%s1 + $0x1d0] sm:$0xff]
  %v81 = vld [vmem:[%s1 + $0x1d8] sm:$0xff]
  %v82 = vld [vmem:[%s1 + $0x1e0] sm:$0xff]
  %v83 = vld [vmem:[%s1 + $0x1e8] sm:$0xff]
  %v84 = vld [vmem:[%s1 + $0x1f0] sm:$0xff]
  %v85 = vld [vmem:[%s1 + $0x1f8] sm:$0xff]
  %v86 = vld [vmem:[%s1 + $0x200] sm:$0xff]
  %v87 = vld [vmem:[%s1 + $0x208] sm:$0xff]
  %v88 = vld [vmem:[%s1 + $0x210] sm:$0xff]
  %v89 = vld [vmem:[%s1 + $0x218] sm:$0xff]
  %v90 = vld [vmem:[%s1 + $0x220] sm:$0xff]
  %v91 = vld [vmem:[%s1 + $0x228] sm:$0xff]
  %v92 = vld [vmem:[%s1 + $0x230] sm:$0xff]
  %v93 = vld [vmem:[%s1 + $0x238] sm:$0xff]
  %v94 = vld [vmem:[%s1 + $0x240] sm:$0xff]
  %v95 = vld [vmem:[%s1 + $0x248] sm:$0xff]
  %v96 = vld [vmem:[%s1 + $0x250] sm:$0xff]
  %v97 = vld [vmem:[%s1 + $0x258] sm:$0xff]
  %v98 = vld [vmem:[%s1 + $0x260] sm:$0xff]
  %v99 = vld [vmem:[%s1 + $0x268] sm:$0xff]
  %v100 = vld [vmem:[%s1 + $0x270] sm:$0xff]
  %v101 = vld [vmem:[%s1 + $0x278] sm:$0xff]
  %v102 = vld [vmem:[%s1 + $0x280] sm:$0xff]
  %v103 = vld [vmem:[%s1 + $0x288] sm:$0xff]
  %v104 = vld [vmem:[%s1 + $0x290] sm:$0xff]
  %v105 = vld [vmem:[%s1 + $0x298] sm:$0xff]
  %v106 = vld [vmem:[%s1 + $0x2a0] sm:$0xff]
  %v107 = vld [vmem:[%s1 + $0x2a8] sm:$0xff]
  %v108 = vld [vmem:[%s1 + $0x2b0] sm:$0xff]
  %v109 = vld [vmem:[%s1 + $0x2b8] sm:$0xff]
  %v110 = vld [vmem:[%s1 + $0x2c0] sm:$0xff]
  %v111 = vld [vmem:[%s1 + $0x2c8] sm:$0xff]
  %v112 = vld [vmem:[%s1 + $0x2d0] sm:$0xff]
  %v113 = vld [vmem:[%s1 + $0x2d8] sm:$0xff]
  %v114 = vld [vmem:[%s1 + $0x2e0] sm:$0xff]
  %v115 = vld [vmem:[%s1 + $0x2e8] sm:$0xff]
  %v116 = vld [vmem:[%s1 + $0x2f0] sm:$0xff]
  %v117 = vld [vmem:[%s1 + $0x2f8] sm:$0xff]
  %v118 = vld [vmem:[%s1 + $0x300] sm:$0xff]
  %v119 = vld [vmem:[%s1 + $0x308] sm:$0xff]
  %v120 = vld [vmem:[%s1 + $0x310] sm:$0xff]
  %v121 = vld [vmem:[%s1 + $0x318] sm:$0xff]
  %v122 = vld [vmem:[%s1 + $0x320] sm:$0xff]
  %v123 = vld [vmem:[%s1 + $0x328] sm:$0xff]
  %v124 = vld [vmem:[%s1 + $0x330] sm:$0xff]
  %v125 = vld [vmem:[%s1 + $0x338] sm:$0xff]
  %v126 = vld [vmem:[%s1 + $0x340] sm:$0xff]
  %v127 = vld [vmem:[%s1 + $0x348] sm:$0xff]
  %v128 = vld [vmem:[%s1 + $0x350] sm:$0xff]
  %v129 = vld [vmem:[%s1 + $0x358] sm:$0xff]
  %v130 = vld [vmem:[%s1 + $0x360] sm:$0xff]
  %v131 = vld [vmem:[%s1 + $0x368] sm:$0xff]
  %v132 = vld [vmem:[%s1 + $0x370] sm:$0xff]
  %v133 = vld [vmem:[%s1 + $0x378] sm:$0xff]
  %v134 = vld [vmem:[%s1 + $0x380] sm:$0xff]
  %v135 = vld [vmem:[%s1 + $0x388] sm:$0xff]
  %v136 = vld [vmem:[%s1 + $0x390] sm:$0xff]
  %v137 = vld [vmem:[%s1 + $0x398] sm:$0xff]
  %v138 = vld [vmem:[%s1 + $0x3a0] sm:$0xff]
  %v139 = vld [vmem:[%s1 + $0x3a8] sm:$0xff]
  %v140 = vld [vmem:[%s1 + $0x3b0] sm:$0xff]
  %v141 = vld [vmem:[%s1 + $0x3b8] sm:$0xff]
  %v142 = vld [vmem:[%s1 + $0x3c0] sm:$0xff]
  %v143 = vld [vmem:[%s1 + $0x3c8] sm:$0xff]
  %v144 = vld [vmem:[%s1 + $0x3d0] sm:$0xff]
  %v145 = vld [vmem:[%s1 + $0x3d8] sm:$0xff]
  %v146 = vld [vmem:[%s1 + $0x3e0] sm:$0xff]
  %v147 = vld [vmem:[%s1 + $0x3e8] sm:$0xff]
  %v148 = vld [vmem:[%s1 + $0x3f0] sm:$0xff]
  %v149 = vld [vmem:[%s1 + $0x3f8] sm:$0xff]
  %v150 = vld [vmem:[%s1 + $0x400] sm:$0xff]
  %v151 = vld [vmem:[%s1 + $0x408] sm:$0xff]
  %v152 = vld [vmem:[%s1 + $0x410] sm:$0xff]
  %v153 = vld [vmem:[%s1 + $0x418] sm:$0xff]
  %v154 = vld [vmem:[%s1 + $0x420] sm:$0xff]
  %v155 = vld [vmem:[%s1 + $0x428] sm:$0xff]
  %v156 = vld [vmem:[%s1 + $0x430] sm:$0xff]
  %v157 = vld [vmem:[%s1 + $0x438] sm:$0xff]
  %v158 = vld [vmem:[%s1 + $0x440] sm:$0xff]
  %v159 = vld [vmem:[%s1 + $0x448] sm:$0xff]
  %v160 = vld [vmem:[%s1 + $0x450] sm:$0xff]
  %v161 = vld [vmem:[%s1 + $0x458] sm:$0xff]
  %v162 = vld [vmem:[%s1 + $0x460] sm:$0xff]
  %v163 = vld [vmem:[%s1 + $0x468] sm:$0xff]
  %v164 = vld [vmem:[%s1 + $0x470] sm:$0xff]
  %v165 = vld [vmem:[%s1 + $0x478] sm:$0xff]
  %v166 = vld [vmem:[%s1 + $0x480] sm:$0xff]
  %v167 = vld [vmem:[%s1 + $0x488] sm:$0xff]
  %v168 = vld [vmem:[%s1 + $0x490] sm:$0xff]
  %v169 = vld [vmem:[%s1 + $0x498] sm:$0xff]
  %v170 = vld [vmem:[%s1 + $0x4a0] sm:$0xff]
  %v171 = vld [vmem:[%s1 + $0x4a8] sm:$0xff]
  %v172 = vld [vmem:[%s1 + $0x4b0] sm:$0xff]
  %v173 = vld [vmem:[%s1 + $0x4b8] sm:$0xff]
  %v174 = vld [vmem:[%s1 + $0x4c0] sm:$0xff]
  %v175 = vld [vmem:[%s1 + $0x4c8] sm:$0xff]
  %v176 = vld [vmem:[%s1 + $0x4d0] sm:$0xff]
  %v177 = vld [vmem:[%s1 + $0x4d8] sm:$0xff]
  %v178 = vld [vmem:[%s1 + $0x4e0] sm:$0xff]
  %v179 = vld [vmem:[%s1 + $0x4e8] sm:$0xff]
  %v180 = vld [vmem:[%s1 + $0x4f0] sm:$0xff]
  %v181 = vld [vmem:[%s1 + $0x4f8] sm:$0xff]
  %v182 = vld [vmem:[%s1 + $0x500] sm:$0xff]
  %v183 = vld [vmem:[%s1 + $0x508] sm:$0xff]
  %v184 = vld [vmem:[%s1 + $0x510] sm:$0xff]
  %v185 = vld [vmem:[%s1 + $0x518] sm:$0xff]
  %v186 = vld [vmem:[%s1 + $0x520] sm:$0xff]
  %v187 = vld [vmem:[%s1 + $0x528] sm:$0xff]
  %v188 = vld [vmem:[%s1 + $0x530] sm:$0xff]
  %v189 = vld [vmem:[%s1 + $0x538] sm:$0xff]
  %v190 = vld [vmem:[%s1 + $0x540] sm:$0xff]
  %v191 = vld [vmem:[%s1 + $0x548] sm:$0xff]
  %v192 = vld [vmem:[%s1 + $0x550] sm:$0xff]
  %v193 = vld [vmem:[%s1 + $0x558] sm:$0xff]
  %v194 = vld [vmem:[%s1 + $0x560] sm:$0xff]
  %v195 = vld [vmem:[%s1 + $0x568] sm:$0xff]
  %v196 = vld [vmem:[%s1 + $0x570] sm:$0xff]
  %v197 = vld [vmem:[%s1 + $0x578] sm:$0xff]
  %v198 = vld [vmem:[%s1 + $0x580] sm:$0xff]
  %v199 = vld [vmem:[%s1 + $0x588] sm:$0xff]
  %v200 = vld [vmem:[%s1 + $0x590] sm:$0xff]
  %v201 = vld [vmem:[%s1 + $0x598] sm:$0xff]
  %v202 = vld [vmem:[%s1 + $0x5a0] sm:$0xff]
  %v203 = vld [vmem:[%s1 + $0x5a8] sm:$0xff]
  %v204 = vld [vmem:[%s1 + $0x5b0] sm:$0xff]
  %v205 = vld [vmem:[%s1 + $0x5b8] sm:$0xff]
  %v206 = vld [vmem:[%s1 + $0x5c0] sm:$0xff]
  %v207 = vld [vmem:[%s1 + $0x5c8] sm:$0xff]
  %v208 = vld [vmem:[%s1 + $0x5d0] sm:$0xff]
  %v209 = vld [vmem:[%s1 + $0x5d8] sm:$0xff]
  %v210 = vld [vmem:[%s1 + $0x5e0] sm:$0xff]
  %v211 = vld [vmem:[%s1 + $0x5e8] sm:$0xff]
  %v212 = vld [vmem:[%s1 + $0x5f0] sm:$0xff]
  %v213 = vld [vmem:[%s1 + $0x5f8] sm:$0xff]
  %v214 = vld [vmem:[%s1 + $0x600] sm:$0xff]
  %v215 = vld [vmem:[%s1 + $0x608] sm:$0xff]
  %v216 = vld [vmem:[%s1 + $0x610] sm:$0xff]
  %v217 = vld [vmem:[%s1 + $0x618] sm:$0xff]
  %v218 = vld [vmem:[%s1 + $0x620] sm:$0xff]
  %v219 = vld [vmem:[%s1 + $0x628] sm:$0xff]
  %v220 = vld [vmem:[%s1 + $0x630] sm:$0xff]
  %v221 = vld [vmem:[%s1 + $0x638] sm:$0xff]
  %v222 = vld [vmem:[%s1 + $0x640] sm:$0xff]
  %v223 = vld [vmem:[%s1 + $0x648] sm:$0xff]
  %v224 = vld [vmem:[%s1 + $0x650] sm:$0xff]
  %v225 = vld [vmem:[%s1 + $0x658] sm:$0xff]
  %v226 = vld [vmem:[%s1 + $0x660] sm:$0xff]
  %v227 = vld [vmem:[%s1 + $0x668] sm:$0xff]
  %v228 = vld [vmem:[%s1 + $0x670] sm:$0xff]
  %v229 = vld [vmem:[%s1 + $0x678] sm:$0xff]
  %v230 = vld [vmem:[%s1 + $0x680] sm:$0xff]
  %v231 = vld [vmem:[%s1 + $0x688] sm:$0xff]
  %v232 = vld [vmem:[%s1 + $0x690] sm:$0xff]
  %v233 = vld [vmem:[%s1 + $0x698] sm:$0xff]
  %v234 = vld [vmem:[%s1 + $0x6a0] sm:$0xff]
  %v235 = vld [vmem:[%s1 + $0x6a8] sm:$0xff]
  %v236 = vld [vmem:[%s1 + $0x6b0] sm:$0xff]
  %v237 = vld [vmem:[%s1 + $0x6b8] sm:$0xff]
  %v238 = vld [vmem:[%s1 + $0x6c0] sm:$0xff]
  %v239 = vld [vmem:[%s1 + $0x6c8] sm:$0xff]
  %v240 = vld [vmem:[%s1 + $0x6d0] sm:$0xff]
  %v241 = vld [vmem:[%s1 + $0x6d8] sm:$0xff]
  %v242 = vld [vmem:[%s1 + $0x6e0] sm:$0xff]
  %v243 = vld [vmem:[%s1 + $0x6e8] sm:$0xff]
  %v244 = vld [vmem:[%s1 + $0x6f0] sm:$0xff]
  %v245 = vld [vmem:[%s1 + $0x6f8] sm:$0xff]
  %v246 = vld [vmem:[%s1 + $0x700] sm:$0xff]
  %v247 = vld [vmem:[%s1 + $0x708] sm:$0xff]
  %v248 = vld [vmem:[%s1 + $0x710] sm:$0xff]
  %v249 = vld [vmem:[%s1 + $0x718] sm:$0xff]
  %v250 = vld [vmem:[%s1 + $0x720] sm:$0xff]
  %v251 = vld [vmem:[%s1 + $0x728] sm:$0xff]
  %v252 = vld [vmem:[%s1 + $0x730] sm:$0xff]
  %v253 = vld [vmem:[%s1 + $0x738] sm:$0xff]
  %v254 = vld [vmem:[%s1 + $0x740] sm:$0xff]
  %v255 = vld [vmem:[%s1 + $0x748] sm:$0xff]
  %v256 = vld [vmem:[%s1 + $0x750] sm:$0xff]
  %v257 = vld [vmem:[%s1 + $0x758] sm:$0xff]
  %v258 = vld [vmem:[%s1 + $0x760] sm:$0xff]
  %v259 = vld [vmem:[%s1 + $0x768] sm:$0xff]
  %v260 = vld [vmem:[%s1 + $0x770] sm:$0xff]
  %v261 = vld [vmem:[%s1 + $0x778] sm:$0xff]
  %v262 = vld [vmem:[%s1 + $0x780] sm:$0xff]
  %v263 = vld [vmem:[%s1 + $0x788] sm:$0xff]
  %v264 = vld [vmem:[%s1 + $0x790] sm:$0xff]
  %v265 = vld [vmem:[%s1 + $0x798] sm:$0xff]
  %v266 = vld [vmem:[%s1 + $0x7a0] sm:$0xff]
  %v267 = vld [vmem:[%s1 + $0x7a8] sm:$0xff]
  %v268 = vld [vmem:[%s1 + $0x7b0] sm:$0xff]
  %v269 = vld [vmem:[%s1 + $0x7b8] sm:$0xff]
  %v270 = vld [vmem:[%s1 + $0x7c0] sm:$0xff]
  %v271 = vld [vmem:[%s1 + $0x7c8] sm:$0xff]
  %v272 = vld [vmem:[%s1 + $0x7d0] sm:$0xff]
  %v273 = vld [vmem:[%s1 + $0x7d8] sm:$0xff]
  %v274 = vld [vmem:[%s1 + $0x7e0] sm:$0xff]
  %v275 = vld [vmem:[%s1 + $0x7e8] sm:$0xff]
  %v276 = vld [vmem:[%s1 + $0x7f0] sm:$0xff]
  %v277 = vld [vmem:[%s1 + $0x7f8] sm:$0xff]
  %v278 = vld [vmem:[%s1 + $0x800] sm:$0xff]
  %v279 = vld [vmem:[%s1 + $0x808] sm:$0xff]
  %v280 = vld [vmem:[%s1 + $0x810] sm:$0xff]
  %v281 = vld [vmem:[%s1 + $0x818] sm:$0xff]
  %v282 = vld [vmem:[%s1 + $0x820] sm:$0xff]
  %v283 = vld [vmem:[%s1 + $0x828] sm:$0xff]
  %v284 = vld [vmem:[%s1 + $0x830] sm:$0xff]
  %v285 = vld [vmem:[%s1 + $0x838] sm:$0xff]
  %v286 = vld [vmem:[%s1 + $0x840] sm:$0xff]
  %v287 = vld [vmem:[%s1 + $0x848] sm:$0xff]
  %v288 = vld [vmem:[%s1 + $0x850] sm:$0xff]
  %v289 = vld [vmem:[%s1 + $0x858] sm:$0xff]
  %v290 = vld [vmem:[%s1 + $0x860] sm:$0xff]
  %v291 = vld [vmem:[%s1 + $0x868] sm:$0xff]
  %v292 = vld [vmem:[%s1 + $0x870] sm:$0xff]
  %v293 = vld [vmem:[%s1 + $0x878] sm:$0xff]
  %v294 = vld [vmem:[%s1 + $0x880] sm:$0xff]
  %v295 = vld [vmem:[%s1 + $0x888] sm:$0xff]
  %v296 = vld [vmem:[%s1 + $0x890] sm:$0xff]
  %v297 = vld [vmem:[%s1 + $0x898] sm:$0xff]
  %v298 = vld [vmem:[%s1 + $0x8a0] sm:$0xff]
  %v299 = vld [vmem:[%s1 + $0x8a8] sm:$0xff]
  %v300 = vld [vmem:[%s1 + $0x8b0] sm:$0xff]
  %v301 = vld [vmem:[%s1 + $0x8b8] sm:$0xff]
  %v302 = vld [vmem:[%s1 + $0x8c0] sm:$0xff]
  %v303 = vld [vmem:[%s1 + $0x8c8] sm:$0xff]
  %v304 = vld [vmem:[%s1 + $0x8d0] sm:$0xff]
  %v305 = vld [vmem:[%s1 + $0x8d8] sm:$0xff]
  %v306 = vld [vmem:[%s1 + $0x8e0] sm:$0xff]
  %v307 = vld [vmem:[%s1 + $0x8e8] sm:$0xff]
  %v308 = vld [vmem:[%s1 + $0x8f0] sm:$0xff]
  %v309 = vld [vmem:[%s1 + $0x8f8] sm:$0xff]
  %v310 = vld [vmem:[%s1 + $0x900] sm:$0xff]
  %v311 = vld [vmem:[%s1 + $0x908] sm:$0xff]
  %v312 = vld [vmem:[%s1 + $0x910] sm:$0xff]
  %v313 = vld [vmem:[%s1 + $0x918] sm:$0xff]
  %v314 = vld [vmem:[%s1 + $0x920] sm:$0xff]
  %v315 = vld [vmem:[%s1 + $0x928] sm:$0xff]
  %v316 = vld [vmem:[%s1 + $0x930] sm:$0xff]
  %v317 = vld [vmem:[%s1 + $0x938] sm:$0xff]
  %v318 = vld [vmem:[%s1 + $0x940] sm:$0xff]
  %v319 = vld [vmem:[%s1 + $0x948] sm:$0xff]
  %v320 = vld [vmem:[%s1 + $0x950] sm:$0xff]
  %v321 = vld [vmem:[%s1 + $0x958] sm:$0xff]
  %v322 = vld [vmem:[%s1 + $0x960] sm:$0xff]
  %v323 = vld [vmem:[%s1 + $0x968] sm:$0xff]
  %v324 = vld [vmem:[%s1 + $0x970] sm:$0xff]
  %v325 = vld [vmem:[%s1 + $0x978] sm:$0xff]
  %v326 = vld [vmem:[%s1 + $0x980] sm:$0xff]
  %v327 = vld [vmem:[%s1 + $0x988] sm:$0xff]
  %v328 = vld [vmem:[%s1 + $0x990] sm:$0xff]
  %v329 = vld [vmem:[%s1 + $0x998] sm:$0xff]
  %v330 = vld [vmem:[%s1 + $0x9a0] sm:$0xff]
  %v331 = vld [vmem:[%s1 + $0x9a8] sm:$0xff]
  %v332 = vld [vmem:[%s1 + $0x9b0] sm:$0xff]
  %v333 = vld [vmem:[%s1 + $0x9b8] sm:$0xff]
  %v334 = vld [vmem:[%s1 + $0x9c0] sm:$0xff]
  %v335 = vld [vmem:[%s1 + $0x9c8] sm:$0xff]
  %v336 = vld [vmem:[%s1 + $0x9d0] sm:$0xff]
  %v337 = vld [vmem:[%s1 + $0x9d8] sm:$0xff]
  %v338 = vld [vmem:[%s1 + $0x9e0] sm:$0xff]
  %v339 = vld [vmem:[%s1 + $0x9e8] sm:$0xff]
  %v340 = vld [vmem:[%s1 + $0x9f0] sm:$0xff]
  %v341 = vld [vmem:[%s1 + $0x9f8] sm:$0xff]
  %v342 = vld [vmem:[%s1 + $0xa00] sm:$0xff]
  %v343 = vld [vmem:[%s1 + $0xa08] sm:$0xff]
  %v344 = vld [vmem:[%s1 + $0xa10] sm:$0xff]
  %v345 = vld [vmem:[%s1 + $0xa18] sm:$0xff]
  %v346 = vld [vmem:[%s1 + $0xa20] sm:$0xff]
  %v347 = vld [vmem:[%s1 + $0xa28] sm:$0xff]
  %v348 = vld [vmem:[%s1 + $0xa30] sm:$0xff]
  %v349 = vld [vmem:[%s1 + $0xa38] sm:$0xff]
  %v350 = vld [vmem:[%s1 + $0xa40] sm:$0xff]
  %v351 = vld [vmem:[%s1 + $0xa48] sm:$0xff]
  %v352 = vld [vmem:[%s1 + $0xa50] sm:$0xff]
  %v353 = vld [vmem:[%s1 + $0xa58] sm:$0xff]
  %v354 = vld [vmem:[%s1 + $0xa60] sm:$0xff]
  %v355 = vld [vmem:[%s1 + $0xa68] sm:$0xff]
  %v356 = vld [vmem:[%s1 + $0xa70] sm:$0xff]
  %v357 = vld [vmem:[%s1 + $0xa78] sm:$0xff]
  %v358 = vld [vmem:[%s1 + $0xa80] sm:$0xff]
  %v359 = vld [vmem:[%s1 + $0xa88] sm:$0xff]
  %v360 = vld [vmem:[%s1 + $0xa90] sm:$0xff]
  %v361 = vld [vmem:[%s1 + $0xa98] sm:$0xff]
  %v362 = vld [vmem:[%s1 + $0xaa0] sm:$0xff]
  %v363 = vld [vmem:[%s1 + $0xaa8] sm:$0xff]
  %v364 = vld [vmem:[%s1 + $0xab0] sm:$0xff]
  %v365 = vld [vmem:[%s1 + $0xab8] sm:$0xff]
  %v366 = vld [vmem:[%s1 + $0xac0] sm:$0xff]
  %v367 = vld [vmem:[%s1 + $0xac8] sm:$0xff]
  %v368 = vld [vmem:[%s1 + $0xad0] sm:$0xff]
  %v369 = vld [vmem:[%s1 + $0xad8] sm:$0xff]
  %v370 = vld [vmem:[%s1 + $0xae0] sm:$0xff]
  %v371 = vld [vmem:[%s1 + $0xae8] sm:$0xff]
  %v372 = vld [vmem:[%s1 + $0xaf0] sm:$0xff]
  %v373 = vld [vmem:[%s1 + $0xaf8] sm:$0xff]
  %v374 = vld [vmem:[%s1 + $0xb00] sm:$0xff]
  %v375 = vld [vmem:[%s1 + $0xb08] sm:$0xff]
  %v376 = vld [vmem:[%s1 + $0xb10] sm:$0xff]
  %v377 = vld [vmem:[%s1 + $0xb18] sm:$0xff]
  %v378 = vld [vmem:[%s1 + $0xb20] sm:$0xff]
  %v379 = vld [vmem:[%s1 + $0xb28] sm:$0xff]
  %v380 = vld [vmem:[%s1 + $0xb30] sm:$0xff]
  %v381 = vld [vmem:[%s1 + $0xb38] sm:$0xff]
  %v382 = vld [vmem:[%s1 + $0xb40] sm:$0xff]
  %v383 = vld [vmem:[%s1 + $0xb48] sm:$0xff]
  %v384 = vld [vmem:[%s1 + $0xb50] sm:$0xff]
  %v385 = vld [vmem:[%s1 + $0xb58] sm:$0xff]
  %v386 = vld [vmem:[%s1 + $0xb60] sm:$0xff]
  %v387 = vld [vmem:[%s1 + $0xb68] sm:$0xff]
  %v388 = vld [vmem:[%s1 + $0xb70] sm:$0xff]
  %v389 = vld [vmem:[%s1 + $0xb78] sm:$0xff]
  %v390 = vld [vmem:[%s1 + $0xb80] sm:$0xff]
  %v391 = vld [vmem:[%s1 + $0xb88] sm:$0xff]
  %v392 = vld [vmem:[%s1 + $0xb90] sm:$0xff]
  %v393 = vld [vmem:[%s1 + $0xb98] sm:$0xff]
  %v394 = vld [vmem:[%s1 + $0xba0] sm:$0xff]
  %v395 = vld [vmem:[%s1 + $0xba8] sm:$0xff]
  %v396 = vld [vmem:[%s1 + $0xbb0] sm:$0xff]
  %v397 = vld [vmem:[%s1 + $0xbb8] sm:$0xff]
  %v398 = vld [vmem:[%s1 + $0xbc0] sm:$0xff]
  %v399 = vld [vmem:[%s1 + $0xbc8] sm:$0xff]
  %v400 = vld [vmem:[%s1 + $0xbd0] sm:$0xff]
  %v401 = vld [vmem:[%s1 + $0xbd8] sm:$0xff]
  %v402 = vld [vmem:[%s1 + $0xbe0] sm:$0xff]
  %v403 = vld [vmem:[%s1 + $0xbe8] sm:$0xff]
  %v404 = vld [vmem:[%s1 + $0xbf0] sm:$0xff]
  %v405 = vld [vmem:[%s1 + $0xbf8] sm:$0xff]
  %v406 = vld [vmem:[%s1 + $0xc00] sm:$0xff]
  %v407 = vld [vmem:[%s1 + $0xc08] sm:$0xff]
  %v408 = vld [vmem:[%s1 + $0xc10] sm:$0xff]
  %v409 = vld [vmem:[%s1 + $0xc18] sm:$0xff]
  %v410 = vld [vmem:[%s1 + $0xc20] sm:$0xff]
  %v411 = vld [vmem:[%s1 + $0xc28] sm:$0xff]
  %v412 = vld [vmem:[%s1 + $0xc30] sm:$0xff]
  %v413 = vld [vmem:[%s1 + $0xc38] sm:$0xff]
  %v414 = vld [vmem:[%s1 + $0xc40] sm:$0xff]
  %v415 = vld [vmem:[%s1 + $0xc48] sm:$0xff]
  %v416 = vld [vmem:[%s1 + $0xc50] sm:$0xff]
  %v417 = vld [vmem:[%s1 + $0xc58] sm:$0xff]
  %v418 = vld [vmem:[%s1 + $0xc60] sm:$0xff]
  %v419 = vld [vmem:[%s1 + $0xc68] sm:$0xff]
  %v420 = vld [vmem:[%s1 + $0xc70] sm:$0xff]
  %v421 = vld [vmem:[%s1 + $0xc78] sm:$0xff]
  %v422 = vld [vmem:[%s1 + $0xc80] sm:$0xff]
  %v423 = vld [vmem:[%s1 + $0xc88] sm:$0xff]
  %v424 = vld [vmem:[%s1 + $0xc90] sm:$0xff]
  %v425 = vld [vmem:[%s1 + $0xc98] sm:$0xff]
  %v426 = vld [vmem:[%s1 + $0xca0] sm:$0xff]
  %v427 = vld [vmem:[%s1 + $0xca8] sm:$0xff]
  %v428 = vld [vmem:[%s1 + $0xcb0] sm:$0xff]
  %v429 = vld [vmem:[%s1 + $0xcb8] sm:$0xff]
  %v430 = vld [vmem:[%s1 + $0xcc0] sm:$0xff]
  %v431 = vld [vmem:[%s1 + $0xcc8] sm:$0xff]
  %v432 = vld [vmem:[%s1 + $0xcd0] sm:$0xff]
  %v433 = vld [vmem:[%s1 + $0xcd8] sm:$0xff]
  %v434 = vld [vmem:[%s1 + $0xce0] sm:$0xff]
  %v435 = vld [vmem:[%s1 + $0xce8] sm:$0xff]
  %v436 = vld [vmem:[%s1 + $0xcf0] sm:$0xff]
  %v437 = vld [vmem:[%s1 + $0xcf8] sm:$0xff]
  %v438 = vld [vmem:[%s1 + $0xd00] sm:$0xff]
  %v439 = vld [vmem:[%s1 + $0xd08] sm:$0xff]
  %v440 = vld [vmem:[%s1 + $0xd10] sm:$0xff]
  %v441 = vld [vmem:[%s1 + $0xd18] sm:$0xff]
  %v442 = vld [vmem:[%s1 + $0xd20] sm:$0xff]
  %v443 = vld [vmem:[%s1 + $0xd28] sm:$0xff]
  %v444 = vld [vmem:[%s1 + $0xd30] sm:$0xff]
  %v445 = vld [vmem:[%s1 + $0xd38] sm:$0xff]
  %v446 = vld [vmem:[%s1 + $0xd40] sm:$0xff]
  %v447 = vld [vmem:[%s1 + $0xd48] sm:$0xff]
  %v448 = vld [vmem:[%s1 + $0xd50] sm:$0xff]
  %v449 = vld [vmem:[%s1 + $0xd58] sm:$0xff]
  %v450 = vld [vmem:[%s1 + $0xd60] sm:$0xff]
  %v451 = vld [vmem:[%s1 + $0xd68] sm:$0xff]
  %v452 = vld [vmem:[%s1 + $0xd70] sm:$0xff]
  %v453 = vld [vmem:[%s1 + $0xd78] sm:$0xff]
  %v454 = vld [vmem:[%s1 + $0xd80] sm:$0xff]
  %v455 = vld [vmem:[%s1 + $0xd88] sm:$0xff]
  %v456 = vld [vmem:[%s1 + $0xd90] sm:$0xff]
  %v457 = vld [vmem:[%s1 + $0xd98] sm:$0xff]
  %v458 = vld [vmem:[%s1 + $0xda0] sm:$0xff]
  %v459 = vld [vmem:[%s1 + $0xda8] sm:$0xff]
  %v460 = vld [vmem:[%s1 + $0xdb0] sm:$0xff]
  %v461 = vld [vmem:[%s1 + $0xdb8] sm:$0xff]
  %v462 = vld [vmem:[%s1 + $0xdc0] sm:$0xff]
  %v463 = vld [vmem:[%s1 + $0xdc8] sm:$0xff]
  %v464 = vld [vmem:[%s1 + $0xdd0] sm:$0xff]
  %v465 = vld [vmem:[%s1 + $0xdd8] sm:$0xff]
  %v466 = vld [vmem:[%s1 + $0xde0] sm:$0xff]
  %v467 = vld [vmem:[%s1 + $0xde8] sm:$0xff]
  %v468 = vld [vmem:[%s1 + $0xdf0] sm:$0xff]
  %v469 = vld [vmem:[%s1 + $0xdf8] sm:$0xff]
  %v470 = vld [vmem:[%s1 + $0xe00] sm:$0xff]
  %v471 = vld [vmem:[%s1 + $0xe08] sm:$0xff]
  %v472 = vld [vmem:[%s1 + $0xe10] sm:$0xff]
  %v473 = vld [vmem:[%s1 + $0xe18] sm:$0xff]
  %v474 = vld [vmem:[%s1 + $0xe20] sm:$0xff]
  %v475 = vld [vmem:[%s1 + $0xe28] sm:$0xff]
  %v476 = vld [vmem:[%s1 + $0xe30] sm:$0xff]
  %v477 = vld [vmem:[%s1 + $0xe38] sm:$0xff]
  %v478 = vld [vmem:[%s1 + $0xe40] sm:$0xff]
  %v479 = vld [vmem:[%s1 + $0xe48] sm:$0xff]
  %v480 = vld [vmem:[%s1 + $0xe50] sm:$0xff]
  %v481 = vld [vmem:[%s1 + $0xe58] sm:$0xff]
  %v482 = vld [vmem:[%s1 + $0xe60] sm:$0xff]
  %v483 = vld [vmem:[%s1 + $0xe68] sm:$0xff]
  %v484 = vld [vmem:[%s1 + $0xe70] sm:$0xff]
  %v485 = vld [vmem:[%s1 + $0xe78] sm:$0xff]
  %v486 = vld [vmem:[%s1 + $0xe80] sm:$0xff]
  %v487 = vld [vmem:[%s1 + $0xe88] sm:$0xff]
  %v488 = vld [vmem:[%s1 + $0xe90] sm:$0xff]
  %v489 = vld [vmem:[%s1 + $0xe98] sm:$0xff]
  %v490 = vld [vmem:[%s1 + $0xea0] sm:$0xff]
  %v491 = vld [vmem:[%s1 + $0xea8] sm:$0xff]
  %v492 = vld [vmem:[%s1 + $0xeb0] sm:$0xff]
  %v493 = vld [vmem:[%s1 + $0xeb8] sm:$0xff]
  %v494 = vld [vmem:[%s1 + $0xec0] sm:$0xff]
  %v495 = vld [vmem:[%s1 + $0xec8] sm:$0xff]
  %v496 = vld [vmem:[%s1 + $0xed0] sm:$0xff]
  %v497 = vld [vmem:[%s1 + $0xed8] sm:$0xff]
  %v498 = vld [vmem:[%s1 + $0xee0] sm:$0xff]
  %v499 = vld [vmem:[%s1 + $0xee8] sm:$0xff]
  %v500 = vld [vmem:[%s1 + $0xef0] sm:$0xff]
  %v501 = vld [vmem:[%s1 + $0xef8] sm:$0xff]
  %v502 = vld [vmem:[%s1 + $0xf00] sm:$0xff]
  %v503 = vld [vmem:[%s1 + $0xf08] sm:$0xff]
  %v504 = vld [vmem:[%s1 + $0xf10] sm:$0xff]
  %v505 = vld [vmem:[%s1 + $0xf18] sm:$0xff]
  %v506 = vld [vmem:[%s1 + $0xf20] sm:$0xff]
  %v507 = vld [vmem:[%s1 + $0xf28] sm:$0xff]
  %v508 = vld [vmem:[%s1 + $0xf30] sm:$0xff]
  %v509 = vld [vmem:[%s1 + $0xf38] sm:$0xff]
  %v510 = vld [vmem:[%s1 + $0xf40] sm:$0xff]
  %v511 = vld [vmem:[%s1 + $0xf48] sm:$0xff]
  %v512 = vld [vmem:[%s1 + $0xf50] sm:$0xff]
  %v513 = vld [vmem:[%s1 + $0xf58] sm:$0xff]
  %v514 = vld [vmem:[%s1 + $0xf60] sm:$0xff]
  %v515 = vld [vmem:[%s1 + $0xf68] sm:$0xff]
  %v516 = vld [vmem:[%s1 + $0xf70] sm:$0xff]
  %v517 = vld [vmem:[%s1 + $0xf78] sm:$0xff]
  %v518 = vld [vmem:[%s1 + $0xf80] sm:$0xff]
  %v519 = vld [vmem:[%s1 + $0xf88] sm:$0xff]
  %v520 = vld [vmem:[%s1 + $0xf90] sm:$0xff]
  %v521 = vld [vmem:[%s1 + $0xf98] sm:$0xff]
  %v522 = vld [vmem:[%s1 + $0xfa0] sm:$0xff]
  %v523 = vld [vmem:[%s1 + $0xfa8] sm:$0xff]
  %v524 = vld [vmem:[%s1 + $0xfb0] sm:$0xff]
  %v525 = vld [vmem:[%s1 + $0xfb8] sm:$0xff]
  %v526 = vld [vmem:[%s1 + $0xfc0] sm:$0xff]
  %v527 = vld [vmem:[%s1 + $0xfc8] sm:$0xff]
  %v528 = vld [vmem:[%s1 + $0xfd0] sm:$0xff]
  %v529 = vld [vmem:[%s1 + $0xfd8] sm:$0xff]
  %v530 = vld [vmem:[%s1 + $0xfe0] sm:$0xff]
  %v531 = vld [vmem:[%s1 + $0xfe8] sm:$0xff]
  %v532 = vld [vmem:[%s1 + $0xff0] sm:$0xff]
  %v533 = vld [vmem:[%s1 + $0xff8] sm:$0xff]
  %v534 = vld [vmem:[%s1 + $0x1000] sm:$0xff]
  %v535 = vld [vmem:[%s1 + $0x1008] sm:$0xff]
  %v536 = vld [vmem:[%s1 + $0x1010] sm:$0xff]
  %v537 = vld [vmem:[%s1 + $0x1018] sm:$0xff]
  %v538 = vld [vmem:[%s1 + $0x1020] sm:$0xff]
  %v539 = vld [vmem:[%s1 + $0x1028] sm:$0xff]
  %v540 = vld [vmem:[%s1 + $0x1030] sm:$0xff]
  %v541 = vld [vmem:[%s1 + $0x1038] sm:$0xff]
  %v542 = vld [vmem:[%s1 + $0x1040] sm:$0xff]
  %v543 = vld [vmem:[%s1 + $0x1048] sm:$0xff]
  %v544 = vld [vmem:[%s1 + $0x1050] sm:$0xff]
  %v545 = vld [vmem:[%s1 + $0x1058] sm:$0xff]
  %v546 = vld [vmem:[%s1 + $0x1060] sm:$0xff]
  %v547 = vld [vmem:[%s1 + $0x1068] sm:$0xff]
  %v548 = vld [vmem:[%s1 + $0x1070] sm:$0xff]
  %v549 = vld [vmem:[%s1 + $0x1078] sm:$0xff]
  %v550 = vld [vmem:[%s1 + $0x1080] sm:$0xff]
  %v551 = vld [vmem:[%s1 + $0x1088] sm:$0xff]
  %v552 = vld [vmem:[%s1 + $0x1090] sm:$0xff]
  %v553 = vld [vmem:[%s1 + $0x1098] sm:$0xff]
  %v554 = vld [vmem:[%s1 + $0x10a0] sm:$0xff]
  %v555 = vld [vmem:[%s1 + $0x10a8] sm:$0xff]
  %v556 = vld [vmem:[%s1 + $0x10b0] sm:$0xff]
  %v557 = vld [vmem:[%s1 + $0x10b8] sm:$0xff]
  %v558 = vld [vmem:[%s1 + $0x10c0] sm:$0xff]
  %v559 = vld [vmem:[%s1 + $0x10c8] sm:$0xff]
  %v560 = vld [vmem:[%s1 + $0x10d0] sm:$0xff]
  %v561 = vld [vmem:[%s1 + $0x10d8] sm:$0xff]
  %v562 = vld [vmem:[%s1 + $0x10e0] sm:$0xff]
  %v563 = vld [vmem:[%s1 + $0x10e8] sm:$0xff]
  %v564 = vld [vmem:[%s1 + $0x10f0] sm:$0xff]
  %v565 = vld [vmem:[%s1 + $0x10f8] sm:$0xff]
  %v566 = vld [vmem:[%s1 + $0x1100] sm:$0xff]
  %v567 = vld [vmem:[%s1 + $0x1108] sm:$0xff]
  %v568 = vld [vmem:[%s1 + $0x1110] sm:$0xff]
  %v569 = vld [vmem:[%s1 + $0x1118] sm:$0xff]
  %v570 = vld [vmem:[%s1 + $0x1120] sm:$0xff]
  %v571 = vld [vmem:[%s1 + $0x1128] sm:$0xff]
  %v572 = vld [vmem:[%s1 + $0x1130] sm:$0xff]
  %v573 = vld [vmem:[%s1 + $0x1138] sm:$0xff]
  %v574 = vld [vmem:[%s1 + $0x1140] sm:$0xff]
  %v575 = vld [vmem:[%s1 + $0x1148] sm:$0xff]
  %v576 = vld [vmem:[%s1 + $0x1150] sm:$0xff]
  %v577 = vld [vmem:[%s1 + $0x1158] sm:$0xff]
  %v578 = vld [vmem:[%s1 + $0x1160] sm:$0xff]
  %v579 = vld [vmem:[%s1 + $0x1168] sm:$0xff]
  %v580 = vld [vmem:[%s1 + $0x1170] sm:$0xff]
  %v581 = vld [vmem:[%s1 + $0x1178] sm:$0xff]
  %v582 = vld [vmem:[%s1 + $0x1180] sm:$0xff]
  %v583 = vld [vmem:[%s1 + $0x1188] sm:$0xff]
  %v584 = vld [vmem:[%s1 + $0x1190] sm:$0xff]
  %v585 = vld [vmem:[%s1 + $0x1198] sm:$0xff]
  %v586 = vld [vmem:[%s1 + $0x11a0] sm:$0xff]
  %v587 = vld [vmem:[%s1 + $0x11a8] sm:$0xff]
  %v588 = vld [vmem:[%s1 + $0x11b0] sm:$0xff]
  %v589 = vld [vmem:[%s1 + $0x11b8] sm:$0xff]
  %v590 = vld [vmem:[%s1 + $0x11c0] sm:$0xff]
  %v591 = vld [vmem:[%s1 + $0x11c8] sm:$0xff]
  %v592 = vld [vmem:[%s1 + $0x11d0] sm:$0xff]
  %v593 = vld [vmem:[%s1 + $0x11d8] sm:$0xff]
  %v594 = vld [vmem:[%s1 + $0x11e0] sm:$0xff]
  %v595 = vld [vmem:[%s1 + $0x11e8] sm:$0xff]
  %v596 = vld [vmem:[%s1 + $0x11f0] sm:$0xff]
  %v597 = vld [vmem:[%s1 + $0x11f8] sm:$0xff]
  %v607 = vunpack.c.l.b16 %v13
  %v608 = vunpack.c.h.b16 %v13
  %v609 = vunpack.c.l.b16 %v14
  %v610 = vunpack.c.h.b16 %v14
  %v611 = vunpack.c.l.b16 %v15
  %v612 = vunpack.c.h.b16 %v15
  %v613 = vunpack.c.l.b16 %v16
  %v614 = vunpack.c.h.b16 %v16
  %v615 = vunpack.c.l.b16 %v17
  %v616 = vunpack.c.h.b16 %v17
  %v617 = vunpack.c.l.b16 %v18
  %v618 = vunpack.c.h.b16 %v18
  %v619 = vunpack.c.l.b16 %v19
  %v620 = vunpack.c.h.b16 %v19
  %v621 = vunpack.c.l.b16 %v20
  %v622 = vunpack.c.h.b16 %v20
  %v623 = vunpack.c.l.b16 %v21
  %v624 = vunpack.c.h.b16 %v21
  %v625 = vpack.c.b16 %v607, %v607
  %v626 = vpack.c.b16 %v608, %v608
  %v627 = vpack.c.b16 %v609, %v609
  %v628 = vpack.c.b16 %v610, %v610
  %v629 = vpack.c.b16 %v611, %v611
  %v630 = vpack.c.b16 %v612, %v612
  %v631 = vpack.c.b16 %v613, %v613
  %v632 = vpack.c.b16 %v614, %v614
  %v633 = vpack.c.b16 %v615, %v615
  %v634 = vpack.c.b16 %v616, %v616
  %v635 = vpack.c.b16 %v617, %v617
  %v636 = vpack.c.b16 %v618, %v618
  %v637 = vpack.c.b16 %v619, %v619
  %v638 = vpack.c.b16 %v620, %v620
  %v639 = vpack.c.b16 %v621, %v621
  %v640 = vpack.c.b16 %v622, %v622
  %v641 = vpack.c.b16 %v623, %v623
  %v642 = vpack.c.b16 %v624, %v624
  %v1237 = vunpack.c.l.b16 %v22
  %v1238 = vunpack.c.h.b16 %v22
  %v1239 = vunpack.c.l.b16 %v23
  %v1240 = vunpack.c.h.b16 %v23
  %v1241 = vunpack.c.l.b16 %v24
  %v1242 = vunpack.c.h.b16 %v24
  %v1243 = vunpack.c.l.b16 %v25
  %v1244 = vunpack.c.h.b16 %v25
  %v1245 = vunpack.c.l.b16 %v26
  %v1246 = vunpack.c.h.b16 %v26
  %v1247 = vunpack.c.l.b16 %v27
  %v1248 = vunpack.c.h.b16 %v27
  %v1249 = vunpack.c.l.b16 %v28
  %v1250 = vunpack.c.h.b16 %v28
  %v1251 = vunpack.c.l.b16 %v29
  %v1252 = vunpack.c.h.b16 %v29
  %v1253 = vunpack.c.l.b16 %v30
  %v1254 = vunpack.c.h.b16 %v30
  %v1255 = vunpack.c.l.b16 %v31
  %v1256 = vunpack.c.h.b16 %v31
  %v1257 = vunpack.c.l.b16 %v32
  %v1258 = vunpack.c.h.b16 %v32
  %v1259 = vunpack.c.l.b16 %v33
  %v1260 = vunpack.c.h.b16 %v33
  %v1261 = vunpack.c.l.b16 %v34
  %v1262 = vunpack.c.h.b16 %v34
  %v1263 = vunpack.c.l.b16 %v35
  %v1264 = vunpack.c.h.b16 %v35
  %v1265 = vunpack.c.l.b16 %v36
  %v1266 = vunpack.c.h.b16 %v36
  %v1267 = vunpack.c.l.b16 %v37
  %v1268 = vunpack.c.h.b16 %v37
  %v1269 = vunpack.c.l.b16 %v38
  %v1270 = vunpack.c.h.b16 %v38
  %v1271 = vunpack.c.l.b16 %v39
  %v1272 = vunpack.c.h.b16 %v39
  %v1273 = vunpack.c.l.b16 %v40
  %v1274 = vunpack.c.h.b16 %v40
  %v1275 = vunpack.c.l.b16 %v41
  %v1276 = vunpack.c.h.b16 %v41
  %v1277 = vunpack.c.l.b16 %v42
  %v1278 = vunpack.c.h.b16 %v42
  %v1279 = vunpack.c.l.b16 %v43
  %v1280 = vunpack.c.h.b16 %v43
  %v1281 = vunpack.c.l.b16 %v44
  %v1282 = vunpack.c.h.b16 %v44
  %v1283 = vunpack.c.l.b16 %v45
  %v1284 = vunpack.c.h.b16 %v45
  %v1285 = vunpack.c.l.b16 %v46
  %v1286 = vunpack.c.h.b16 %v46
  %v1287 = vunpack.c.l.b16 %v47
  %v1288 = vunpack.c.h.b16 %v47
  %v1289 = vunpack.c.l.b16 %v48
  %v1290 = vunpack.c.h.b16 %v48
  %v1291 = vunpack.c.l.b16 %v49
  %v1292 = vunpack.c.h.b16 %v49
  %v1293 = vunpack.c.l.b16 %v50
  %v1294 = vunpack.c.h.b16 %v50
  %v1295 = vunpack.c.l.b16 %v51
  %v1296 = vunpack.c.h.b16 %v51
  %v1297 = vunpack.c.l.b16 %v52
  %v1298 = vunpack.c.h.b16 %v52
  %v1299 = vunpack.c.l.b16 %v53
  %v1300 = vunpack.c.h.b16 %v53
  %v1301 = vunpack.c.l.b16 %v54
  %v1302 = vunpack.c.h.b16 %v54
  %v1303 = vunpack.c.l.b16 %v55
  %v1304 = vunpack.c.h.b16 %v55
  %v1305 = vunpack.c.l.b16 %v56
  %v1306 = vunpack.c.h.b16 %v56
  %v1307 = vunpack.c.l.b16 %v57
  %v1308 = vunpack.c.h.b16 %v57
  %v1309 = vunpack.c.l.b16 %v58
  %v1310 = vunpack.c.h.b16 %v58
  %v1311 = vunpack.c.l.b16 %v59
  %v1312 = vunpack.c.h.b16 %v59
  %v1313 = vunpack.c.l.b16 %v60
  %v1314 = vunpack.c.h.b16 %v60
  %v1315 = vunpack.c.l.b16 %v61
  %v1316 = vunpack.c.h.b16 %v61
  %v1317 = vunpack.c.l.b16 %v62
  %v1318 = vunpack.c.h.b16 %v62
  %v1319 = vunpack.c.l.b16 %v63
  %v1320 = vunpack.c.h.b16 %v63
  %v1321 = vunpack.c.l.b16 %v64
  %v1322 = vunpack.c.h.b16 %v64
  %v1323 = vunpack.c.l.b16 %v65
  %v1324 = vunpack.c.h.b16 %v65
  %v1325 = vunpack.c.l.b16 %v66
  %v1326 = vunpack.c.h.b16 %v66
  %v1327 = vunpack.c.l.b16 %v67
  %v1328 = vunpack.c.h.b16 %v67
  %v1329 = vunpack.c.l.b16 %v68
  %v1330 = vunpack.c.h.b16 %v68
  %v1331 = vunpack.c.l.b16 %v69
  %v1332 = vunpack.c.h.b16 %v69
  %v1333 = vunpack.c.l.b16 %v70
  %v1334 = vunpack.c.h.b16 %v70
  %v1335 = vunpack.c.l.b16 %v71
  %v1336 = vunpack.c.h.b16 %v71
  %v1337 = vunpack.c.l.b16 %v72
  %v1338 = vunpack.c.h.b16 %v72
  %v1339 = vunpack.c.l.b16 %v73
  %v1340 = vunpack.c.h.b16 %v73
  %v1341 = vunpack.c.l.b16 %v74
  %v1342 = vunpack.c.h.b16 %v74
  %v1343 = vunpack.c.l.b16 %v75
  %v1344 = vunpack.c.h.b16 %v75
  %v1345 = vunpack.c.l.b16 %v76
  %v1346 = vunpack.c.h.b16 %v76
  %v1347 = vunpack.c.l.b16 %v77
  %v1348 = vunpack.c.h.b16 %v77
  %v1349 = vunpack.c.l.b16 %v78
  %v1350 = vunpack.c.h.b16 %v78
  %v1351 = vunpack.c.l.b16 %v79
  %v1352 = vunpack.c.h.b16 %v79
  %v1353 = vunpack.c.l.b16 %v80
  %v1354 = vunpack.c.h.b16 %v80
  %v1355 = vunpack.c.l.b16 %v81
  %v1356 = vunpack.c.h.b16 %v81
  %v1357 = vunpack.c.l.b16 %v82
  %v1358 = vunpack.c.h.b16 %v82
  %v1359 = vunpack.c.l.b16 %v83
  %v1360 = vunpack.c.h.b16 %v83
  %v1361 = vunpack.c.l.b16 %v84
  %v1362 = vunpack.c.h.b16 %v84
  %v1363 = vunpack.c.l.b16 %v85
  %v1364 = vunpack.c.h.b16 %v85
  %v1365 = vunpack.c.l.b16 %v86
  %v1366 = vunpack.c.h.b16 %v86
  %v1367 = vunpack.c.l.b16 %v87
  %v1368 = vunpack.c.h.b16 %v87
  %v1369 = vunpack.c.l.b16 %v88
  %v1370 = vunpack.c.h.b16 %v88
  %v1371 = vunpack.c.l.b16 %v89
  %v1372 = vunpack.c.h.b16 %v89
  %v1373 = vunpack.c.l.b16 %v90
  %v1374 = vunpack.c.h.b16 %v90
  %v1375 = vunpack.c.l.b16 %v91
  %v1376 = vunpack.c.h.b16 %v91
  %v1377 = vunpack.c.l.b16 %v92
  %v1378 = vunpack.c.h.b16 %v92
  %v1379 = vunpack.c.l.b16 %v93
  %v1380 = vunpack.c.h.b16 %v93
  %v1381 = vunpack.c.l.b16 %v94
  %v1382 = vunpack.c.h.b16 %v94
  %v1383 = vunpack.c.l.b16 %v95
  %v1384 = vunpack.c.h.b16 %v95
  %v1385 = vunpack.c.l.b16 %v96
  %v1386 = vunpack.c.h.b16 %v96
  %v1387 = vunpack.c.l.b16 %v97
  %v1388 = vunpack.c.h.b16 %v97
  %v1389 = vunpack.c.l.b16 %v98
  %v1390 = vunpack.c.h.b16 %v98
  %v1391 = vunpack.c.l.b16 %v99
  %v1392 = vunpack.c.h.b16 %v99
  %v1393 = vunpack.c.l.b16 %v100
  %v1394 = vunpack.c.h.b16 %v100
  %v1395 = vunpack.c.l.b16 %v101
  %v1396 = vunpack.c.h.b16 %v101
  %v1397 = vunpack.c.l.b16 %v102
  %v1398 = vunpack.c.h.b16 %v102
  %v1399 = vunpack.c.l.b16 %v103
  %v1400 = vunpack.c.h.b16 %v103
  %v1401 = vunpack.c.l.b16 %v104
  %v1402 = vunpack.c.h.b16 %v104
  %v1403 = vunpack.c.l.b16 %v105
  %v1404 = vunpack.c.h.b16 %v105
  %v1405 = vunpack.c.l.b16 %v106
  %v1406 = vunpack.c.h.b16 %v106
  %v1407 = vunpack.c.l.b16 %v107
  %v1408 = vunpack.c.h.b16 %v107
  %v1409 = vunpack.c.l.b16 %v108
  %v1410 = vunpack.c.h.b16 %v108
  %v1411 = vunpack.c.l.b16 %v109
  %v1412 = vunpack.c.h.b16 %v109
  %v1413 = vunpack.c.l.b16 %v110
  %v1414 = vunpack.c.h.b16 %v110
  %v1415 = vunpack.c.l.b16 %v111
  %v1416 = vunpack.c.h.b16 %v111
  %v1417 = vunpack.c.l.b16 %v112
  %v1418 = vunpack.c.h.b16 %v112
  %v1419 = vunpack.c.l.b16 %v113
  %v1420 = vunpack.c.h.b16 %v113
  %v1421 = vunpack.c.l.b16 %v114
  %v1422 = vunpack.c.h.b16 %v114
  %v1423 = vunpack.c.l.b16 %v115
  %v1424 = vunpack.c.h.b16 %v115
  %v1425 = vunpack.c.l.b16 %v116
  %v1426 = vunpack.c.h.b16 %v116
  %v1427 = vunpack.c.l.b16 %v117
  %v1428 = vunpack.c.h.b16 %v117
  %v1429 = vunpack.c.l.b16 %v118
  %v1430 = vunpack.c.h.b16 %v118
  %v1431 = vunpack.c.l.b16 %v119
  %v1432 = vunpack.c.h.b16 %v119
  %v1433 = vunpack.c.l.b16 %v120
  %v1434 = vunpack.c.h.b16 %v120
  %v1435 = vunpack.c.l.b16 %v121
  %v1436 = vunpack.c.h.b16 %v121
  %v1437 = vunpack.c.l.b16 %v122
  %v1438 = vunpack.c.h.b16 %v122
  %v1439 = vunpack.c.l.b16 %v123
  %v1440 = vunpack.c.h.b16 %v123
  %v1441 = vunpack.c.l.b16 %v124
  %v1442 = vunpack.c.h.b16 %v124
  %v1443 = vunpack.c.l.b16 %v125
  %v1444 = vunpack.c.h.b16 %v125
  %v1445 = vunpack.c.l.b16 %v126
  %v1446 = vunpack.c.h.b16 %v126
  %v1447 = vunpack.c.l.b16 %v127
  %v1448 = vunpack.c.h.b16 %v127
  %v1449 = vunpack.c.l.b16 %v128
  %v1450 = vunpack.c.h.b16 %v128
  %v1451 = vunpack.c.l.b16 %v129
  %v1452 = vunpack.c.h.b16 %v129
  %v1453 = vunpack.c.l.b16 %v130
  %v1454 = vunpack.c.h.b16 %v130
  %v1455 = vunpack.c.l.b16 %v131
  %v1456 = vunpack.c.h.b16 %v131
  %v1457 = vunpack.c.l.b16 %v132
  %v1458 = vunpack.c.h.b16 %v132
  %v1459 = vunpack.c.l.b16 %v133
  %v1460 = vunpack.c.h.b16 %v133
  %v1461 = vunpack.c.l.b16 %v134
  %v1462 = vunpack.c.h.b16 %v134
  %v1463 = vunpack.c.l.b16 %v135
  %v1464 = vunpack.c.h.b16 %v135
  %v1465 = vunpack.c.l.b16 %v136
  %v1466 = vunpack.c.h.b16 %v136
  %v1467 = vunpack.c.l.b16 %v137
  %v1468 = vunpack.c.h.b16 %v137
  %v1469 = vunpack.c.l.b16 %v138
  %v1470 = vunpack.c.h.b16 %v138
  %v1471 = vunpack.c.l.b16 %v139
  %v1472 = vunpack.c.h.b16 %v139
  %v1473 = vunpack.c.l.b16 %v140
  %v1474 = vunpack.c.h.b16 %v140
  %v1475 = vunpack.c.l.b16 %v141
  %v1476 = vunpack.c.h.b16 %v141
  %v1477 = vunpack.c.l.b16 %v142
  %v1478 = vunpack.c.h.b16 %v142
  %v1479 = vunpack.c.l.b16 %v143
  %v1480 = vunpack.c.h.b16 %v143
  %v1481 = vunpack.c.l.b16 %v144
  %v1482 = vunpack.c.h.b16 %v144
  %v1483 = vunpack.c.l.b16 %v145
  %v1484 = vunpack.c.h.b16 %v145
  %v1485 = vunpack.c.l.b16 %v146
  %v1486 = vunpack.c.h.b16 %v146
  %v1487 = vunpack.c.l.b16 %v147
  %v1488 = vunpack.c.h.b16 %v147
  %v1489 = vunpack.c.l.b16 %v148
  %v1490 = vunpack.c.h.b16 %v148
  %v1491 = vunpack.c.l.b16 %v149
  %v1492 = vunpack.c.h.b16 %v149
  %v1493 = vunpack.c.l.b16 %v150
  %v1494 = vunpack.c.h.b16 %v150
  %v1495 = vunpack.c.l.b16 %v151
  %v1496 = vunpack.c.h.b16 %v151
  %v1497 = vunpack.c.l.b16 %v152
  %v1498 = vunpack.c.h.b16 %v152
  %v1499 = vunpack.c.l.b16 %v153
  %v1500 = vunpack.c.h.b16 %v153
  %v1501 = vunpack.c.l.b16 %v154
  %v1502 = vunpack.c.h.b16 %v154
  %v1503 = vunpack.c.l.b16 %v155
  %v1504 = vunpack.c.h.b16 %v155
  %v1505 = vunpack.c.l.b16 %v156
  %v1506 = vunpack.c.h.b16 %v156
  %v1507 = vunpack.c.l.b16 %v157
  %v1508 = vunpack.c.h.b16 %v157
  %v1509 = vunpack.c.l.b16 %v158
  %v1510 = vunpack.c.h.b16 %v158
  %v1511 = vunpack.c.l.b16 %v159
  %v1512 = vunpack.c.h.b16 %v159
  %v1513 = vunpack.c.l.b16 %v160
  %v1514 = vunpack.c.h.b16 %v160
  %v1515 = vunpack.c.l.b16 %v161
  %v1516 = vunpack.c.h.b16 %v161
  %v1517 = vunpack.c.l.b16 %v162
  %v1518 = vunpack.c.h.b16 %v162
  %v1519 = vunpack.c.l.b16 %v163
  %v1520 = vunpack.c.h.b16 %v163
  %v1521 = vunpack.c.l.b16 %v164
  %v1522 = vunpack.c.h.b16 %v164
  %v1523 = vunpack.c.l.b16 %v165
  %v1524 = vunpack.c.h.b16 %v165
  %v1525 = vunpack.c.l.b16 %v166
  %v1526 = vunpack.c.h.b16 %v166
  %v1527 = vunpack.c.l.b16 %v167
  %v1528 = vunpack.c.h.b16 %v167
  %v1529 = vunpack.c.l.b16 %v168
  %v1530 = vunpack.c.h.b16 %v168
  %v1531 = vunpack.c.l.b16 %v169
  %v1532 = vunpack.c.h.b16 %v169
  %v1533 = vunpack.c.l.b16 %v170
  %v1534 = vunpack.c.h.b16 %v170
  %v1535 = vunpack.c.l.b16 %v171
  %v1536 = vunpack.c.h.b16 %v171
  %v1537 = vunpack.c.l.b16 %v172
  %v1538 = vunpack.c.h.b16 %v172
  %v1539 = vunpack.c.l.b16 %v173
  %v1540 = vunpack.c.h.b16 %v173
  %v1541 = vunpack.c.l.b16 %v174
  %v1542 = vunpack.c.h.b16 %v174
  %v1543 = vunpack.c.l.b16 %v175
  %v1544 = vunpack.c.h.b16 %v175
  %v1545 = vunpack.c.l.b16 %v176
  %v1546 = vunpack.c.h.b16 %v176
  %v1547 = vunpack.c.l.b16 %v177
  %v1548 = vunpack.c.h.b16 %v177
  %v1549 = vunpack.c.l.b16 %v178
  %v1550 = vunpack.c.h.b16 %v178
  %v1551 = vunpack.c.l.b16 %v179
  %v1552 = vunpack.c.h.b16 %v179
  %v1553 = vunpack.c.l.b16 %v180
  %v1554 = vunpack.c.h.b16 %v180
  %v1555 = vunpack.c.l.b16 %v181
  %v1556 = vunpack.c.h.b16 %v181
  %v1557 = vunpack.c.l.b16 %v182
  %v1558 = vunpack.c.h.b16 %v182
  %v1559 = vunpack.c.l.b16 %v183
  %v1560 = vunpack.c.h.b16 %v183
  %v1561 = vunpack.c.l.b16 %v184
  %v1562 = vunpack.c.h.b16 %v184
  %v1563 = vunpack.c.l.b16 %v185
  %v1564 = vunpack.c.h.b16 %v185
  %v1565 = vunpack.c.l.b16 %v186
  %v1566 = vunpack.c.h.b16 %v186
  %v1567 = vunpack.c.l.b16 %v187
  %v1568 = vunpack.c.h.b16 %v187
  %v1569 = vunpack.c.l.b16 %v188
  %v1570 = vunpack.c.h.b16 %v188
  %v1571 = vunpack.c.l.b16 %v189
  %v1572 = vunpack.c.h.b16 %v189
  %v1573 = vunpack.c.l.b16 %v190
  %v1574 = vunpack.c.h.b16 %v190
  %v1575 = vunpack.c.l.b16 %v191
  %v1576 = vunpack.c.h.b16 %v191
  %v1577 = vunpack.c.l.b16 %v192
  %v1578 = vunpack.c.h.b16 %v192
  %v1579 = vunpack.c.l.b16 %v193
  %v1580 = vunpack.c.h.b16 %v193
  %v1581 = vunpack.c.l.b16 %v194
  %v1582 = vunpack.c.h.b16 %v194
  %v1583 = vunpack.c.l.b16 %v195
  %v1584 = vunpack.c.h.b16 %v195
  %v1585 = vunpack.c.l.b16 %v196
  %v1586 = vunpack.c.h.b16 %v196
  %v1587 = vunpack.c.l.b16 %v197
  %v1588 = vunpack.c.h.b16 %v197
  %v1589 = vunpack.c.l.b16 %v198
  %v1590 = vunpack.c.h.b16 %v198
  %v1591 = vunpack.c.l.b16 %v199
  %v1592 = vunpack.c.h.b16 %v199
  %v1593 = vunpack.c.l.b16 %v200
  %v1594 = vunpack.c.h.b16 %v200
  %v1595 = vunpack.c.l.b16 %v201
  %v1596 = vunpack.c.h.b16 %v201
  %v1597 = vunpack.c.l.b16 %v202
  %v1598 = vunpack.c.h.b16 %v202
  %v1599 = vunpack.c.l.b16 %v203
  %v1600 = vunpack.c.h.b16 %v203
  %v1601 = vunpack.c.l.b16 %v204
  %v1602 = vunpack.c.h.b16 %v204
  %v1603 = vunpack.c.l.b16 %v205
  %v1604 = vunpack.c.h.b16 %v205
  %v1605 = vunpack.c.l.b16 %v206
  %v1606 = vunpack.c.h.b16 %v206
  %v1607 = vunpack.c.l.b16 %v207
  %v1608 = vunpack.c.h.b16 %v207
  %v1609 = vunpack.c.l.b16 %v208
  %v1610 = vunpack.c.h.b16 %v208
  %v1611 = vunpack.c.l.b16 %v209
  %v1612 = vunpack.c.h.b16 %v209
  %v1613 = vunpack.c.l.b16 %v210
  %v1614 = vunpack.c.h.b16 %v210
  %v1615 = vunpack.c.l.b16 %v211
  %v1616 = vunpack.c.h.b16 %v211
  %v1617 = vunpack.c.l.b16 %v212
  %v1618 = vunpack.c.h.b16 %v212
  %v1619 = vunpack.c.l.b16 %v213
  %v1620 = vunpack.c.h.b16 %v213
  %v1621 = vunpack.c.l.b16 %v214
  %v1622 = vunpack.c.h.b16 %v214
  %v1623 = vunpack.c.l.b16 %v215
  %v1624 = vunpack.c.h.b16 %v215
  %v1625 = vunpack.c.l.b16 %v216
  %v1626 = vunpack.c.h.b16 %v216
  %v1627 = vunpack.c.l.b16 %v217
  %v1628 = vunpack.c.h.b16 %v217
  %v1629 = vunpack.c.l.b16 %v218
  %v1630 = vunpack.c.h.b16 %v218
  %v1631 = vunpack.c.l.b16 %v219
  %v1632 = vunpack.c.h.b16 %v219
  %v1633 = vunpack.c.l.b16 %v220
  %v1634 = vunpack.c.h.b16 %v220
  %v1635 = vunpack.c.l.b16 %v221
  %v1636 = vunpack.c.h.b16 %v221
  %v1637 = vunpack.c.l.b16 %v222
  %v1638 = vunpack.c.h.b16 %v222
  %v1639 = vunpack.c.l.b16 %v223
  %v1640 = vunpack.c.h.b16 %v223
  %v1641 = vunpack.c.l.b16 %v224
  %v1642 = vunpack.c.h.b16 %v224
  %v1643 = vunpack.c.l.b16 %v225
  %v1644 = vunpack.c.h.b16 %v225
  %v1645 = vunpack.c.l.b16 %v226
  %v1646 = vunpack.c.h.b16 %v226
  %v1647 = vunpack.c.l.b16 %v227
  %v1648 = vunpack.c.h.b16 %v227
  %v1649 = vunpack.c.l.b16 %v228
  %v1650 = vunpack.c.h.b16 %v228
  %v1651 = vunpack.c.l.b16 %v229
  %v1652 = vunpack.c.h.b16 %v229
  %v1653 = vunpack.c.l.b16 %v230
  %v1654 = vunpack.c.h.b16 %v230
  %v1655 = vunpack.c.l.b16 %v231
  %v1656 = vunpack.c.h.b16 %v231
  %v1657 = vunpack.c.l.b16 %v232
  %v1658 = vunpack.c.h.b16 %v232
  %v1659 = vunpack.c.l.b16 %v233
  %v1660 = vunpack.c.h.b16 %v233
  %v1661 = vunpack.c.l.b16 %v234
  %v1662 = vunpack.c.h.b16 %v234
  %v1663 = vunpack.c.l.b16 %v235
  %v1664 = vunpack.c.h.b16 %v235
  %v1665 = vunpack.c.l.b16 %v236
  %v1666 = vunpack.c.h.b16 %v236
  %v1667 = vunpack.c.l.b16 %v237
  %v1668 = vunpack.c.h.b16 %v237
  %v1669 = vunpack.c.l.b16 %v238
  %v1670 = vunpack.c.h.b16 %v238
  %v1671 = vunpack.c.l.b16 %v239
  %v1672 = vunpack.c.h.b16 %v239
  %v1673 = vunpack.c.l.b16 %v240
  %v1674 = vunpack.c.h.b16 %v240
  %v1675 = vunpack.c.l.b16 %v241
  %v1676 = vunpack.c.h.b16 %v241
  %v1677 = vunpack.c.l.b16 %v242
  %v1678 = vunpack.c.h.b16 %v242
  %v1679 = vunpack.c.l.b16 %v243
  %v1680 = vunpack.c.h.b16 %v243
  %v1681 = vunpack.c.l.b16 %v244
  %v1682 = vunpack.c.h.b16 %v244
  %v1683 = vunpack.c.l.b16 %v245
  %v1684 = vunpack.c.h.b16 %v245
  %v1685 = vunpack.c.l.b16 %v246
  %v1686 = vunpack.c.h.b16 %v246
  %v1687 = vunpack.c.l.b16 %v247
  %v1688 = vunpack.c.h.b16 %v247
  %v1689 = vunpack.c.l.b16 %v248
  %v1690 = vunpack.c.h.b16 %v248
  %v1691 = vunpack.c.l.b16 %v249
  %v1692 = vunpack.c.h.b16 %v249
  %v1693 = vunpack.c.l.b16 %v250
  %v1694 = vunpack.c.h.b16 %v250
  %v1695 = vunpack.c.l.b16 %v251
  %v1696 = vunpack.c.h.b16 %v251
  %v1697 = vunpack.c.l.b16 %v252
  %v1698 = vunpack.c.h.b16 %v252
  %v1699 = vunpack.c.l.b16 %v253
  %v1700 = vunpack.c.h.b16 %v253
  %v1701 = vunpack.c.l.b16 %v254
  %v1702 = vunpack.c.h.b16 %v254
  %v1703 = vunpack.c.l.b16 %v255
  %v1704 = vunpack.c.h.b16 %v255
  %v1705 = vunpack.c.l.b16 %v256
  %v1706 = vunpack.c.h.b16 %v256
  %v1707 = vunpack.c.l.b16 %v257
  %v1708 = vunpack.c.h.b16 %v257
  %v1709 = vunpack.c.l.b16 %v258
  %v1710 = vunpack.c.h.b16 %v258
  %v1711 = vunpack.c.l.b16 %v259
  %v1712 = vunpack.c.h.b16 %v259
  %v1713 = vunpack.c.l.b16 %v260
  %v1714 = vunpack.c.h.b16 %v260
  %v1715 = vunpack.c.l.b16 %v261
  %v1716 = vunpack.c.h.b16 %v261
  %v1717 = vunpack.c.l.b16 %v262
  %v1718 = vunpack.c.h.b16 %v262
  %v1719 = vunpack.c.l.b16 %v263
  %v1720 = vunpack.c.h.b16 %v263
  %v1721 = vunpack.c.l.b16 %v264
  %v1722 = vunpack.c.h.b16 %v264
  %v1723 = vunpack.c.l.b16 %v265
  %v1724 = vunpack.c.h.b16 %v265
  %v1725 = vunpack.c.l.b16 %v266
  %v1726 = vunpack.c.h.b16 %v266
  %v1727 = vunpack.c.l.b16 %v267
  %v1728 = vunpack.c.h.b16 %v267
  %v1729 = vunpack.c.l.b16 %v268
  %v1730 = vunpack.c.h.b16 %v268
  %v1731 = vunpack.c.l.b16 %v269
  %v1732 = vunpack.c.h.b16 %v269
  %v1733 = vunpack.c.l.b16 %v270
  %v1734 = vunpack.c.h.b16 %v270
  %v1735 = vunpack.c.l.b16 %v271
  %v1736 = vunpack.c.h.b16 %v271
  %v1737 = vunpack.c.l.b16 %v272
  %v1738 = vunpack.c.h.b16 %v272
  %v1739 = vunpack.c.l.b16 %v273
  %v1740 = vunpack.c.h.b16 %v273
  %v1741 = vunpack.c.l.b16 %v274
  %v1742 = vunpack.c.h.b16 %v274
  %v1743 = vunpack.c.l.b16 %v275
  %v1744 = vunpack.c.h.b16 %v275
  %v1745 = vunpack.c.l.b16 %v276
  %v1746 = vunpack.c.h.b16 %v276
  %v1747 = vunpack.c.l.b16 %v277
  %v1748 = vunpack.c.h.b16 %v277
  %v1749 = vunpack.c.l.b16 %v278
  %v1750 = vunpack.c.h.b16 %v278
  %v1751 = vunpack.c.l.b16 %v279
  %v1752 = vunpack.c.h.b16 %v279
  %v1753 = vunpack.c.l.b16 %v280
  %v1754 = vunpack.c.h.b16 %v280
  %v1755 = vunpack.c.l.b16 %v281
  %v1756 = vunpack.c.h.b16 %v281
  %v1757 = vunpack.c.l.b16 %v282
  %v1758 = vunpack.c.h.b16 %v282
  %v1759 = vunpack.c.l.b16 %v283
  %v1760 = vunpack.c.h.b16 %v283
  %v1761 = vunpack.c.l.b16 %v284
  %v1762 = vunpack.c.h.b16 %v284
  %v1763 = vunpack.c.l.b16 %v285
  %v1764 = vunpack.c.h.b16 %v285
  %v1765 = vunpack.c.l.b16 %v286
  %v1766 = vunpack.c.h.b16 %v286
  %v1767 = vunpack.c.l.b16 %v287
  %v1768 = vunpack.c.h.b16 %v287
  %v1769 = vunpack.c.l.b16 %v288
  %v1770 = vunpack.c.h.b16 %v288
  %v1771 = vunpack.c.l.b16 %v289
  %v1772 = vunpack.c.h.b16 %v289
  %v1773 = vunpack.c.l.b16 %v290
  %v1774 = vunpack.c.h.b16 %v290
  %v1775 = vunpack.c.l.b16 %v291
  %v1776 = vunpack.c.h.b16 %v291
  %v1777 = vunpack.c.l.b16 %v292
  %v1778 = vunpack.c.h.b16 %v292
  %v1779 = vunpack.c.l.b16 %v293
  %v1780 = vunpack.c.h.b16 %v293
  %v1781 = vunpack.c.l.b16 %v294
  %v1782 = vunpack.c.h.b16 %v294
  %v1783 = vunpack.c.l.b16 %v295
  %v1784 = vunpack.c.h.b16 %v295
  %v1785 = vunpack.c.l.b16 %v296
  %v1786 = vunpack.c.h.b16 %v296
  %v1787 = vunpack.c.l.b16 %v297
  %v1788 = vunpack.c.h.b16 %v297
  %v1789 = vunpack.c.l.b16 %v298
  %v1790 = vunpack.c.h.b16 %v298
  %v1791 = vunpack.c.l.b16 %v299
  %v1792 = vunpack.c.h.b16 %v299
  %v1793 = vunpack.c.l.b16 %v300
  %v1794 = vunpack.c.h.b16 %v300
  %v1795 = vunpack.c.l.b16 %v301
  %v1796 = vunpack.c.h.b16 %v301
  %v1797 = vunpack.c.l.b16 %v302
  %v1798 = vunpack.c.h.b16 %v302
  %v1799 = vunpack.c.l.b16 %v303
  %v1800 = vunpack.c.h.b16 %v303
  %v1801 = vunpack.c.l.b16 %v304
  %v1802 = vunpack.c.h.b16 %v304
  %v1803 = vunpack.c.l.b16 %v305
  %v1804 = vunpack.c.h.b16 %v305
  %v1805 = vunpack.c.l.b16 %v306
  %v1806 = vunpack.c.h.b16 %v306
  %v1807 = vunpack.c.l.b16 %v307
  %v1808 = vunpack.c.h.b16 %v307
  %v1809 = vunpack.c.l.b16 %v308
  %v1810 = vunpack.c.h.b16 %v308
  %v1811 = vunpack.c.l.b16 %v309
  %v1812 = vunpack.c.h.b16 %v309
  %v1813 = vunpack.c.l.b16 %v310
  %v1814 = vunpack.c.h.b16 %v310
  %v1815 = vunpack.c.l.b16 %v311
  %v1816 = vunpack.c.h.b16 %v311
  %v1817 = vunpack.c.l.b16 %v312
  %v1818 = vunpack.c.h.b16 %v312
  %v1819 = vunpack.c.l.b16 %v313
  %v1820 = vunpack.c.h.b16 %v313
  %v1821 = vunpack.c.l.b16 %v314
  %v1822 = vunpack.c.h.b16 %v314
  %v1823 = vunpack.c.l.b16 %v315
  %v1824 = vunpack.c.h.b16 %v315
  %v1825 = vunpack.c.l.b16 %v316
  %v1826 = vunpack.c.h.b16 %v316
  %v1827 = vunpack.c.l.b16 %v317
  %v1828 = vunpack.c.h.b16 %v317
  %v1829 = vunpack.c.l.b16 %v318
  %v1830 = vunpack.c.h.b16 %v318
  %v1831 = vunpack.c.l.b16 %v319
  %v1832 = vunpack.c.h.b16 %v319
  %v1833 = vunpack.c.l.b16 %v320
  %v1834 = vunpack.c.h.b16 %v320
  %v1835 = vunpack.c.l.b16 %v321
  %v1836 = vunpack.c.h.b16 %v321
  %v1837 = vunpack.c.l.b16 %v322
  %v1838 = vunpack.c.h.b16 %v322
  %v1839 = vunpack.c.l.b16 %v323
  %v1840 = vunpack.c.h.b16 %v323
  %v1841 = vunpack.c.l.b16 %v324
  %v1842 = vunpack.c.h.b16 %v324
  %v1843 = vunpack.c.l.b16 %v325
  %v1844 = vunpack.c.h.b16 %v325
  %v1845 = vunpack.c.l.b16 %v326
  %v1846 = vunpack.c.h.b16 %v326
  %v1847 = vunpack.c.l.b16 %v327
  %v1848 = vunpack.c.h.b16 %v327
  %v1849 = vunpack.c.l.b16 %v328
  %v1850 = vunpack.c.h.b16 %v328
  %v1851 = vunpack.c.l.b16 %v329
  %v1852 = vunpack.c.h.b16 %v329
  %v1853 = vunpack.c.l.b16 %v330
  %v1854 = vunpack.c.h.b16 %v330
  %v1855 = vunpack.c.l.b16 %v331
  %v1856 = vunpack.c.h.b16 %v331
  %v1857 = vunpack.c.l.b16 %v332
  %v1858 = vunpack.c.h.b16 %v332
  %v1859 = vunpack.c.l.b16 %v333
  %v1860 = vunpack.c.h.b16 %v333
  %v1861 = vunpack.c.l.b16 %v334
  %v1862 = vunpack.c.h.b16 %v334
  %v1863 = vunpack.c.l.b16 %v335
  %v1864 = vunpack.c.h.b16 %v335
  %v1865 = vunpack.c.l.b16 %v336
  %v1866 = vunpack.c.h.b16 %v336
  %v1867 = vunpack.c.l.b16 %v337
  %v1868 = vunpack.c.h.b16 %v337
  %v1869 = vunpack.c.l.b16 %v338
  %v1870 = vunpack.c.h.b16 %v338
  %v1871 = vunpack.c.l.b16 %v339
  %v1872 = vunpack.c.h.b16 %v339
  %v1873 = vunpack.c.l.b16 %v340
  %v1874 = vunpack.c.h.b16 %v340
  %v1875 = vunpack.c.l.b16 %v341
  %v1876 = vunpack.c.h.b16 %v341
  %v1877 = vunpack.c.l.b16 %v342
  %v1878 = vunpack.c.h.b16 %v342
  %v1879 = vunpack.c.l.b16 %v343
  %v1880 = vunpack.c.h.b16 %v343
  %v1881 = vunpack.c.l.b16 %v344
  %v1882 = vunpack.c.h.b16 %v344
  %v1883 = vunpack.c.l.b16 %v345
  %v1884 = vunpack.c.h.b16 %v345
  %v1885 = vunpack.c.l.b16 %v346
  %v1886 = vunpack.c.h.b16 %v346
  %v1887 = vunpack.c.l.b16 %v347
  %v1888 = vunpack.c.h.b16 %v347
  %v1889 = vunpack.c.l.b16 %v348
  %v1890 = vunpack.c.h.b16 %v348
  %v1891 = vunpack.c.l.b16 %v349
  %v1892 = vunpack.c.h.b16 %v349
  %v1893 = vunpack.c.l.b16 %v350
  %v1894 = vunpack.c.h.b16 %v350
  %v1895 = vunpack.c.l.b16 %v351
  %v1896 = vunpack.c.h.b16 %v351
  %v1897 = vunpack.c.l.b16 %v352
  %v1898 = vunpack.c.h.b16 %v352
  %v1899 = vunpack.c.l.b16 %v353
  %v1900 = vunpack.c.h.b16 %v353
  %v1901 = vunpack.c.l.b16 %v354
  %v1902 = vunpack.c.h.b16 %v354
  %v1903 = vunpack.c.l.b16 %v355
  %v1904 = vunpack.c.h.b16 %v355
  %v1905 = vunpack.c.l.b16 %v356
  %v1906 = vunpack.c.h.b16 %v356
  %v1907 = vunpack.c.l.b16 %v357
  %v1908 = vunpack.c.h.b16 %v357
  %v1909 = vunpack.c.l.b16 %v358
  %v1910 = vunpack.c.h.b16 %v358
  %v1911 = vunpack.c.l.b16 %v359
  %v1912 = vunpack.c.h.b16 %v359
  %v1913 = vunpack.c.l.b16 %v360
  %v1914 = vunpack.c.h.b16 %v360
  %v1915 = vunpack.c.l.b16 %v361
  %v1916 = vunpack.c.h.b16 %v361
  %v1917 = vunpack.c.l.b16 %v362
  %v1918 = vunpack.c.h.b16 %v362
  %v1919 = vunpack.c.l.b16 %v363
  %v1920 = vunpack.c.h.b16 %v363
  %v1921 = vunpack.c.l.b16 %v364
  %v1922 = vunpack.c.h.b16 %v364
  %v1923 = vunpack.c.l.b16 %v365
  %v1924 = vunpack.c.h.b16 %v365
  %v1925 = vunpack.c.l.b16 %v366
  %v1926 = vunpack.c.h.b16 %v366
  %v1927 = vunpack.c.l.b16 %v367
  %v1928 = vunpack.c.h.b16 %v367
  %v1929 = vunpack.c.l.b16 %v368
  %v1930 = vunpack.c.h.b16 %v368
  %v1931 = vunpack.c.l.b16 %v369
  %v1932 = vunpack.c.h.b16 %v369
  %v1933 = vunpack.c.l.b16 %v370
  %v1934 = vunpack.c.h.b16 %v370
  %v1935 = vunpack.c.l.b16 %v371
  %v1936 = vunpack.c.h.b16 %v371
  %v1937 = vunpack.c.l.b16 %v372
  %v1938 = vunpack.c.h.b16 %v372
  %v1939 = vunpack.c.l.b16 %v373
  %v1940 = vunpack.c.h.b16 %v373
  %v1941 = vunpack.c.l.b16 %v374
  %v1942 = vunpack.c.h.b16 %v374
  %v1943 = vunpack.c.l.b16 %v375
  %v1944 = vunpack.c.h.b16 %v375
  %v1945 = vunpack.c.l.b16 %v376
  %v1946 = vunpack.c.h.b16 %v376
  %v1947 = vunpack.c.l.b16 %v377
  %v1948 = vunpack.c.h.b16 %v377
  %v1949 = vunpack.c.l.b16 %v378
  %v1950 = vunpack.c.h.b16 %v378
  %v1951 = vunpack.c.l.b16 %v379
  %v1952 = vunpack.c.h.b16 %v379
  %v1953 = vunpack.c.l.b16 %v380
  %v1954 = vunpack.c.h.b16 %v380
  %v1955 = vunpack.c.l.b16 %v381
  %v1956 = vunpack.c.h.b16 %v381
  %v1957 = vunpack.c.l.b16 %v382
  %v1958 = vunpack.c.h.b16 %v382
  %v1959 = vunpack.c.l.b16 %v383
  %v1960 = vunpack.c.h.b16 %v383
  %v1961 = vunpack.c.l.b16 %v384
  %v1962 = vunpack.c.h.b16 %v384
  %v1963 = vunpack.c.l.b16 %v385
  %v1964 = vunpack.c.h.b16 %v385
  %v1965 = vunpack.c.l.b16 %v386
  %v1966 = vunpack.c.h.b16 %v386
  %v1967 = vunpack.c.l.b16 %v387
  %v1968 = vunpack.c.h.b16 %v387
  %v1969 = vunpack.c.l.b16 %v388
  %v1970 = vunpack.c.h.b16 %v388
  %v1971 = vunpack.c.l.b16 %v389
  %v1972 = vunpack.c.h.b16 %v389
  %v1973 = vunpack.c.l.b16 %v390
  %v1974 = vunpack.c.h.b16 %v390
  %v1975 = vunpack.c.l.b16 %v391
  %v1976 = vunpack.c.h.b16 %v391
  %v1977 = vunpack.c.l.b16 %v392
  %v1978 = vunpack.c.h.b16 %v392
  %v1979 = vunpack.c.l.b16 %v393
  %v1980 = vunpack.c.h.b16 %v393
  %v1981 = vunpack.c.l.b16 %v394
  %v1982 = vunpack.c.h.b16 %v394
  %v1983 = vunpack.c.l.b16 %v395
  %v1984 = vunpack.c.h.b16 %v395
  %v1985 = vunpack.c.l.b16 %v396
  %v1986 = vunpack.c.h.b16 %v396
  %v1987 = vunpack.c.l.b16 %v397
  %v1988 = vunpack.c.h.b16 %v397
  %v1989 = vunpack.c.l.b16 %v398
  %v1990 = vunpack.c.h.b16 %v398
  %v1991 = vunpack.c.l.b16 %v399
  %v1992 = vunpack.c.h.b16 %v399
  %v1993 = vunpack.c.l.b16 %v400
  %v1994 = vunpack.c.h.b16 %v400
  %v1995 = vunpack.c.l.b16 %v401
  %v1996 = vunpack.c.h.b16 %v401
  %v1997 = vunpack.c.l.b16 %v402
  %v1998 = vunpack.c.h.b16 %v402
  %v1999 = vunpack.c.l.b16 %v403
  %v2000 = vunpack.c.h.b16 %v403
  %v2001 = vunpack.c.l.b16 %v404
  %v2002 = vunpack.c.h.b16 %v404
  %v2003 = vunpack.c.l.b16 %v405
  %v2004 = vunpack.c.h.b16 %v405
  %v2005 = vunpack.c.l.b16 %v406
  %v2006 = vunpack.c.h.b16 %v406
  %v2007 = vunpack.c.l.b16 %v407
  %v2008 = vunpack.c.h.b16 %v407
  %v2009 = vunpack.c.l.b16 %v408
  %v2010 = vunpack.c.h.b16 %v408
  %v2011 = vunpack.c.l.b16 %v409
  %v2012 = vunpack.c.h.b16 %v409
  %v2013 = vunpack.c.l.b16 %v410
  %v2014 = vunpack.c.h.b16 %v410
  %v2015 = vunpack.c.l.b16 %v411
  %v2016 = vunpack.c.h.b16 %v411
  %v2017 = vunpack.c.l.b16 %v412
  %v2018 = vunpack.c.h.b16 %v412
  %v2019 = vunpack.c.l.b16 %v413
  %v2020 = vunpack.c.h.b16 %v413
  %v2021 = vunpack.c.l.b16 %v414
  %v2022 = vunpack.c.h.b16 %v414
  %v2023 = vunpack.c.l.b16 %v415
  %v2024 = vunpack.c.h.b16 %v415
  %v2025 = vunpack.c.l.b16 %v416
  %v2026 = vunpack.c.h.b16 %v416
  %v2027 = vunpack.c.l.b16 %v417
  %v2028 = vunpack.c.h.b16 %v417
  %v2029 = vunpack.c.l.b16 %v418
  %v2030 = vunpack.c.h.b16 %v418
  %v2031 = vunpack.c.l.b16 %v419
  %v2032 = vunpack.c.h.b16 %v419
  %v2033 = vunpack.c.l.b16 %v420
  %v2034 = vunpack.c.h.b16 %v420
  %v2035 = vunpack.c.l.b16 %v421
  %v2036 = vunpack.c.h.b16 %v421
  %v2037 = vunpack.c.l.b16 %v422
  %v2038 = vunpack.c.h.b16 %v422
  %v2039 = vunpack.c.l.b16 %v423
  %v2040 = vunpack.c.h.b16 %v423
  %v2041 = vunpack.c.l.b16 %v424
  %v2042 = vunpack.c.h.b16 %v424
  %v2043 = vunpack.c.l.b16 %v425
  %v2044 = vunpack.c.h.b16 %v425
  %v2045 = vunpack.c.l.b16 %v426
  %v2046 = vunpack.c.h.b16 %v426
  %v2047 = vunpack.c.l.b16 %v427
  %v2048 = vunpack.c.h.b16 %v427
  %v2049 = vunpack.c.l.b16 %v428
  %v2050 = vunpack.c.h.b16 %v428
  %v2051 = vunpack.c.l.b16 %v429
  %v2052 = vunpack.c.h.b16 %v429
  %v2053 = vunpack.c.l.b16 %v430
  %v2054 = vunpack.c.h.b16 %v430
  %v2055 = vunpack.c.l.b16 %v431
  %v2056 = vunpack.c.h.b16 %v431
  %v2057 = vunpack.c.l.b16 %v432
  %v2058 = vunpack.c.h.b16 %v432
  %v2059 = vunpack.c.l.b16 %v433
  %v2060 = vunpack.c.h.b16 %v433
  %v2061 = vunpack.c.l.b16 %v434
  %v2062 = vunpack.c.h.b16 %v434
  %v2063 = vunpack.c.l.b16 %v435
  %v2064 = vunpack.c.h.b16 %v435
  %v2065 = vunpack.c.l.b16 %v436
  %v2066 = vunpack.c.h.b16 %v436
  %v2067 = vunpack.c.l.b16 %v437
  %v2068 = vunpack.c.h.b16 %v437
  %v2069 = vunpack.c.l.b16 %v438
  %v2070 = vunpack.c.h.b16 %v438
  %v2071 = vunpack.c.l.b16 %v439
  %v2072 = vunpack.c.h.b16 %v439
  %v2073 = vunpack.c.l.b16 %v440
  %v2074 = vunpack.c.h.b16 %v440
  %v2075 = vunpack.c.l.b16 %v441
  %v2076 = vunpack.c.h.b16 %v441
  %v2077 = vunpack.c.l.b16 %v442
  %v2078 = vunpack.c.h.b16 %v442
  %v2079 = vunpack.c.l.b16 %v443
  %v2080 = vunpack.c.h.b16 %v443
  %v2081 = vunpack.c.l.b16 %v444
  %v2082 = vunpack.c.h.b16 %v444
  %v2083 = vunpack.c.l.b16 %v445
  %v2084 = vunpack.c.h.b16 %v445
  %v2085 = vunpack.c.l.b16 %v446
  %v2086 = vunpack.c.h.b16 %v446
  %v2087 = vunpack.c.l.b16 %v447
  %v2088 = vunpack.c.h.b16 %v447
  %v2089 = vunpack.c.l.b16 %v448
  %v2090 = vunpack.c.h.b16 %v448
  %v2091 = vunpack.c.l.b16 %v449
  %v2092 = vunpack.c.h.b16 %v449
  %v2093 = vunpack.c.l.b16 %v450
  %v2094 = vunpack.c.h.b16 %v450
  %v2095 = vunpack.c.l.b16 %v451
  %v2096 = vunpack.c.h.b16 %v451
  %v2097 = vunpack.c.l.b16 %v452
  %v2098 = vunpack.c.h.b16 %v452
  %v2099 = vunpack.c.l.b16 %v453
  %v2100 = vunpack.c.h.b16 %v453
  %v2101 = vunpack.c.l.b16 %v454
  %v2102 = vunpack.c.h.b16 %v454
  %v2103 = vunpack.c.l.b16 %v455
  %v2104 = vunpack.c.h.b16 %v455
  %v2105 = vunpack.c.l.b16 %v456
  %v2106 = vunpack.c.h.b16 %v456
  %v2107 = vunpack.c.l.b16 %v457
  %v2108 = vunpack.c.h.b16 %v457
  %v2109 = vunpack.c.l.b16 %v458
  %v2110 = vunpack.c.h.b16 %v458
  %v2111 = vunpack.c.l.b16 %v459
  %v2112 = vunpack.c.h.b16 %v459
  %v2113 = vunpack.c.l.b16 %v460
  %v2114 = vunpack.c.h.b16 %v460
  %v2115 = vunpack.c.l.b16 %v461
  %v2116 = vunpack.c.h.b16 %v461
  %v2117 = vunpack.c.l.b16 %v462
  %v2118 = vunpack.c.h.b16 %v462
  %v2119 = vunpack.c.l.b16 %v463
  %v2120 = vunpack.c.h.b16 %v463
  %v2121 = vunpack.c.l.b16 %v464
  %v2122 = vunpack.c.h.b16 %v464
  %v2123 = vunpack.c.l.b16 %v465
  %v2124 = vunpack.c.h.b16 %v465
  %v2125 = vunpack.c.l.b16 %v466
  %v2126 = vunpack.c.h.b16 %v466
  %v2127 = vunpack.c.l.b16 %v467
  %v2128 = vunpack.c.h.b16 %v467
  %v2129 = vunpack.c.l.b16 %v468
  %v2130 = vunpack.c.h.b16 %v468
  %v2131 = vunpack.c.l.b16 %v469
  %v2132 = vunpack.c.h.b16 %v469
  %v2133 = vunpack.c.l.b16 %v470
  %v2134 = vunpack.c.h.b16 %v470
  %v2135 = vunpack.c.l.b16 %v471
  %v2136 = vunpack.c.h.b16 %v471
  %v2137 = vunpack.c.l.b16 %v472
  %v2138 = vunpack.c.h.b16 %v472
  %v2139 = vunpack.c.l.b16 %v473
  %v2140 = vunpack.c.h.b16 %v473
  %v2141 = vunpack.c.l.b16 %v474
  %v2142 = vunpack.c.h.b16 %v474
  %v2143 = vunpack.c.l.b16 %v475
  %v2144 = vunpack.c.h.b16 %v475
  %v2145 = vunpack.c.l.b16 %v476
  %v2146 = vunpack.c.h.b16 %v476
  %v2147 = vunpack.c.l.b16 %v477
  %v2148 = vunpack.c.h.b16 %v477
  %v2149 = vunpack.c.l.b16 %v478
  %v2150 = vunpack.c.h.b16 %v478
  %v2151 = vunpack.c.l.b16 %v479
  %v2152 = vunpack.c.h.b16 %v479
  %v2153 = vunpack.c.l.b16 %v480
  %v2154 = vunpack.c.h.b16 %v480
  %v2155 = vunpack.c.l.b16 %v481
  %v2156 = vunpack.c.h.b16 %v481
  %v2157 = vunpack.c.l.b16 %v482
  %v2158 = vunpack.c.h.b16 %v482
  %v2159 = vunpack.c.l.b16 %v483
  %v2160 = vunpack.c.h.b16 %v483
  %v2161 = vunpack.c.l.b16 %v484
  %v2162 = vunpack.c.h.b16 %v484
  %v2163 = vunpack.c.l.b16 %v485
  %v2164 = vunpack.c.h.b16 %v485
  %v2165 = vunpack.c.l.b16 %v486
  %v2166 = vunpack.c.h.b16 %v486
  %v2167 = vunpack.c.l.b16 %v487
  %v2168 = vunpack.c.h.b16 %v487
  %v2169 = vunpack.c.l.b16 %v488
  %v2170 = vunpack.c.h.b16 %v488
  %v2171 = vunpack.c.l.b16 %v489
  %v2172 = vunpack.c.h.b16 %v489
  %v2173 = vunpack.c.l.b16 %v490
  %v2174 = vunpack.c.h.b16 %v490
  %v2175 = vunpack.c.l.b16 %v491
  %v2176 = vunpack.c.h.b16 %v491
  %v2177 = vunpack.c.l.b16 %v492
  %v2178 = vunpack.c.h.b16 %v492
  %v2179 = vunpack.c.l.b16 %v493
  %v2180 = vunpack.c.h.b16 %v493
  %v2181 = vunpack.c.l.b16 %v494
  %v2182 = vunpack.c.h.b16 %v494
  %v2183 = vunpack.c.l.b16 %v495
  %v2184 = vunpack.c.h.b16 %v495
  %v2185 = vunpack.c.l.b16 %v496
  %v2186 = vunpack.c.h.b16 %v496
  %v2187 = vunpack.c.l.b16 %v497
  %v2188 = vunpack.c.h.b16 %v497
  %v2189 = vunpack.c.l.b16 %v498
  %v2190 = vunpack.c.h.b16 %v498
  %v2191 = vunpack.c.l.b16 %v499
  %v2192 = vunpack.c.h.b16 %v499
  %v2193 = vunpack.c.l.b16 %v500
  %v2194 = vunpack.c.h.b16 %v500
  %v2195 = vunpack.c.l.b16 %v501
  %v2196 = vunpack.c.h.b16 %v501
  %v2197 = vunpack.c.l.b16 %v502
  %v2198 = vunpack.c.h.b16 %v502
  %v2199 = vunpack.c.l.b16 %v503
  %v2200 = vunpack.c.h.b16 %v503
  %v2201 = vunpack.c.l.b16 %v504
  %v2202 = vunpack.c.h.b16 %v504
  %v2203 = vunpack.c.l.b16 %v505
  %v2204 = vunpack.c.h.b16 %v505
  %v2205 = vunpack.c.l.b16 %v506
  %v2206 = vunpack.c.h.b16 %v506
  %v2207 = vunpack.c.l.b16 %v507
  %v2208 = vunpack.c.h.b16 %v507
  %v2209 = vunpack.c.l.b16 %v508
  %v2210 = vunpack.c.h.b16 %v508
  %v2211 = vunpack.c.l.b16 %v509
  %v2212 = vunpack.c.h.b16 %v509
  %v2213 = vunpack.c.l.b16 %v510
  %v2214 = vunpack.c.h.b16 %v510
  %v2215 = vunpack.c.l.b16 %v511
  %v2216 = vunpack.c.h.b16 %v511
  %v2217 = vunpack.c.l.b16 %v512
  %v2218 = vunpack.c.h.b16 %v512
  %v2219 = vunpack.c.l.b16 %v513
  %v2220 = vunpack.c.h.b16 %v513
  %v2221 = vunpack.c.l.b16 %v514
  %v2222 = vunpack.c.h.b16 %v514
  %v2223 = vunpack.c.l.b16 %v515
  %v2224 = vunpack.c.h.b16 %v515
  %v2225 = vunpack.c.l.b16 %v516
  %v2226 = vunpack.c.h.b16 %v516
  %v2227 = vunpack.c.l.b16 %v517
  %v2228 = vunpack.c.h.b16 %v517
  %v2229 = vunpack.c.l.b16 %v518
  %v2230 = vunpack.c.h.b16 %v518
  %v2231 = vunpack.c.l.b16 %v519
  %v2232 = vunpack.c.h.b16 %v519
  %v2233 = vunpack.c.l.b16 %v520
  %v2234 = vunpack.c.h.b16 %v520
  %v2235 = vunpack.c.l.b16 %v521
  %v2236 = vunpack.c.h.b16 %v521
  %v2237 = vunpack.c.l.b16 %v522
  %v2238 = vunpack.c.h.b16 %v522
  %v2239 = vunpack.c.l.b16 %v523
  %v2240 = vunpack.c.h.b16 %v523
  %v2241 = vunpack.c.l.b16 %v524
  %v2242 = vunpack.c.h.b16 %v524
  %v2243 = vunpack.c.l.b16 %v525
  %v2244 = vunpack.c.h.b16 %v525
  %v2245 = vunpack.c.l.b16 %v526
  %v2246 = vunpack.c.h.b16 %v526
  %v2247 = vunpack.c.l.b16 %v527
  %v2248 = vunpack.c.h.b16 %v527
  %v2249 = vunpack.c.l.b16 %v528
  %v2250 = vunpack.c.h.b16 %v528
  %v2251 = vunpack.c.l.b16 %v529
  %v2252 = vunpack.c.h.b16 %v529
  %v2253 = vunpack.c.l.b16 %v530
  %v2254 = vunpack.c.h.b16 %v530
  %v2255 = vunpack.c.l.b16 %v531
  %v2256 = vunpack.c.h.b16 %v531
  %v2257 = vunpack.c.l.b16 %v532
  %v2258 = vunpack.c.h.b16 %v532
  %v2259 = vunpack.c.l.b16 %v533
  %v2260 = vunpack.c.h.b16 %v533
  %v2261 = vunpack.c.l.b16 %v534
  %v2262 = vunpack.c.h.b16 %v534
  %v2263 = vunpack.c.l.b16 %v535
  %v2264 = vunpack.c.h.b16 %v535
  %v2265 = vunpack.c.l.b16 %v536
  %v2266 = vunpack.c.h.b16 %v536
  %v2267 = vunpack.c.l.b16 %v537
  %v2268 = vunpack.c.h.b16 %v537
  %v2269 = vunpack.c.l.b16 %v538
  %v2270 = vunpack.c.h.b16 %v538
  %v2271 = vunpack.c.l.b16 %v539
  %v2272 = vunpack.c.h.b16 %v539
  %v2273 = vunpack.c.l.b16 %v540
  %v2274 = vunpack.c.h.b16 %v540
  %v2275 = vunpack.c.l.b16 %v541
  %v2276 = vunpack.c.h.b16 %v541
  %v2277 = vunpack.c.l.b16 %v542
  %v2278 = vunpack.c.h.b16 %v542
  %v2279 = vunpack.c.l.b16 %v543
  %v2280 = vunpack.c.h.b16 %v543
  %v2281 = vunpack.c.l.b16 %v544
  %v2282 = vunpack.c.h.b16 %v544
  %v2283 = vunpack.c.l.b16 %v545
  %v2284 = vunpack.c.h.b16 %v545
  %v2285 = vunpack.c.l.b16 %v546
  %v2286 = vunpack.c.h.b16 %v546
  %v2287 = vunpack.c.l.b16 %v547
  %v2288 = vunpack.c.h.b16 %v547
  %v2289 = vunpack.c.l.b16 %v548
  %v2290 = vunpack.c.h.b16 %v548
  %v2291 = vunpack.c.l.b16 %v549
  %v2292 = vunpack.c.h.b16 %v549
  %v2293 = vunpack.c.l.b16 %v550
  %v2294 = vunpack.c.h.b16 %v550
  %v2295 = vunpack.c.l.b16 %v551
  %v2296 = vunpack.c.h.b16 %v551
  %v2297 = vunpack.c.l.b16 %v552
  %v2298 = vunpack.c.h.b16 %v552
  %v2299 = vunpack.c.l.b16 %v553
  %v2300 = vunpack.c.h.b16 %v553
  %v2301 = vunpack.c.l.b16 %v554
  %v2302 = vunpack.c.h.b16 %v554
  %v2303 = vunpack.c.l.b16 %v555
  %v2304 = vunpack.c.h.b16 %v555
  %v2305 = vunpack.c.l.b16 %v556
  %v2306 = vunpack.c.h.b16 %v556
  %v2307 = vunpack.c.l.b16 %v557
  %v2308 = vunpack.c.h.b16 %v557
  %v2309 = vunpack.c.l.b16 %v558
  %v2310 = vunpack.c.h.b16 %v558
  %v2311 = vunpack.c.l.b16 %v559
  %v2312 = vunpack.c.h.b16 %v559
  %v2313 = vunpack.c.l.b16 %v560
  %v2314 = vunpack.c.h.b16 %v560
  %v2315 = vunpack.c.l.b16 %v561
  %v2316 = vunpack.c.h.b16 %v561
  %v2317 = vunpack.c.l.b16 %v562
  %v2318 = vunpack.c.h.b16 %v562
  %v2319 = vunpack.c.l.b16 %v563
  %v2320 = vunpack.c.h.b16 %v563
  %v2321 = vunpack.c.l.b16 %v564
  %v2322 = vunpack.c.h.b16 %v564
  %v2323 = vunpack.c.l.b16 %v565
  %v2324 = vunpack.c.h.b16 %v565
  %v2325 = vunpack.c.l.b16 %v566
  %v2326 = vunpack.c.h.b16 %v566
  %v2327 = vunpack.c.l.b16 %v567
  %v2328 = vunpack.c.h.b16 %v567
  %v2329 = vunpack.c.l.b16 %v568
  %v2330 = vunpack.c.h.b16 %v568
  %v2331 = vunpack.c.l.b16 %v569
  %v2332 = vunpack.c.h.b16 %v569
  %v2333 = vunpack.c.l.b16 %v570
  %v2334 = vunpack.c.h.b16 %v570
  %v2335 = vunpack.c.l.b16 %v571
  %v2336 = vunpack.c.h.b16 %v571
  %v2337 = vunpack.c.l.b16 %v572
  %v2338 = vunpack.c.h.b16 %v572
  %v2339 = vunpack.c.l.b16 %v573
  %v2340 = vunpack.c.h.b16 %v573
  %v2341 = vunpack.c.l.b16 %v574
  %v2342 = vunpack.c.h.b16 %v574
  %v2343 = vunpack.c.l.b16 %v575
  %v2344 = vunpack.c.h.b16 %v575
  %v2345 = vunpack.c.l.b16 %v576
  %v2346 = vunpack.c.h.b16 %v576
  %v2347 = vunpack.c.l.b16 %v577
  %v2348 = vunpack.c.h.b16 %v577
  %v2349 = vunpack.c.l.b16 %v578
  %v2350 = vunpack.c.h.b16 %v578
  %v2351 = vunpack.c.l.b16 %v579
  %v2352 = vunpack.c.h.b16 %v579
  %v2353 = vunpack.c.l.b16 %v580
  %v2354 = vunpack.c.h.b16 %v580
  %v2355 = vunpack.c.l.b16 %v581
  %v2356 = vunpack.c.h.b16 %v581
  %v2357 = vunpack.c.l.b16 %v582
  %v2358 = vunpack.c.h.b16 %v582
  %v2359 = vunpack.c.l.b16 %v583
  %v2360 = vunpack.c.h.b16 %v583
  %v2361 = vunpack.c.l.b16 %v584
  %v2362 = vunpack.c.h.b16 %v584
  %v2363 = vunpack.c.l.b16 %v585
  %v2364 = vunpack.c.h.b16 %v585
  %v2365 = vunpack.c.l.b16 %v586
  %v2366 = vunpack.c.h.b16 %v586
  %v2367 = vunpack.c.l.b16 %v587
  %v2368 = vunpack.c.h.b16 %v587
  %v2369 = vunpack.c.l.b16 %v588
  %v2370 = vunpack.c.h.b16 %v588
  %v2371 = vunpack.c.l.b16 %v589
  %v2372 = vunpack.c.h.b16 %v589
  %v2373 = vunpack.c.l.b16 %v590
  %v2374 = vunpack.c.h.b16 %v590
  %v2375 = vunpack.c.l.b16 %v591
  %v2376 = vunpack.c.h.b16 %v591
  %v2377 = vunpack.c.l.b16 %v592
  %v2378 = vunpack.c.h.b16 %v592
  %v2379 = vunpack.c.l.b16 %v593
  %v2380 = vunpack.c.h.b16 %v593
  %v2381 = vunpack.c.l.b16 %v594
  %v2382 = vunpack.c.h.b16 %v594
  %v2383 = vunpack.c.l.b16 %v595
  %v2384 = vunpack.c.h.b16 %v595
  %v2385 = vunpack.c.l.b16 %v596
  %v2386 = vunpack.c.h.b16 %v596
  %v2387 = vunpack.c.l.b16 %v597
  %v2388 = vunpack.c.h.b16 %v597
  %v2389 = vpack.c.b16 %v1241, %v1237
  %v2390 = vpack.c.b16 %v1242, %v1238
  %v2391 = vpack.c.b16 %v1243, %v1239
  %v2392 = vpack.c.b16 %v1244, %v1240
  %v2393 = vpack.c.b16 %v1249, %v1245
  %v2394 = vpack.c.b16 %v1250, %v1246
  %v2395 = vpack.c.b16 %v1251, %v1247
  %v2396 = vpack.c.b16 %v1252, %v1248
  %v2397 = vpack.c.b16 %v1257, %v1253
  %v2398 = vpack.c.b16 %v1258, %v1254
  %v2399 = vpack.c.b16 %v1259, %v1255
  %v2400 = vpack.c.b16 %v1260, %v1256
  %v2401 = vpack.c.b16 %v1265, %v1261
  %v2402 = vpack.c.b16 %v1266, %v1262
  %v2403 = vpack.c.b16 %v1267, %v1263
  %v2404 = vpack.c.b16 %v1268, %v1264
  %v2405 = vpack.c.b16 %v1273, %v1269
  %v2406 = vpack.c.b16 %v1274, %v1270
  %v2407 = vpack.c.b16 %v1275, %v1271
  %v2408 = vpack.c.b16 %v1276, %v1272
  %v2409 = vpack.c.b16 %v1281, %v1277
  %v2410 = vpack.c.b16 %v1282, %v1278
  %v2411 = vpack.c.b16 %v1283, %v1279
  %v2412 = vpack.c.b16 %v1284, %v1280
  %v2413 = vpack.c.b16 %v1289, %v1285
  %v2414 = vpack.c.b16 %v1290, %v1286
  %v2415 = vpack.c.b16 %v1291, %v1287
  %v2416 = vpack.c.b16 %v1292, %v1288
  %v2417 = vpack.c.b16 %v1297, %v1293
  %v2418 = vpack.c.b16 %v1298, %v1294
  %v2419 = vpack.c.b16 %v1299, %v1295
  %v2420 = vpack.c.b16 %v1300, %v1296
  %v2421 = vpack.c.b16 %v1305, %v1301
  %v2422 = vpack.c.b16 %v1306, %v1302
  %v2423 = vpack.c.b16 %v1307, %v1303
  %v2424 = vpack.c.b16 %v1308, %v1304
  %v2425 = vpack.c.b16 %v1313, %v1309
  %v2426 = vpack.c.b16 %v1314, %v1310
  %v2427 = vpack.c.b16 %v1315, %v1311
  %v2428 = vpack.c.b16 %v1316, %v1312
  %v2429 = vpack.c.b16 %v1321, %v1317
  %v2430 = vpack.c.b16 %v1322, %v1318
  %v2431 = vpack.c.b16 %v1323, %v1319
  %v2432 = vpack.c.b16 %v1324, %v1320
  %v2433 = vpack.c.b16 %v1329, %v1325
  %v2434 = vpack.c.b16 %v1330, %v1326
  %v2435 = vpack.c.b16 %v1331, %v1327
  %v2436 = vpack.c.b16 %v1332, %v1328
  %v2437 = vpack.c.b16 %v1337, %v1333
  %v2438 = vpack.c.b16 %v1338, %v1334
  %v2439 = vpack.c.b16 %v1339, %v1335
  %v2440 = vpack.c.b16 %v1340, %v1336
  %v2441 = vpack.c.b16 %v1345, %v1341
  %v2442 = vpack.c.b16 %v1346, %v1342
  %v2443 = vpack.c.b16 %v1347, %v1343
  %v2444 = vpack.c.b16 %v1348, %v1344
  %v2445 = vpack.c.b16 %v1353, %v1349
  %v2446 = vpack.c.b16 %v1354, %v1350
  %v2447 = vpack.c.b16 %v1355, %v1351
  %v2448 = vpack.c.b16 %v1356, %v1352
  %v2449 = vpack.c.b16 %v1361, %v1357
  %v2450 = vpack.c.b16 %v1362, %v1358
  %v2451 = vpack.c.b16 %v1363, %v1359
  %v2452 = vpack.c.b16 %v1364, %v1360
  %v2453 = vpack.c.b16 %v1369, %v1365
  %v2454 = vpack.c.b16 %v1370, %v1366
  %v2455 = vpack.c.b16 %v1371, %v1367
  %v2456 = vpack.c.b16 %v1372, %v1368
  %v2457 = vpack.c.b16 %v1377, %v1373
  %v2458 = vpack.c.b16 %v1378, %v1374
  %v2459 = vpack.c.b16 %v1379, %v1375
  %v2460 = vpack.c.b16 %v1380, %v1376
  %v2461 = vpack.c.b16 %v1385, %v1381
  %v2462 = vpack.c.b16 %v1386, %v1382
  %v2463 = vpack.c.b16 %v1387, %v1383
  %v2464 = vpack.c.b16 %v1388, %v1384
  %v2465 = vpack.c.b16 %v1393, %v1389
  %v2466 = vpack.c.b16 %v1394, %v1390
  %v2467 = vpack.c.b16 %v1395, %v1391
  %v2468 = vpack.c.b16 %v1396, %v1392
  %v2469 = vpack.c.b16 %v1401, %v1397
  %v2470 = vpack.c.b16 %v1402, %v1398
  %v2471 = vpack.c.b16 %v1403, %v1399
  %v2472 = vpack.c.b16 %v1404, %v1400
  %v2473 = vpack.c.b16 %v1409, %v1405
  %v2474 = vpack.c.b16 %v1410, %v1406
  %v2475 = vpack.c.b16 %v1411, %v1407
  %v2476 = vpack.c.b16 %v1412, %v1408
  %v2477 = vpack.c.b16 %v1417, %v1413
  %v2478 = vpack.c.b16 %v1418, %v1414
  %v2479 = vpack.c.b16 %v1419, %v1415
  %v2480 = vpack.c.b16 %v1420, %v1416
  %v2481 = vpack.c.b16 %v1425, %v1421
  %v2482 = vpack.c.b16 %v1426, %v1422
  %v2483 = vpack.c.b16 %v1427, %v1423
  %v2484 = vpack.c.b16 %v1428, %v1424
  %v2485 = vpack.c.b16 %v1433, %v1429
  %v2486 = vpack.c.b16 %v1434, %v1430
  %v2487 = vpack.c.b16 %v1435, %v1431
  %v2488 = vpack.c.b16 %v1436, %v1432
  %v2489 = vpack.c.b16 %v1441, %v1437
  %v2490 = vpack.c.b16 %v1442, %v1438
  %v2491 = vpack.c.b16 %v1443, %v1439
  %v2492 = vpack.c.b16 %v1444, %v1440
  %v2493 = vpack.c.b16 %v1449, %v1445
  %v2494 = vpack.c.b16 %v1450, %v1446
  %v2495 = vpack.c.b16 %v1451, %v1447
  %v2496 = vpack.c.b16 %v1452, %v1448
  %v2497 = vpack.c.b16 %v1457, %v1453
  %v2498 = vpack.c.b16 %v1458, %v1454
  %v2499 = vpack.c.b16 %v1459, %v1455
  %v2500 = vpack.c.b16 %v1460, %v1456
  %v2501 = vpack.c.b16 %v1465, %v1461
  %v2502 = vpack.c.b16 %v1466, %v1462
  %v2503 = vpack.c.b16 %v1467, %v1463
  %v2504 = vpack.c.b16 %v1468, %v1464
  %v2505 = vpack.c.b16 %v1473, %v1469
  %v2506 = vpack.c.b16 %v1474, %v1470
  %v2507 = vpack.c.b16 %v1475, %v1471
  %v2508 = vpack.c.b16 %v1476, %v1472
  %v2509 = vpack.c.b16 %v1481, %v1477
  %v2510 = vpack.c.b16 %v1482, %v1478
  %v2511 = vpack.c.b16 %v1483, %v1479
  %v2512 = vpack.c.b16 %v1484, %v1480
  %v2513 = vpack.c.b16 %v1489, %v1485
  %v2514 = vpack.c.b16 %v1490, %v1486
  %v2515 = vpack.c.b16 %v1491, %v1487
  %v2516 = vpack.c.b16 %v1492, %v1488
  %v2517 = vpack.c.b16 %v1497, %v1493
  %v2518 = vpack.c.b16 %v1498, %v1494
  %v2519 = vpack.c.b16 %v1499, %v1495
  %v2520 = vpack.c.b16 %v1500, %v1496
  %v2521 = vpack.c.b16 %v1505, %v1501
  %v2522 = vpack.c.b16 %v1506, %v1502
  %v2523 = vpack.c.b16 %v1507, %v1503
  %v2524 = vpack.c.b16 %v1508, %v1504
  %v2525 = vpack.c.b16 %v1513, %v1509
  %v2526 = vpack.c.b16 %v1514, %v1510
  %v2527 = vpack.c.b16 %v1515, %v1511
  %v2528 = vpack.c.b16 %v1516, %v1512
  %v2529 = vpack.c.b16 %v1521, %v1517
  %v2530 = vpack.c.b16 %v1522, %v1518
  %v2531 = vpack.c.b16 %v1523, %v1519
  %v2532 = vpack.c.b16 %v1524, %v1520
  %v2533 = vpack.c.b16 %v1529, %v1525
  %v2534 = vpack.c.b16 %v1530, %v1526
  %v2535 = vpack.c.b16 %v1531, %v1527
  %v2536 = vpack.c.b16 %v1532, %v1528
  %v2537 = vpack.c.b16 %v1537, %v1533
  %v2538 = vpack.c.b16 %v1538, %v1534
  %v2539 = vpack.c.b16 %v1539, %v1535
  %v2540 = vpack.c.b16 %v1540, %v1536
  %v2541 = vpack.c.b16 %v1545, %v1541
  %v2542 = vpack.c.b16 %v1546, %v1542
  %v2543 = vpack.c.b16 %v1547, %v1543
  %v2544 = vpack.c.b16 %v1548, %v1544
  %v2545 = vpack.c.b16 %v1553, %v1549
  %v2546 = vpack.c.b16 %v1554, %v1550
  %v2547 = vpack.c.b16 %v1555, %v1551
  %v2548 = vpack.c.b16 %v1556, %v1552
  %v2549 = vpack.c.b16 %v1561, %v1557
  %v2550 = vpack.c.b16 %v1562, %v1558
  %v2551 = vpack.c.b16 %v1563, %v1559
  %v2552 = vpack.c.b16 %v1564, %v1560
  %v2553 = vpack.c.b16 %v1569, %v1565
  %v2554 = vpack.c.b16 %v1570, %v1566
  %v2555 = vpack.c.b16 %v1571, %v1567
  %v2556 = vpack.c.b16 %v1572, %v1568
  %v2557 = vpack.c.b16 %v1577, %v1573
  %v2558 = vpack.c.b16 %v1578, %v1574
  %v2559 = vpack.c.b16 %v1579, %v1575
  %v2560 = vpack.c.b16 %v1580, %v1576
  %v2561 = vpack.c.b16 %v1585, %v1581
  %v2562 = vpack.c.b16 %v1586, %v1582
  %v2563 = vpack.c.b16 %v1587, %v1583
  %v2564 = vpack.c.b16 %v1588, %v1584
  %v2565 = vpack.c.b16 %v1593, %v1589
  %v2566 = vpack.c.b16 %v1594, %v1590
  %v2567 = vpack.c.b16 %v1595, %v1591
  %v2568 = vpack.c.b16 %v1596, %v1592
  %v2569 = vpack.c.b16 %v1601, %v1597
  %v2570 = vpack.c.b16 %v1602, %v1598
  %v2571 = vpack.c.b16 %v1603, %v1599
  %v2572 = vpack.c.b16 %v1604, %v1600
  %v2573 = vpack.c.b16 %v1609, %v1605
  %v2574 = vpack.c.b16 %v1610, %v1606
  %v2575 = vpack.c.b16 %v1611, %v1607
  %v2576 = vpack.c.b16 %v1612, %v1608
  %v2577 = vpack.c.b16 %v1617, %v1613
  %v2578 = vpack.c.b16 %v1618, %v1614
  %v2579 = vpack.c.b16 %v1619, %v1615
  %v2580 = vpack.c.b16 %v1620, %v1616
  %v2581 = vpack.c.b16 %v1625, %v1621
  %v2582 = vpack.c.b16 %v1626, %v1622
  %v2583 = vpack.c.b16 %v1627, %v1623
  %v2584 = vpack.c.b16 %v1628, %v1624
  %v2585 = vpack.c.b16 %v1633, %v1629
  %v2586 = vpack.c.b16 %v1634, %v1630
  %v2587 = vpack.c.b16 %v1635, %v1631
  %v2588 = vpack.c.b16 %v1636, %v1632
  %v2589 = vpack.c.b16 %v1641, %v1637
  %v2590 = vpack.c.b16 %v1642, %v1638
  %v2591 = vpack.c.b16 %v1643, %v1639
  %v2592 = vpack.c.b16 %v1644, %v1640
  %v2593 = vpack.c.b16 %v1649, %v1645
  %v2594 = vpack.c.b16 %v1650, %v1646
  %v2595 = vpack.c.b16 %v1651, %v1647
  %v2596 = vpack.c.b16 %v1652, %v1648
  %v2597 = vpack.c.b16 %v1657, %v1653
  %v2598 = vpack.c.b16 %v1658, %v1654
  %v2599 = vpack.c.b16 %v1659, %v1655
  %v2600 = vpack.c.b16 %v1660, %v1656
  %v2601 = vpack.c.b16 %v1665, %v1661
  %v2602 = vpack.c.b16 %v1666, %v1662
  %v2603 = vpack.c.b16 %v1667, %v1663
  %v2604 = vpack.c.b16 %v1668, %v1664
  %v2605 = vpack.c.b16 %v1673, %v1669
  %v2606 = vpack.c.b16 %v1674, %v1670
  %v2607 = vpack.c.b16 %v1675, %v1671
  %v2608 = vpack.c.b16 %v1676, %v1672
  %v2609 = vpack.c.b16 %v1681, %v1677
  %v2610 = vpack.c.b16 %v1682, %v1678
  %v2611 = vpack.c.b16 %v1683, %v1679
  %v2612 = vpack.c.b16 %v1684, %v1680
  %v2613 = vpack.c.b16 %v1689, %v1685
  %v2614 = vpack.c.b16 %v1690, %v1686
  %v2615 = vpack.c.b16 %v1691, %v1687
  %v2616 = vpack.c.b16 %v1692, %v1688
  %v2617 = vpack.c.b16 %v1697, %v1693
  %v2618 = vpack.c.b16 %v1698, %v1694
  %v2619 = vpack.c.b16 %v1699, %v1695
  %v2620 = vpack.c.b16 %v1700, %v1696
  %v2621 = vpack.c.b16 %v1705, %v1701
  %v2622 = vpack.c.b16 %v1706, %v1702
  %v2623 = vpack.c.b16 %v1707, %v1703
  %v2624 = vpack.c.b16 %v1708, %v1704
  %v2625 = vpack.c.b16 %v1713, %v1709
  %v2626 = vpack.c.b16 %v1714, %v1710
  %v2627 = vpack.c.b16 %v1715, %v1711
  %v2628 = vpack.c.b16 %v1716, %v1712
  %v2629 = vpack.c.b16 %v1721, %v1717
  %v2630 = vpack.c.b16 %v1722, %v1718
  %v2631 = vpack.c.b16 %v1723, %v1719
  %v2632 = vpack.c.b16 %v1724, %v1720
  %v2633 = vpack.c.b16 %v1729, %v1725
  %v2634 = vpack.c.b16 %v1730, %v1726
  %v2635 = vpack.c.b16 %v1731, %v1727
  %v2636 = vpack.c.b16 %v1732, %v1728
  %v2637 = vpack.c.b16 %v1737, %v1733
  %v2638 = vpack.c.b16 %v1738, %v1734
  %v2639 = vpack.c.b16 %v1739, %v1735
  %v2640 = vpack.c.b16 %v1740, %v1736
  %v2641 = vpack.c.b16 %v1745, %v1741
  %v2642 = vpack.c.b16 %v1746, %v1742
  %v2643 = vpack.c.b16 %v1747, %v1743
  %v2644 = vpack.c.b16 %v1748, %v1744
  %v2645 = vpack.c.b16 %v1753, %v1749
  %v2646 = vpack.c.b16 %v1754, %v1750
  %v2647 = vpack.c.b16 %v1755, %v1751
  %v2648 = vpack.c.b16 %v1756, %v1752
  %v2649 = vpack.c.b16 %v1761, %v1757
  %v2650 = vpack.c.b16 %v1762, %v1758
  %v2651 = vpack.c.b16 %v1763, %v1759
  %v2652 = vpack.c.b16 %v1764, %v1760
  %v2653 = vpack.c.b16 %v1769, %v1765
  %v2654 = vpack.c.b16 %v1770, %v1766
  %v2655 = vpack.c.b16 %v1771, %v1767
  %v2656 = vpack.c.b16 %v1772, %v1768
  %v2657 = vpack.c.b16 %v1777, %v1773
  %v2658 = vpack.c.b16 %v1778, %v1774
  %v2659 = vpack.c.b16 %v1779, %v1775
  %v2660 = vpack.c.b16 %v1780, %v1776
  %v2661 = vpack.c.b16 %v1785, %v1781
  %v2662 = vpack.c.b16 %v1786, %v1782
  %v2663 = vpack.c.b16 %v1787, %v1783
  %v2664 = vpack.c.b16 %v1788, %v1784
  %v2665 = vpack.c.b16 %v1793, %v1789
  %v2666 = vpack.c.b16 %v1794, %v1790
  %v2667 = vpack.c.b16 %v1795, %v1791
  %v2668 = vpack.c.b16 %v1796, %v1792
  %v2669 = vpack.c.b16 %v1801, %v1797
  %v2670 = vpack.c.b16 %v1802, %v1798
  %v2671 = vpack.c.b16 %v1803, %v1799
  %v2672 = vpack.c.b16 %v1804, %v1800
  %v2673 = vpack.c.b16 %v1809, %v1805
  %v2674 = vpack.c.b16 %v1810, %v1806
  %v2675 = vpack.c.b16 %v1811, %v1807
  %v2676 = vpack.c.b16 %v1812, %v1808
  %v2677 = vpack.c.b16 %v1817, %v1813
  %v2678 = vpack.c.b16 %v1818, %v1814
  %v2679 = vpack.c.b16 %v1819, %v1815
  %v2680 = vpack.c.b16 %v1820, %v1816
  %v2681 = vpack.c.b16 %v1825, %v1821
  %v2682 = vpack.c.b16 %v1826, %v1822
  %v2683 = vpack.c.b16 %v1827, %v1823
  %v2684 = vpack.c.b16 %v1828, %v1824
  %v2685 = vpack.c.b16 %v1833, %v1829
  %v2686 = vpack.c.b16 %v1834, %v1830
  %v2687 = vpack.c.b16 %v1835, %v1831
  %v2688 = vpack.c.b16 %v1836, %v1832
  %v2689 = vpack.c.b16 %v1841, %v1837
  %v2690 = vpack.c.b16 %v1842, %v1838
  %v2691 = vpack.c.b16 %v1843, %v1839
  %v2692 = vpack.c.b16 %v1844, %v1840
  %v2693 = vpack.c.b16 %v1849, %v1845
  %v2694 = vpack.c.b16 %v1850, %v1846
  %v2695 = vpack.c.b16 %v1851, %v1847
  %v2696 = vpack.c.b16 %v1852, %v1848
  %v2697 = vpack.c.b16 %v1857, %v1853
  %v2698 = vpack.c.b16 %v1858, %v1854
  %v2699 = vpack.c.b16 %v1859, %v1855
  %v2700 = vpack.c.b16 %v1860, %v1856
  %v2701 = vpack.c.b16 %v1865, %v1861
  %v2702 = vpack.c.b16 %v1866, %v1862
  %v2703 = vpack.c.b16 %v1867, %v1863
  %v2704 = vpack.c.b16 %v1868, %v1864
  %v2705 = vpack.c.b16 %v1873, %v1869
  %v2706 = vpack.c.b16 %v1874, %v1870
  %v2707 = vpack.c.b16 %v1875, %v1871
  %v2708 = vpack.c.b16 %v1876, %v1872
  %v2709 = vpack.c.b16 %v1881, %v1877
  %v2710 = vpack.c.b16 %v1882, %v1878
  %v2711 = vpack.c.b16 %v1883, %v1879
  %v2712 = vpack.c.b16 %v1884, %v1880
  %v2713 = vpack.c.b16 %v1889, %v1885
  %v2714 = vpack.c.b16 %v1890, %v1886
  %v2715 = vpack.c.b16 %v1891, %v1887
  %v2716 = vpack.c.b16 %v1892, %v1888
  %v2717 = vpack.c.b16 %v1897, %v1893
  %v2718 = vpack.c.b16 %v1898, %v1894
  %v2719 = vpack.c.b16 %v1899, %v1895
  %v2720 = vpack.c.b16 %v1900, %v1896
  %v2721 = vpack.c.b16 %v1905, %v1901
  %v2722 = vpack.c.b16 %v1906, %v1902
  %v2723 = vpack.c.b16 %v1907, %v1903
  %v2724 = vpack.c.b16 %v1908, %v1904
  %v2725 = vpack.c.b16 %v1913, %v1909
  %v2726 = vpack.c.b16 %v1914, %v1910
  %v2727 = vpack.c.b16 %v1915, %v1911
  %v2728 = vpack.c.b16 %v1916, %v1912
  %v2729 = vpack.c.b16 %v1921, %v1917
  %v2730 = vpack.c.b16 %v1922, %v1918
  %v2731 = vpack.c.b16 %v1923, %v1919
  %v2732 = vpack.c.b16 %v1924, %v1920
  %v2733 = vpack.c.b16 %v1929, %v1925
  %v2734 = vpack.c.b16 %v1930, %v1926
  %v2735 = vpack.c.b16 %v1931, %v1927
  %v2736 = vpack.c.b16 %v1932, %v1928
  %v2737 = vpack.c.b16 %v1937, %v1933
  %v2738 = vpack.c.b16 %v1938, %v1934
  %v2739 = vpack.c.b16 %v1939, %v1935
  %v2740 = vpack.c.b16 %v1940, %v1936
  %v2741 = vpack.c.b16 %v1945, %v1941
  %v2742 = vpack.c.b16 %v1946, %v1942
  %v2743 = vpack.c.b16 %v1947, %v1943
  %v2744 = vpack.c.b16 %v1948, %v1944
  %v2745 = vpack.c.b16 %v1953, %v1949
  %v2746 = vpack.c.b16 %v1954, %v1950
  %v2747 = vpack.c.b16 %v1955, %v1951
  %v2748 = vpack.c.b16 %v1956, %v1952
  %v2749 = vpack.c.b16 %v1961, %v1957
  %v2750 = vpack.c.b16 %v1962, %v1958
  %v2751 = vpack.c.b16 %v1963, %v1959
  %v2752 = vpack.c.b16 %v1964, %v1960
  %v2753 = vpack.c.b16 %v1969, %v1965
  %v2754 = vpack.c.b16 %v1970, %v1966
  %v2755 = vpack.c.b16 %v1971, %v1967
  %v2756 = vpack.c.b16 %v1972, %v1968
  %v2757 = vpack.c.b16 %v1977, %v1973
  %v2758 = vpack.c.b16 %v1978, %v1974
  %v2759 = vpack.c.b16 %v1979, %v1975
  %v2760 = vpack.c.b16 %v1980, %v1976
  %v2761 = vpack.c.b16 %v1985, %v1981
  %v2762 = vpack.c.b16 %v1986, %v1982
  %v2763 = vpack.c.b16 %v1987, %v1983
  %v2764 = vpack.c.b16 %v1988, %v1984
  %v2765 = vpack.c.b16 %v1993, %v1989
  %v2766 = vpack.c.b16 %v1994, %v1990
  %v2767 = vpack.c.b16 %v1995, %v1991
  %v2768 = vpack.c.b16 %v1996, %v1992
  %v2769 = vpack.c.b16 %v2001, %v1997
  %v2770 = vpack.c.b16 %v2002, %v1998
  %v2771 = vpack.c.b16 %v2003, %v1999
  %v2772 = vpack.c.b16 %v2004, %v2000
  %v2773 = vpack.c.b16 %v2009, %v2005
  %v2774 = vpack.c.b16 %v2010, %v2006
  %v2775 = vpack.c.b16 %v2011, %v2007
  %v2776 = vpack.c.b16 %v2012, %v2008
  %v2777 = vpack.c.b16 %v2017, %v2013
  %v2778 = vpack.c.b16 %v2018, %v2014
  %v2779 = vpack.c.b16 %v2019, %v2015
  %v2780 = vpack.c.b16 %v2020, %v2016
  %v2781 = vpack.c.b16 %v2025, %v2021
  %v2782 = vpack.c.b16 %v2026, %v2022
  %v2783 = vpack.c.b16 %v2027, %v2023
  %v2784 = vpack.c.b16 %v2028, %v2024
  %v2785 = vpack.c.b16 %v2033, %v2029
  %v2786 = vpack.c.b16 %v2034, %v2030
  %v2787 = vpack.c.b16 %v2035, %v2031
  %v2788 = vpack.c.b16 %v2036, %v2032
  %v2789 = vpack.c.b16 %v2041, %v2037
  %v2790 = vpack.c.b16 %v2042, %v2038
  %v2791 = vpack.c.b16 %v2043, %v2039
  %v2792 = vpack.c.b16 %v2044, %v2040
  %v2793 = vpack.c.b16 %v2049, %v2045
  %v2794 = vpack.c.b16 %v2050, %v2046
  %v2795 = vpack.c.b16 %v2051, %v2047
  %v2796 = vpack.c.b16 %v2052, %v2048
  %v2797 = vpack.c.b16 %v2057, %v2053
  %v2798 = vpack.c.b16 %v2058, %v2054
  %v2799 = vpack.c.b16 %v2059, %v2055
  %v2800 = vpack.c.b16 %v2060, %v2056
  %v2801 = vpack.c.b16 %v2065, %v2061
  %v2802 = vpack.c.b16 %v2066, %v2062
  %v2803 = vpack.c.b16 %v2067, %v2063
  %v2804 = vpack.c.b16 %v2068, %v2064
  %v2805 = vpack.c.b16 %v2073, %v2069
  %v2806 = vpack.c.b16 %v2074, %v2070
  %v2807 = vpack.c.b16 %v2075, %v2071
  %v2808 = vpack.c.b16 %v2076, %v2072
  %v2809 = vpack.c.b16 %v2081, %v2077
  %v2810 = vpack.c.b16 %v2082, %v2078
  %v2811 = vpack.c.b16 %v2083, %v2079
  %v2812 = vpack.c.b16 %v2084, %v2080
  %v2813 = vpack.c.b16 %v2089, %v2085
  %v2814 = vpack.c.b16 %v2090, %v2086
  %v2815 = vpack.c.b16 %v2091, %v2087
  %v2816 = vpack.c.b16 %v2092, %v2088
  %v2817 = vpack.c.b16 %v2097, %v2093
  %v2818 = vpack.c.b16 %v2098, %v2094
  %v2819 = vpack.c.b16 %v2099, %v2095
  %v2820 = vpack.c.b16 %v2100, %v2096
  %v2821 = vpack.c.b16 %v2105, %v2101
  %v2822 = vpack.c.b16 %v2106, %v2102
  %v2823 = vpack.c.b16 %v2107, %v2103
  %v2824 = vpack.c.b16 %v2108, %v2104
  %v2825 = vpack.c.b16 %v2113, %v2109
  %v2826 = vpack.c.b16 %v2114, %v2110
  %v2827 = vpack.c.b16 %v2115, %v2111
  %v2828 = vpack.c.b16 %v2116, %v2112
  %v2829 = vpack.c.b16 %v2121, %v2117
  %v2830 = vpack.c.b16 %v2122, %v2118
  %v2831 = vpack.c.b16 %v2123, %v2119
  %v2832 = vpack.c.b16 %v2124, %v2120
  %v2833 = vpack.c.b16 %v2129, %v2125
  %v2834 = vpack.c.b16 %v2130, %v2126
  %v2835 = vpack.c.b16 %v2131, %v2127
  %v2836 = vpack.c.b16 %v2132, %v2128
  %v2837 = vpack.c.b16 %v2137, %v2133
  %v2838 = vpack.c.b16 %v2138, %v2134
  %v2839 = vpack.c.b16 %v2139, %v2135
  %v2840 = vpack.c.b16 %v2140, %v2136
  %v2841 = vpack.c.b16 %v2145, %v2141
  %v2842 = vpack.c.b16 %v2146, %v2142
  %v2843 = vpack.c.b16 %v2147, %v2143
  %v2844 = vpack.c.b16 %v2148, %v2144
  %v2845 = vpack.c.b16 %v2153, %v2149
  %v2846 = vpack.c.b16 %v2154, %v2150
  %v2847 = vpack.c.b16 %v2155, %v2151
  %v2848 = vpack.c.b16 %v2156, %v2152
  %v2849 = vpack.c.b16 %v2161, %v2157
  %v2850 = vpack.c.b16 %v2162, %v2158
  %v2851 = vpack.c.b16 %v2163, %v2159
  %v2852 = vpack.c.b16 %v2164, %v2160
  %v2853 = vpack.c.b16 %v2169, %v2165
  %v2854 = vpack.c.b16 %v2170, %v2166
  %v2855 = vpack.c.b16 %v2171, %v2167
  %v2856 = vpack.c.b16 %v2172, %v2168
  %v2857 = vpack.c.b16 %v2177, %v2173
  %v2858 = vpack.c.b16 %v2178, %v2174
  %v2859 = vpack.c.b16 %v2179, %v2175
  %v2860 = vpack.c.b16 %v2180, %v2176
  %v2861 = vpack.c.b16 %v2185, %v2181
  %v2862 = vpack.c.b16 %v2186, %v2182
  %v2863 = vpack.c.b16 %v2187, %v2183
  %v2864 = vpack.c.b16 %v2188, %v2184
  %v2865 = vpack.c.b16 %v2193, %v2189
  %v2866 = vpack.c.b16 %v2194, %v2190
  %v2867 = vpack.c.b16 %v2195, %v2191
  %v2868 = vpack.c.b16 %v2196, %v2192
  %v2869 = vpack.c.b16 %v2201, %v2197
  %v2870 = vpack.c.b16 %v2202, %v2198
  %v2871 = vpack.c.b16 %v2203, %v2199
  %v2872 = vpack.c.b16 %v2204, %v2200
  %v2873 = vpack.c.b16 %v2209, %v2205
  %v2874 = vpack.c.b16 %v2210, %v2206
  %v2875 = vpack.c.b16 %v2211, %v2207
  %v2876 = vpack.c.b16 %v2212, %v2208
  %v2877 = vpack.c.b16 %v2217, %v2213
  %v2878 = vpack.c.b16 %v2218, %v2214
  %v2879 = vpack.c.b16 %v2219, %v2215
  %v2880 = vpack.c.b16 %v2220, %v2216
  %v2881 = vpack.c.b16 %v2225, %v2221
  %v2882 = vpack.c.b16 %v2226, %v2222
  %v2883 = vpack.c.b16 %v2227, %v2223
  %v2884 = vpack.c.b16 %v2228, %v2224
  %v2885 = vpack.c.b16 %v2233, %v2229
  %v2886 = vpack.c.b16 %v2234, %v2230
  %v2887 = vpack.c.b16 %v2235, %v2231
  %v2888 = vpack.c.b16 %v2236, %v2232
  %v2889 = vpack.c.b16 %v2241, %v2237
  %v2890 = vpack.c.b16 %v2242, %v2238
  %v2891 = vpack.c.b16 %v2243, %v2239
  %v2892 = vpack.c.b16 %v2244, %v2240
  %v2893 = vpack.c.b16 %v2249, %v2245
  %v2894 = vpack.c.b16 %v2250, %v2246
  %v2895 = vpack.c.b16 %v2251, %v2247
  %v2896 = vpack.c.b16 %v2252, %v2248
  %v2897 = vpack.c.b16 %v2257, %v2253
  %v2898 = vpack.c.b16 %v2258, %v2254
  %v2899 = vpack.c.b16 %v2259, %v2255
  %v2900 = vpack.c.b16 %v2260, %v2256
  %v2901 = vpack.c.b16 %v2265, %v2261
  %v2902 = vpack.c.b16 %v2266, %v2262
  %v2903 = vpack.c.b16 %v2267, %v2263
  %v2904 = vpack.c.b16 %v2268, %v2264
  %v2905 = vpack.c.b16 %v2273, %v2269
  %v2906 = vpack.c.b16 %v2274, %v2270
  %v2907 = vpack.c.b16 %v2275, %v2271
  %v2908 = vpack.c.b16 %v2276, %v2272
  %v2909 = vpack.c.b16 %v2281, %v2277
  %v2910 = vpack.c.b16 %v2282, %v2278
  %v2911 = vpack.c.b16 %v2283, %v2279
  %v2912 = vpack.c.b16 %v2284, %v2280
  %v2913 = vpack.c.b16 %v2289, %v2285
  %v2914 = vpack.c.b16 %v2290, %v2286
  %v2915 = vpack.c.b16 %v2291, %v2287
  %v2916 = vpack.c.b16 %v2292, %v2288
  %v2917 = vpack.c.b16 %v2297, %v2293
  %v2918 = vpack.c.b16 %v2298, %v2294
  %v2919 = vpack.c.b16 %v2299, %v2295
  %v2920 = vpack.c.b16 %v2300, %v2296
  %v2921 = vpack.c.b16 %v2305, %v2301
  %v2922 = vpack.c.b16 %v2306, %v2302
  %v2923 = vpack.c.b16 %v2307, %v2303
  %v2924 = vpack.c.b16 %v2308, %v2304
  %v2925 = vpack.c.b16 %v2313, %v2309
  %v2926 = vpack.c.b16 %v2314, %v2310
  %v2927 = vpack.c.b16 %v2315, %v2311
  %v2928 = vpack.c.b16 %v2316, %v2312
  %v2929 = vpack.c.b16 %v2321, %v2317
  %v2930 = vpack.c.b16 %v2322, %v2318
  %v2931 = vpack.c.b16 %v2323, %v2319
  %v2932 = vpack.c.b16 %v2324, %v2320
  %v2933 = vpack.c.b16 %v2329, %v2325
  %v2934 = vpack.c.b16 %v2330, %v2326
  %v2935 = vpack.c.b16 %v2331, %v2327
  %v2936 = vpack.c.b16 %v2332, %v2328
  %v2937 = vpack.c.b16 %v2337, %v2333
  %v2938 = vpack.c.b16 %v2338, %v2334
  %v2939 = vpack.c.b16 %v2339, %v2335
  %v2940 = vpack.c.b16 %v2340, %v2336
  %v2941 = vpack.c.b16 %v2345, %v2341
  %v2942 = vpack.c.b16 %v2346, %v2342
  %v2943 = vpack.c.b16 %v2347, %v2343
  %v2944 = vpack.c.b16 %v2348, %v2344
  %v2945 = vpack.c.b16 %v2353, %v2349
  %v2946 = vpack.c.b16 %v2354, %v2350
  %v2947 = vpack.c.b16 %v2355, %v2351
  %v2948 = vpack.c.b16 %v2356, %v2352
  %v2949 = vpack.c.b16 %v2361, %v2357
  %v2950 = vpack.c.b16 %v2362, %v2358
  %v2951 = vpack.c.b16 %v2363, %v2359
  %v2952 = vpack.c.b16 %v2364, %v2360
  %v2953 = vpack.c.b16 %v2369, %v2365
  %v2954 = vpack.c.b16 %v2370, %v2366
  %v2955 = vpack.c.b16 %v2371, %v2367
  %v2956 = vpack.c.b16 %v2372, %v2368
  %v2957 = vpack.c.b16 %v2377, %v2373
  %v2958 = vpack.c.b16 %v2378, %v2374
  %v2959 = vpack.c.b16 %v2379, %v2375
  %v2960 = vpack.c.b16 %v2380, %v2376
  %v2961 = vpack.c.b16 %v2385, %v2381
  %v2962 = vpack.c.b16 %v2386, %v2382
  %v2963 = vpack.c.b16 %v2387, %v2383
  %v2964 = vpack.c.b16 %v2388, %v2384
  %3541 = vmatprep.subr.bf16.mxu0 %v2390
  %3542 = vmatpush1.bf16.msra.mxu0 %v2389
  %3543 = vmatprep.subr.bf16.mxu0 %v2394
  %3544 = vmatpush1.bf16.msra.mxu0 %v2393
  %3545 = vmatprep.subr.bf16.mxu0 %v2398
  %3546 = vmatpush1.bf16.msra.mxu0 %v2397
  %3547 = vmatprep.subr.bf16.mxu0 %v2402
  %3548 = vmatpush1.bf16.msra.mxu0 %v2401
  %3549 = vmatprep.subr.bf16.mxu0 %v2406
  %3550 = vmatpush1.bf16.msra.mxu0 %v2405
  %3551 = vmatprep.subr.bf16.mxu0 %v2410
  %3552 = vmatpush1.bf16.msra.mxu0 %v2409
  %3553 = vmatprep.subr.bf16.mxu0 %v2414
  %3554 = vmatpush1.bf16.msra.mxu0 %v2413
  %3555 = vmatprep.subr.bf16.mxu0 %v2418
  %3556 = vmatpush1.bf16.msra.mxu0 %v2417
  %3557 = vmatprep.subr.bf16.mxu0 %v2422
  %3558 = vmatpush1.bf16.msra.mxu0 %v2421
  %3559 = vmatprep.subr.bf16.mxu0 %v2426
  %3560 = vmatpush1.bf16.msra.mxu0 %v2425
  %3561 = vmatprep.subr.bf16.mxu0 %v2430
  %3562 = vmatpush1.bf16.msra.mxu0 %v2429
  %3563 = vmatprep.subr.bf16.mxu0 %v2434
  %3564 = vmatpush1.bf16.msra.mxu0 %v2433
  %3565 = vmatprep.subr.bf16.mxu0 %v2438
  %3566 = vmatpush1.bf16.msra.mxu0 %v2437
  %3567 = vmatprep.subr.bf16.mxu0 %v2442
  %3568 = vmatpush1.bf16.msra.mxu0 %v2441
  %3569 = vmatprep.subr.bf16.mxu0 %v2446
  %3570 = vmatpush1.bf16.msra.mxu0 %v2445
  %3571 = vmatprep.subr.bf16.mxu0 %v2450
  %3572 = vmatpush1.bf16.msra.mxu0 %v2449
  %3573 = vmatprep.mubr.bf16.mxu0 %v626
  %3574 = vmatmul.mubr.bf16.gmra.mrb[0].mxu0 %v625
  %v3575 = vpop.f32.mrb[0].mxu0
  %v3576 = vadd.f32 0.0, %v3575
  %v3577 = vpop.f32.mrb[0].mxu0
  %v3578 = vadd.f32 0.0, %v3577
  %v3579 = vpop.f32.mrb[0].mxu0
  %v3580 = vpop.f32.mrb[0].mxu0
  %3581 = vdwg.mxu0
  %3582 = vmatprep.subr.bf16.mxu0 %v2454
  %3583 = vmatpush1.bf16.msra.mxu0 %v2453
  %3584 = vmatprep.subr.bf16.mxu0 %v2458
  %3585 = vmatpush1.bf16.msra.mxu0 %v2457
  %3586 = vmatprep.subr.bf16.mxu0 %v2462
  %3587 = vmatpush1.bf16.msra.mxu0 %v2461
  %3588 = vmatprep.subr.bf16.mxu0 %v2466
  %3589 = vmatpush1.bf16.msra.mxu0 %v2465
  %3590 = vmatprep.subr.bf16.mxu0 %v2470
  %3591 = vmatpush1.bf16.msra.mxu0 %v2469
  %3592 = vmatprep.subr.bf16.mxu0 %v2474
  %3593 = vmatpush1.bf16.msra.mxu0 %v2473
  %3594 = vmatprep.subr.bf16.mxu0 %v2478
  %3595 = vmatpush1.bf16.msra.mxu0 %v2477
  %3596 = vmatprep.subr.bf16.mxu0 %v2482
  %3597 = vmatpush1.bf16.msra.mxu0 %v2481
  %3598 = vmatprep.subr.bf16.mxu0 %v2486
  %3599 = vmatpush1.bf16.msra.mxu0 %v2485
  %3600 = vmatprep.subr.bf16.mxu0 %v2490
  %3601 = vmatpush1.bf16.msra.mxu0 %v2489
  %3602 = vmatprep.subr.bf16.mxu0 %v2494
  %3603 = vmatpush1.bf16.msra.mxu0 %v2493
  %3604 = vmatprep.subr.bf16.mxu0 %v2498
  %3605 = vmatpush1.bf16.msra.mxu0 %v2497
  %3606 = vmatprep.subr.bf16.mxu0 %v2502
  %3607 = vmatpush1.bf16.msra.mxu0 %v2501
  %3608 = vmatprep.subr.bf16.mxu0 %v2506
  %3609 = vmatpush1.bf16.msra.mxu0 %v2505
  %3610 = vmatprep.subr.bf16.mxu0 %v2510
  %3611 = vmatpush1.bf16.msra.mxu0 %v2509
  %3612 = vmatprep.subr.bf16.mxu0 %v2514
  %3613 = vmatpush1.bf16.msra.mxu0 %v2513
  %3614 = vmatprep.mubr.bf16.mxu0 %v628
  %3615 = vmatmul.mubr.bf16.gmra.mrb[0].mxu0 %v627
  %v3616 = vpop.f32.mrb[0].mxu0
  %v3617 = vadd.f32 %v3576, %v3616
  %v3618 = vpop.f32.mrb[0].mxu0
  %v3619 = vadd.f32 %v3578, %v3618
  %v3620 = vpop.f32.mrb[0].mxu0
  %v3621 = vpop.f32.mrb[0].mxu0
  %3622 = vdwg.mxu0
  %3623 = vmatprep.subr.bf16.mxu0 %v2518
  %3624 = vmatpush1.bf16.msra.mxu0 %v2517
  %3625 = vmatprep.subr.bf16.mxu0 %v2522
  %3626 = vmatpush1.bf16.msra.mxu0 %v2521
  %3627 = vmatprep.subr.bf16.mxu0 %v2526
  %3628 = vmatpush1.bf16.msra.mxu0 %v2525
  %3629 = vmatprep.subr.bf16.mxu0 %v2530
  %3630 = vmatpush1.bf16.msra.mxu0 %v2529
  %3631 = vmatprep.subr.bf16.mxu0 %v2534
  %3632 = vmatpush1.bf16.msra.mxu0 %v2533
  %3633 = vmatprep.subr.bf16.mxu0 %v2538
  %3634 = vmatpush1.bf16.msra.mxu0 %v2537
  %3635 = vmatprep.subr.bf16.mxu0 %v2542
  %3636 = vmatpush1.bf16.msra.mxu0 %v2541
  %3637 = vmatprep.subr.bf16.mxu0 %v2546
  %3638 = vmatpush1.bf16.msra.mxu0 %v2545
  %3639 = vmatprep.subr.bf16.mxu0 %v2550
  %3640 = vmatpush1.bf16.msra.mxu0 %v2549
  %3641 = vmatprep.subr.bf16.mxu0 %v2554
  %3642 = vmatpush1.bf16.msra.mxu0 %v2553
  %3643 = vmatprep.subr.bf16.mxu0 %v2558
  %3644 = vmatpush1.bf16.msra.mxu0 %v2557
  %3645 = vmatprep.subr.bf16.mxu0 %v2562
  %3646 = vmatpush1.bf16.msra.mxu0 %v2561
  %3647 = vmatprep.subr.bf16.mxu0 %v2566
  %3648 = vmatpush1.bf16.msra.mxu0 %v2565
  %3649 = vmatprep.subr.bf16.mxu0 %v2570
  %3650 = vmatpush1.bf16.msra.mxu0 %v2569
  %3651 = vmatprep.subr.bf16.mxu0 %v2574
  %3652 = vmatpush1.bf16.msra.mxu0 %v2573
  %3653 = vmatprep.subr.bf16.mxu0 %v2578
  %3654 = vmatpush1.bf16.msra.mxu0 %v2577
  %3655 = vmatprep.mubr.bf16.mxu0 %v630
  %3656 = vmatmul.mubr.bf16.gmra.mrb[0].mxu0 %v629
  %v3657 = vpop.f32.mrb[0].mxu0
  %v3658 = vadd.f32 %v3617, %v3657
  %v3659 = vpop.f32.mrb[0].mxu0
  %v3660 = vadd.f32 %v3619, %v3659
  %v3661 = vpop.f32.mrb[0].mxu0
  %v3662 = vpop.f32.mrb[0].mxu0
  %3663 = vdwg.mxu0
  %3664 = vmatprep.subr.bf16.mxu0 %v2582
  %3665 = vmatpush1.bf16.msra.mxu0 %v2581
  %3666 = vmatprep.subr.bf16.mxu0 %v2586
  %3667 = vmatpush1.bf16.msra.mxu0 %v2585
  %3668 = vmatprep.subr.bf16.mxu0 %v2590
  %3669 = vmatpush1.bf16.msra.mxu0 %v2589
  %3670 = vmatprep.subr.bf16.mxu0 %v2594
  %3671 = vmatpush1.bf16.msra.mxu0 %v2593
  %3672 = vmatprep.subr.bf16.mxu0 %v2598
  %3673 = vmatpush1.bf16.msra.mxu0 %v2597
  %3674 = vmatprep.subr.bf16.mxu0 %v2602
  %3675 = vmatpush1.bf16.msra.mxu0 %v2601
  %3676 = vmatprep.subr.bf16.mxu0 %v2606
  %3677 = vmatpush1.bf16.msra.mxu0 %v2605
  %3678 = vmatprep.subr.bf16.mxu0 %v2610
  %3679 = vmatpush1.bf16.msra.mxu0 %v2609
  %3680 = vmatprep.subr.bf16.mxu0 %v2614
  %3681 = vmatpush1.bf16.msra.mxu0 %v2613
  %3682 = vmatprep.subr.bf16.mxu0 %v2618
  %3683 = vmatpush1.bf16.msra.mxu0 %v2617
  %3684 = vmatprep.subr.bf16.mxu0 %v2622
  %3685 = vmatpush1.bf16.msra.mxu0 %v2621
  %3686 = vmatprep.subr.bf16.mxu0 %v2626
  %3687 = vmatpush1.bf16.msra.mxu0 %v2625
  %3688 = vmatprep.subr.bf16.mxu0 %v2630
  %3689 = vmatpush1.bf16.msra.mxu0 %v2629
  %3690 = vmatprep.subr.bf16.mxu0 %v2634
  %3691 = vmatpush1.bf16.msra.mxu0 %v2633
  %3692 = vmatprep.subr.bf16.mxu0 %v2638
  %3693 = vmatpush1.bf16.msra.mxu0 %v2637
  %3694 = vmatprep.subr.bf16.mxu0 %v2642
  %3695 = vmatpush1.bf16.msra.mxu0 %v2641
  %3696 = vmatprep.mubr.bf16.mxu0 %v632
  %3697 = vmatmul.mubr.bf16.gmra.mrb[0].mxu0 %v631
  %v3698 = vpop.f32.mrb[0].mxu0
  %v3699 = vadd.f32 %v3658, %v3698
  %v3700 = vpop.f32.mrb[0].mxu0
  %v3701 = vadd.f32 %v3660, %v3700
  %v3702 = vpop.f32.mrb[0].mxu0
  %v3703 = vpop.f32.mrb[0].mxu0
  %3704 = vdwg.mxu0
  %3705 = vmatprep.subr.bf16.mxu0 %v2646
  %3706 = vmatpush1.bf16.msra.mxu0 %v2645
  %3707 = vmatprep.subr.bf16.mxu0 %v2650
  %3708 = vmatpush1.bf16.msra.mxu0 %v2649
  %3709 = vmatprep.subr.bf16.mxu0 %v2654
  %3710 = vmatpush1.bf16.msra.mxu0 %v2653
  %3711 = vmatprep.subr.bf16.mxu0 %v2658
  %3712 = vmatpush1.bf16.msra.mxu0 %v2657
  %3713 = vmatprep.subr.bf16.mxu0 %v2662
  %3714 = vmatpush1.bf16.msra.mxu0 %v2661
  %3715 = vmatprep.subr.bf16.mxu0 %v2666
  %3716 = vmatpush1.bf16.msra.mxu0 %v2665
  %3717 = vmatprep.subr.bf16.mxu0 %v2670
  %3718 = vmatpush1.bf16.msra.mxu0 %v2669
  %3719 = vmatprep.subr.bf16.mxu0 %v2674
  %3720 = vmatpush1.bf16.msra.mxu0 %v2673
  %3721 = vmatprep.subr.bf16.mxu0 %v2678
  %3722 = vmatpush1.bf16.msra.mxu0 %v2677
  %3723 = vmatprep.subr.bf16.mxu0 %v2682
  %3724 = vmatpush1.bf16.msra.mxu0 %v2681
  %3725 = vmatprep.subr.bf16.mxu0 %v2686
  %3726 = vmatpush1.bf16.msra.mxu0 %v2685
  %3727 = vmatprep.subr.bf16.mxu0 %v2690
  %3728 = vmatpush1.bf16.msra.mxu0 %v2689
  %3729 = vmatprep.subr.bf16.mxu0 %v2694
  %3730 = vmatpush1.bf16.msra.mxu0 %v2693
  %3731 = vmatprep.subr.bf16.mxu0 %v2698
  %3732 = vmatpush1.bf16.msra.mxu0 %v2697
  %3733 = vmatprep.subr.bf16.mxu0 %v2702
  %3734 = vmatpush1.bf16.msra.mxu0 %v2701
  %3735 = vmatprep.subr.bf16.mxu0 %v2706
  %3736 = vmatpush1.bf16.msra.mxu0 %v2705
  %3737 = vmatprep.mubr.bf16.mxu0 %v634
  %3738 = vmatmul.mubr.bf16.gmra.mrb[0].mxu0 %v633
  %v3739 = vpop.f32.mrb[0].mxu0
  %v3740 = vadd.f32 %v3699, %v3739
  %v3741 = vpop.f32.mrb[0].mxu0
  %v3742 = vadd.f32 %v3701, %v3741
  %v3743 = vpop.f32.mrb[0].mxu0
  %v3744 = vpop.f32.mrb[0].mxu0
  %3745 = vdwg.mxu0
  %3746 = vmatprep.subr.bf16.mxu0 %v2710
  %3747 = vmatpush1.bf16.msra.mxu0 %v2709
  %3748 = vmatprep.subr.bf16.mxu0 %v2714
  %3749 = vmatpush1.bf16.msra.mxu0 %v2713
  %3750 = vmatprep.subr.bf16.mxu0 %v2718
  %3751 = vmatpush1.bf16.msra.mxu0 %v2717
  %3752 = vmatprep.subr.bf16.mxu0 %v2722
  %3753 = vmatpush1.bf16.msra.mxu0 %v2721
  %3754 = vmatprep.subr.bf16.mxu0 %v2726
  %3755 = vmatpush1.bf16.msra.mxu0 %v2725
  %3756 = vmatprep.subr.bf16.mxu0 %v2730
  %3757 = vmatpush1.bf16.msra.mxu0 %v2729
  %3758 = vmatprep.subr.bf16.mxu0 %v2734
  %3759 = vmatpush1.bf16.msra.mxu0 %v2733
  %3760 = vmatprep.subr.bf16.mxu0 %v2738
  %3761 = vmatpush1.bf16.msra.mxu0 %v2737
  %3762 = vmatprep.subr.bf16.mxu0 %v2742
  %3763 = vmatpush1.bf16.msra.mxu0 %v2741
  %3764 = vmatprep.subr.bf16.mxu0 %v2746
  %3765 = vmatpush1.bf16.msra.mxu0 %v2745
  %3766 = vmatprep.subr.bf16.mxu0 %v2750
  %3767 = vmatpush1.bf16.msra.mxu0 %v2749
  %3768 = vmatprep.subr.bf16.mxu0 %v2754
  %3769 = vmatpush1.bf16.msra.mxu0 %v2753
  %3770 = vmatprep.subr.bf16.mxu0 %v2758
  %3771 = vmatpush1.bf16.msra.mxu0 %v2757
  %3772 = vmatprep.subr.bf16.mxu0 %v2762
  %3773 = vmatpush1.bf16.msra.mxu0 %v2761
  %3774 = vmatprep.subr.bf16.mxu0 %v2766
  %3775 = vmatpush1.bf16.msra.mxu0 %v2765
  %3776 = vmatprep.subr.bf16.mxu0 %v2770
  %3777 = vmatpush1.bf16.msra.mxu0 %v2769
  %3778 = vmatprep.mubr.bf16.mxu0 %v636
  %3779 = vmatmul.mubr.bf16.gmra.mrb[0].mxu0 %v635
  %v3780 = vpop.f32.mrb[0].mxu0
  %v3781 = vadd.f32 %v3740, %v3780
  %v3782 = vpop.f32.mrb[0].mxu0
  %v3783 = vadd.f32 %v3742, %v3782
  %v3784 = vpop.f32.mrb[0].mxu0
  %v3785 = vpop.f32.mrb[0].mxu0
  %3786 = vdwg.mxu0
  %3787 = vmatprep.subr.bf16.mxu0 %v2774
  %3788 = vmatpush1.bf16.msra.mxu0 %v2773
  %3789 = vmatprep.subr.bf16.mxu0 %v2778
  %3790 = vmatpush1.bf16.msra.mxu0 %v2777
  %3791 = vmatprep.subr.bf16.mxu0 %v2782
  %3792 = vmatpush1.bf16.msra.mxu0 %v2781
  %3793 = vmatprep.subr.bf16.mxu0 %v2786
  %3794 = vmatpush1.bf16.msra.mxu0 %v2785
  %3795 = vmatprep.subr.bf16.mxu0 %v2790
  %3796 = vmatpush1.bf16.msra.mxu0 %v2789
  %3797 = vmatprep.subr.bf16.mxu0 %v2794
  %3798 = vmatpush1.bf16.msra.mxu0 %v2793
  %3799 = vmatprep.subr.bf16.mxu0 %v2798
  %3800 = vmatpush1.bf16.msra.mxu0 %v2797
  %3801 = vmatprep.subr.bf16.mxu0 %v2802
  %3802 = vmatpush1.bf16.msra.mxu0 %v2801
  %3803 = vmatprep.subr.bf16.mxu0 %v2806
  %3804 = vmatpush1.bf16.msra.mxu0 %v2805
  %3805 = vmatprep.subr.bf16.mxu0 %v2810
  %3806 = vmatpush1.bf16.msra.mxu0 %v2809
  %3807 = vmatprep.subr.bf16.mxu0 %v2814
  %3808 = vmatpush1.bf16.msra.mxu0 %v2813
  %3809 = vmatprep.subr.bf16.mxu0 %v2818
  %3810 = vmatpush1.bf16.msra.mxu0 %v2817
  %3811 = vmatprep.subr.bf16.mxu0 %v2822
  %3812 = vmatpush1.bf16.msra.mxu0 %v2821
  %3813 = vmatprep.subr.bf16.mxu0 %v2826
  %3814 = vmatpush1.bf16.msra.mxu0 %v2825
  %3815 = vmatprep.subr.bf16.mxu0 %v2830
  %3816 = vmatpush1.bf16.msra.mxu0 %v2829
  %3817 = vmatprep.subr.bf16.mxu0 %v2834
  %3818 = vmatpush1.bf16.msra.mxu0 %v2833
  %3819 = vmatprep.mubr.bf16.mxu0 %v638
  %3820 = vmatmul.mubr.bf16.gmra.mrb[0].mxu0 %v637
  %v3821 = vpop.f32.mrb[0].mxu0
  %v3822 = vadd.f32 %v3781, %v3821
  %v3823 = vpop.f32.mrb[0].mxu0
  %v3824 = vadd.f32 %v3783, %v3823
  %v3825 = vpop.f32.mrb[0].mxu0
  %v3826 = vpop.f32.mrb[0].mxu0
  %3827 = vdwg.mxu0
  %3828 = vmatprep.subr.bf16.mxu0 %v2838
  %3829 = vmatpush1.bf16.msra.mxu0 %v2837
  %3830 = vmatprep.subr.bf16.mxu0 %v2842
  %3831 = vmatpush1.bf16.msra.mxu0 %v2841
  %3832 = vmatprep.subr.bf16.mxu0 %v2846
  %3833 = vmatpush1.bf16.msra.mxu0 %v2845
  %3834 = vmatprep.subr.bf16.mxu0 %v2850
  %3835 = vmatpush1.bf16.msra.mxu0 %v2849
  %3836 = vmatprep.subr.bf16.mxu0 %v2854
  %3837 = vmatpush1.bf16.msra.mxu0 %v2853
  %3838 = vmatprep.subr.bf16.mxu0 %v2858
  %3839 = vmatpush1.bf16.msra.mxu0 %v2857
  %3840 = vmatprep.subr.bf16.mxu0 %v2862
  %3841 = vmatpush1.bf16.msra.mxu0 %v2861
  %3842 = vmatprep.subr.bf16.mxu0 %v2866
  %3843 = vmatpush1.bf16.msra.mxu0 %v2865
  %3844 = vmatprep.subr.bf16.mxu0 %v2870
  %3845 = vmatpush1.bf16.msra.mxu0 %v2869
  %3846 = vmatprep.subr.bf16.mxu0 %v2874
  %3847 = vmatpush1.bf16.msra.mxu0 %v2873
  %3848 = vmatprep.subr.bf16.mxu0 %v2878
  %3849 = vmatpush1.bf16.msra.mxu0 %v2877
  %3850 = vmatprep.subr.bf16.mxu0 %v2882
  %3851 = vmatpush1.bf16.msra.mxu0 %v2881
  %3852 = vmatprep.subr.bf16.mxu0 %v2886
  %3853 = vmatpush1.bf16.msra.mxu0 %v2885
  %3854 = vmatprep.subr.bf16.mxu0 %v2890
  %3855 = vmatpush1.bf16.msra.mxu0 %v2889
  %3856 = vmatprep.subr.bf16.mxu0 %v2894
  %3857 = vmatpush1.bf16.msra.mxu0 %v2893
  %3858 = vmatprep.subr.bf16.mxu0 %v2898
  %3859 = vmatpush1.bf16.msra.mxu0 %v2897
  %3860 = vmatprep.mubr.bf16.mxu0 %v640
  %3861 = vmatmul.mubr.bf16.gmra.mrb[0].mxu0 %v639
  %v3862 = vpop.f32.mrb[0].mxu0
  %v3863 = vadd.f32 %v3822, %v3862
  %v3864 = vpop.f32.mrb[0].mxu0
  %v3865 = vadd.f32 %v3824, %v3864
  %v3866 = vpop.f32.mrb[0].mxu0
  %v3867 = vpop.f32.mrb[0].mxu0
  %3868 = vdwg.mxu0
  %3869 = vmatprep.subr.bf16.mxu0 %v2902
  %3870 = vmatpush1.bf16.msra.mxu0 %v2901
  %3871 = vmatprep.subr.bf16.mxu0 %v2906
  %3872 = vmatpush1.bf16.msra.mxu0 %v2905
  %3873 = vmatprep.subr.bf16.mxu0 %v2910
  %3874 = vmatpush1.bf16.msra.mxu0 %v2909
  %3875 = vmatprep.subr.bf16.mxu0 %v2914
  %3876 = vmatpush1.bf16.msra.mxu0 %v2913
  %3877 = vmatprep.subr.bf16.mxu0 %v2918
  %3878 = vmatpush1.bf16.msra.mxu0 %v2917
  %3879 = vmatprep.subr.bf16.mxu0 %v2922
  %3880 = vmatpush1.bf16.msra.mxu0 %v2921
  %3881 = vmatprep.subr.bf16.mxu0 %v2926
  %3882 = vmatpush1.bf16.msra.mxu0 %v2925
  %3883 = vmatprep.subr.bf16.mxu0 %v2930
  %3884 = vmatpush1.bf16.msra.mxu0 %v2929
  %3885 = vmatprep.subr.bf16.mxu0 %v2934
  %3886 = vmatpush1.bf16.msra.mxu0 %v2933
  %3887 = vmatprep.subr.bf16.mxu0 %v2938
  %3888 = vmatpush1.bf16.msra.mxu0 %v2937
  %3889 = vmatprep.subr.bf16.mxu0 %v2942
  %3890 = vmatpush1.bf16.msra.mxu0 %v2941
  %3891 = vmatprep.subr.bf16.mxu0 %v2946
  %3892 = vmatpush1.bf16.msra.mxu0 %v2945
  %3893 = vmatprep.subr.bf16.mxu0 %v2950
  %3894 = vmatpush1.bf16.msra.mxu0 %v2949
  %3895 = vmatprep.subr.bf16.mxu0 %v2954
  %3896 = vmatpush1.bf16.msra.mxu0 %v2953
  %3897 = vmatprep.subr.bf16.mxu0 %v2958
  %3898 = vmatpush1.bf16.msra.mxu0 %v2957
  %3899 = vmatprep.subr.bf16.mxu0 %v2962
  %3900 = vmatpush1.bf16.msra.mxu0 %v2961
  %3901 = vmatprep.mubr.bf16.mxu0 %v642
  %3902 = vmatmul.mubr.bf16.gmra.mrb[0].mxu0 %v641
  %v3903 = vpop.f32.mrb[0].mxu0
  %v3904 = vadd.f32 %v3863, %v3903
  %v3905 = vpop.f32.mrb[0].mxu0
  %v3906 = vadd.f32 %v3865, %v3905
  %v3907 = vpop.f32.mrb[0].mxu0
  %v3908 = vpop.f32.mrb[0].mxu0
  %3909 = vdwg.mxu0
  %3910 = vmatprep.subr.bf16.mxu0 %v2392
  %3911 = vmatpush1.bf16.msra.mxu0 %v2391
  %3912 = vmatprep.subr.bf16.mxu0 %v2396
  %3913 = vmatpush1.bf16.msra.mxu0 %v2395
  %3914 = vmatprep.subr.bf16.mxu0 %v2400
  %3915 = vmatpush1.bf16.msra.mxu0 %v2399
  %3916 = vmatprep.subr.bf16.mxu0 %v2404
  %3917 = vmatpush1.bf16.msra.mxu0 %v2403
  %3918 = vmatprep.subr.bf16.mxu0 %v2408
  %3919 = vmatpush1.bf16.msra.mxu0 %v2407
  %3920 = vmatprep.subr.bf16.mxu0 %v2412
  %3921 = vmatpush1.bf16.msra.mxu0 %v2411
  %3922 = vmatprep.subr.bf16.mxu0 %v2416
  %3923 = vmatpush1.bf16.msra.mxu0 %v2415
  %3924 = vmatprep.subr.bf16.mxu0 %v2420
  %3925 = vmatpush1.bf16.msra.mxu0 %v2419
  %3926 = vmatprep.subr.bf16.mxu0 %v2424
  %3927 = vmatpush1.bf16.msra.mxu0 %v2423
  %3928 = vmatprep.subr.bf16.mxu0 %v2428
  %3929 = vmatpush1.bf16.msra.mxu0 %v2427
  %3930 = vmatprep.subr.bf16.mxu0 %v2432
  %3931 = vmatpush1.bf16.msra.mxu0 %v2431
  %3932 = vmatprep.subr.bf16.mxu0 %v2436
  %3933 = vmatpush1.bf16.msra.mxu0 %v2435
  %3934 = vmatprep.subr.bf16.mxu0 %v2440
  %3935 = vmatpush1.bf16.msra.mxu0 %v2439
  %3936 = vmatprep.subr.bf16.mxu0 %v2444
  %3937 = vmatpush1.bf16.msra.mxu0 %v2443
  %3938 = vmatprep.subr.bf16.mxu0 %v2448
  %3939 = vmatpush1.bf16.msra.mxu0 %v2447
  %3940 = vmatprep.subr.bf16.mxu0 %v2452
  %3941 = vmatpush1.bf16.msra.mxu0 %v2451
  %3942 = vmatprep.mubr.bf16.mxu0 %v626
  %3943 = vmatmul.mubr.bf16.gmra.mrb[0].mxu0 %v625
  %v3944 = vpop.f32.mrb[0].mxu0
  %v3945 = vadd.f32 0.0, %v3944
  %v3946 = vpop.f32.mrb[0].mxu0
  %v3947 = vadd.f32 0.0, %v3946
  %v3948 = vpop.f32.mrb[0].mxu0
  %v3949 = vpop.f32.mrb[0].mxu0
  %3950 = vdwg.mxu0
  %3951 = vmatprep.subr.bf16.mxu0 %v2456
  %3952 = vmatpush1.bf16.msra.mxu0 %v2455
  %3953 = vmatprep.subr.bf16.mxu0 %v2460
  %3954 = vmatpush1.bf16.msra.mxu0 %v2459
  %3955 = vmatprep.subr.bf16.mxu0 %v2464
  %3956 = vmatpush1.bf16.msra.mxu0 %v2463
  %3957 = vmatprep.subr.bf16.mxu0 %v2468
  %3958 = vmatpush1.bf16.msra.mxu0 %v2467
  %3959 = vmatprep.subr.bf16.mxu0 %v2472
  %3960 = vmatpush1.bf16.msra.mxu0 %v2471
  %3961 = vmatprep.subr.bf16.mxu0 %v2476
  %3962 = vmatpush1.bf16.msra.mxu0 %v2475
  %3963 = vmatprep.subr.bf16.mxu0 %v2480
  %3964 = vmatpush1.bf16.msra.mxu0 %v2479
  %3965 = vmatprep.subr.bf16.mxu0 %v2484
  %3966 = vmatpush1.bf16.msra.mxu0 %v2483
  %3967 = vmatprep.subr.bf16.mxu0 %v2488
  %3968 = vmatpush1.bf16.msra.mxu0 %v2487
  %3969 = vmatprep.subr.bf16.mxu0 %v2492
  %3970 = vmatpush1.bf16.msra.mxu0 %v2491
  %3971 = vmatprep.subr.bf16.mxu0 %v2496
  %3972 = vmatpush1.bf16.msra.mxu0 %v2495
  %3973 = vmatprep.subr.bf16.mxu0 %v2500
  %3974 = vmatpush1.bf16.msra.mxu0 %v2499
  %3975 = vmatprep.subr.bf16.mxu0 %v2504
  %3976 = vmatpush1.bf16.msra.mxu0 %v2503
  %3977 = vmatprep.subr.bf16.mxu0 %v2508
  %3978 = vmatpush1.bf16.msra.mxu0 %v2507
  %3979 = vmatprep.subr.bf16.mxu0 %v2512
  %3980 = vmatpush1.bf16.msra.mxu0 %v2511
  %3981 = vmatprep.subr.bf16.mxu0 %v2516
  %3982 = vmatpush1.bf16.msra.mxu0 %v2515
  %3983 = vmatprep.mubr.bf16.mxu0 %v628
  %3984 = vmatmul.mubr.bf16.gmra.mrb[0].mxu0 %v627
  %v3985 = vpop.f32.mrb[0].mxu0
  %v3986 = vadd.f32 %v3945, %v3985
  %v3987 = vpop.f32.mrb[0].mxu0
  %v3988 = vadd.f32 %v3947, %v3987
  %v3989 = vpop.f32.mrb[0].mxu0
  %v3990 = vpop.f32.mrb[0].mxu0
  %3991 = vdwg.mxu0
  %3992 = vmatprep.subr.bf16.mxu0 %v2520
  %3993 = vmatpush1.bf16.msra.mxu0 %v2519
  %3994 = vmatprep.subr.bf16.mxu0 %v2524
  %3995 = vmatpush1.bf16.msra.mxu0 %v2523
  %3996 = vmatprep.subr.bf16.mxu0 %v2528
  %3997 = vmatpush1.bf16.msra.mxu0 %v2527
  %3998 = vmatprep.subr.bf16.mxu0 %v2532
  %3999 = vmatpush1.bf16.msra.mxu0 %v2531
  %4000 = vmatprep.subr.bf16.mxu0 %v2536
  %4001 = vmatpush1.bf16.msra.mxu0 %v2535
  %4002 = vmatprep.subr.bf16.mxu0 %v2540
  %4003 = vmatpush1.bf16.msra.mxu0 %v2539
  %4004 = vmatprep.subr.bf16.mxu0 %v2544
  %4005 = vmatpush1.bf16.msra.mxu0 %v2543
  %4006 = vmatprep.subr.bf16.mxu0 %v2548
  %4007 = vmatpush1.bf16.msra.mxu0 %v2547
  %4008 = vmatprep.subr.bf16.mxu0 %v2552
  %4009 = vmatpush1.bf16.msra.mxu0 %v2551
  %4010 = vmatprep.subr.bf16.mxu0 %v2556
  %4011 = vmatpush1.bf16.msra.mxu0 %v2555
  %4012 = vmatprep.subr.bf16.mxu0 %v2560
  %4013 = vmatpush1.bf16.msra.mxu0 %v2559
  %4014 = vmatprep.subr.bf16.mxu0 %v2564
  %4015 = vmatpush1.bf16.msra.mxu0 %v2563
  %4016 = vmatprep.subr.bf16.mxu0 %v2568
  %4017 = vmatpush1.bf16.msra.mxu0 %v2567
  %4018 = vmatprep.subr.bf16.mxu0 %v2572
  %4019 = vmatpush1.bf16.msra.mxu0 %v2571
  %4020 = vmatprep.subr.bf16.mxu0 %v2576
  %4021 = vmatpush1.bf16.msra.mxu0 %v2575
  %4022 = vmatprep.subr.bf16.mxu0 %v2580
  %4023 = vmatpush1.bf16.msra.mxu0 %v2579
  %4024 = vmatprep.mubr.bf16.mxu0 %v630
  %4025 = vmatmul.mubr.bf16.gmra.mrb[0].mxu0 %v629
  %v4026 = vpop.f32.mrb[0].mxu0
  %v4027 = vadd.f32 %v3986, %v4026
  %v4028 = vpop.f32.mrb[0].mxu0
  %v4029 = vadd.f32 %v3988, %v4028
  %v4030 = vpop.f32.mrb[0].mxu0
  %v4031 = vpop.f32.mrb[0].mxu0
  %4032 = vdwg.mxu0
  %4033 = vmatprep.subr.bf16.mxu0 %v2584
  %4034 = vmatpush1.bf16.msra.mxu0 %v2583
  %4035 = vmatprep.subr.bf16.mxu0 %v2588
  %4036 = vmatpush1.bf16.msra.mxu0 %v2587
  %4037 = vmatprep.subr.bf16.mxu0 %v2592
  %4038 = vmatpush1.bf16.msra.mxu0 %v2591
  %4039 = vmatprep.subr.bf16.mxu0 %v2596
  %4040 = vmatpush1.bf16.msra.mxu0 %v2595
  %4041 = vmatprep.subr.bf16.mxu0 %v2600
  %4042 = vmatpush1.bf16.msra.mxu0 %v2599
  %4043 = vmatprep.subr.bf16.mxu0 %v2604
  %4044 = vmatpush1.bf16.msra.mxu0 %v2603
  %4045 = vmatprep.subr.bf16.mxu0 %v2608
  %4046 = vmatpush1.bf16.msra.mxu0 %v2607
  %4047 = vmatprep.subr.bf16.mxu0 %v2612
  %4048 = vmatpush1.bf16.msra.mxu0 %v2611
  %4049 = vmatprep.subr.bf16.mxu0 %v2616
  %4050 = vmatpush1.bf16.msra.mxu0 %v2615
  %4051 = vmatprep.subr.bf16.mxu0 %v2620
  %4052 = vmatpush1.bf16.msra.mxu0 %v2619
  %4053 = vmatprep.subr.bf16.mxu0 %v2624
  %4054 = vmatpush1.bf16.msra.mxu0 %v2623
  %4055 = vmatprep.subr.bf16.mxu0 %v2628
  %4056 = vmatpush1.bf16.msra.mxu0 %v2627
  %4057 = vmatprep.subr.bf16.mxu0 %v2632
  %4058 = vmatpush1.bf16.msra.mxu0 %v2631
  %4059 = vmatprep.subr.bf16.mxu0 %v2636
  %4060 = vmatpush1.bf16.msra.mxu0 %v2635
  %4061 = vmatprep.subr.bf16.mxu0 %v2640
  %4062 = vmatpush1.bf16.msra.mxu0 %v2639
  %4063 = vmatprep.subr.bf16.mxu0 %v2644
  %4064 = vmatpush1.bf16.msra.mxu0 %v2643
  %4065 = vmatprep.mubr.bf16.mxu0 %v632
  %4066 = vmatmul.mubr.bf16.gmra.mrb[0].mxu0 %v631
  %v4067 = vpop.f32.mrb[0].mxu0
  %v4068 = vadd.f32 %v4027, %v4067
  %v4069 = vpop.f32.mrb[0].mxu0
  %v4070 = vadd.f32 %v4029, %v4069
  %v4071 = vpop.f32.mrb[0].mxu0
  %v4072 = vpop.f32.mrb[0].mxu0
  %4073 = vdwg.mxu0
  %4074 = vmatprep.subr.bf16.mxu0 %v2648
  %4075 = vmatpush1.bf16.msra.mxu0 %v2647
  %4076 = vmatprep.subr.bf16.mxu0 %v2652
  %4077 = vmatpush1.bf16.msra.mxu0 %v2651
  %4078 = vmatprep.subr.bf16.mxu0 %v2656
  %4079 = vmatpush1.bf16.msra.mxu0 %v2655
  %4080 = vmatprep.subr.bf16.mxu0 %v2660
  %4081 = vmatpush1.bf16.msra.mxu0 %v2659
  %4082 = vmatprep.subr.bf16.mxu0 %v2664
  %4083 = vmatpush1.bf16.msra.mxu0 %v2663
  %4084 = vmatprep.subr.bf16.mxu0 %v2668
  %4085 = vmatpush1.bf16.msra.mxu0 %v2667
  %4086 = vmatprep.subr.bf16.mxu0 %v2672
  %4087 = vmatpush1.bf16.msra.mxu0 %v2671
  %4088 = vmatprep.subr.bf16.mxu0 %v2676
  %4089 = vmatpush1.bf16.msra.mxu0 %v2675
  %4090 = vmatprep.subr.bf16.mxu0 %v2680
  %4091 = vmatpush1.bf16.msra.mxu0 %v2679
  %4092 = vmatprep.subr.bf16.mxu0 %v2684
  %4093 = vmatpush1.bf16.msra.mxu0 %v2683
  %4094 = vmatprep.subr.bf16.mxu0 %v2688
  %4095 = vmatpush1.bf16.msra.mxu0 %v2687
  %4096 = vmatprep.subr.bf16.mxu0 %v2692
  %4097 = vmatpush1.bf16.msra.mxu0 %v2691
  %4098 = vmatprep.subr.bf16.mxu0 %v2696
  %4099 = vmatpush1.bf16.msra.mxu0 %v2695
  %4100 = vmatprep.subr.bf16.mxu0 %v2700
  %4101 = vmatpush1.bf16.msra.mxu0 %v2699
  %4102 = vmatprep.subr.bf16.mxu0 %v2704
  %4103 = vmatpush1.bf16.msra.mxu0 %v2703
  %4104 = vmatprep.subr.bf16.mxu0 %v2708
  %4105 = vmatpush1.bf16.msra.mxu0 %v2707
  %4106 = vmatprep.mubr.bf16.mxu0 %v634
  %4107 = vmatmul.mubr.bf16.gmra.mrb[0].mxu0 %v633
  %v4108 = vpop.f32.mrb[0].mxu0
  %v4109 = vadd.f32 %v4068, %v4108
  %v4110 = vpop.f32.mrb[0].mxu0
  %v4111 = vadd.f32 %v4070, %v4110
  %v4112 = vpop.f32.mrb[0].mxu0
  %v4113 = vpop.f32.mrb[0].mxu0
  %4114 = vdwg.mxu0
  %4115 = vmatprep.subr.bf16.mxu0 %v2712
  %4116 = vmatpush1.bf16.msra.mxu0 %v2711
  %4117 = vmatprep.subr.bf16.mxu0 %v2716
  %4118 = vmatpush1.bf16.msra.mxu0 %v2715
  %4119 = vmatprep.subr.bf16.mxu0 %v2720
  %4120 = vmatpush1.bf16.msra.mxu0 %v2719
  %4121 = vmatprep.subr.bf16.mxu0 %v2724
  %4122 = vmatpush1.bf16.msra.mxu0 %v2723
  %4123 = vmatprep.subr.bf16.mxu0 %v2728
  %4124 = vmatpush1.bf16.msra.mxu0 %v2727
  %4125 = vmatprep.subr.bf16.mxu0 %v2732
  %4126 = vmatpush1.bf16.msra.mxu0 %v2731
  %4127 = vmatprep.subr.bf16.mxu0 %v2736
  %4128 = vmatpush1.bf16.msra.mxu0 %v2735
  %4129 = vmatprep.subr.bf16.mxu0 %v2740
  %4130 = vmatpush1.bf16.msra.mxu0 %v2739
  %4131 = vmatprep.subr.bf16.mxu0 %v2744
  %4132 = vmatpush1.bf16.msra.mxu0 %v2743
  %4133 = vmatprep.subr.bf16.mxu0 %v2748
  %4134 = vmatpush1.bf16.msra.mxu0 %v2747
  %4135 = vmatprep.subr.bf16.mxu0 %v2752
  %4136 = vmatpush1.bf16.msra.mxu0 %v2751
  %4137 = vmatprep.subr.bf16.mxu0 %v2756
  %4138 = vmatpush1.bf16.msra.mxu0 %v2755
  %4139 = vmatprep.subr.bf16.mxu0 %v2760
  %4140 = vmatpush1.bf16.msra.mxu0 %v2759
  %4141 = vmatprep.subr.bf16.mxu0 %v2764
  %4142 = vmatpush1.bf16.msra.mxu0 %v2763
  %4143 = vmatprep.subr.bf16.mxu0 %v2768
  %4144 = vmatpush1.bf16.msra.mxu0 %v2767
  %4145 = vmatprep.subr.bf16.mxu0 %v2772
  %4146 = vmatpush1.bf16.msra.mxu0 %v2771
  %4147 = vmatprep.mubr.bf16.mxu0 %v636
  %4148 = vmatmul.mubr.bf16.gmra.mrb[0].mxu0 %v635
  %v4149 = vpop.f32.mrb[0].mxu0
  %v4150 = vadd.f32 %v4109, %v4149
  %v4151 = vpop.f32.mrb[0].mxu0
  %v4152 = vadd.f32 %v4111, %v4151
  %v4153 = vpop.f32.mrb[0].mxu0
  %v4154 = vpop.f32.mrb[0].mxu0
  %4155 = vdwg.mxu0
  %4156 = vmatprep.subr.bf16.mxu0 %v2776
  %4157 = vmatpush1.bf16.msra.mxu0 %v2775
  %4158 = vmatprep.subr.bf16.mxu0 %v2780
  %4159 = vmatpush1.bf16.msra.mxu0 %v2779
  %4160 = vmatprep.subr.bf16.mxu0 %v2784
  %4161 = vmatpush1.bf16.msra.mxu0 %v2783
  %4162 = vmatprep.subr.bf16.mxu0 %v2788
  %4163 = vmatpush1.bf16.msra.mxu0 %v2787
  %4164 = vmatprep.subr.bf16.mxu0 %v2792
  %4165 = vmatpush1.bf16.msra.mxu0 %v2791
  %4166 = vmatprep.subr.bf16.mxu0 %v2796
  %4167 = vmatpush1.bf16.msra.mxu0 %v2795
  %4168 = vmatprep.subr.bf16.mxu0 %v2800
  %4169 = vmatpush1.bf16.msra.mxu0 %v2799
  %4170 = vmatprep.subr.bf16.mxu0 %v2804
  %4171 = vmatpush1.bf16.msra.mxu0 %v2803
  %4172 = vmatprep.subr.bf16.mxu0 %v2808
  %4173 = vmatpush1.bf16.msra.mxu0 %v2807
  %4174 = vmatprep.subr.bf16.mxu0 %v2812
  %4175 = vmatpush1.bf16.msra.mxu0 %v2811
  %4176 = vmatprep.subr.bf16.mxu0 %v2816
  %4177 = vmatpush1.bf16.msra.mxu0 %v2815
  %4178 = vmatprep.subr.bf16.mxu0 %v2820
  %4179 = vmatpush1.bf16.msra.mxu0 %v2819
  %4180 = vmatprep.subr.bf16.mxu0 %v2824
  %4181 = vmatpush1.bf16.msra.mxu0 %v2823
  %4182 = vmatprep.subr.bf16.mxu0 %v2828
  %4183 = vmatpush1.bf16.msra.mxu0 %v2827
  %4184 = vmatprep.subr.bf16.mxu0 %v2832
  %4185 = vmatpush1.bf16.msra.mxu0 %v2831
  %4186 = vmatprep.subr.bf16.mxu0 %v2836
  %4187 = vmatpush1.bf16.msra.mxu0 %v2835
  %4188 = vmatprep.mubr.bf16.mxu0 %v638
  %4189 = vmatmul.mubr.bf16.gmra.mrb[0].mxu0 %v637
  %v4190 = vpop.f32.mrb[0].mxu0
  %v4191 = vadd.f32 %v4150, %v4190
  %v4192 = vpop.f32.mrb[0].mxu0
  %v4193 = vadd.f32 %v4152, %v4192
  %v4194 = vpop.f32.mrb[0].mxu0
  %v4195 = vpop.f32.mrb[0].mxu0
  %4196 = vdwg.mxu0
  %4197 = vmatprep.subr.bf16.mxu0 %v2840
  %4198 = vmatpush1.bf16.msra.mxu0 %v2839
  %4199 = vmatprep.subr.bf16.mxu0 %v2844
  %4200 = vmatpush1.bf16.msra.mxu0 %v2843
  %4201 = vmatprep.subr.bf16.mxu0 %v2848
  %4202 = vmatpush1.bf16.msra.mxu0 %v2847
  %4203 = vmatprep.subr.bf16.mxu0 %v2852
  %4204 = vmatpush1.bf16.msra.mxu0 %v2851
  %4205 = vmatprep.subr.bf16.mxu0 %v2856
  %4206 = vmatpush1.bf16.msra.mxu0 %v2855
  %4207 = vmatprep.subr.bf16.mxu0 %v2860
  %4208 = vmatpush1.bf16.msra.mxu0 %v2859
  %4209 = vmatprep.subr.bf16.mxu0 %v2864
  %4210 = vmatpush1.bf16.msra.mxu0 %v2863
  %4211 = vmatprep.subr.bf16.mxu0 %v2868
  %4212 = vmatpush1.bf16.msra.mxu0 %v2867
  %4213 = vmatprep.subr.bf16.mxu0 %v2872
  %4214 = vmatpush1.bf16.msra.mxu0 %v2871
  %4215 = vmatprep.subr.bf16.mxu0 %v2876
  %4216 = vmatpush1.bf16.msra.mxu0 %v2875
  %4217 = vmatprep.subr.bf16.mxu0 %v2880
  %4218 = vmatpush1.bf16.msra.mxu0 %v2879
  %4219 = vmatprep.subr.bf16.mxu0 %v2884
  %4220 = vmatpush1.bf16.msra.mxu0 %v2883
  %4221 = vmatprep.subr.bf16.mxu0 %v2888
  %4222 = vmatpush1.bf16.msra.mxu0 %v2887
  %4223 = vmatprep.subr.bf16.mxu0 %v2892
  %4224 = vmatpush1.bf16.msra.mxu0 %v2891
  %4225 = vmatprep.subr.bf16.mxu0 %v2896
  %4226 = vmatpush1.bf16.msra.mxu0 %v2895
  %4227 = vmatprep.subr.bf16.mxu0 %v2900
  %4228 = vmatpush1.bf16.msra.mxu0 %v2899
  %4229 = vmatprep.mubr.bf16.mxu0 %v640
  %4230 = vmatmul.mubr.bf16.gmra.mrb[0].mxu0 %v639
  %v4231 = vpop.f32.mrb[0].mxu0
  %v4232 = vadd.f32 %v4191, %v4231
  %v4233 = vpop.f32.mrb[0].mxu0
  %v4234 = vadd.f32 %v4193, %v4233
  %v4235 = vpop.f32.mrb[0].mxu0
  %v4236 = vpop.f32.mrb[0].mxu0
  %4237 = vdwg.mxu0
  %4238 = vmatprep.subr.bf16.mxu0 %v2904
  %4239 = vmatpush1.bf16.msra.mxu0 %v2903
  %4240 = vmatprep.subr.bf16.mxu0 %v2908
  %4241 = vmatpush1.bf16.msra.mxu0 %v2907
  %4242 = vmatprep.subr.bf16.mxu0 %v2912
  %4243 = vmatpush1.bf16.msra.mxu0 %v2911
  %4244 = vmatprep.subr.bf16.mxu0 %v2916
  %4245 = vmatpush1.bf16.msra.mxu0 %v2915
  %4246 = vmatprep.subr.bf16.mxu0 %v2920
  %4247 = vmatpush1.bf16.msra.mxu0 %v2919
  %4248 = vmatprep.subr.bf16.mxu0 %v2924
  %4249 = vmatpush1.bf16.msra.mxu0 %v2923
  %4250 = vmatprep.subr.bf16.mxu0 %v2928
  %4251 = vmatpush1.bf16.msra.mxu0 %v2927
  %4252 = vmatprep.subr.bf16.mxu0 %v2932
  %4253 = vmatpush1.bf16.msra.mxu0 %v2931
  %4254 = vmatprep.subr.bf16.mxu0 %v2936
  %4255 = vmatpush1.bf16.msra.mxu0 %v2935
  %4256 = vmatprep.subr.bf16.mxu0 %v2940
  %4257 = vmatpush1.bf16.msra.mxu0 %v2939
  %4258 = vmatprep.subr.bf16.mxu0 %v2944
  %4259 = vmatpush1.bf16.msra.mxu0 %v2943
  %4260 = vmatprep.subr.bf16.mxu0 %v2948
  %4261 = vmatpush1.bf16.msra.mxu0 %v2947
  %4262 = vmatprep.subr.bf16.mxu0 %v2952
  %4263 = vmatpush1.bf16.msra.mxu0 %v2951
  %4264 = vmatprep.subr.bf16.mxu0 %v2956
  %4265 = vmatpush1.bf16.msra.mxu0 %v2955
  %4266 = vmatprep.subr.bf16.mxu0 %v2960
  %4267 = vmatpush1.bf16.msra.mxu0 %v2959
  %4268 = vmatprep.subr.bf16.mxu0 %v2964
  %4269 = vmatpush1.bf16.msra.mxu0 %v2963
  %4270 = vmatprep.mubr.bf16.mxu0 %v642
  %4271 = vmatmul.mubr.bf16.gmra.mrb[0].mxu0 %v641
  %v4272 = vpop.f32.mrb[0].mxu0
  %v4273 = vadd.f32 %v4232, %v4272
  %v4274 = vpop.f32.mrb[0].mxu0
  %v4275 = vadd.f32 %v4234, %v4274
  %v4276 = vpop.f32.mrb[0].mxu0
  %v4277 = vpop.f32.mrb[0].mxu0
  %4278 = vdwg.mxu0
  %4279 = vst [vmem:[%s2] sm:$0xff] %v3904
  %4280 = vst [vmem:[%s2 + $0x8] sm:$0xff] %v3906
  %4281 = vst [vmem:[%s2 + $0x10] sm:$0xff] %v4273
  %4282 = vst [vmem:[%s2 + $0x18] sm:$0xff] %v4275
  %v4283 = vrot.slane %v3904, 4
  %v4284 = vadd.f32 %v3904, %v4283
  %v4285 = vrot.slane %v4284, 2
  %v4286 = vadd.f32 %v4284, %v4285
  %v4287 = vrot.slane %v4286, 1
  %v4288 = vadd.f32 %v4286, %v4287
  %v4289 = vrot.slane %v3906, 4
  %v4290 = vadd.f32 %v3906, %v4289
  %v4291 = vrot.slane %v4290, 2
  %v4292 = vadd.f32 %v4290, %v4291
  %v4293 = vrot.slane %v4292, 1
  %v4294 = vadd.f32 %v4292, %v4293
  %v4295 = vrot.slane %v4273, 4
  %v4296 = vadd.f32 %v4273, %v4295
  %v4297 = vrot.slane %v4296, 2
  %v4298 = vadd.f32 %v4296, %v4297
  %v4299 = vrot.slane %v4298, 1
  %v4300 = vadd.f32 %v4298, %v4299
  %v4301 = vrot.slane %v4275, 4
  %v4302 = vadd.f32 %v4275, %v4301
  %v4303 = vrot.slane %v4302, 2
  %v4304 = vadd.f32 %v4302, %v4303
  %v4305 = vrot.slane %v4304, 1
  %v4306 = vadd.f32 %v4304, %v4305
  %v4307 = vmul.f32 %v3904, %v3904
  %v4308 = vmul.f32 %v3906, %v3906
  %v4309 = vmul.f32 %v4273, %v4273
  %v4310 = vmul.f32 %v4275, %v4275
  %v4311 = vrot.slane %v4307, 4
  %v4312 = vadd.f32 %v4307, %v4311
  %v4313 = vrot.slane %v4312, 2
  %v4314 = vadd.f32 %v4312, %v4313
  %v4315 = vrot.slane %v4314, 1
  %v4316 = vadd.f32 %v4314, %v4315
  %v4317 = vrot.slane %v4308, 4
  %v4318 = vadd.f32 %v4308, %v4317
  %v4319 = vrot.slane %v4318, 2
  %v4320 = vadd.f32 %v4318, %v4319
  %v4321 = vrot.slane %v4320, 1
  %v4322 = vadd.f32 %v4320, %v4321
  %v4323 = vrot.slane %v4309, 4
  %v4324 = vadd.f32 %v4309, %v4323
  %v4325 = vrot.slane %v4324, 2
  %v4326 = vadd.f32 %v4324, %v4325
  %v4327 = vrot.slane %v4326, 1
  %v4328 = vadd.f32 %v4326, %v4327
  %v4329 = vrot.slane %v4310, 4
  %v4330 = vadd.f32 %v4310, %v4329
  %v4331 = vrot.slane %v4330, 2
  %v4332 = vadd.f32 %v4330, %v4331
  %v4333 = vrot.slane %v4332, 1
  %v4334 = vadd.f32 %v4332, %v4333
  %vm4335 = vcmask 1040384
  %v4336 = vsel %vm4335, %v4288, %v4316
  %v4337 = vsel %vm4335, %v4294, %v4322
  %v4338 = vsel %vm4335, %v4300, %v4328
  %v4339 = vsel %vm4335, %v4306, %v4334
  %v4344 = vcombine.low %v4336, %v4337
  %v4345 = vcombine.low %v4338, %v4339
  %v4347 = vunpack.c.l.s4 1983009808
  %v4348 = vunpack.c.0.s8 %v4347
  %v4349 = vlaneseq
  %v4350 = vshrl.u32 %v4349, 7
  %v4351 = vsub.s32 %v4348, %v4350
  %v4352 = vrot.slane %v4344, %v4351
  %v4354 = vunpack.c.l.s4 1983009808
  %v4355 = vunpack.c.0.s8 %v4354
  %v4356 = vlaneseq
  %v4357 = vshrl.u32 %v4356, 7
  %v4358 = vsub.s32 %v4355, %v4357
  %v4359 = vrot.slane %v4345, %v4358
  %v4360 = vcombine.low %v4352, %v4359
  %4362 = vst [vmem:[%s3] sm:$0xff] %v4360
  // Predicated region
  $region10: #{autoencoder_forward.25} parent=0 // pred_check
    _
  $region11: #{autoencoder_forward.25} parent=0 // pred_check_branch
    %4364 = sbr.rel (0) target = $region13
  $region12: #{autoencoder_forward.25} parent=0 // pred_region
    _
  $region13: #{autoencoder_forward.25} parent=0 // pred_fallthru
    _
  // Predicated region
  $region14: #{autoencoder_forward.25} parent=0 // pred_check
    _
  $region15: #{autoencoder_forward.25} parent=0 // pred_check_branch
    %4366 = sbr.rel (0) target = $region17
  $region16: #{autoencoder_forward.25} parent=0 // pred_region
    _
  $region17: #{autoencoder_forward.25} parent=0 // pred_fallthru
    _
  // Predicated region
  $region18: #{autoencoder_forward.25} parent=0 // pred_check
    _
  $region19: #{autoencoder_forward.25} parent=0 // pred_check_branch
    %4368 = sbr.rel (0) target = $region21
  $region20: #{autoencoder_forward.25} parent=0 // pred_region
    _
  $region21: #{autoencoder_forward.25} parent=0 // pred_fallthru
    _
  // Predicated region
  $region22: #{autoencoder_forward.25} parent=0 // pred_check
    _
  $region23: #{autoencoder_forward.25} parent=0 // pred_check_branch
    %4370 = sbr.rel (0) target = $region25
  $region24: #{autoencoder_forward.25} parent=0 // pred_region
    _
  $region25: #{autoencoder_forward.25} parent=0 // pred_fallthru
    _

// kernel: tile.43
$region0: #{tile.43}
  #allocation0 [shape = 's32[1]{0}', space=sflag, size = 0x4, scoped, tag = 'scoped memory for tile.43']
  %s0 = inlined_call_operand.vmem [shape: f32[128], index: 0, kind: input, shape index: {}]
  %s1 = inlined_call_operand.vmem [shape: f32[4,128], index: 1, kind: output, shape index: {}]
  // Predicated region
  $region2: #{tile.43} parent=0 // pred_check
    _
  $region3: #{tile.43} parent=0 // pred_check_branch
    %3 = sbr.rel (0) target = $region5
  $region4: #{tile.43} parent=0 // pred_region
    _
  $region5: #{tile.43} parent=0 // pred_fallthru
    _
  %v4 = vld [vmem:[%s0] ss:$0 sm:$0xff]
  %5 = vst [vmem:[%s1] sm:$0xf] %v4

// kernel: autoencoder_forward.26
$region0: #{autoencoder_forward.26}
  #allocation0 [shape = 'u32[]', space=smem, size = 0x4, offset = 0x4, fixed_abs, tag = 'smem constant byte address 0x4 - core index']
  #allocation1 [shape = 'u32[144,128]{1,0:T(1,128)}', space=vmem, size = 0x12000, scoped, tag = 'internal scratch']
  %s0 = inlined_call_operand.vmem [shape: f32[8,512], index: 0, kind: input, shape index: {}]
  %s1 = inlined_call_operand.vmem [shape: f32[1,512], index: 1, kind: input, shape index: {}]
  %s2 = inlined_call_operand.vmem [shape: f32[1,512], index: 2, kind: input, shape index: {}]
  %s3 = inlined_call_operand.vmem [shape: f32[8,512], index: 3, kind: output, shape index: {}]
  %s4 = sld [smem:[#allocation0]]
  $region22: #{autoencoder_forward.26} parent=0
    _
  %s6 = ssub.s32 1, %s4
  %s7 = scalar_select 0, %s6, %s4
  // Predicated region
  $region2: #{autoencoder_forward.26} parent=0 // pred_check
    _
  $region3: #{autoencoder_forward.26} parent=0 // pred_check_branch
    %9 = sbr.rel (0) target = $region5
  $region4: #{autoencoder_forward.26} parent=0 // pred_region
    _
  $region5: #{autoencoder_forward.26} parent=0 // pred_fallthru
    _
  // Predicated region
  $region6: #{autoencoder_forward.26} parent=0 // pred_check
    _
  $region7: #{autoencoder_forward.26} parent=0 // pred_check_branch
    %11 = sbr.rel (0) target = $region9
  $region8: #{autoencoder_forward.26} parent=0 // pred_region
    _
  $region9: #{autoencoder_forward.26} parent=0 // pred_fallthru
    _
  // Predicated region
  $region10: #{autoencoder_forward.26} parent=0 // pred_check
    _
  $region11: #{autoencoder_forward.26} parent=0 // pred_check_branch
    %13 = sbr.rel (0) target = $region13
  $region12: #{autoencoder_forward.26} parent=0 // pred_region
    _
  $region13: #{autoencoder_forward.26} parent=0 // pred_fallthru
    _
  %v14 = vld [vmem:[%s0] sm:$0xff]
  %v15 = vld [vmem:[%s0 + $0x8] sm:$0xff]
  %v16 = vld [vmem:[%s0 + $0x10] sm:$0xff]
  %v17 = vld [vmem:[%s0 + $0x18] sm:$0xff]
  %v18 = vld [vmem:[%s1] sm:$0xf]
  %v20 = vlaneseq
  %v21 = vshrl.u32 %v20, 7
  %v22 = vsub.s32 0, %v21
  %v23 = vrot.slane %v18, %v22
  %v24 = vlaneseq
  %v25 = vshrl.u32 %v24, 7
  %v26 = vsub.s32 1, %v25
  %v27 = vrot.slane %v18, %v26
  %v28 = vlaneseq
  %v29 = vshrl.u32 %v28, 7
  %v30 = vsub.s32 2, %v29
  %v31 = vrot.slane %v18, %v30
  %v32 = vlaneseq
  %v33 = vshrl.u32 %v32, 7
  %v34 = vsub.s32 3, %v33
  %v35 = vrot.slane %v18, %v34
  %v40 = vmul.f32 %v14, %v23
  %v41 = vmul.f32 %v15, %v27
  %v42 = vmul.f32 %v16, %v31
  %v43 = vmul.f32 %v17, %v35
  %v44 = vld [vmem:[%s2] sm:$0xf]
  %v46 = vlaneseq
  %v47 = vshrl.u32 %v46, 7
  %v48 = vsub.s32 0, %v47
  %v49 = vrot.slane %v44, %v48
  %v50 = vlaneseq
  %v51 = vshrl.u32 %v50, 7
  %v52 = vsub.s32 1, %v51
  %v53 = vrot.slane %v44, %v52
  %v54 = vlaneseq
  %v55 = vshrl.u32 %v54, 7
  %v56 = vsub.s32 2, %v55
  %v57 = vrot.slane %v44, %v56
  %v58 = vlaneseq
  %v59 = vshrl.u32 %v58, 7
  %v60 = vsub.s32 3, %v59
  %v61 = vrot.slane %v44, %v60
  %v66 = vadd.f32 %v40, %v49
  %v67 = vadd.f32 %v41, %v53
  %v68 = vadd.f32 %v42, %v57
  %v69 = vadd.f32 %v43, %v61
  %v70 = vmax.f32 %v66, 0.0
  %v71 = vmax.f32 %v67, 0.0
  %v72 = vmax.f32 %v68, 0.0
  %v73 = vmax.f32 %v69, 0.0
  %74 = vst [vmem:[%s3] sm:$0xff] %v70
  %75 = vst [vmem:[%s3 + $0x8] sm:$0xff] %v71
  %76 = vst [vmem:[%s3 + $0x10] sm:$0xff] %v72
  %77 = vst [vmem:[%s3 + $0x18] sm:$0xff] %v73
  // Predicated region
  $region14: #{autoencoder_forward.26} parent=0 // pred_check
    _
  $region15: #{autoencoder_forward.26} parent=0 // pred_check_branch
    %79 = sbr.rel (0) target = $region17
  $region16: #{autoencoder_forward.26} parent=0 // pred_region
    _
  $region17: #{autoencoder_forward.26} parent=0 // pred_fallthru
    _
  // Predicated region
  $region18: #{autoencoder_forward.26} parent=0 // pred_check
    _
  $region19: #{autoencoder_forward.26} parent=0 // pred_check_branch
    %81 = sbr.rel (0) target = $region21
  $region20: #{autoencoder_forward.26} parent=0 // pred_region
    _
  $region21: #{autoencoder_forward.26} parent=0 // pred_fallthru
    _

// kernel: tile.53
$region0: #{tile.53}
  #allocation0 [shape = 's32[1]{0}', space=sflag, size = 0x4, scoped, tag = 'scoped memory for tile.53']
  %s0 = inlined_call_operand.vmem [shape: f32[64], index: 0, kind: input, shape index: {}]
  %s1 = inlined_call_operand.vmem [shape: f32[4,64], index: 1, kind: output, shape index: {}]
  // Predicated region
  $region2: #{tile.53} parent=0 // pred_check
    _
  $region3: #{tile.53} parent=0 // pred_check_branch
    %3 = sbr.rel (0) target = $region5
  $region4: #{tile.53} parent=0 // pred_region
    _
  $region5: #{tile.53} parent=0 // pred_fallthru
    _
  %v4 = vld [vmem:[%s0] ss:$0 sm:$0xff]
  %5 = vst [vmem:[%s1] sm:$0xf] %v4

// kernel: autoencoder_forward.29
$region0: #{autoencoder_forward.29}
  #allocation0 [shape = 'u32[]', space=smem, size = 0x4, offset = 0x4, fixed_abs, tag = 'smem constant byte address 0x4 - core index']
  #allocation1 [shape = 'u32[144,128]{1,0:T(1,128)}', space=vmem, size = 0x12000, scoped, tag = 'internal scratch']
  %s0 = inlined_call_operand.vmem [shape: bf16[32,640], index: 0, kind: input, shape index: {}]
  %s1 = inlined_call_operand.vmem [shape: bf16[640,128], index: 1, kind: input, shape index: {}]
  %s2 = inlined_call_operand.vmem [shape: f32[32,128], index: 2, kind: output, shape index: {0}]
  %s3 = inlined_call_operand.vmem [shape: f32[1,2,128], index: 3, kind: output, shape index: {1}]
  %4 = xla_tuple %s2, %s3
  %s5 = sld [smem:[#allocation0]]
  $region26: #{autoencoder_forward.29} parent=0
    _
  %s7 = ssub.s32 1, %s5
  %s8 = scalar_select 0, %s7, %s5
  // Predicated region
  $region2: #{autoencoder_forward.29} parent=0 // pred_check
    _
  $region3: #{autoencoder_forward.29} parent=0 // pred_check_branch
    %10 = sbr.rel (0) target = $region5
  $region4: #{autoencoder_forward.29} parent=0 // pred_region
    _
  $region5: #{autoencoder_forward.29} parent=0 // pred_fallthru
    _
  // Predicated region
  $region6: #{autoencoder_forward.29} parent=0 // pred_check
    _
  $region7: #{autoencoder_forward.29} parent=0 // pred_check_branch
    %12 = sbr.rel (0) target = $region9
  $region8: #{autoencoder_forward.29} parent=0 // pred_region
    _
  $region9: #{autoencoder_forward.29} parent=0 // pred_fallthru
    _
  %v14 = vld [vmem:[%s0] sm:$0xff]
  %v15 = vld [vmem:[%s0 + $0x8] sm:$0xff]
  %v16 = vld [vmem:[%s0 + $0x10] sm:$0xf]
  %v17 = vld [vmem:[%s0 + $0x14] sm:$0xff]
  %v18 = vld [vmem:[%s0 + $0x1c] sm:$0xff]
  %v19 = vld [vmem:[%s0 + $0x24] sm:$0xf]
  %v20 = vld [vmem:[%s0 + $0x28] sm:$0xff]
  %v21 = vld [vmem:[%s0 + $0x30] sm:$0xff]
  %v22 = vld [vmem:[%s0 + $0x38] sm:$0xf]
  %v23 = vld [vmem:[%s0 + $0x3c] sm:$0xff]
  %v24 = vld [vmem:[%s0 + $0x44] sm:$0xff]
  %v25 = vld [vmem:[%s0 + $0x4c] sm:$0xf]
  %v26 = vld [vmem:[%s1] sm:$0xf]
  %v27 = vld [vmem:[%s1 + $0x4] sm:$0xf]
  %v28 = vld [vmem:[%s1 + $0x8] sm:$0xf]
  %v29 = vld [vmem:[%s1 + $0xc] sm:$0xf]
  %v30 = vld [vmem:[%s1 + $0x10] sm:$0xf]
  %v31 = vld [vmem:[%s1 + $0x14] sm:$0xf]
  %v32 = vld [vmem:[%s1 + $0x18] sm:$0xf]
  %v33 = vld [vmem:[%s1 + $0x1c] sm:$0xf]
  %v34 = vld [vmem:[%s1 + $0x20] sm:$0xf]
  %v35 = vld [vmem:[%s1 + $0x24] sm:$0xf]
  %v36 = vld [vmem:[%s1 + $0x28] sm:$0xf]
  %v37 = vld [vmem:[%s1 + $0x2c] sm:$0xf]
  %v38 = vld [vmem:[%s1 + $0x30] sm:$0xf]
  %v39 = vld [vmem:[%s1 + $0x34] sm:$0xf]
  %v40 = vld [vmem:[%s1 + $0x38] sm:$0xf]
  %v41 = vld [vmem:[%s1 + $0x3c] sm:$0xf]
  %v42 = vld [vmem:[%s1 + $0x40] sm:$0xf]
  %v43 = vld [vmem:[%s1 + $0x44] sm:$0xf]
  %v44 = vld [vmem:[%s1 + $0x48] sm:$0xf]
  %v45 = vld [vmem:[%s1 + $0x4c] sm:$0xf]
  %v46 = vld [vmem:[%s1 + $0x50] sm:$0xf]
  %v47 = vld [vmem:[%s1 + $0x54] sm:$0xf]
  %v48 = vld [vmem:[%s1 + $0x58] sm:$0xf]
  %v49 = vld [vmem:[%s1 + $0x5c] sm:$0xf]
  %v50 = vld [vmem:[%s1 + $0x60] sm:$0xf]
  %v51 = vld [vmem:[%s1 + $0x64] sm:$0xf]
  %v52 = vld [vmem:[%s1 + $0x68] sm:$0xf]
  %v53 = vld [vmem:[%s1 + $0x6c] sm:$0xf]
  %v54 = vld [vmem:[%s1 + $0x70] sm:$0xf]
  %v55 = vld [vmem:[%s1 + $0x74] sm:$0xf]
  %v56 = vld [vmem:[%s1 + $0x78] sm:$0xf]
  %v57 = vld [vmem:[%s1 + $0x7c] sm:$0xf]
  %v58 = vld [vmem:[%s1 + $0x80] sm:$0xf]
  %v59 = vld [vmem:[%s1 + $0x84] sm:$0xf]
  %v60 = vld [vmem:[%s1 + $0x88] sm:$0xf]
  %v61 = vld [vmem:[%s1 + $0x8c] sm:$0xf]
  %v62 = vld [vmem:[%s1 + $0x90] sm:$0xf]
  %v63 = vld [vmem:[%s1 + $0x94] sm:$0xf]
  %v64 = vld [vmem:[%s1 + $0x98] sm:$0xf]
  %v65 = vld [vmem:[%s1 + $0x9c] sm:$0xf]
  %v66 = vld [vmem:[%s1 + $0xa0] sm:$0xf]
  %v67 = vld [vmem:[%s1 + $0xa4] sm:$0xf]
  %v68 = vld [vmem:[%s1 + $0xa8] sm:$0xf]
  %v69 = vld [vmem:[%s1 + $0xac] sm:$0xf]
  %v70 = vld [vmem:[%s1 + $0xb0] sm:$0xf]
  %v71 = vld [vmem:[%s1 + $0xb4] sm:$0xf]
  %v72 = vld [vmem:[%s1 + $0xb8] sm:$0xf]
  %v73 = vld [vmem:[%s1 + $0xbc] sm:$0xf]
  %v74 = vld [vmem:[%s1 + $0xc0] sm:$0xf]
  %v75 = vld [vmem:[%s1 + $0xc4] sm:$0xf]
  %v76 = vld [vmem:[%s1 + $0xc8] sm:$0xf]
  %v77 = vld [vmem:[%s1 + $0xcc] sm:$0xf]
  %v78 = vld [vmem:[%s1 + $0xd0] sm:$0xf]
  %v79 = vld [vmem:[%s1 + $0xd4] sm:$0xf]
  %v80 = vld [vmem:[%s1 + $0xd8] sm:$0xf]
  %v81 = vld [vmem:[%s1 + $0xdc] sm:$0xf]
  %v82 = vld [vmem:[%s1 + $0xe0] sm:$0xf]
  %v83 = vld [vmem:[%s1 + $0xe4] sm:$0xf]
  %v84 = vld [vmem:[%s1 + $0xe8] sm:$0xf]
  %v85 = vld [vmem:[%s1 + $0xec] sm:$0xf]
  %v86 = vld [vmem:[%s1 + $0xf0] sm:$0xf]
  %v87 = vld [vmem:[%s1 + $0xf4] sm:$0xf]
  %v88 = vld [vmem:[%s1 + $0xf8] sm:$0xf]
  %v89 = vld [vmem:[%s1 + $0xfc] sm:$0xf]
  %v90 = vld [vmem:[%s1 + $0x100] sm:$0xf]
  %v91 = vld [vmem:[%s1 + $0x104] sm:$0xf]
  %v92 = vld [vmem:[%s1 + $0x108] sm:$0xf]
  %v93 = vld [vmem:[%s1 + $0x10c] sm:$0xf]
  %v94 = vld [vmem:[%s1 + $0x110] sm:$0xf]
  %v95 = vld [vmem:[%s1 + $0x114] sm:$0xf]
  %v96 = vld [vmem:[%s1 + $0x118] sm:$0xf]
  %v97 = vld [vmem:[%s1 + $0x11c] sm:$0xf]
  %v98 = vld [vmem:[%s1 + $0x120] sm:$0xf]
  %v99 = vld [vmem:[%s1 + $0x124] sm:$0xf]
  %v100 = vld [vmem:[%s1 + $0x128] sm:$0xf]
  %v101 = vld [vmem:[%s1 + $0x12c] sm:$0xf]
  %v102 = vld [vmem:[%s1 + $0x130] sm:$0xf]
  %v103 = vld [vmem:[%s1 + $0x134] sm:$0xf]
  %v104 = vld [vmem:[%s1 + $0x138] sm:$0xf]
  %v105 = vld [vmem:[%s1 + $0x13c] sm:$0xf]
  %v118 = vunpack.c.l.b16 %v14
  %v119 = vunpack.c.h.b16 %v14
  %v120 = vunpack.c.l.b16 %v15
  %v121 = vunpack.c.h.b16 %v15
  %v122 = vunpack.c.l.b16 %v16
  %v123 = vunpack.c.l.b16 %v17
  %v124 = vunpack.c.h.b16 %v17
  %v125 = vunpack.c.l.b16 %v18
  %v126 = vunpack.c.h.b16 %v18
  %v127 = vunpack.c.l.b16 %v19
  %v128 = vunpack.c.l.b16 %v20
  %v129 = vunpack.c.h.b16 %v20
  %v130 = vunpack.c.l.b16 %v21
  %v131 = vunpack.c.h.b16 %v21
  %v132 = vunpack.c.l.b16 %v22
  %v133 = vunpack.c.l.b16 %v23
  %v134 = vunpack.c.h.b16 %v23
  %v135 = vunpack.c.l.b16 %v24
  %v136 = vunpack.c.h.b16 %v24
  %v137 = vunpack.c.l.b16 %v25
  %v138 = vpack.c.b16 %v123, %v118
  %v139 = vpack.c.b16 %v124, %v119
  %v140 = vpack.c.b16 %v125, %v120
  %v141 = vpack.c.b16 %v126, %v121
  %v142 = vpack.c.b16 %v127, %v122
  %v143 = vpack.c.b16 %v133, %v128
  %v144 = vpack.c.b16 %v134, %v129
  %v145 = vpack.c.b16 %v135, %v130
  %v146 = vpack.c.b16 %v136, %v131
  %v147 = vpack.c.b16 %v137, %v132
  %v238 = vunpack.c.l.b16 %v26
  %v239 = vunpack.c.l.b16 %v27
  %v240 = vunpack.c.l.b16 %v28
  %v241 = vunpack.c.l.b16 %v29
  %v242 = vunpack.c.l.b16 %v30
  %v243 = vunpack.c.l.b16 %v31
  %v244 = vunpack.c.l.b16 %v32
  %v245 = vunpack.c.l.b16 %v33
  %v246 = vunpack.c.l.b16 %v34
  %v247 = vunpack.c.l.b16 %v35
  %v248 = vunpack.c.l.b16 %v36
  %v249 = vunpack.c.l.b16 %v37
  %v250 = vunpack.c.l.b16 %v38
  %v251 = vunpack.c.l.b16 %v39
  %v252 = vunpack.c.l.b16 %v40
  %v253 = vunpack.c.l.b16 %v41
  %v254 = vunpack.c.l.b16 %v42
  %v255 = vunpack.c.l.b16 %v43
  %v256 = vunpack.c.l.b16 %v44
  %v257 = vunpack.c.l.b16 %v45
  %v258 = vunpack.c.l.b16 %v46
  %v259 = vunpack.c.l.b16 %v47
  %v260 = vunpack.c.l.b16 %v48
  %v261 = vunpack.c.l.b16 %v49
  %v262 = vunpack.c.l.b16 %v50
  %v263 = vunpack.c.l.b16 %v51
  %v264 = vunpack.c.l.b16 %v52
  %v265 = vunpack.c.l.b16 %v53
  %v266 = vunpack.c.l.b16 %v54
  %v267 = vunpack.c.l.b16 %v55
  %v268 = vunpack.c.l.b16 %v56
  %v269 = vunpack.c.l.b16 %v57
  %v270 = vunpack.c.l.b16 %v58
  %v271 = vunpack.c.l.b16 %v59
  %v272 = vunpack.c.l.b16 %v60
  %v273 = vunpack.c.l.b16 %v61
  %v274 = vunpack.c.l.b16 %v62
  %v275 = vunpack.c.l.b16 %v63
  %v276 = vunpack.c.l.b16 %v64
  %v277 = vunpack.c.l.b16 %v65
  %v278 = vunpack.c.l.b16 %v66
  %v279 = vunpack.c.l.b16 %v67
  %v280 = vunpack.c.l.b16 %v68
  %v281 = vunpack.c.l.b16 %v69
  %v282 = vunpack.c.l.b16 %v70
  %v283 = vunpack.c.l.b16 %v71
  %v284 = vunpack.c.l.b16 %v72
  %v285 = vunpack.c.l.b16 %v73
  %v286 = vunpack.c.l.b16 %v74
  %v287 = vunpack.c.l.b16 %v75
  %v288 = vunpack.c.l.b16 %v76
  %v289 = vunpack.c.l.b16 %v77
  %v290 = vunpack.c.l.b16 %v78
  %v291 = vunpack.c.l.b16 %v79
  %v292 = vunpack.c.l.b16 %v80
  %v293 = vunpack.c.l.b16 %v81
  %v294 = vunpack.c.l.b16 %v82
  %v295 = vunpack.c.l.b16 %v83
  %v296 = vunpack.c.l.b16 %v84
  %v297 = vunpack.c.l.b16 %v85
  %v298 = vunpack.c.l.b16 %v86
  %v299 = vunpack.c.l.b16 %v87
  %v300 = vunpack.c.l.b16 %v88
  %v301 = vunpack.c.l.b16 %v89
  %v302 = vunpack.c.l.b16 %v90
  %v303 = vunpack.c.l.b16 %v91
  %v304 = vunpack.c.l.b16 %v92
  %v305 = vunpack.c.l.b16 %v93
  %v306 = vunpack.c.l.b16 %v94
  %v307 = vunpack.c.l.b16 %v95
  %v308 = vunpack.c.l.b16 %v96
  %v309 = vunpack.c.l.b16 %v97
  %v310 = vunpack.c.l.b16 %v98
  %v311 = vunpack.c.l.b16 %v99
  %v312 = vunpack.c.l.b16 %v100
  %v313 = vunpack.c.l.b16 %v101
  %v314 = vunpack.c.l.b16 %v102
  %v315 = vunpack.c.l.b16 %v103
  %v316 = vunpack.c.l.b16 %v104
  %v317 = vunpack.c.l.b16 %v105
  %v318 = vpack.c.b16 %v239, %v238
  %v319 = vpack.c.b16 %v241, %v240
  %v320 = vpack.c.b16 %v243, %v242
  %v321 = vpack.c.b16 %v245, %v244
  %v322 = vpack.c.b16 %v247, %v246
  %v323 = vpack.c.b16 %v249, %v248
  %v324 = vpack.c.b16 %v251, %v250
  %v325 = vpack.c.b16 %v253, %v252
  %v326 = vpack.c.b16 %v255, %v254
  %v327 = vpack.c.b16 %v257, %v256
  %v328 = vpack.c.b16 %v259, %v258
  %v329 = vpack.c.b16 %v261, %v260
  %v330 = vpack.c.b16 %v263, %v262
  %v331 = vpack.c.b16 %v265, %v264
  %v332 = vpack.c.b16 %v267, %v266
  %v333 = vpack.c.b16 %v269, %v268
  %v334 = vpack.c.b16 %v271, %v270
  %v335 = vpack.c.b16 %v273, %v272
  %v336 = vpack.c.b16 %v275, %v274
  %v337 = vpack.c.b16 %v277, %v276
  %v338 = vpack.c.b16 %v279, %v278
  %v339 = vpack.c.b16 %v281, %v280
  %v340 = vpack.c.b16 %v283, %v282
  %v341 = vpack.c.b16 %v285, %v284
  %v342 = vpack.c.b16 %v287, %v286
  %v343 = vpack.c.b16 %v289, %v288
  %v344 = vpack.c.b16 %v291, %v290
  %v345 = vpack.c.b16 %v293, %v292
  %v346 = vpack.c.b16 %v295, %v294
  %v347 = vpack.c.b16 %v297, %v296
  %v348 = vpack.c.b16 %v299, %v298
  %v349 = vpack.c.b16 %v301, %v300
  %v350 = vpack.c.b16 %v303, %v302
  %v351 = vpack.c.b16 %v305, %v304
  %v352 = vpack.c.b16 %v307, %v306
  %v353 = vpack.c.b16 %v309, %v308
  %v354 = vpack.c.b16 %v311, %v310
  %v355 = vpack.c.b16 %v313, %v312
  %v356 = vpack.c.b16 %v315, %v314
  %v357 = vpack.c.b16 %v317, %v316
  %398 = vmatprep.subr.bf16.mxu0 0
  %399 = vmatpush1.bf16.msra.mxu0 %v318
  %400 = vmatprep.subr.bf16.mxu0 0
  %401 = vmatpush1.bf16.msra.mxu0 %v319
  %402 = vmatprep.subr.bf16.mxu0 0
  %403 = vmatpush1.bf16.msra.mxu0 %v320
  %404 = vmatprep.subr.bf16.mxu0 0
  %405 = vmatpush1.bf16.msra.mxu0 %v321
  %406 = vmatprep.subr.bf16.mxu0 0
  %407 = vmatpush1.bf16.msra.mxu0 %v322
  %408 = vmatprep.subr.bf16.mxu0 0
  %409 = vmatpush1.bf16.msra.mxu0 %v323
  %410 = vmatprep.subr.bf16.mxu0 0
  %411 = vmatpush1.bf16.msra.mxu0 %v324
  %412 = vmatprep.subr.bf16.mxu0 0
  %413 = vmatpush1.bf16.msra.mxu0 %v325
  %414 = vmatprep.subr.bf16.mxu0 0
  %415 = vmatpush1.bf16.msra.mxu0 %v326
  %416 = vmatprep.subr.bf16.mxu0 0
  %417 = vmatpush1.bf16.msra.mxu0 %v327
  %418 = vmatprep.subr.bf16.mxu0 0
  %419 = vmatpush1.bf16.msra.mxu0 %v328
  %420 = vmatprep.subr.bf16.mxu0 0
  %421 = vmatpush1.bf16.msra.mxu0 %v329
  %422 = vmatprep.subr.bf16.mxu0 0
  %423 = vmatpush1.bf16.msra.mxu0 %v330
  %424 = vmatprep.subr.bf16.mxu0 0
  %425 = vmatpush1.bf16.msra.mxu0 %v331
  %426 = vmatprep.subr.bf16.mxu0 0
  %427 = vmatpush1.bf16.msra.mxu0 %v332
  %428 = vmatprep.subr.bf16.mxu0 0
  %429 = vmatpush1.bf16.msra.mxu0 %v333
  %430 = vmatprep.mubr.bf16.mxu0 %v139
  %431 = vmatmul.mubr.bf16.gmra.mrb[0].mxu0 %v138
  %v432 = vpop.f32.mrb[0].mxu0
  %v433 = vadd.f32 0.0, %v432
  %v434 = vpop.f32.mrb[0].mxu0
  %v435 = vpop.f32.mrb[0].mxu0
  %v436 = vadd.f32 0.0, %v435
  %v437 = vpop.f32.mrb[0].mxu0
  %438 = vmatprep.mubr.bf16.mxu0 %v144
  %439 = vmatmul.mubr.bf16.gmra.mrb[0].mxu0 %v143
  %v440 = vpop.f32.mrb[0].mxu0
  %v441 = vadd.f32 0.0, %v440
  %v442 = vpop.f32.mrb[0].mxu0
  %v443 = vpop.f32.mrb[0].mxu0
  %v444 = vadd.f32 0.0, %v443
  %v445 = vpop.f32.mrb[0].mxu0
  %446 = vdwg.mxu0
  %447 = vmatprep.subr.bf16.mxu0 0
  %448 = vmatpush1.bf16.msra.mxu0 %v334
  %449 = vmatprep.subr.bf16.mxu0 0
  %450 = vmatpush1.bf16.msra.mxu0 %v335
  %451 = vmatprep.subr.bf16.mxu0 0
  %452 = vmatpush1.bf16.msra.mxu0 %v336
  %453 = vmatprep.subr.bf16.mxu0 0
  %454 = vmatpush1.bf16.msra.mxu0 %v337
  %455 = vmatprep.subr.bf16.mxu0 0
  %456 = vmatpush1.bf16.msra.mxu0 %v338
  %457 = vmatprep.subr.bf16.mxu0 0
  %458 = vmatpush1.bf16.msra.mxu0 %v339
  %459 = vmatprep.subr.bf16.mxu0 0
  %460 = vmatpush1.bf16.msra.mxu0 %v340
  %461 = vmatprep.subr.bf16.mxu0 0
  %462 = vmatpush1.bf16.msra.mxu0 %v341
  %463 = vmatprep.subr.bf16.mxu0 0
  %464 = vmatpush1.bf16.msra.mxu0 %v342
  %465 = vmatprep.subr.bf16.mxu0 0
  %466 = vmatpush1.bf16.msra.mxu0 %v343
  %467 = vmatprep.subr.bf16.mxu0 0
  %468 = vmatpush1.bf16.msra.mxu0 %v344
  %469 = vmatprep.subr.bf16.mxu0 0
  %470 = vmatpush1.bf16.msra.mxu0 %v345
  %471 = vmatprep.subr.bf16.mxu0 0
  %472 = vmatpush1.bf16.msra.mxu0 %v346
  %473 = vmatprep.subr.bf16.mxu0 0
  %474 = vmatpush1.bf16.msra.mxu0 %v347
  %475 = vmatprep.subr.bf16.mxu0 0
  %476 = vmatpush1.bf16.msra.mxu0 %v348
  %477 = vmatprep.subr.bf16.mxu0 0
  %478 = vmatpush1.bf16.msra.mxu0 %v349
  %479 = vmatprep.mubr.bf16.mxu0 %v141
  %480 = vmatmul.mubr.bf16.gmra.mrb[0].mxu0 %v140
  %v481 = vpop.f32.mrb[0].mxu0
  %v482 = vadd.f32 %v433, %v481
  %v483 = vpop.f32.mrb[0].mxu0
  %v484 = vpop.f32.mrb[0].mxu0
  %v485 = vadd.f32 %v436, %v484
  %v486 = vpop.f32.mrb[0].mxu0
  %487 = vmatprep.mubr.bf16.mxu0 %v146
  %488 = vmatmul.mubr.bf16.gmra.mrb[0].mxu0 %v145
  %v489 = vpop.f32.mrb[0].mxu0
  %v490 = vadd.f32 %v441, %v489
  %v491 = vpop.f32.mrb[0].mxu0
  %v492 = vpop.f32.mrb[0].mxu0
  %v493 = vadd.f32 %v444, %v492
  %v494 = vpop.f32.mrb[0].mxu0
  %495 = vdwg.mxu0
  %496 = vmatprep.subr.bf16.mxu0 0
  %497 = vmatpush1.bf16.msra.mxu0 %v350
  %498 = vmatprep.subr.bf16.mxu0 0
  %499 = vmatpush1.bf16.msra.mxu0 %v351
  %500 = vmatprep.subr.bf16.mxu0 0
  %501 = vmatpush1.bf16.msra.mxu0 %v352
  %502 = vmatprep.subr.bf16.mxu0 0
  %503 = vmatpush1.bf16.msra.mxu0 %v353
  %504 = vmatprep.subr.bf16.mxu0 0
  %505 = vmatpush1.bf16.msra.mxu0 %v354
  %506 = vmatprep.subr.bf16.mxu0 0
  %507 = vmatpush1.bf16.msra.mxu0 %v355
  %508 = vmatprep.subr.bf16.mxu0 0
  %509 = vmatpush1.bf16.msra.mxu0 %v356
  %510 = vmatprep.subr.bf16.mxu0 0
  %511 = vmatpush1.bf16.msra.mxu0 %v357
  %512 = vmatprep.subr.bf16.mxu0 0
  %513 = vmatpush1.bf16.msra.mxu0 0
  %514 = vmatprep.subr.bf16.mxu0 0
  %515 = vmatpush1.bf16.msra.mxu0 0
  %516 = vmatprep.subr.bf16.mxu0 0
  %517 = vmatpush1.bf16.msra.mxu0 0
  %518 = vmatprep.subr.bf16.mxu0 0
  %519 = vmatpush1.bf16.msra.mxu0 0
  %520 = vmatprep.subr.bf16.mxu0 0
  %521 = vmatpush1.bf16.msra.mxu0 0
  %522 = vmatprep.subr.bf16.mxu0 0
  %523 = vmatpush1.bf16.msra.mxu0 0
  %524 = vmatprep.subr.bf16.mxu0 0
  %525 = vmatpush1.bf16.msra.mxu0 0
  %526 = vmatprep.subr.bf16.mxu0 0
  %527 = vmatpush1.bf16.msra.mxu0 0
  %528 = vmatprep.mubr.bf16.mxu0 0
  %529 = vmatmul.mubr.bf16.gmra.mrb[0].mxu0 %v142
  %v530 = vpop.f32.mrb[0].mxu0
  %v531 = vadd.f32 %v482, %v530
  %v532 = vpop.f32.mrb[0].mxu0
  %v533 = vpop.f32.mrb[0].mxu0
  %v534 = vadd.f32 %v485, %v533
  %v535 = vpop.f32.mrb[0].mxu0
  %536 = vmatprep.mubr.bf16.mxu0 0
  %537 = vmatmul.mubr.bf16.gmra.mrb[0].mxu0 %v147
  %v538 = vpop.f32.mrb[0].mxu0
  %v539 = vadd.f32 %v490, %v538
  %v540 = vpop.f32.mrb[0].mxu0
  %v541 = vpop.f32.mrb[0].mxu0
  %v542 = vadd.f32 %v493, %v541
  %v543 = vpop.f32.mrb[0].mxu0
  %544 = vdwg.mxu0
  %545 = vst [vmem:[%s2] sm:$0xff] %v531
  %546 = vst [vmem:[%s2 + $0x8] sm:$0xff] %v534
  %547 = vst [vmem:[%s2 + $0x10] sm:$0xff] %v539
  %548 = vst [vmem:[%s2 + $0x18] sm:$0xff] %v542
  %v549 = vadd.f32 %v531, %v534
  %v550 = vadd.f32 %v549, %v539
  %v551 = vadd.f32 %v550, %v542
  %v552 = vrot.slane %v551, 4
  %v553 = vadd.f32 %v551, %v552
  %v554 = vrot.slane %v553, 2
  %v555 = vadd.f32 %v553, %v554
  %v556 = vrot.slane %v555, 1
  %v557 = vadd.f32 %v555, %v556
  %v558 = vmul.f32 %v531, %v531
  %v559 = vmul.f32 %v534, %v534
  %v560 = vmul.f32 %v539, %v539
  %v561 = vmul.f32 %v542, %v542
  %v562 = vadd.f32 %v558, %v559
  %v563 = vadd.f32 %v562, %v560
  %v564 = vadd.f32 %v563, %v561
  %v565 = vrot.slane %v564, 4
  %v566 = vadd.f32 %v564, %v565
  %v567 = vrot.slane %v566, 2
  %v568 = vadd.f32 %v566, %v567
  %v569 = vrot.slane %v568, 1
  %v570 = vadd.f32 %v568, %v569
  %vm571 = vcmask 1040384
  %v572 = vsel %vm571, %v557, %v570
  %573 = vst [vmem:[%s3] sm:$0x3] %v572
  // Predicated region
  $region10: #{autoencoder_forward.29} parent=0 // pred_check
    _
  $region11: #{autoencoder_forward.29} parent=0 // pred_check_branch
    %575 = sbr.rel (0) target = $region13
  $region12: #{autoencoder_forward.29} parent=0 // pred_region
    _
  $region13: #{autoencoder_forward.29} parent=0 // pred_fallthru
    _
  // Predicated region
  $region14: #{autoencoder_forward.29} parent=0 // pred_check
    _
  $region15: #{autoencoder_forward.29} parent=0 // pred_check_branch
    %577 = sbr.rel (0) target = $region17
  $region16: #{autoencoder_forward.29} parent=0 // pred_region
    _
  $region17: #{autoencoder_forward.29} parent=0 // pred_fallthru
    _
  // Predicated region
  $region18: #{autoencoder_forward.29} parent=0 // pred_check
    _
  $region19: #{autoencoder_forward.29} parent=0 // pred_check_branch
    %579 = sbr.rel (0) target = $region21
  $region20: #{autoencoder_forward.29} parent=0 // pred_region
    _
  $region21: #{autoencoder_forward.29} parent=0 // pred_fallthru
    _
  // Predicated region
  $region22: #{autoencoder_forward.29} parent=0 // pred_check
    _
  $region23: #{autoencoder_forward.29} parent=0 // pred_check_branch
    %581 = sbr.rel (0) target = $region25
  $region24: #{autoencoder_forward.29} parent=0 // pred_region
    _
  $region25: #{autoencoder_forward.29} parent=0 // pred_fallthru
    _

// kernel: tile.63
$region0: #{tile.63}
  #allocation0 [shape = 's32[1]{0}', space=sflag, size = 0x4, scoped, tag = 'scoped memory for tile.63']
  %s0 = inlined_call_operand.vmem [shape: f32[32], index: 0, kind: input, shape index: {}]
  %s1 = inlined_call_operand.vmem [shape: f32[4,32], index: 1, kind: output, shape index: {}]
  // Predicated region
  $region2: #{tile.63} parent=0 // pred_check
    _
  $region3: #{tile.63} parent=0 // pred_check_branch
    %3 = sbr.rel (0) target = $region5
  $region4: #{tile.63} parent=0 // pred_region
    _
  $region5: #{tile.63} parent=0 // pred_fallthru
    _
  %v4 = vld [vmem:[%s0] ss:$0 sm:$0xff]
  %5 = vst [vmem:[%s1] sm:$0xf] %v4

// kernel: autoencoder_forward.31
$region0: #{autoencoder_forward.31}
  #allocation0 [shape = 'u32[]', space=smem, size = 0x4, offset = 0x4, fixed_abs, tag = 'smem constant byte address 0x4 - core index']
  #allocation1 [shape = 'u32[144,128]{1,0:T(1,128)}', space=vmem, size = 0x12000, scoped, tag = 'internal scratch']
  %s0 = inlined_call_operand.vmem [shape: bf16[128,384], index: 0, kind: input, shape index: {}]
  %s1 = inlined_call_operand.vmem [shape: bf16[384,128], index: 1, kind: input, shape index: {}]
  %s2 = inlined_call_operand.vmem [shape: f32[128,128], index: 2, kind: output, shape index: {0}]
  %s3 = inlined_call_operand.vmem [shape: f32[1,2,128], index: 3, kind: output, shape index: {1}]
  %4 = xla_tuple %s2, %s3
  %s5 = sld [smem:[#allocation0]]
  $region26: #{autoencoder_forward.31} parent=0
    _
  %s7 = ssub.s32 1, %s5
  %s8 = scalar_select 0, %s7, %s5
  // Predicated region
  $region2: #{autoencoder_forward.31} parent=0 // pred_check
    _
  $region3: #{autoencoder_forward.31} parent=0 // pred_check_branch
    %10 = sbr.rel (0) target = $region5
  $region4: #{autoencoder_forward.31} parent=0 // pred_region
    _
  $region5: #{autoencoder_forward.31} parent=0 // pred_fallthru
    _
  // Predicated region
  $region6: #{autoencoder_forward.31} parent=0 // pred_check
    _
  $region7: #{autoencoder_forward.31} parent=0 // pred_check_branch
    %12 = sbr.rel (0) target = $region9
  $region8: #{autoencoder_forward.31} parent=0 // pred_region
    _
  $region9: #{autoencoder_forward.31} parent=0 // pred_fallthru
    _
  %v14 = vld [vmem:[%s0] sm:$0xff]
  %v15 = vld [vmem:[%s0 + $0x8] sm:$0xf]
  %v16 = vld [vmem:[%s0 + $0xc] sm:$0xff]
  %v17 = vld [vmem:[%s0 + $0x14] sm:$0xf]
  %v18 = vld [vmem:[%s0 + $0x18] sm:$0xff]
  %v19 = vld [vmem:[%s0 + $0x20] sm:$0xf]
  %v20 = vld [vmem:[%s0 + $0x24] sm:$0xff]
  %v21 = vld [vmem:[%s0 + $0x2c] sm:$0xf]
  %v22 = vld [vmem:[%s0 + $0x30] sm:$0xff]
  %v23 = vld [vmem:[%s0 + $0x38] sm:$0xf]
  %v24 = vld [vmem:[%s0 + $0x3c] sm:$0xff]
  %v25 = vld [vmem:[%s0 + $0x44] sm:$0xf]
  %v26 = vld [vmem:[%s0 + $0x48] sm:$0xff]
  %v27 = vld [vmem:[%s0 + $0x50] sm:$0xf]
  %v28 = vld [vmem:[%s0 + $0x54] sm:$0xff]
  %v29 = vld [vmem:[%s0 + $0x5c] sm:$0xf]
  %v30 = vld [vmem:[%s0 + $0x60] sm:$0xff]
  %v31 = vld [vmem:[%s0 + $0x68] sm:$0xf]
  %v32 = vld [vmem:[%s0 + $0x6c] sm:$0xff]
  %v33 = vld [vmem:[%s0 + $0x74] sm:$0xf]
  %v34 = vld [vmem:[%s0 + $0x78] sm:$0xff]
  %v35 = vld [vmem:[%s0 + $0x80] sm:$0xf]
  %v36 = vld [vmem:[%s0 + $0x84] sm:$0xff]
  %v37 = vld [vmem:[%s0 + $0x8c] sm:$0xf]
  %v38 = vld [vmem:[%s0 + $0x90] sm:$0xff]
  %v39 = vld [vmem:[%s0 + $0x98] sm:$0xf]
  %v40 = vld [vmem:[%s0 + $0x9c] sm:$0xff]
  %v41 = vld [vmem:[%s0 + $0xa4] sm:$0xf]
  %v42 = vld [vmem:[%s0 + $0xa8] sm:$0xff]
  %v43 = vld [vmem:[%s0 + $0xb0] sm:$0xf]
  %v44 = vld [vmem:[%s0 + $0xb4] sm:$0xff]
  %v45 = vld [vmem:[%s0 + $0xbc] sm:$0xf]
  %v46 = vld [vmem:[%s1] sm:$0xf]
  %v47 = vld [vmem:[%s1 + $0x4] sm:$0xf]
  %v48 = vld [vmem:[%s1 + $0x8] sm:$0xf]
  %v49 = vld [vmem:[%s1 + $0xc] sm:$0xf]
  %v50 = vld [vmem:[%s1 + $0x10] sm:$0xf]
  %v51 = vld [vmem:[%s1 + $0x14] sm:$0xf]
  %v52 = vld [vmem:[%s1 + $0x18] sm:$0xf]
  %v53 = vld [vmem:[%s1 + $0x1c] sm:$0xf]
  %v54 = vld [vmem:[%s1 + $0x20] sm:$0xf]
  %v55 = vld [vmem:[%s1 + $0x24] sm:$0xf]
  %v56 = vld [vmem:[%s1 + $0x28] sm:$0xf]
  %v57 = vld [vmem:[%s1 + $0x2c] sm:$0xf]
  %v58 = vld [vmem:[%s1 + $0x30] sm:$0xf]
  %v59 = vld [vmem:[%s1 + $0x34] sm:$0xf]
  %v60 = vld [vmem:[%s1 + $0x38] sm:$0xf]
  %v61 = vld [vmem:[%s1 + $0x3c] sm:$0xf]
  %v62 = vld [vmem:[%s1 + $0x40] sm:$0xf]
  %v63 = vld [vmem:[%s1 + $0x44] sm:$0xf]
  %v64 = vld [vmem:[%s1 + $0x48] sm:$0xf]
  %v65 = vld [vmem:[%s1 + $0x4c] sm:$0xf]
  %v66 = vld [vmem:[%s1 + $0x50] sm:$0xf]
  %v67 = vld [vmem:[%s1 + $0x54] sm:$0xf]
  %v68 = vld [vmem:[%s1 + $0x58] sm:$0xf]
  %v69 = vld [vmem:[%s1 + $0x5c] sm:$0xf]
  %v70 = vld [vmem:[%s1 + $0x60] sm:$0xf]
  %v71 = vld [vmem:[%s1 + $0x64] sm:$0xf]
  %v72 = vld [vmem:[%s1 + $0x68] sm:$0xf]
  %v73 = vld [vmem:[%s1 + $0x6c] sm:$0xf]
  %v74 = vld [vmem:[%s1 + $0x70] sm:$0xf]
  %v75 = vld [vmem:[%s1 + $0x74] sm:$0xf]
  %v76 = vld [vmem:[%s1 + $0x78] sm:$0xf]
  %v77 = vld [vmem:[%s1 + $0x7c] sm:$0xf]
  %v78 = vld [vmem:[%s1 + $0x80] sm:$0xf]
  %v79 = vld [vmem:[%s1 + $0x84] sm:$0xf]
  %v80 = vld [vmem:[%s1 + $0x88] sm:$0xf]
  %v81 = vld [vmem:[%s1 + $0x8c] sm:$0xf]
  %v82 = vld [vmem:[%s1 + $0x90] sm:$0xf]
  %v83 = vld [vmem:[%s1 + $0x94] sm:$0xf]
  %v84 = vld [vmem:[%s1 + $0x98] sm:$0xf]
  %v85 = vld [vmem:[%s1 + $0x9c] sm:$0xf]
  %v86 = vld [vmem:[%s1 + $0xa0] sm:$0xf]
  %v87 = vld [vmem:[%s1 + $0xa4] sm:$0xf]
  %v88 = vld [vmem:[%s1 + $0xa8] sm:$0xf]
  %v89 = vld [vmem:[%s1 + $0xac] sm:$0xf]
  %v90 = vld [vmem:[%s1 + $0xb0] sm:$0xf]
  %v91 = vld [vmem:[%s1 + $0xb4] sm:$0xf]
  %v92 = vld [vmem:[%s1 + $0xb8] sm:$0xf]
  %v93 = vld [vmem:[%s1 + $0xbc] sm:$0xf]
  %v126 = vunpack.c.l.b16 %v14
  %v127 = vunpack.c.h.b16 %v14
  %v128 = vunpack.c.l.b16 %v15
  %v129 = vunpack.c.l.b16 %v16
  %v130 = vunpack.c.h.b16 %v16
  %v131 = vunpack.c.l.b16 %v17
  %v132 = vunpack.c.l.b16 %v18
  %v133 = vunpack.c.h.b16 %v18
  %v134 = vunpack.c.l.b16 %v19
  %v135 = vunpack.c.l.b16 %v20
  %v136 = vunpack.c.h.b16 %v20
  %v137 = vunpack.c.l.b16 %v21
  %v138 = vunpack.c.l.b16 %v22
  %v139 = vunpack.c.h.b16 %v22
  %v140 = vunpack.c.l.b16 %v23
  %v141 = vunpack.c.l.b16 %v24
  %v142 = vunpack.c.h.b16 %v24
  %v143 = vunpack.c.l.b16 %v25
  %v144 = vunpack.c.l.b16 %v26
  %v145 = vunpack.c.h.b16 %v26
  %v146 = vunpack.c.l.b16 %v27
  %v147 = vunpack.c.l.b16 %v28
  %v148 = vunpack.c.h.b16 %v28
  %v149 = vunpack.c.l.b16 %v29
  %v150 = vunpack.c.l.b16 %v30
  %v151 = vunpack.c.h.b16 %v30
  %v152 = vunpack.c.l.b16 %v31
  %v153 = vunpack.c.l.b16 %v32
  %v154 = vunpack.c.h.b16 %v32
  %v155 = vunpack.c.l.b16 %v33
  %v156 = vunpack.c.l.b16 %v34
  %v157 = vunpack.c.h.b16 %v34
  %v158 = vunpack.c.l.b16 %v35
  %v159 = vunpack.c.l.b16 %v36
  %v160 = vunpack.c.h.b16 %v36
  %v161 = vunpack.c.l.b16 %v37
  %v162 = vunpack.c.l.b16 %v38
  %v163 = vunpack.c.h.b16 %v38
  %v164 = vunpack.c.l.b16 %v39
  %v165 = vunpack.c.l.b16 %v40
  %v166 = vunpack.c.h.b16 %v40
  %v167 = vunpack.c.l.b16 %v41
  %v168 = vunpack.c.l.b16 %v42
  %v169 = vunpack.c.h.b16 %v42
  %v170 = vunpack.c.l.b16 %v43
  %v171 = vunpack.c.l.b16 %v44
  %v172 = vunpack.c.h.b16 %v44
  %v173 = vunpack.c.l.b16 %v45
  %v174 = vpack.c.b16 %v129, %v126
  %v175 = vpack.c.b16 %v130, %v127
  %v176 = vpack.c.b16 %v131, %v128
  %v177 = vpack.c.b16 %v135, %v132
  %v178 = vpack.c.b16 %v136, %v133
  %v179 = vpack.c.b16 %v137, %v134
  %v180 = vpack.c.b16 %v141, %v138
  %v181 = vpack.c.b16 %v142, %v139
  %v182 = vpack.c.b16 %v143, %v140
  %v183 = vpack.c.b16 %v147, %v144
  %v184 = vpack.c.b16 %v148, %v145
  %v185 = vpack.c.b16 %v149, %v146
  %v186 = vpack.c.b16 %v153, %v150
  %v187 = vpack.c.b16 %v154, %v151
  %v188 = vpack.c.b16 %v155, %v152
  %v189 = vpack.c.b16 %v159, %v156
  %v190 = vpack.c.b16 %v160, %v157
  %v191 = vpack.c.b16 %v161, %v158
  %v192 = vpack.c.b16 %v165, %v162
  %v193 = vpack.c.b16 %v166, %v163
  %v194 = vpack.c.b16 %v167, %v164
  %v195 = vpack.c.b16 %v171, %v168
  %v196 = vpack.c.b16 %v172, %v169
  %v197 = vpack.c.b16 %v173, %v170
  %v270 = vunpack.c.l.b16 %v46
  %v271 = vunpack.c.l.b16 %v47
  %v272 = vunpack.c.l.b16 %v48
  %v273 = vunpack.c.l.b16 %v49
  %v274 = vunpack.c.l.b16 %v50
  %v275 = vunpack.c.l.b16 %v51
  %v276 = vunpack.c.l.b16 %v52
  %v277 = vunpack.c.l.b16 %v53
  %v278 = vunpack.c.l.b16 %v54
  %v279 = vunpack.c.l.b16 %v55
  %v280 = vunpack.c.l.b16 %v56
  %v281 = vunpack.c.l.b16 %v57
  %v282 = vunpack.c.l.b16 %v58
  %v283 = vunpack.c.l.b16 %v59
  %v284 = vunpack.c.l.b16 %v60
  %v285 = vunpack.c.l.b16 %v61
  %v286 = vunpack.c.l.b16 %v62
  %v287 = vunpack.c.l.b16 %v63
  %v288 = vunpack.c.l.b16 %v64
  %v289 = vunpack.c.l.b16 %v65
  %v290 = vunpack.c.l.b16 %v66
  %v291 = vunpack.c.l.b16 %v67
  %v292 = vunpack.c.l.b16 %v68
  %v293 = vunpack.c.l.b16 %v69
  %v294 = vunpack.c.l.b16 %v70
  %v295 = vunpack.c.l.b16 %v71
  %v296 = vunpack.c.l.b16 %v72
  %v297 = vunpack.c.l.b16 %v73
  %v298 = vunpack.c.l.b16 %v74
  %v299 = vunpack.c.l.b16 %v75
  %v300 = vunpack.c.l.b16 %v76
  %v301 = vunpack.c.l.b16 %v77
  %v302 = vunpack.c.l.b16 %v78
  %v303 = vunpack.c.l.b16 %v79
  %v304 = vunpack.c.l.b16 %v80
  %v305 = vunpack.c.l.b16 %v81
  %v306 = vunpack.c.l.b16 %v82
  %v307 = vunpack.c.l.b16 %v83
  %v308 = vunpack.c.l.b16 %v84
  %v309 = vunpack.c.l.b16 %v85
  %v310 = vunpack.c.l.b16 %v86
  %v311 = vunpack.c.l.b16 %v87
  %v312 = vunpack.c.l.b16 %v88
  %v313 = vunpack.c.l.b16 %v89
  %v314 = vunpack.c.l.b16 %v90
  %v315 = vunpack.c.l.b16 %v91
  %v316 = vunpack.c.l.b16 %v92
  %v317 = vunpack.c.l.b16 %v93
  %v318 = vpack.c.b16 %v271, %v270
  %v319 = vpack.c.b16 %v273, %v272
  %v320 = vpack.c.b16 %v275, %v274
  %v321 = vpack.c.b16 %v277, %v276
  %v322 = vpack.c.b16 %v279, %v278
  %v323 = vpack.c.b16 %v281, %v280
  %v324 = vpack.c.b16 %v283, %v282
  %v325 = vpack.c.b16 %v285, %v284
  %v326 = vpack.c.b16 %v287, %v286
  %v327 = vpack.c.b16 %v289, %v288
  %v328 = vpack.c.b16 %v291, %v290
  %v329 = vpack.c.b16 %v293, %v292
  %v330 = vpack.c.b16 %v295, %v294
  %v331 = vpack.c.b16 %v297, %v296
  %v332 = vpack.c.b16 %v299, %v298
  %v333 = vpack.c.b16 %v301, %v300
  %v334 = vpack.c.b16 %v303, %v302
  %v335 = vpack.c.b16 %v305, %v304
  %v336 = vpack.c.b16 %v307, %v306
  %v337 = vpack.c.b16 %v309, %v308
  %v338 = vpack.c.b16 %v311, %v310
  %v339 = vpack.c.b16 %v313, %v312
  %v340 = vpack.c.b16 %v315, %v314
  %v341 = vpack.c.b16 %v317, %v316
  %366 = vmatprep.subr.bf16.mxu0 0
  %367 = vmatpush1.bf16.msra.mxu0 %v318
  %368 = vmatprep.subr.bf16.mxu0 0
  %369 = vmatpush1.bf16.msra.mxu0 %v319
  %370 = vmatprep.subr.bf16.mxu0 0
  %371 = vmatpush1.bf16.msra.mxu0 %v320
  %372 = vmatprep.subr.bf16.mxu0 0
  %373 = vmatpush1.bf16.msra.mxu0 %v321
  %374 = vmatprep.subr.bf16.mxu0 0
  %375 = vmatpush1.bf16.msra.mxu0 %v322
  %376 = vmatprep.subr.bf16.mxu0 0
  %377 = vmatpush1.bf16.msra.mxu0 %v323
  %378 = vmatprep.subr.bf16.mxu0 0
  %379 = vmatpush1.bf16.msra.mxu0 %v324
  %380 = vmatprep.subr.bf16.mxu0 0
  %381 = vmatpush1.bf16.msra.mxu0 %v325
  %382 = vmatprep.subr.bf16.mxu0 0
  %383 = vmatpush1.bf16.msra.mxu0 %v326
  %384 = vmatprep.subr.bf16.mxu0 0
  %385 = vmatpush1.bf16.msra.mxu0 %v327
  %386 = vmatprep.subr.bf16.mxu0 0
  %387 = vmatpush1.bf16.msra.mxu0 %v328
  %388 = vmatprep.subr.bf16.mxu0 0
  %389 = vmatpush1.bf16.msra.mxu0 %v329
  %390 = vmatprep.subr.bf16.mxu0 0
  %391 = vmatpush1.bf16.msra.mxu0 %v330
  %392 = vmatprep.subr.bf16.mxu0 0
  %393 = vmatpush1.bf16.msra.mxu0 %v331
  %394 = vmatprep.subr.bf16.mxu0 0
  %395 = vmatpush1.bf16.msra.mxu0 %v332
  %396 = vmatprep.subr.bf16.mxu0 0
  %397 = vmatpush1.bf16.msra.mxu0 %v333
  %398 = vmatprep.mubr.bf16.mxu0 %v175
  %399 = vmatmul.mubr.bf16.gmra.mrb[0].mxu0 %v174
  %v400 = vpop.f32.mrb[0].mxu0
  %v401 = vadd.f32 0.0, %v400
  %v402 = vpop.f32.mrb[0].mxu0
  %v403 = vpop.f32.mrb[0].mxu0
  %v404 = vadd.f32 0.0, %v403
  %v405 = vpop.f32.mrb[0].mxu0
  %406 = vmatprep.mubr.bf16.mxu0 %v178
  %407 = vmatmul.mubr.bf16.gmra.mrb[0].mxu0 %v177
  %v408 = vpop.f32.mrb[0].mxu0
  %v409 = vadd.f32 0.0, %v408
  %v410 = vpop.f32.mrb[0].mxu0
  %v411 = vpop.f32.mrb[0].mxu0
  %v412 = vadd.f32 0.0, %v411
  %v413 = vpop.f32.mrb[0].mxu0
  %414 = vmatprep.mubr.bf16.mxu0 %v181
  %415 = vmatmul.mubr.bf16.gmra.mrb[0].mxu0 %v180
  %v416 = vpop.f32.mrb[0].mxu0
  %v417 = vadd.f32 0.0, %v416
  %v418 = vpop.f32.mrb[0].mxu0
  %v419 = vpop.f32.mrb[0].mxu0
  %v420 = vadd.f32 0.0, %v419
  %v421 = vpop.f32.mrb[0].mxu0
  %422 = vmatprep.mubr.bf16.mxu0 %v184
  %423 = vmatmul.mubr.bf16.gmra.mrb[0].mxu0 %v183
  %v424 = vpop.f32.mrb[0].mxu0
  %v425 = vadd.f32 0.0, %v424
  %v426 = vpop.f32.mrb[0].mxu0
  %v427 = vpop.f32.mrb[0].mxu0
  %v428 = vadd.f32 0.0, %v427
  %v429 = vpop.f32.mrb[0].mxu0
  %430 = vmatprep.mubr.bf16.mxu0 %v187
  %431 = vmatmul.mubr.bf16.gmra.mrb[0].mxu0 %v186
  %v432 = vpop.f32.mrb[0].mxu0
  %v433 = vadd.f32 0.0, %v432
  %v434 = vpop.f32.mrb[0].mxu0
  %v435 = vpop.f32.mrb[0].mxu0
  %v436 = vadd.f32 0.0, %v435
  %v437 = vpop.f32.mrb[0].mxu0
  %438 = vmatprep.mubr.bf16.mxu0 %v190
  %439 = vmatmul.mubr.bf16.gmra.mrb[0].mxu0 %v189
  %v440 = vpop.f32.mrb[0].mxu0
  %v441 = vadd.f32 0.0, %v440
  %v442 = vpop.f32.mrb[0].mxu0
  %v443 = vpop.f32.mrb[0].mxu0
  %v444 = vadd.f32 0.0, %v443
  %v445 = vpop.f32.mrb[0].mxu0
  %446 = vmatprep.mubr.bf16.mxu0 %v193
  %447 = vmatmul.mubr.bf16.gmra.mrb[0].mxu0 %v192
  %v448 = vpop.f32.mrb[0].mxu0
  %v449 = vadd.f32 0.0, %v448
  %v450 = vpop.f32.mrb[0].mxu0
  %v451 = vpop.f32.mrb[0].mxu0
  %v452 = vadd.f32 0.0, %v451
  %v453 = vpop.f32.mrb[0].mxu0
  %454 = vmatprep.mubr.bf16.mxu0 %v196
  %455 = vmatmul.mubr.bf16.gmra.mrb[0].mxu0 %v195
  %v456 = vpop.f32.mrb[0].mxu0
  %v457 = vadd.f32 0.0, %v456
  %v458 = vpop.f32.mrb[0].mxu0
  %v459 = vpop.f32.mrb[0].mxu0
  %v460 = vadd.f32 0.0, %v459
  %v461 = vpop.f32.mrb[0].mxu0
  %462 = vdwg.mxu0
  %463 = vmatprep.subr.bf16.mxu0 0
  %464 = vmatpush1.bf16.msra.mxu0 %v334
  %465 = vmatprep.subr.bf16.mxu0 0
  %466 = vmatpush1.bf16.msra.mxu0 %v335
  %467 = vmatprep.subr.bf16.mxu0 0
  %468 = vmatpush1.bf16.msra.mxu0 %v336
  %469 = vmatprep.subr.bf16.mxu0 0
  %470 = vmatpush1.bf16.msra.mxu0 %v337
  %471 = vmatprep.subr.bf16.mxu0 0
  %472 = vmatpush1.bf16.msra.mxu0 %v338
  %473 = vmatprep.subr.bf16.mxu0 0
  %474 = vmatpush1.bf16.msra.mxu0 %v339
  %475 = vmatprep.subr.bf16.mxu0 0
  %476 = vmatpush1.bf16.msra.mxu0 %v340
  %477 = vmatprep.subr.bf16.mxu0 0
  %478 = vmatpush1.bf16.msra.mxu0 %v341
  %479 = vmatprep.subr.bf16.mxu0 0
  %480 = vmatpush1.bf16.msra.mxu0 0
  %481 = vmatprep.subr.bf16.mxu0 0
  %482 = vmatpush1.bf16.msra.mxu0 0
  %483 = vmatprep.subr.bf16.mxu0 0
  %484 = vmatpush1.bf16.msra.mxu0 0
  %485 = vmatprep.subr.bf16.mxu0 0
  %486 = vmatpush1.bf16.msra.mxu0 0
  %487 = vmatprep.subr.bf16.mxu0 0
  %488 = vmatpush1.bf16.msra.mxu0 0
  %489 = vmatprep.subr.bf16.mxu0 0
  %490 = vmatpush1.bf16.msra.mxu0 0
  %491 = vmatprep.subr.bf16.mxu0 0
  %492 = vmatpush1.bf16.msra.mxu0 0
  %493 = vmatprep.subr.bf16.mxu0 0
  %494 = vmatpush1.bf16.msra.mxu0 0
  %495 = vmatprep.mubr.bf16.mxu0 0
  %496 = vmatmul.mubr.bf16.gmra.mrb[0].mxu0 %v176
  %v497 = vpop.f32.mrb[0].mxu0
  %v498 = vadd.f32 %v401, %v497
  %v499 = vpop.f32.mrb[0].mxu0
  %v500 = vpop.f32.mrb[0].mxu0
  %v501 = vadd.f32 %v404, %v500
  %v502 = vpop.f32.mrb[0].mxu0
  %503 = vmatprep.mubr.bf16.mxu0 0
  %504 = vmatmul.mubr.bf16.gmra.mrb[0].mxu0 %v179
  %v505 = vpop.f32.mrb[0].mxu0
  %v506 = vadd.f32 %v409, %v505
  %v507 = vpop.f32.mrb[0].mxu0
  %v508 = vpop.f32.mrb[0].mxu0
  %v509 = vadd.f32 %v412, %v508
  %v510 = vpop.f32.mrb[0].mxu0
  %511 = vmatprep.mubr.bf16.mxu0 0
  %512 = vmatmul.mubr.bf16.gmra.mrb[0].mxu0 %v182
  %v513 = vpop.f32.mrb[0].mxu0
  %v514 = vadd.f32 %v417, %v513
  %v515 = vpop.f32.mrb[0].mxu0
  %v516 = vpop.f32.mrb[0].mxu0
  %v517 = vadd.f32 %v420, %v516
  %v518 = vpop.f32.mrb[0].mxu0
  %519 = vmatprep.mubr.bf16.mxu0 0
  %520 = vmatmul.mubr.bf16.gmra.mrb[0].mxu0 %v185
  %v521 = vpop.f32.mrb[0].mxu0
  %v522 = vadd.f32 %v425, %v521
  %v523 = vpop.f32.mrb[0].mxu0
  %v524 = vpop.f32.mrb[0].mxu0
  %v525 = vadd.f32 %v428, %v524
  %v526 = vpop.f32.mrb[0].mxu0
  %527 = vmatprep.mubr.bf16.mxu0 0
  %528 = vmatmul.mubr.bf16.gmra.mrb[0].mxu0 %v188
  %v529 = vpop.f32.mrb[0].mxu0
  %v530 = vadd.f32 %v433, %v529
  %v531 = vpop.f32.mrb[0].mxu0
  %v532 = vpop.f32.mrb[0].mxu0
  %v533 = vadd.f32 %v436, %v532
  %v534 = vpop.f32.mrb[0].mxu0
  %535 = vmatprep.mubr.bf16.mxu0 0
  %536 = vmatmul.mubr.bf16.gmra.mrb[0].mxu0 %v191
  %v537 = vpop.f32.mrb[0].mxu0
  %v538 = vadd.f32 %v441, %v537
  %v539 = vpop.f32.mrb[0].mxu0
  %v540 = vpop.f32.mrb[0].mxu0
  %v541 = vadd.f32 %v444, %v540
  %v542 = vpop.f32.mrb[0].mxu0
  %543 = vmatprep.mubr.bf16.mxu0 0
  %544 = vmatmul.mubr.bf16.gmra.mrb[0].mxu0 %v194
  %v545 = vpop.f32.mrb[0].mxu0
  %v546 = vadd.f32 %v449, %v545
  %v547 = vpop.f32.mrb[0].mxu0
  %v548 = vpop.f32.mrb[0].mxu0
  %v549 = vadd.f32 %v452, %v548
  %v550 = vpop.f32.mrb[0].mxu0
  %551 = vmatprep.mubr.bf16.mxu0 0
  %552 = vmatmul.mubr.bf16.gmra.mrb[0].mxu0 %v197
  %v553 = vpop.f32.mrb[0].mxu0
  %v554 = vadd.f32 %v457, %v553
  %v555 = vpop.f32.mrb[0].mxu0
  %v556 = vpop.f32.mrb[0].mxu0
  %v557 = vadd.f32 %v460, %v556
  %v558 = vpop.f32.mrb[0].mxu0
  %559 = vdwg.mxu0
  %560 = vst [vmem:[%s2] sm:$0xff] %v498
  %561 = vst [vmem:[%s2 + $0x8] sm:$0xff] %v501
  %562 = vst [vmem:[%s2 + $0x10] sm:$0xff] %v506
  %563 = vst [vmem:[%s2 + $0x18] sm:$0xff] %v509
  %564 = vst [vmem:[%s2 + $0x20] sm:$0xff] %v514
  %565 = vst [vmem:[%s2 + $0x28] sm:$0xff] %v517
  %566 = vst [vmem:[%s2 + $0x30] sm:$0xff] %v522
  %567 = vst [vmem:[%s2 + $0x38] sm:$0xff] %v525
  %568 = vst [vmem:[%s2 + $0x40] sm:$0xff] %v530
  %569 = vst [vmem:[%s2 + $0x48] sm:$0xff] %v533
  %570 = vst [vmem:[%s2 + $0x50] sm:$0xff] %v538
  %571 = vst [vmem:[%s2 + $0x58] sm:$0xff] %v541
  %572 = vst [vmem:[%s2 + $0x60] sm:$0xff] %v546
  %573 = vst [vmem:[%s2 + $0x68] sm:$0xff] %v549
  %574 = vst [vmem:[%s2 + $0x70] sm:$0xff] %v554
  %575 = vst [vmem:[%s2 + $0x78] sm:$0xff] %v557
  %v576 = vadd.f32 %v498, %v501
  %v577 = vadd.f32 %v576, %v506
  %v578 = vadd.f32 %v577, %v509
  %v579 = vadd.f32 %v578, %v514
  %v580 = vadd.f32 %v579, %v517
  %v581 = vadd.f32 %v580, %v522
  %v582 = vadd.f32 %v581, %v525
  %v583 = vadd.f32 %v582, %v530
  %v584 = vadd.f32 %v583, %v533
  %v585 = vadd.f32 %v584, %v538
  %v586 = vadd.f32 %v585, %v541
  %v587 = vadd.f32 %v586, %v546
  %v588 = vadd.f32 %v587, %v549
  %v589 = vadd.f32 %v588, %v554
  %v590 = vadd.f32 %v589, %v557
  %v591 = vrot.slane %v590, 4
  %v592 = vadd.f32 %v590, %v591
  %v593 = vrot.slane %v592, 2
  %v594 = vadd.f32 %v592, %v593
  %v595 = vrot.slane %v594, 1
  %v596 = vadd.f32 %v594, %v595
  %v597 = vmul.f32 %v498, %v498
  %v598 = vmul.f32 %v501, %v501
  %v599 = vmul.f32 %v506, %v506
  %v600 = vmul.f32 %v509, %v509
  %v601 = vmul.f32 %v514, %v514
  %v602 = vmul.f32 %v517, %v517
  %v603 = vmul.f32 %v522, %v522
  %v604 = vmul.f32 %v525, %v525
  %v605 = vmul.f32 %v530, %v530
  %v606 = vmul.f32 %v533, %v533
  %v607 = vmul.f32 %v538, %v538
  %v608 = vmul.f32 %v541, %v541
  %v609 = vmul.f32 %v546, %v546
  %v610 = vmul.f32 %v549, %v549
  %v611 = vmul.f32 %v554, %v554
  %v612 = vmul.f32 %v557, %v557
  %v613 = vadd.f32 %v597, %v598
  %v614 = vadd.f32 %v613, %v599
  %v615 = vadd.f32 %v614, %v600
  %v616 = vadd.f32 %v615, %v601
  %v617 = vadd.f32 %v616, %v602
  %v618 = vadd.f32 %v617, %v603
  %v619 = vadd.f32 %v618, %v604
  %v620 = vadd.f32 %v619, %v605
  %v621 = vadd.f32 %v620, %v606
  %v622 = vadd.f32 %v621, %v607
  %v623 = vadd.f32 %v622, %v608
  %v624 = vadd.f32 %v623, %v609
  %v625 = vadd.f32 %v624, %v610
  %v626 = vadd.f32 %v625, %v611
  %v627 = vadd.f32 %v626, %v612
  %v628 = vrot.slane %v627, 4
  %v629 = vadd.f32 %v627, %v628
  %v630 = vrot.slane %v629, 2
  %v631 = vadd.f32 %v629, %v630
  %v632 = vrot.slane %v631, 1
  %v633 = vadd.f32 %v631, %v632
  %vm634 = vcmask 1040384
  %v635 = vsel %vm634, %v596, %v633
  %636 = vst [vmem:[%s3] sm:$0x3] %v635
  // Predicated region
  $region10: #{autoencoder_forward.31} parent=0 // pred_check
    _
  $region11: #{autoencoder_forward.31} parent=0 // pred_check_branch
    %638 = sbr.rel (0) target = $region13
  $region12: #{autoencoder_forward.31} parent=0 // pred_region
    _
  $region13: #{autoencoder_forward.31} parent=0 // pred_fallthru
    _
  // Predicated region
  $region14: #{autoencoder_forward.31} parent=0 // pred_check
    _
  $region15: #{autoencoder_forward.31} parent=0 // pred_check_branch
    %640 = sbr.rel (0) target = $region17
  $region16: #{autoencoder_forward.31} parent=0 // pred_region
    _
  $region17: #{autoencoder_forward.31} parent=0 // pred_fallthru
    _
  // Predicated region
  $region18: #{autoencoder_forward.31} parent=0 // pred_check
    _
  $region19: #{autoencoder_forward.31} parent=0 // pred_check_branch
    %642 = sbr.rel (0) target = $region21
  $region20: #{autoencoder_forward.31} parent=0 // pred_region
    _
  $region21: #{autoencoder_forward.31} parent=0 // pred_fallthru
    _
  // Predicated region
  $region22: #{autoencoder_forward.31} parent=0 // pred_check
    _
  $region23: #{autoencoder_forward.31} parent=0 // pred_check_branch
    %644 = sbr.rel (0) target = $region25
  $region24: #{autoencoder_forward.31} parent=0 // pred_region
    _
  $region25: #{autoencoder_forward.31} parent=0 // pred_fallthru
    _

// kernel: autoencoder_forward.33
$region0: #{autoencoder_forward.33}
  #allocation0 [shape = 'u32[]', space=smem, size = 0x4, offset = 0x4, fixed_abs, tag = 'smem constant byte address 0x4 - core index']
  #allocation1 [shape = 'u32[144,128]{1,0:T(1,128)}', space=vmem, size = 0x12000, scoped, tag = 'internal scratch']
  %s0 = inlined_call_operand.vmem [shape: bf16[512,384], index: 0, kind: input, shape index: {}]
  %s1 = inlined_call_operand.vmem [shape: bf16[384,128], index: 1, kind: input, shape index: {}]
  %s2 = inlined_call_operand.vmem [shape: f32[1,128], index: 2, kind: input, shape index: {}]
  %s3 = inlined_call_operand.vmem [shape: f32[512,128], index: 3, kind: output, shape index: {}]
  %s4 = sld [smem:[#allocation0]]
  $region22: #{autoencoder_forward.33} parent=0
    _
  %s6 = ssub.s32 1, %s4
  %s7 = scalar_select 0, %s6, %s4
  // Predicated region
  $region2: #{autoencoder_forward.33} parent=0 // pred_check
    _
  $region3: #{autoencoder_forward.33} parent=0 // pred_check_branch
    %9 = sbr.rel (0) target = $region5
  $region4: #{autoencoder_forward.33} parent=0 // pred_region
    _
  $region5: #{autoencoder_forward.33} parent=0 // pred_fallthru
    _
  // Predicated region
  $region6: #{autoencoder_forward.33} parent=0 // pred_check
    _
  $region7: #{autoencoder_forward.33} parent=0 // pred_check_branch
    %11 = sbr.rel (0) target = $region9
  $region8: #{autoencoder_forward.33} parent=0 // pred_region
    _
  $region9: #{autoencoder_forward.33} parent=0 // pred_fallthru
    _
  // Predicated region
  $region10: #{autoencoder_forward.33} parent=0 // pred_check
    _
  $region11: #{autoencoder_forward.33} parent=0 // pred_check_branch
    %13 = sbr.rel (0) target = $region13
  $region12: #{autoencoder_forward.33} parent=0 // pred_region
    _
  $region13: #{autoencoder_forward.33} parent=0 // pred_fallthru
    _
  %v15 = vld [vmem:[%s0] sm:$0xff]
  %v16 = vld [vmem:[%s0 + $0x8] sm:$0xf]
  %v17 = vld [vmem:[%s0 + $0xc] sm:$0xff]
  %v18 = vld [vmem:[%s0 + $0x14] sm:$0xf]
  %v19 = vld [vmem:[%s0 + $0x18] sm:$0xff]
  %v20 = vld [vmem:[%s0 + $0x20] sm:$0xf]
  %v21 = vld [vmem:[%s0 + $0x24] sm:$0xff]
  %v22 = vld [vmem:[%s0 + $0x2c] sm:$0xf]
  %v23 = vld [vmem:[%s0 + $0x30] sm:$0xff]
  %v24 = vld [vmem:[%s0 + $0x38] sm:$0xf]
  %v25 = vld [vmem:[%s0 + $0x3c] sm:$0xff]
  %v26 = vld [vmem:[%s0 + $0x44] sm:$0xf]
  %v27 = vld [vmem:[%s0 + $0x48] sm:$0xff]
  %v28 = vld [vmem:[%s0 + $0x50] sm:$0xf]
  %v29 = vld [vmem:[%s0 + $0x54] sm:$0xff]
  %v30 = vld [vmem:[%s0 + $0x5c] sm:$0xf]
  %v31 = vld [vmem:[%s0 + $0x60] sm:$0xff]
  %v32 = vld [vmem:[%s0 + $0x68] sm:$0xf]
  %v33 = vld [vmem:[%s0 + $0x6c] sm:$0xff]
  %v34 = vld [vmem:[%s0 + $0x74] sm:$0xf]
  %v35 = vld [vmem:[%s0 + $0x78] sm:$0xff]
  %v36 = vld [vmem:[%s0 + $0x80] sm:$0xf]
  %v37 = vld [vmem:[%s0 + $0x84] sm:$0xff]
  %v38 = vld [vmem:[%s0 + $0x8c] sm:$0xf]
  %v39 = vld [vmem:[%s0 + $0x90] sm:$0xff]
  %v40 = vld [vmem:[%s0 + $0x98] sm:$0xf]
  %v41 = vld [vmem:[%s0 + $0x9c] sm:$0xff]
  %v42 = vld [vmem:[%s0 + $0xa4] sm:$0xf]
  %v43 = vld [vmem:[%s0 + $0xa8] sm:$0xff]
  %v44 = vld [vmem:[%s0 + $0xb0] sm:$0xf]
  %v45 = vld [vmem:[%s0 + $0xb4] sm:$0xff]
  %v46 = vld [vmem:[%s0 + $0xbc] sm:$0xf]
  %v47 = vld [vmem:[%s0 + $0xc0] sm:$0xff]
  %v48 = vld [vmem:[%s0 + $0xc8] sm:$0xf]
  %v49 = vld [vmem:[%s0 + $0xcc] sm:$0xff]
  %v50 = vld [vmem:[%s0 + $0xd4] sm:$0xf]
  %v51 = vld [vmem:[%s0 + $0xd8] sm:$0xff]
  %v52 = vld [vmem:[%s0 + $0xe0] sm:$0xf]
  %v53 = vld [vmem:[%s0 + $0xe4] sm:$0xff]
  %v54 = vld [vmem:[%s0 + $0xec] sm:$0xf]
  %v55 = vld [vmem:[%s0 + $0xf0] sm:$0xff]
  %v56 = vld [vmem:[%s0 + $0xf8] sm:$0xf]
  %v57 = vld [vmem:[%s0 + $0xfc] sm:$0xff]
  %v58 = vld [vmem:[%s0 + $0x104] sm:$0xf]
  %v59 = vld [vmem:[%s0 + $0x108] sm:$0xff]
  %v60 = vld [vmem:[%s0 + $0x110] sm:$0xf]
  %v61 = vld [vmem:[%s0 + $0x114] sm:$0xff]
  %v62 = vld [vmem:[%s0 + $0x11c] sm:$0xf]
  %v63 = vld [vmem:[%s0 + $0x120] sm:$0xff]
  %v64 = vld [vmem:[%s0 + $0x128] sm:$0xf]
  %v65 = vld [vmem:[%s0 + $0x12c] sm:$0xff]
  %v66 = vld [vmem:[%s0 + $0x134] sm:$0xf]
  %v67 = vld [vmem:[%s0 + $0x138] sm:$0xff]
  %v68 = vld [vmem:[%s0 + $0x140] sm:$0xf]
  %v69 = vld [vmem:[%s0 + $0x144] sm:$0xff]
  %v70 = vld [vmem:[%s0 + $0x14c] sm:$0xf]
  %v71 = vld [vmem:[%s0 + $0x150] sm:$0xff]
  %v72 = vld [vmem:[%s0 + $0x158] sm:$0xf]
  %v73 = vld [vmem:[%s0 + $0x15c] sm:$0xff]
  %v74 = vld [vmem:[%s0 + $0x164] sm:$0xf]
  %v75 = vld [vmem:[%s0 + $0x168] sm:$0xff]
  %v76 = vld [vmem:[%s0 + $0x170] sm:$0xf]
  %v77 = vld [vmem:[%s0 + $0x174] sm:$0xff]
  %v78 = vld [vmem:[%s0 + $0x17c] sm:$0xf]
  %v79 = vld [vmem:[%s0 + $0x180] sm:$0xff]
  %v80 = vld [vmem:[%s0 + $0x188] sm:$0xf]
  %v81 = vld [vmem:[%s0 + $0x18c] sm:$0xff]
  %v82 = vld [vmem:[%s0 + $0x194] sm:$0xf]
  %v83 = vld [vmem:[%s0 + $0x198] sm:$0xff]
  %v84 = vld [vmem:[%s0 + $0x1a0] sm:$0xf]
  %v85 = vld [vmem:[%s0 + $0x1a4] sm:$0xff]
  %v86 = vld [vmem:[%s0 + $0x1ac] sm:$0xf]
  %v87 = vld [vmem:[%s0 + $0x1b0] sm:$0xff]
  %v88 = vld [vmem:[%s0 + $0x1b8] sm:$0xf]
  %v89 = vld [vmem:[%s0 + $0x1bc] sm:$0xff]
  %v90 = vld [vmem:[%s0 + $0x1c4] sm:$0xf]
  %v91 = vld [vmem:[%s0 + $0x1c8] sm:$0xff]
  %v92 = vld [vmem:[%s0 + $0x1d0] sm:$0xf]
  %v93 = vld [vmem:[%s0 + $0x1d4] sm:$0xff]
  %v94 = vld [vmem:[%s0 + $0x1dc] sm:$0xf]
  %v95 = vld [vmem:[%s0 + $0x1e0] sm:$0xff]
  %v96 = vld [vmem:[%s0 + $0x1e8] sm:$0xf]
  %v97 = vld [vmem:[%s0 + $0x1ec] sm:$0xff]
  %v98 = vld [vmem:[%s0 + $0x1f4] sm:$0xf]
  %v99 = vld [vmem:[%s0 + $0x1f8] sm:$0xff]
  %v100 = vld [vmem:[%s0 + $0x200] sm:$0xf]
  %v101 = vld [vmem:[%s0 + $0x204] sm:$0xff]
  %v102 = vld [vmem:[%s0 + $0x20c] sm:$0xf]
  %v103 = vld [vmem:[%s0 + $0x210] sm:$0xff]
  %v104 = vld [vmem:[%s0 + $0x218] sm:$0xf]
  %v105 = vld [vmem:[%s0 + $0x21c] sm:$0xff]
  %v106 = vld [vmem:[%s0 + $0x224] sm:$0xf]
  %v107 = vld [vmem:[%s0 + $0x228] sm:$0xff]
  %v108 = vld [vmem:[%s0 + $0x230] sm:$0xf]
  %v109 = vld [vmem:[%s0 + $0x234] sm:$0xff]
  %v110 = vld [vmem:[%s0 + $0x23c] sm:$0xf]
  %v111 = vld [vmem:[%s0 + $0x240] sm:$0xff]
  %v112 = vld [vmem:[%s0 + $0x248] sm:$0xf]
  %v113 = vld [vmem:[%s0 + $0x24c] sm:$0xff]
  %v114 = vld [vmem:[%s0 + $0x254] sm:$0xf]
  %v115 = vld [vmem:[%s0 + $0x258] sm:$0xff]
  %v116 = vld [vmem:[%s0 + $0x260] sm:$0xf]
  %v117 = vld [vmem:[%s0 + $0x264] sm:$0xff]
  %v118 = vld [vmem:[%s0 + $0x26c] sm:$0xf]
  %v119 = vld [vmem:[%s0 + $0x270] sm:$0xff]
  %v120 = vld [vmem:[%s0 + $0x278] sm:$0xf]
  %v121 = vld [vmem:[%s0 + $0x27c] sm:$0xff]
  %v122 = vld [vmem:[%s0 + $0x284] sm:$0xf]
  %v123 = vld [vmem:[%s0 + $0x288] sm:$0xff]
  %v124 = vld [vmem:[%s0 + $0x290] sm:$0xf]
  %v125 = vld [vmem:[%s0 + $0x294] sm:$0xff]
  %v126 = vld [vmem:[%s0 + $0x29c] sm:$0xf]
  %v127 = vld [vmem:[%s0 + $0x2a0] sm:$0xff]
  %v128 = vld [vmem:[%s0 + $0x2a8] sm:$0xf]
  %v129 = vld [vmem:[%s0 + $0x2ac] sm:$0xff]
  %v130 = vld [vmem:[%s0 + $0x2b4] sm:$0xf]
  %v131 = vld [vmem:[%s0 + $0x2b8] sm:$0xff]
  %v132 = vld [vmem:[%s0 + $0x2c0] sm:$0xf]
  %v133 = vld [vmem:[%s0 + $0x2c4] sm:$0xff]
  %v134 = vld [vmem:[%s0 + $0x2cc] sm:$0xf]
  %v135 = vld [vmem:[%s0 + $0x2d0] sm:$0xff]
  %v136 = vld [vmem:[%s0 + $0x2d8] sm:$0xf]
  %v137 = vld [vmem:[%s0 + $0x2dc] sm:$0xff]
  %v138 = vld [vmem:[%s0 + $0x2e4] sm:$0xf]
  %v139 = vld [vmem:[%s0 + $0x2e8] sm:$0xff]
  %v140 = vld [vmem:[%s0 + $0x2f0] sm:$0xf]
  %v141 = vld [vmem:[%s0 + $0x2f4] sm:$0xff]
  %v142 = vld [vmem:[%s0 + $0x2fc] sm:$0xf]
  %v143 = vld [vmem:[%s1] sm:$0xf]
  %v144 = vld [vmem:[%s1 + $0x4] sm:$0xf]
  %v145 = vld [vmem:[%s1 + $0x8] sm:$0xf]
  %v146 = vld [vmem:[%s1 + $0xc] sm:$0xf]
  %v147 = vld [vmem:[%s1 + $0x10] sm:$0xf]
  %v148 = vld [vmem:[%s1 + $0x14] sm:$0xf]
  %v149 = vld [vmem:[%s1 + $0x18] sm:$0xf]
  %v150 = vld [vmem:[%s1 + $0x1c] sm:$0xf]
  %v151 = vld [vmem:[%s1 + $0x20] sm:$0xf]
  %v152 = vld [vmem:[%s1 + $0x24] sm:$0xf]
  %v153 = vld [vmem:[%s1 + $0x28] sm:$0xf]
  %v154 = vld [vmem:[%s1 + $0x2c] sm:$0xf]
  %v155 = vld [vmem:[%s1 + $0x30] sm:$0xf]
  %v156 = vld [vmem:[%s1 + $0x34] sm:$0xf]
  %v157 = vld [vmem:[%s1 + $0x38] sm:$0xf]
  %v158 = vld [vmem:[%s1 + $0x3c] sm:$0xf]
  %v159 = vld [vmem:[%s1 + $0x40] sm:$0xf]
  %v160 = vld [vmem:[%s1 + $0x44] sm:$0xf]
  %v161 = vld [vmem:[%s1 + $0x48] sm:$0xf]
  %v162 = vld [vmem:[%s1 + $0x4c] sm:$0xf]
  %v163 = vld [vmem:[%s1 + $0x50] sm:$0xf]
  %v164 = vld [vmem:[%s1 + $0x54] sm:$0xf]
  %v165 = vld [vmem:[%s1 + $0x58] sm:$0xf]
  %v166 = vld [vmem:[%s1 + $0x5c] sm:$0xf]
  %v167 = vld [vmem:[%s1 + $0x60] sm:$0xf]
  %v168 = vld [vmem:[%s1 + $0x64] sm:$0xf]
  %v169 = vld [vmem:[%s1 + $0x68] sm:$0xf]
  %v170 = vld [vmem:[%s1 + $0x6c] sm:$0xf]
  %v171 = vld [vmem:[%s1 + $0x70] sm:$0xf]
  %v172 = vld [vmem:[%s1 + $0x74] sm:$0xf]
  %v173 = vld [vmem:[%s1 + $0x78] sm:$0xf]
  %v174 = vld [vmem:[%s1 + $0x7c] sm:$0xf]
  %v175 = vld [vmem:[%s1 + $0x80] sm:$0xf]
  %v176 = vld [vmem:[%s1 + $0x84] sm:$0xf]
  %v177 = vld [vmem:[%s1 + $0x88] sm:$0xf]
  %v178 = vld [vmem:[%s1 + $0x8c] sm:$0xf]
  %v179 = vld [vmem:[%s1 + $0x90] sm:$0xf]
  %v180 = vld [vmem:[%s1 + $0x94] sm:$0xf]
  %v181 = vld [vmem:[%s1 + $0x98] sm:$0xf]
  %v182 = vld [vmem:[%s1 + $0x9c] sm:$0xf]
  %v183 = vld [vmem:[%s1 + $0xa0] sm:$0xf]
  %v184 = vld [vmem:[%s1 + $0xa4] sm:$0xf]
  %v185 = vld [vmem:[%s1 + $0xa8] sm:$0xf]
  %v186 = vld [vmem:[%s1 + $0xac] sm:$0xf]
  %v187 = vld [vmem:[%s1 + $0xb0] sm:$0xf]
  %v188 = vld [vmem:[%s1 + $0xb4] sm:$0xf]
  %v189 = vld [vmem:[%s1 + $0xb8] sm:$0xf]
  %v190 = vld [vmem:[%s1 + $0xbc] sm:$0xf]
  %v191 = vld [vmem:[%s2] sm:$0x1]
  %v193 = vlaneseq
  %v194 = vshrl.u32 %v193, 7
  %v195 = vsub.s32 0, %v194
  %v196 = vrot.slane %v191, %v195
  %v326 = vunpack.c.l.b16 %v15
  %v327 = vunpack.c.h.b16 %v15
  %v328 = vunpack.c.l.b16 %v16
  %v329 = vunpack.c.l.b16 %v17
  %v330 = vunpack.c.h.b16 %v17
  %v331 = vunpack.c.l.b16 %v18
  %v332 = vunpack.c.l.b16 %v19
  %v333 = vunpack.c.h.b16 %v19
  %v334 = vunpack.c.l.b16 %v20
  %v335 = vunpack.c.l.b16 %v21
  %v336 = vunpack.c.h.b16 %v21
  %v337 = vunpack.c.l.b16 %v22
  %v338 = vunpack.c.l.b16 %v23
  %v339 = vunpack.c.h.b16 %v23
  %v340 = vunpack.c.l.b16 %v24
  %v341 = vunpack.c.l.b16 %v25
  %v342 = vunpack.c.h.b16 %v25
  %v343 = vunpack.c.l.b16 %v26
  %v344 = vunpack.c.l.b16 %v27
  %v345 = vunpack.c.h.b16 %v27
  %v346 = vunpack.c.l.b16 %v28
  %v347 = vunpack.c.l.b16 %v29
  %v348 = vunpack.c.h.b16 %v29
  %v349 = vunpack.c.l.b16 %v30
  %v350 = vunpack.c.l.b16 %v31
  %v351 = vunpack.c.h.b16 %v31
  %v352 = vunpack.c.l.b16 %v32
  %v353 = vunpack.c.l.b16 %v33
  %v354 = vunpack.c.h.b16 %v33
  %v355 = vunpack.c.l.b16 %v34
  %v356 = vunpack.c.l.b16 %v35
  %v357 = vunpack.c.h.b16 %v35
  %v358 = vunpack.c.l.b16 %v36
  %v359 = vunpack.c.l.b16 %v37
  %v360 = vunpack.c.h.b16 %v37
  %v361 = vunpack.c.l.b16 %v38
  %v362 = vunpack.c.l.b16 %v39
  %v363 = vunpack.c.h.b16 %v39
  %v364 = vunpack.c.l.b16 %v40
  %v365 = vunpack.c.l.b16 %v41
  %v366 = vunpack.c.h.b16 %v41
  %v367 = vunpack.c.l.b16 %v42
  %v368 = vunpack.c.l.b16 %v43
  %v369 = vunpack.c.h.b16 %v43
  %v370 = vunpack.c.l.b16 %v44
  %v371 = vunpack.c.l.b16 %v45
  %v372 = vunpack.c.h.b16 %v45
  %v373 = vunpack.c.l.b16 %v46
  %v374 = vunpack.c.l.b16 %v47
  %v375 = vunpack.c.h.b16 %v47
  %v376 = vunpack.c.l.b16 %v48
  %v377 = vunpack.c.l.b16 %v49
  %v378 = vunpack.c.h.b16 %v49
  %v379 = vunpack.c.l.b16 %v50
  %v380 = vunpack.c.l.b16 %v51
  %v381 = vunpack.c.h.b16 %v51
  %v382 = vunpack.c.l.b16 %v52
  %v383 = vunpack.c.l.b16 %v53
  %v384 = vunpack.c.h.b16 %v53
  %v385 = vunpack.c.l.b16 %v54
  %v386 = vunpack.c.l.b16 %v55
  %v387 = vunpack.c.h.b16 %v55
  %v388 = vunpack.c.l.b16 %v56
  %v389 = vunpack.c.l.b16 %v57
  %v390 = vunpack.c.h.b16 %v57
  %v391 = vunpack.c.l.b16 %v58
  %v392 = vunpack.c.l.b16 %v59
  %v393 = vunpack.c.h.b16 %v59
  %v394 = vunpack.c.l.b16 %v60
  %v395 = vunpack.c.l.b16 %v61
  %v396 = vunpack.c.h.b16 %v61
  %v397 = vunpack.c.l.b16 %v62
  %v398 = vunpack.c.l.b16 %v63
  %v399 = vunpack.c.h.b16 %v63
  %v400 = vunpack.c.l.b16 %v64
  %v401 = vunpack.c.l.b16 %v65
  %v402 = vunpack.c.h.b16 %v65
  %v403 = vunpack.c.l.b16 %v66
  %v404 = vunpack.c.l.b16 %v67
  %v405 = vunpack.c.h.b16 %v67
  %v406 = vunpack.c.l.b16 %v68
  %v407 = vunpack.c.l.b16 %v69
  %v408 = vunpack.c.h.b16 %v69
  %v409 = vunpack.c.l.b16 %v70
  %v410 = vunpack.c.l.b16 %v71
  %v411 = vunpack.c.h.b16 %v71
  %v412 = vunpack.c.l.b16 %v72
  %v413 = vunpack.c.l.b16 %v73
  %v414 = vunpack.c.h.b16 %v73
  %v415 = vunpack.c.l.b16 %v74
  %v416 = vunpack.c.l.b16 %v75
  %v417 = vunpack.c.h.b16 %v75
  %v418 = vunpack.c.l.b16 %v76
  %v419 = vunpack.c.l.b16 %v77
  %v420 = vunpack.c.h.b16 %v77
  %v421 = vunpack.c.l.b16 %v78
  %v422 = vunpack.c.l.b16 %v79
  %v423 = vunpack.c.h.b16 %v79
  %v424 = vunpack.c.l.b16 %v80
  %v425 = vunpack.c.l.b16 %v81
  %v426 = vunpack.c.h.b16 %v81
  %v427 = vunpack.c.l.b16 %v82
  %v428 = vunpack.c.l.b16 %v83
  %v429 = vunpack.c.h.b16 %v83
  %v430 = vunpack.c.l.b16 %v84
  %v431 = vunpack.c.l.b16 %v85
  %v432 = vunpack.c.h.b16 %v85
  %v433 = vunpack.c.l.b16 %v86
  %v434 = vunpack.c.l.b16 %v87
  %v435 = vunpack.c.h.b16 %v87
  %v436 = vunpack.c.l.b16 %v88
  %v437 = vunpack.c.l.b16 %v89
  %v438 = vunpack.c.h.b16 %v89
  %v439 = vunpack.c.l.b16 %v90
  %v440 = vunpack.c.l.b16 %v91
  %v441 = vunpack.c.h.b16 %v91
  %v442 = vunpack.c.l.b16 %v92
  %v443 = vunpack.c.l.b16 %v93
  %v444 = vunpack.c.h.b16 %v93
  %v445 = vunpack.c.l.b16 %v94
  %v446 = vunpack.c.l.b16 %v95
  %v447 = vunpack.c.h.b16 %v95
  %v448 = vunpack.c.l.b16 %v96
  %v449 = vunpack.c.l.b16 %v97
  %v450 = vunpack.c.h.b16 %v97
  %v451 = vunpack.c.l.b16 %v98
  %v452 = vunpack.c.l.b16 %v99
  %v453 = vunpack.c.h.b16 %v99
  %v454 = vunpack.c.l.b16 %v100
  %v455 = vunpack.c.l.b16 %v101
  %v456 = vunpack.c.h.b16 %v101
  %v457 = vunpack.c.l.b16 %v102
  %v458 = vunpack.c.l.b16 %v103
  %v459 = vunpack.c.h.b16 %v103
  %v460 = vunpack.c.l.b16 %v104
  %v461 = vunpack.c.l.b16 %v105
  %v462 = vunpack.c.h.b16 %v105
  %v463 = vunpack.c.l.b16 %v106
  %v464 = vunpack.c.l.b16 %v107
  %v465 = vunpack.c.h.b16 %v107
  %v466 = vunpack.c.l.b16 %v108
  %v467 = vunpack.c.l.b16 %v109
  %v468 = vunpack.c.h.b16 %v109
  %v469 = vunpack.c.l.b16 %v110
  %v470 = vunpack.c.l.b16 %v111
  %v471 = vunpack.c.h.b16 %v111
  %v472 = vunpack.c.l.b16 %v112
  %v473 = vunpack.c.l.b16 %v113
  %v474 = vunpack.c.h.b16 %v113
  %v475 = vunpack.c.l.b16 %v114
  %v476 = vunpack.c.l.b16 %v115
  %v477 = vunpack.c.h.b16 %v115
  %v478 = vunpack.c.l.b16 %v116
  %v479 = vunpack.c.l.b16 %v117
  %v480 = vunpack.c.h.b16 %v117
  %v481 = vunpack.c.l.b16 %v118
  %v482 = vunpack.c.l.b16 %v119
  %v483 = vunpack.c.h.b16 %v119
  %v484 = vunpack.c.l.b16 %v120
  %v485 = vunpack.c.l.b16 %v121
  %v486 = vunpack.c.h.b16 %v121
  %v487 = vunpack.c.l.b16 %v122
  %v488 = vunpack.c.l.b16 %v123
  %v489 = vunpack.c.h.b16 %v123
  %v490 = vunpack.c.l.b16 %v124
  %v491 = vunpack.c.l.b16 %v125
  %v492 = vunpack.c.h.b16 %v125
  %v493 = vunpack.c.l.b16 %v126
  %v494 = vunpack.c.l.b16 %v127
  %v495 = vunpack.c.h.b16 %v127
  %v496 = vunpack.c.l.b16 %v128
  %v497 = vunpack.c.l.b16 %v129
  %v498 = vunpack.c.h.b16 %v129
  %v499 = vunpack.c.l.b16 %v130
  %v500 = vunpack.c.l.b16 %v131
  %v501 = vunpack.c.h.b16 %v131
  %v502 = vunpack.c.l.b16 %v132
  %v503 = vunpack.c.l.b16 %v133
  %v504 = vunpack.c.h.b16 %v133
  %v505 = vunpack.c.l.b16 %v134
  %v506 = vunpack.c.l.b16 %v135
  %v507 = vunpack.c.h.b16 %v135
  %v508 = vunpack.c.l.b16 %v136
  %v509 = vunpack.c.l.b16 %v137
  %v510 = vunpack.c.h.b16 %v137
  %v511 = vunpack.c.l.b16 %v138
  %v512 = vunpack.c.l.b16 %v139
  %v513 = vunpack.c.h.b16 %v139
  %v514 = vunpack.c.l.b16 %v140
  %v515 = vunpack.c.l.b16 %v141
  %v516 = vunpack.c.h.b16 %v141
  %v517 = vunpack.c.l.b16 %v142
  %v518 = vpack.c.b16 %v329, %v326
  %v519 = vpack.c.b16 %v330, %v327
  %v520 = vpack.c.b16 %v331, %v328
  %v521 = vpack.c.b16 %v335, %v332
  %v522 = vpack.c.b16 %v336, %v333
  %v523 = vpack.c.b16 %v337, %v334
  %v524 = vpack.c.b16 %v341, %v338
  %v525 = vpack.c.b16 %v342, %v339
  %v526 = vpack.c.b16 %v343, %v340
  %v527 = vpack.c.b16 %v347, %v344
  %v528 = vpack.c.b16 %v348, %v345
  %v529 = vpack.c.b16 %v349, %v346
  %v530 = vpack.c.b16 %v353, %v350
  %v531 = vpack.c.b16 %v354, %v351
  %v532 = vpack.c.b16 %v355, %v352
  %v533 = vpack.c.b16 %v359, %v356
  %v534 = vpack.c.b16 %v360, %v357
  %v535 = vpack.c.b16 %v361, %v358
  %v536 = vpack.c.b16 %v365, %v362
  %v537 = vpack.c.b16 %v366, %v363
  %v538 = vpack.c.b16 %v367, %v364
  %v539 = vpack.c.b16 %v371, %v368
  %v540 = vpack.c.b16 %v372, %v369
  %v541 = vpack.c.b16 %v373, %v370
  %v542 = vpack.c.b16 %v377, %v374
  %v543 = vpack.c.b16 %v378, %v375
  %v544 = vpack.c.b16 %v379, %v376
  %v545 = vpack.c.b16 %v383, %v380
  %v546 = vpack.c.b16 %v384, %v381
  %v547 = vpack.c.b16 %v385, %v382
  %v548 = vpack.c.b16 %v389, %v386
  %v549 = vpack.c.b16 %v390, %v387
  %v550 = vpack.c.b16 %v391, %v388
  %v551 = vpack.c.b16 %v395, %v392
  %v552 = vpack.c.b16 %v396, %v393
  %v553 = vpack.c.b16 %v397, %v394
  %v554 = vpack.c.b16 %v401, %v398
  %v555 = vpack.c.b16 %v402, %v399
  %v556 = vpack.c.b16 %v403, %v400
  %v557 = vpack.c.b16 %v407, %v404
  %v558 = vpack.c.b16 %v408, %v405
  %v559 = vpack.c.b16 %v409, %v406
  %v560 = vpack.c.b16 %v413, %v410
  %v561 = vpack.c.b16 %v414, %v411
  %v562 = vpack.c.b16 %v415, %v412
  %v563 = vpack.c.b16 %v419, %v416
  %v564 = vpack.c.b16 %v420, %v417
  %v565 = vpack.c.b16 %v421, %v418
  %v566 = vpack.c.b16 %v425, %v422
  %v567 = vpack.c.b16 %v426, %v423
  %v568 = vpack.c.b16 %v427, %v424
  %v569 = vpack.c.b16 %v431, %v428
  %v570 = vpack.c.b16 %v432, %v429
  %v571 = vpack.c.b16 %v433, %v430
  %v572 = vpack.c.b16 %v437, %v434
  %v573 = vpack.c.b16 %v438, %v435
  %v574 = vpack.c.b16 %v439, %v436
  %v575 = vpack.c.b16 %v443, %v440
  %v576 = vpack.c.b16 %v444, %v441
  %v577 = vpack.c.b16 %v445, %v442
  %v578 = vpack.c.b16 %v449, %v446
  %v579 = vpack.c.b16 %v450, %v447
  %v580 = vpack.c.b16 %v451, %v448
  %v581 = vpack.c.b16 %v455, %v452
  %v582 = vpack.c.b16 %v456, %v453
  %v583 = vpack.c.b16 %v457, %v454
  %v584 = vpack.c.b16 %v461, %v458
  %v585 = vpack.c.b16 %v462, %v459
  %v586 = vpack.c.b16 %v463, %v460
  %v587 = vpack.c.b16 %v467, %v464
  %v588 = vpack.c.b16 %v468, %v465
  %v589 = vpack.c.b16 %v469, %v466
  %v590 = vpack.c.b16 %v473, %v470
  %v591 = vpack.c.b16 %v474, %v471
  %v592 = vpack.c.b16 %v475, %v472
  %v593 = vpack.c.b16 %v479, %v476
  %v594 = vpack.c.b16 %v480, %v477
  %v595 = vpack.c.b16 %v481, %v478
  %v596 = vpack.c.b16 %v485, %v482
  %v597 = vpack.c.b16 %v486, %v483
  %v598 = vpack.c.b16 %v487, %v484
  %v599 = vpack.c.b16 %v491, %v488
  %v600 = vpack.c.b16 %v492, %v489
  %v601 = vpack.c.b16 %v493, %v490
  %v602 = vpack.c.b16 %v497, %v494
  %v603 = vpack.c.b16 %v498, %v495
  %v604 = vpack.c.b16 %v499, %v496
  %v605 = vpack.c.b16 %v503, %v500
  %v606 = vpack.c.b16 %v504, %v501
  %v607 = vpack.c.b16 %v505, %v502
  %v608 = vpack.c.b16 %v509, %v506
  %v609 = vpack.c.b16 %v510, %v507
  %v610 = vpack.c.b16 %v511, %v508
  %v611 = vpack.c.b16 %v515, %v512
  %v612 = vpack.c.b16 %v516, %v513
  %v613 = vpack.c.b16 %v517, %v514
  %v758 = vunpack.c.l.b16 %v143
  %v759 = vunpack.c.l.b16 %v144
  %v760 = vunpack.c.l.b16 %v145
  %v761 = vunpack.c.l.b16 %v146
  %v762 = vunpack.c.l.b16 %v147
  %v763 = vunpack.c.l.b16 %v148
  %v764 = vunpack.c.l.b16 %v149
  %v765 = vunpack.c.l.b16 %v150
  %v766 = vunpack.c.l.b16 %v151
  %v767 = vunpack.c.l.b16 %v152
  %v768 = vunpack.c.l.b16 %v153
  %v769 = vunpack.c.l.b16 %v154
  %v770 = vunpack.c.l.b16 %v155
  %v771 = vunpack.c.l.b16 %v156
  %v772 = vunpack.c.l.b16 %v157
  %v773 = vunpack.c.l.b16 %v158
  %v774 = vunpack.c.l.b16 %v159
  %v775 = vunpack.c.l.b16 %v160
  %v776 = vunpack.c.l.b16 %v161
  %v777 = vunpack.c.l.b16 %v162
  %v778 = vunpack.c.l.b16 %v163
  %v779 = vunpack.c.l.b16 %v164
  %v780 = vunpack.c.l.b16 %v165
  %v781 = vunpack.c.l.b16 %v166
  %v782 = vunpack.c.l.b16 %v167
  %v783 = vunpack.c.l.b16 %v168
  %v784 = vunpack.c.l.b16 %v169
  %v785 = vunpack.c.l.b16 %v170
  %v786 = vunpack.c.l.b16 %v171
  %v787 = vunpack.c.l.b16 %v172
  %v788 = vunpack.c.l.b16 %v173
  %v789 = vunpack.c.l.b16 %v174
  %v790 = vunpack.c.l.b16 %v175
  %v791 = vunpack.c.l.b16 %v176
  %v792 = vunpack.c.l.b16 %v177
  %v793 = vunpack.c.l.b16 %v178
  %v794 = vunpack.c.l.b16 %v179
  %v795 = vunpack.c.l.b16 %v180
  %v796 = vunpack.c.l.b16 %v181
  %v797 = vunpack.c.l.b16 %v182
  %v798 = vunpack.c.l.b16 %v183
  %v799 = vunpack.c.l.b16 %v184
  %v800 = vunpack.c.l.b16 %v185
  %v801 = vunpack.c.l.b16 %v186
  %v802 = vunpack.c.l.b16 %v187
  %v803 = vunpack.c.l.b16 %v188
  %v804 = vunpack.c.l.b16 %v189
  %v805 = vunpack.c.l.b16 %v190
  %v806 = vpack.c.b16 %v759, %v758
  %v807 = vpack.c.b16 %v761, %v760
  %v808 = vpack.c.b16 %v763, %v762
  %v809 = vpack.c.b16 %v765, %v764
  %v810 = vpack.c.b16 %v767, %v766
  %v811 = vpack.c.b16 %v769, %v768
  %v812 = vpack.c.b16 %v771, %v770
  %v813 = vpack.c.b16 %v773, %v772
  %v814 = vpack.c.b16 %v775, %v774
  %v815 = vpack.c.b16 %v777, %v776
  %v816 = vpack.c.b16 %v779, %v778
  %v817 = vpack.c.b16 %v781, %v780
  %v818 = vpack.c.b16 %v783, %v782
  %v819 = vpack.c.b16 %v785, %v784
  %v820 = vpack.c.b16 %v787, %v786
  %v821 = vpack.c.b16 %v789, %v788
  %v822 = vpack.c.b16 %v791, %v790
  %v823 = vpack.c.b16 %v793, %v792
  %v824 = vpack.c.b16 %v795, %v794
  %v825 = vpack.c.b16 %v797, %v796
  %v826 = vpack.c.b16 %v799, %v798
  %v827 = vpack.c.b16 %v801, %v800
  %v828 = vpack.c.b16 %v803, %v802
  %v829 = vpack.c.b16 %v805, %v804
  %854 = vmatprep.subr.bf16.mxu0 0
  %855 = vmatpush1.bf16.msra.mxu0 %v806
  %856 = vmatprep.subr.bf16.mxu0 0
  %857 = vmatpush1.bf16.msra.mxu0 %v807
  %858 = vmatprep.subr.bf16.mxu0 0
  %859 = vmatpush1.bf16.msra.mxu0 %v808
  %860 = vmatprep.subr.bf16.mxu0 0
  %861 = vmatpush1.bf16.msra.mxu0 %v809
  %862 = vmatprep.subr.bf16.mxu0 0
  %863 = vmatpush1.bf16.msra.mxu0 %v810
  %864 = vmatprep.subr.bf16.mxu0 0
  %865 = vmatpush1.bf16.msra.mxu0 %v811
  %866 = vmatprep.subr.bf16.mxu0 0
  %867 = vmatpush1.bf16.msra.mxu0 %v812
  %868 = vmatprep.subr.bf16.mxu0 0
  %869 = vmatpush1.bf16.msra.mxu0 %v813
  %870 = vmatprep.subr.bf16.mxu0 0
  %871 = vmatpush1.bf16.msra.mxu0 %v814
  %872 = vmatprep.subr.bf16.mxu0 0
  %873 = vmatpush1.bf16.msra.mxu0 %v815
  %874 = vmatprep.subr.bf16.mxu0 0
  %875 = vmatpush1.bf16.msra.mxu0 %v816
  %876 = vmatprep.subr.bf16.mxu0 0
  %877 = vmatpush1.bf16.msra.mxu0 %v817
  %878 = vmatprep.subr.bf16.mxu0 0
  %879 = vmatpush1.bf16.msra.mxu0 %v818
  %880 = vmatprep.subr.bf16.mxu0 0
  %881 = vmatpush1.bf16.msra.mxu0 %v819
  %882 = vmatprep.subr.bf16.mxu0 0
  %883 = vmatpush1.bf16.msra.mxu0 %v820
  %884 = vmatprep.subr.bf16.mxu0 0
  %885 = vmatpush1.bf16.msra.mxu0 %v821
  %886 = vmatprep.mubr.bf16.mxu0 %v519
  %887 = vmatmul.mubr.bf16.gmra.mrb[0].mxu0 %v518
  %v888 = vpop.f32.mrb[0].mxu0
  %v889 = vadd.f32 %v196, %v888
  %v890 = vpop.f32.mrb[0].mxu0
  %v891 = vpop.f32.mrb[0].mxu0
  %v892 = vadd.f32 %v196, %v891
  %v893 = vpop.f32.mrb[0].mxu0
  %894 = vmatprep.mubr.bf16.mxu0 %v522
  %895 = vmatmul.mubr.bf16.gmra.mrb[0].mxu0 %v521
  %v896 = vpop.f32.mrb[0].mxu0
  %v897 = vadd.f32 %v196, %v896
  %v898 = vpop.f32.mrb[0].mxu0
  %v899 = vpop.f32.mrb[0].mxu0
  %v900 = vadd.f32 %v196, %v899
  %v901 = vpop.f32.mrb[0].mxu0
  %902 = vmatprep.mubr.bf16.mxu0 %v525
  %903 = vmatmul.mubr.bf16.gmra.mrb[0].mxu0 %v524
  %v904 = vpop.f32.mrb[0].mxu0
  %v905 = vadd.f32 %v196, %v904
  %v906 = vpop.f32.mrb[0].mxu0
  %v907 = vpop.f32.mrb[0].mxu0
  %v908 = vadd.f32 %v196, %v907
  %v909 = vpop.f32.mrb[0].mxu0
  %910 = vmatprep.mubr.bf16.mxu0 %v528
  %911 = vmatmul.mubr.bf16.gmra.mrb[0].mxu0 %v527
  %v912 = vpop.f32.mrb[0].mxu0
  %v913 = vadd.f32 %v196, %v912
  %v914 = vpop.f32.mrb[0].mxu0
  %v915 = vpop.f32.mrb[0].mxu0
  %v916 = vadd.f32 %v196, %v915
  %v917 = vpop.f32.mrb[0].mxu0
  %918 = vmatprep.mubr.bf16.mxu0 %v531
  %919 = vmatmul.mubr.bf16.gmra.mrb[0].mxu0 %v530
  %v920 = vpop.f32.mrb[0].mxu0
  %v921 = vadd.f32 %v196, %v920
  %v922 = vpop.f32.mrb[0].mxu0
  %v923 = vpop.f32.mrb[0].mxu0
  %v924 = vadd.f32 %v196, %v923
  %v925 = vpop.f32.mrb[0].mxu0
  %926 = vmatprep.mubr.bf16.mxu0 %v534
  %927 = vmatmul.mubr.bf16.gmra.mrb[0].mxu0 %v533
  %v928 = vpop.f32.mrb[0].mxu0
  %v929 = vadd.f32 %v196, %v928
  %v930 = vpop.f32.mrb[0].mxu0
  %v931 = vpop.f32.mrb[0].mxu0
  %v932 = vadd.f32 %v196, %v931
  %v933 = vpop.f32.mrb[0].mxu0
  %934 = vmatprep.mubr.bf16.mxu0 %v537
  %935 = vmatmul.mubr.bf16.gmra.mrb[0].mxu0 %v536
  %v936 = vpop.f32.mrb[0].mxu0
  %v937 = vadd.f32 %v196, %v936
  %v938 = vpop.f32.mrb[0].mxu0
  %v939 = vpop.f32.mrb[0].mxu0
  %v940 = vadd.f32 %v196, %v939
  %v941 = vpop.f32.mrb[0].mxu0
  %942 = vmatprep.mubr.bf16.mxu0 %v540
  %943 = vmatmul.mubr.bf16.gmra.mrb[0].mxu0 %v539
  %v944 = vpop.f32.mrb[0].mxu0
  %v945 = vadd.f32 %v196, %v944
  %v946 = vpop.f32.mrb[0].mxu0
  %v947 = vpop.f32.mrb[0].mxu0
  %v948 = vadd.f32 %v196, %v947
  %v949 = vpop.f32.mrb[0].mxu0
  %950 = vmatprep.mubr.bf16.mxu0 %v543
  %951 = vmatmul.mubr.bf16.gmra.mrb[0].mxu0 %v542
  %v952 = vpop.f32.mrb[0].mxu0
  %v953 = vadd.f32 %v196, %v952
  %v954 = vpop.f32.mrb[0].mxu0
  %v955 = vpop.f32.mrb[0].mxu0
  %v956 = vadd.f32 %v196, %v955
  %v957 = vpop.f32.mrb[0].mxu0
  %958 = vmatprep.mubr.bf16.mxu0 %v546
  %959 = vmatmul.mubr.bf16.gmra.mrb[0].mxu0 %v545
  %v960 = vpop.f32.mrb[0].mxu0
  %v961 = vadd.f32 %v196, %v960
  %v962 = vpop.f32.mrb[0].mxu0
  %v963 = vpop.f32.mrb[0].mxu0
  %v964 = vadd.f32 %v196, %v963
  %v965 = vpop.f32.mrb[0].mxu0
  %966 = vmatprep.mubr.bf16.mxu0 %v549
  %967 = vmatmul.mubr.bf16.gmra.mrb[0].mxu0 %v548
  %v968 = vpop.f32.mrb[0].mxu0
  %v969 = vadd.f32 %v196, %v968
  %v970 = vpop.f32.mrb[0].mxu0
  %v971 = vpop.f32.mrb[0].mxu0
  %v972 = vadd.f32 %v196, %v971
  %v973 = vpop.f32.mrb[0].mxu0
  %974 = vmatprep.mubr.bf16.mxu0 %v552
  %975 = vmatmul.mubr.bf16.gmra.mrb[0].mxu0 %v551
  %v976 = vpop.f32.mrb[0].mxu0
  %v977 = vadd.f32 %v196, %v976
  %v978 = vpop.f32.mrb[0].mxu0
  %v979 = vpop.f32.mrb[0].mxu0
  %v980 = vadd.f32 %v196, %v979
  %v981 = vpop.f32.mrb[0].mxu0
  %982 = vmatprep.mubr.bf16.mxu0 %v555
  %983 = vmatmul.mubr.bf16.gmra.mrb[0].mxu0 %v554
  %v984 = vpop.f32.mrb[0].mxu0
  %v985 = vadd.f32 %v196, %v984
  %v986 = vpop.f32.mrb[0].mxu0
  %v987 = vpop.f32.mrb[0].mxu0
  %v988 = vadd.f32 %v196, %v987
  %v989 = vpop.f32.mrb[0].mxu0
  %990 = vmatprep.mubr.bf16.mxu0 %v558
  %991 = vmatmul.mubr.bf16.gmra.mrb[0].mxu0 %v557
  %v992 = vpop.f32.mrb[0].mxu0
  %v993 = vadd.f32 %v196, %v992
  %v994 = vpop.f32.mrb[0].mxu0
  %v995 = vpop.f32.mrb[0].mxu0
  %v996 = vadd.f32 %v196, %v995
  %v997 = vpop.f32.mrb[0].mxu0
  %998 = vmatprep.mubr.bf16.mxu0 %v561
  %999 = vmatmul.mubr.bf16.gmra.mrb[0].mxu0 %v560
  %v1000 = vpop.f32.mrb[0].mxu0
  %v1001 = vadd.f32 %v196, %v1000
  %v1002 = vpop.f32.mrb[0].mxu0
  %v1003 = vpop.f32.mrb[0].mxu0
  %v1004 = vadd.f32 %v196, %v1003
  %v1005 = vpop.f32.mrb[0].mxu0
  %1006 = vmatprep.mubr.bf16.mxu0 %v564
  %1007 = vmatmul.mubr.bf16.gmra.mrb[0].mxu0 %v563
  %v1008 = vpop.f32.mrb[0].mxu0
  %v1009 = vadd.f32 %v196, %v1008
  %v1010 = vpop.f32.mrb[0].mxu0
  %v1011 = vpop.f32.mrb[0].mxu0
  %v1012 = vadd.f32 %v196, %v1011
  %v1013 = vpop.f32.mrb[0].mxu0
  %1014 = vmatprep.mubr.bf16.mxu0 %v567
  %1015 = vmatmul.mubr.bf16.gmra.mrb[0].mxu0 %v566
  %v1016 = vpop.f32.mrb[0].mxu0
  %v1017 = vadd.f32 %v196, %v1016
  %v1018 = vpop.f32.mrb[0].mxu0
  %v1019 = vpop.f32.mrb[0].mxu0
  %v1020 = vadd.f32 %v196, %v1019
  %v1021 = vpop.f32.mrb[0].mxu0
  %1022 = vmatprep.mubr.bf16.mxu0 %v570
  %1023 = vmatmul.mubr.bf16.gmra.mrb[0].mxu0 %v569
  %v1024 = vpop.f32.mrb[0].mxu0
  %v1025 = vadd.f32 %v196, %v1024
  %v1026 = vpop.f32.mrb[0].mxu0
  %v1027 = vpop.f32.mrb[0].mxu0
  %v1028 = vadd.f32 %v196, %v1027
  %v1029 = vpop.f32.mrb[0].mxu0
  %1030 = vmatprep.mubr.bf16.mxu0 %v573
  %1031 = vmatmul.mubr.bf16.gmra.mrb[0].mxu0 %v572
  %v1032 = vpop.f32.mrb[0].mxu0
  %v1033 = vadd.f32 %v196, %v1032
  %v1034 = vpop.f32.mrb[0].mxu0
  %v1035 = vpop.f32.mrb[0].mxu0
  %v1036 = vadd.f32 %v196, %v1035
  %v1037 = vpop.f32.mrb[0].mxu0
  %1038 = vmatprep.mubr.bf16.mxu0 %v576
  %1039 = vmatmul.mubr.bf16.gmra.mrb[0].mxu0 %v575
  %v1040 = vpop.f32.mrb[0].mxu0
  %v1041 = vadd.f32 %v196, %v1040
  %v1042 = vpop.f32.mrb[0].mxu0
  %v1043 = vpop.f32.mrb[0].mxu0
  %v1044 = vadd.f32 %v196, %v1043
  %v1045 = vpop.f32.mrb[0].mxu0
  %1046 = vmatprep.mubr.bf16.mxu0 %v579
  %1047 = vmatmul.mubr.bf16.gmra.mrb[0].mxu0 %v578
  %v1048 = vpop.f32.mrb[0].mxu0
  %v1049 = vadd.f32 %v196, %v1048
  %v1050 = vpop.f32.mrb[0].mxu0
  %v1051 = vpop.f32.mrb[0].mxu0
  %v1052 = vadd.f32 %v196, %v1051
  %v1053 = vpop.f32.mrb[0].mxu0
  %1054 = vmatprep.mubr.bf16.mxu0 %v582
  %1055 = vmatmul.mubr.bf16.gmra.mrb[0].mxu0 %v581
  %v1056 = vpop.f32.mrb[0].mxu0
  %v1057 = vadd.f32 %v196, %v1056
  %v1058 = vpop.f32.mrb[0].mxu0
  %v1059 = vpop.f32.mrb[0].mxu0
  %v1060 = vadd.f32 %v196, %v1059
  %v1061 = vpop.f32.mrb[0].mxu0
  %1062 = vmatprep.mubr.bf16.mxu0 %v585
  %1063 = vmatmul.mubr.bf16.gmra.mrb[0].mxu0 %v584
  %v1064 = vpop.f32.mrb[0].mxu0
  %v1065 = vadd.f32 %v196, %v1064
  %v1066 = vpop.f32.mrb[0].mxu0
  %v1067 = vpop.f32.mrb[0].mxu0
  %v1068 = vadd.f32 %v196, %v1067
  %v1069 = vpop.f32.mrb[0].mxu0
  %1070 = vmatprep.mubr.bf16.mxu0 %v588
  %1071 = vmatmul.mubr.bf16.gmra.mrb[0].mxu0 %v587
  %v1072 = vpop.f32.mrb[0].mxu0
  %v1073 = vadd.f32 %v196, %v1072
  %v1074 = vpop.f32.mrb[0].mxu0
  %v1075 = vpop.f32.mrb[0].mxu0
  %v1076 = vadd.f32 %v196, %v1075
  %v1077 = vpop.f32.mrb[0].mxu0
  %1078 = vmatprep.mubr.bf16.mxu0 %v591
  %1079 = vmatmul.mubr.bf16.gmra.mrb[0].mxu0 %v590
  %v1080 = vpop.f32.mrb[0].mxu0
  %v1081 = vadd.f32 %v196, %v1080
  %v1082 = vpop.f32.mrb[0].mxu0
  %v1083 = vpop.f32.mrb[0].mxu0
  %v1084 = vadd.f32 %v196, %v1083
  %v1085 = vpop.f32.mrb[0].mxu0
  %1086 = vmatprep.mubr.bf16.mxu0 %v594
  %1087 = vmatmul.mubr.bf16.gmra.mrb[0].mxu0 %v593
  %v1088 = vpop.f32.mrb[0].mxu0
  %v1089 = vadd.f32 %v196, %v1088
  %v1090 = vpop.f32.mrb[0].mxu0
  %v1091 = vpop.f32.mrb[0].mxu0
  %v1092 = vadd.f32 %v196, %v1091
  %v1093 = vpop.f32.mrb[0].mxu0
  %1094 = vmatprep.mubr.bf16.mxu0 %v597
  %1095 = vmatmul.mubr.bf16.gmra.mrb[0].mxu0 %v596
  %v1096 = vpop.f32.mrb[0].mxu0
  %v1097 = vadd.f32 %v196, %v1096
  %v1098 = vpop.f32.mrb[0].mxu0
  %v1099 = vpop.f32.mrb[0].mxu0
  %v1100 = vadd.f32 %v196, %v1099
  %v1101 = vpop.f32.mrb[0].mxu0
  %1102 = vmatprep.mubr.bf16.mxu0 %v600
  %1103 = vmatmul.mubr.bf16.gmra.mrb[0].mxu0 %v599
  %v1104 = vpop.f32.mrb[0].mxu0
  %v1105 = vadd.f32 %v196, %v1104
  %v1106 = vpop.f32.mrb[0].mxu0
  %v1107 = vpop.f32.mrb[0].mxu0
  %v1108 = vadd.f32 %v196, %v1107
  %v1109 = vpop.f32.mrb[0].mxu0
  %1110 = vmatprep.mubr.bf16.mxu0 %v603
  %1111 = vmatmul.mubr.bf16.gmra.mrb[0].mxu0 %v602
  %v1112 = vpop.f32.mrb[0].mxu0
  %v1113 = vadd.f32 %v196, %v1112
  %v1114 = vpop.f32.mrb[0].mxu0
  %v1115 = vpop.f32.mrb[0].mxu0
  %v1116 = vadd.f32 %v196, %v1115
  %v1117 = vpop.f32.mrb[0].mxu0
  %1118 = vmatprep.mubr.bf16.mxu0 %v606
  %1119 = vmatmul.mubr.bf16.gmra.mrb[0].mxu0 %v605
  %v1120 = vpop.f32.mrb[0].mxu0
  %v1121 = vadd.f32 %v196, %v1120
  %v1122 = vpop.f32.mrb[0].mxu0
  %v1123 = vpop.f32.mrb[0].mxu0
  %v1124 = vadd.f32 %v196, %v1123
  %v1125 = vpop.f32.mrb[0].mxu0
  %1126 = vmatprep.mubr.bf16.mxu0 %v609
  %1127 = vmatmul.mubr.bf16.gmra.mrb[0].mxu0 %v608
  %v1128 = vpop.f32.mrb[0].mxu0
  %v1129 = vadd.f32 %v196, %v1128
  %v1130 = vpop.f32.mrb[0].mxu0
  %v1131 = vpop.f32.mrb[0].mxu0
  %v1132 = vadd.f32 %v196, %v1131
  %v1133 = vpop.f32.mrb[0].mxu0
  %1134 = vmatprep.mubr.bf16.mxu0 %v612
  %1135 = vmatmul.mubr.bf16.gmra.mrb[0].mxu0 %v611
  %v1136 = vpop.f32.mrb[0].mxu0
  %v1137 = vadd.f32 %v196, %v1136
  %v1138 = vpop.f32.mrb[0].mxu0
  %v1139 = vpop.f32.mrb[0].mxu0
  %v1140 = vadd.f32 %v196, %v1139
  %v1141 = vpop.f32.mrb[0].mxu0
  %1142 = vdwg.mxu0
  %1143 = vmatprep.subr.bf16.mxu0 0
  %1144 = vmatpush1.bf16.msra.mxu0 %v822
  %1145 = vmatprep.subr.bf16.mxu0 0
  %1146 = vmatpush1.bf16.msra.mxu0 %v823
  %1147 = vmatprep.subr.bf16.mxu0 0
  %1148 = vmatpush1.bf16.msra.mxu0 %v824
  %1149 = vmatprep.subr.bf16.mxu0 0
  %1150 = vmatpush1.bf16.msra.mxu0 %v825
  %1151 = vmatprep.subr.bf16.mxu0 0
  %1152 = vmatpush1.bf16.msra.mxu0 %v826
  %1153 = vmatprep.subr.bf16.mxu0 0
  %1154 = vmatpush1.bf16.msra.mxu0 %v827
  %1155 = vmatprep.subr.bf16.mxu0 0
  %1156 = vmatpush1.bf16.msra.mxu0 %v828
  %1157 = vmatprep.subr.bf16.mxu0 0
  %1158 = vmatpush1.bf16.msra.mxu0 %v829
  %1159 = vmatprep.subr.bf16.mxu0 0
  %1160 = vmatpush1.bf16.msra.mxu0 0
  %1161 = vmatprep.subr.bf16.mxu0 0
  %1162 = vmatpush1.bf16.msra.mxu0 0
  %1163 = vmatprep.subr.bf16.mxu0 0
  %1164 = vmatpush1.bf16.msra.mxu0 0
  %1165 = vmatprep.subr.bf16.mxu0 0
  %1166 = vmatpush1.bf16.msra.mxu0 0
  %1167 = vmatprep.subr.bf16.mxu0 0
  %1168 = vmatpush1.bf16.msra.mxu0 0
  %1169 = vmatprep.subr.bf16.mxu0 0
  %1170 = vmatpush1.bf16.msra.mxu0 0
  %1171 = vmatprep.subr.bf16.mxu0 0
  %1172 = vmatpush1.bf16.msra.mxu0 0
  %1173 = vmatprep.subr.bf16.mxu0 0
  %1174 = vmatpush1.bf16.msra.mxu0 0
  %1175 = vmatprep.mubr.bf16.mxu0 0
  %1176 = vmatmul.mubr.bf16.gmra.mrb[0].mxu0 %v520
  %v1177 = vpop.f32.mrb[0].mxu0
  %v1178 = vadd.f32 %v889, %v1177
  %v1179 = vpop.f32.mrb[0].mxu0
  %v1180 = vpop.f32.mrb[0].mxu0
  %v1181 = vadd.f32 %v892, %v1180
  %v1182 = vpop.f32.mrb[0].mxu0
  %1183 = vmatprep.mubr.bf16.mxu0 0
  %1184 = vmatmul.mubr.bf16.gmra.mrb[0].mxu0 %v523
  %v1185 = vpop.f32.mrb[0].mxu0
  %v1186 = vadd.f32 %v897, %v1185
  %v1187 = vpop.f32.mrb[0].mxu0
  %v1188 = vpop.f32.mrb[0].mxu0
  %v1189 = vadd.f32 %v900, %v1188
  %v1190 = vpop.f32.mrb[0].mxu0
  %1191 = vmatprep.mubr.bf16.mxu0 0
  %1192 = vmatmul.mubr.bf16.gmra.mrb[0].mxu0 %v526
  %v1193 = vpop.f32.mrb[0].mxu0
  %v1194 = vadd.f32 %v905, %v1193
  %v1195 = vpop.f32.mrb[0].mxu0
  %v1196 = vpop.f32.mrb[0].mxu0
  %v1197 = vadd.f32 %v908, %v1196
  %v1198 = vpop.f32.mrb[0].mxu0
  %1199 = vmatprep.mubr.bf16.mxu0 0
  %1200 = vmatmul.mubr.bf16.gmra.mrb[0].mxu0 %v529
  %v1201 = vpop.f32.mrb[0].mxu0
  %v1202 = vadd.f32 %v913, %v1201
  %v1203 = vpop.f32.mrb[0].mxu0
  %v1204 = vpop.f32.mrb[0].mxu0
  %v1205 = vadd.f32 %v916, %v1204
  %v1206 = vpop.f32.mrb[0].mxu0
  %1207 = vmatprep.mubr.bf16.mxu0 0
  %1208 = vmatmul.mubr.bf16.gmra.mrb[0].mxu0 %v532
  %v1209 = vpop.f32.mrb[0].mxu0
  %v1210 = vadd.f32 %v921, %v1209
  %v1211 = vpop.f32.mrb[0].mxu0
  %v1212 = vpop.f32.mrb[0].mxu0
  %v1213 = vadd.f32 %v924, %v1212
  %v1214 = vpop.f32.mrb[0].mxu0
  %1215 = vmatprep.mubr.bf16.mxu0 0
  %1216 = vmatmul.mubr.bf16.gmra.mrb[0].mxu0 %v535
  %v1217 = vpop.f32.mrb[0].mxu0
  %v1218 = vadd.f32 %v929, %v1217
  %v1219 = vpop.f32.mrb[0].mxu0
  %v1220 = vpop.f32.mrb[0].mxu0
  %v1221 = vadd.f32 %v932, %v1220
  %v1222 = vpop.f32.mrb[0].mxu0
  %1223 = vmatprep.mubr.bf16.mxu0 0
  %1224 = vmatmul.mubr.bf16.gmra.mrb[0].mxu0 %v538
  %v1225 = vpop.f32.mrb[0].mxu0
  %v1226 = vadd.f32 %v937, %v1225
  %v1227 = vpop.f32.mrb[0].mxu0
  %v1228 = vpop.f32.mrb[0].mxu0
  %v1229 = vadd.f32 %v940, %v1228
  %v1230 = vpop.f32.mrb[0].mxu0
  %1231 = vmatprep.mubr.bf16.mxu0 0
  %1232 = vmatmul.mubr.bf16.gmra.mrb[0].mxu0 %v541
  %v1233 = vpop.f32.mrb[0].mxu0
  %v1234 = vadd.f32 %v945, %v1233
  %v1235 = vpop.f32.mrb[0].mxu0
  %v1236 = vpop.f32.mrb[0].mxu0
  %v1237 = vadd.f32 %v948, %v1236
  %v1238 = vpop.f32.mrb[0].mxu0
  %1239 = vmatprep.mubr.bf16.mxu0 0
  %1240 = vmatmul.mubr.bf16.gmra.mrb[0].mxu0 %v544
  %v1241 = vpop.f32.mrb[0].mxu0
  %v1242 = vadd.f32 %v953, %v1241
  %v1243 = vpop.f32.mrb[0].mxu0
  %v1244 = vpop.f32.mrb[0].mxu0
  %v1245 = vadd.f32 %v956, %v1244
  %v1246 = vpop.f32.mrb[0].mxu0
  %1247 = vmatprep.mubr.bf16.mxu0 0
  %1248 = vmatmul.mubr.bf16.gmra.mrb[0].mxu0 %v547
  %v1249 = vpop.f32.mrb[0].mxu0
  %v1250 = vadd.f32 %v961, %v1249
  %v1251 = vpop.f32.mrb[0].mxu0
  %v1252 = vpop.f32.mrb[0].mxu0
  %v1253 = vadd.f32 %v964, %v1252
  %v1254 = vpop.f32.mrb[0].mxu0
  %1255 = vmatprep.mubr.bf16.mxu0 0
  %1256 = vmatmul.mubr.bf16.gmra.mrb[0].mxu0 %v550
  %v1257 = vpop.f32.mrb[0].mxu0
  %v1258 = vadd.f32 %v969, %v1257
  %v1259 = vpop.f32.mrb[0].mxu0
  %v1260 = vpop.f32.mrb[0].mxu0
  %v1261 = vadd.f32 %v972, %v1260
  %v1262 = vpop.f32.mrb[0].mxu0
  %1263 = vmatprep.mubr.bf16.mxu0 0
  %1264 = vmatmul.mubr.bf16.gmra.mrb[0].mxu0 %v553
  %v1265 = vpop.f32.mrb[0].mxu0
  %v1266 = vadd.f32 %v977, %v1265
  %v1267 = vpop.f32.mrb[0].mxu0
  %v1268 = vpop.f32.mrb[0].mxu0
  %v1269 = vadd.f32 %v980, %v1268
  %v1270 = vpop.f32.mrb[0].mxu0
  %1271 = vmatprep.mubr.bf16.mxu0 0
  %1272 = vmatmul.mubr.bf16.gmra.mrb[0].mxu0 %v556
  %v1273 = vpop.f32.mrb[0].mxu0
  %v1274 = vadd.f32 %v985, %v1273
  %v1275 = vpop.f32.mrb[0].mxu0
  %v1276 = vpop.f32.mrb[0].mxu0
  %v1277 = vadd.f32 %v988, %v1276
  %v1278 = vpop.f32.mrb[0].mxu0
  %1279 = vmatprep.mubr.bf16.mxu0 0
  %1280 = vmatmul.mubr.bf16.gmra.mrb[0].mxu0 %v559
  %v1281 = vpop.f32.mrb[0].mxu0
  %v1282 = vadd.f32 %v993, %v1281
  %v1283 = vpop.f32.mrb[0].mxu0
  %v1284 = vpop.f32.mrb[0].mxu0
  %v1285 = vadd.f32 %v996, %v1284
  %v1286 = vpop.f32.mrb[0].mxu0
  %1287 = vmatprep.mubr.bf16.mxu0 0
  %1288 = vmatmul.mubr.bf16.gmra.mrb[0].mxu0 %v562
  %v1289 = vpop.f32.mrb[0].mxu0
  %v1290 = vadd.f32 %v1001, %v1289
  %v1291 = vpop.f32.mrb[0].mxu0
  %v1292 = vpop.f32.mrb[0].mxu0
  %v1293 = vadd.f32 %v1004, %v1292
  %v1294 = vpop.f32.mrb[0].mxu0
  %1295 = vmatprep.mubr.bf16.mxu0 0
  %1296 = vmatmul.mubr.bf16.gmra.mrb[0].mxu0 %v565
  %v1297 = vpop.f32.mrb[0].mxu0
  %v1298 = vadd.f32 %v1009, %v1297
  %v1299 = vpop.f32.mrb[0].mxu0
  %v1300 = vpop.f32.mrb[0].mxu0
  %v1301 = vadd.f32 %v1012, %v1300
  %v1302 = vpop.f32.mrb[0].mxu0
  %1303 = vmatprep.mubr.bf16.mxu0 0
  %1304 = vmatmul.mubr.bf16.gmra.mrb[0].mxu0 %v568
  %v1305 = vpop.f32.mrb[0].mxu0
  %v1306 = vadd.f32 %v1017, %v1305
  %v1307 = vpop.f32.mrb[0].mxu0
  %v1308 = vpop.f32.mrb[0].mxu0
  %v1309 = vadd.f32 %v1020, %v1308
  %v1310 = vpop.f32.mrb[0].mxu0
  %1311 = vmatprep.mubr.bf16.mxu0 0
  %1312 = vmatmul.mubr.bf16.gmra.mrb[0].mxu0 %v571
  %v1313 = vpop.f32.mrb[0].mxu0
  %v1314 = vadd.f32 %v1025, %v1313
  %v1315 = vpop.f32.mrb[0].mxu0
  %v1316 = vpop.f32.mrb[0].mxu0
  %v1317 = vadd.f32 %v1028, %v1316
  %v1318 = vpop.f32.mrb[0].mxu0
  %1319 = vmatprep.mubr.bf16.mxu0 0
  %1320 = vmatmul.mubr.bf16.gmra.mrb[0].mxu0 %v574
  %v1321 = vpop.f32.mrb[0].mxu0
  %v1322 = vadd.f32 %v1033, %v1321
  %v1323 = vpop.f32.mrb[0].mxu0
  %v1324 = vpop.f32.mrb[0].mxu0
  %v1325 = vadd.f32 %v1036, %v1324
  %v1326 = vpop.f32.mrb[0].mxu0
  %1327 = vmatprep.mubr.bf16.mxu0 0
  %1328 = vmatmul.mubr.bf16.gmra.mrb[0].mxu0 %v577
  %v1329 = vpop.f32.mrb[0].mxu0
  %v1330 = vadd.f32 %v1041, %v1329
  %v1331 = vpop.f32.mrb[0].mxu0
  %v1332 = vpop.f32.mrb[0].mxu0
  %v1333 = vadd.f32 %v1044, %v1332
  %v1334 = vpop.f32.mrb[0].mxu0
  %1335 = vmatprep.mubr.bf16.mxu0 0
  %1336 = vmatmul.mubr.bf16.gmra.mrb[0].mxu0 %v580
  %v1337 = vpop.f32.mrb[0].mxu0
  %v1338 = vadd.f32 %v1049, %v1337
  %v1339 = vpop.f32.mrb[0].mxu0
  %v1340 = vpop.f32.mrb[0].mxu0
  %v1341 = vadd.f32 %v1052, %v1340
  %v1342 = vpop.f32.mrb[0].mxu0
  %1343 = vmatprep.mubr.bf16.mxu0 0
  %1344 = vmatmul.mubr.bf16.gmra.mrb[0].mxu0 %v583
  %v1345 = vpop.f32.mrb[0].mxu0
  %v1346 = vadd.f32 %v1057, %v1345
  %v1347 = vpop.f32.mrb[0].mxu0
  %v1348 = vpop.f32.mrb[0].mxu0
  %v1349 = vadd.f32 %v1060, %v1348
  %v1350 = vpop.f32.mrb[0].mxu0
  %1351 = vmatprep.mubr.bf16.mxu0 0
  %1352 = vmatmul.mubr.bf16.gmra.mrb[0].mxu0 %v586
  %v1353 = vpop.f32.mrb[0].mxu0
  %v1354 = vadd.f32 %v1065, %v1353
  %v1355 = vpop.f32.mrb[0].mxu0
  %v1356 = vpop.f32.mrb[0].mxu0
  %v1357 = vadd.f32 %v1068, %v1356
  %v1358 = vpop.f32.mrb[0].mxu0
  %1359 = vmatprep.mubr.bf16.mxu0 0
  %1360 = vmatmul.mubr.bf16.gmra.mrb[0].mxu0 %v589
  %v1361 = vpop.f32.mrb[0].mxu0
  %v1362 = vadd.f32 %v1073, %v1361
  %v1363 = vpop.f32.mrb[0].mxu0
  %v1364 = vpop.f32.mrb[0].mxu0
  %v1365 = vadd.f32 %v1076, %v1364
  %v1366 = vpop.f32.mrb[0].mxu0
  %1367 = vmatprep.mubr.bf16.mxu0 0
  %1368 = vmatmul.mubr.bf16.gmra.mrb[0].mxu0 %v592
  %v1369 = vpop.f32.mrb[0].mxu0
  %v1370 = vadd.f32 %v1081, %v1369
  %v1371 = vpop.f32.mrb[0].mxu0
  %v1372 = vpop.f32.mrb[0].mxu0
  %v1373 = vadd.f32 %v1084, %v1372
  %v1374 = vpop.f32.mrb[0].mxu0
  %1375 = vmatprep.mubr.bf16.mxu0 0
  %1376 = vmatmul.mubr.bf16.gmra.mrb[0].mxu0 %v595
  %v1377 = vpop.f32.mrb[0].mxu0
  %v1378 = vadd.f32 %v1089, %v1377
  %v1379 = vpop.f32.mrb[0].mxu0
  %v1380 = vpop.f32.mrb[0].mxu0
  %v1381 = vadd.f32 %v1092, %v1380
  %v1382 = vpop.f32.mrb[0].mxu0
  %1383 = vmatprep.mubr.bf16.mxu0 0
  %1384 = vmatmul.mubr.bf16.gmra.mrb[0].mxu0 %v598
  %v1385 = vpop.f32.mrb[0].mxu0
  %v1386 = vadd.f32 %v1097, %v1385
  %v1387 = vpop.f32.mrb[0].mxu0
  %v1388 = vpop.f32.mrb[0].mxu0
  %v1389 = vadd.f32 %v1100, %v1388
  %v1390 = vpop.f32.mrb[0].mxu0
  %1391 = vmatprep.mubr.bf16.mxu0 0
  %1392 = vmatmul.mubr.bf16.gmra.mrb[0].mxu0 %v601
  %v1393 = vpop.f32.mrb[0].mxu0
  %v1394 = vadd.f32 %v1105, %v1393
  %v1395 = vpop.f32.mrb[0].mxu0
  %v1396 = vpop.f32.mrb[0].mxu0
  %v1397 = vadd.f32 %v1108, %v1396
  %v1398 = vpop.f32.mrb[0].mxu0
  %1399 = vmatprep.mubr.bf16.mxu0 0
  %1400 = vmatmul.mubr.bf16.gmra.mrb[0].mxu0 %v604
  %v1401 = vpop.f32.mrb[0].mxu0
  %v1402 = vadd.f32 %v1113, %v1401
  %v1403 = vpop.f32.mrb[0].mxu0
  %v1404 = vpop.f32.mrb[0].mxu0
  %v1405 = vadd.f32 %v1116, %v1404
  %v1406 = vpop.f32.mrb[0].mxu0
  %1407 = vmatprep.mubr.bf16.mxu0 0
  %1408 = vmatmul.mubr.bf16.gmra.mrb[0].mxu0 %v607
  %v1409 = vpop.f32.mrb[0].mxu0
  %v1410 = vadd.f32 %v1121, %v1409
  %v1411 = vpop.f32.mrb[0].mxu0
  %v1412 = vpop.f32.mrb[0].mxu0
  %v1413 = vadd.f32 %v1124, %v1412
  %v1414 = vpop.f32.mrb[0].mxu0
  %1415 = vmatprep.mubr.bf16.mxu0 0
  %1416 = vmatmul.mubr.bf16.gmra.mrb[0].mxu0 %v610
  %v1417 = vpop.f32.mrb[0].mxu0
  %v1418 = vadd.f32 %v1129, %v1417
  %v1419 = vpop.f32.mrb[0].mxu0
  %v1420 = vpop.f32.mrb[0].mxu0
  %v1421 = vadd.f32 %v1132, %v1420
  %v1422 = vpop.f32.mrb[0].mxu0
  %1423 = vmatprep.mubr.bf16.mxu0 0
  %1424 = vmatmul.mubr.bf16.gmra.mrb[0].mxu0 %v613
  %v1425 = vpop.f32.mrb[0].mxu0
  %v1426 = vadd.f32 %v1137, %v1425
  %v1427 = vpop.f32.mrb[0].mxu0
  %v1428 = vpop.f32.mrb[0].mxu0
  %v1429 = vadd.f32 %v1140, %v1428
  %v1430 = vpop.f32.mrb[0].mxu0
  %1431 = vdwg.mxu0
  %1432 = vst [vmem:[%s3] sm:$0xff] %v1178
  %1433 = vst [vmem:[%s3 + $0x8] sm:$0xff] %v1181
  %1434 = vst [vmem:[%s3 + $0x10] sm:$0xff] %v1186
  %1435 = vst [vmem:[%s3 + $0x18] sm:$0xff] %v1189
  %1436 = vst [vmem:[%s3 + $0x20] sm:$0xff] %v1194
  %1437 = vst [vmem:[%s3 + $0x28] sm:$0xff] %v1197
  %1438 = vst [vmem:[%s3 + $0x30] sm:$0xff] %v1202
  %1439 = vst [vmem:[%s3 + $0x38] sm:$0xff] %v1205
  %1440 = vst [vmem:[%s3 + $0x40] sm:$0xff] %v1210
  %1441 = vst [vmem:[%s3 + $0x48] sm:$0xff] %v1213
  %1442 = vst [vmem:[%s3 + $0x50] sm:$0xff] %v1218
  %1443 = vst [vmem:[%s3 + $0x58] sm:$0xff] %v1221
  %1444 = vst [vmem:[%s3 + $0x60] sm:$0xff] %v1226
  %1445 = vst [vmem:[%s3 + $0x68] sm:$0xff] %v1229
  %1446 = vst [vmem:[%s3 + $0x70] sm:$0xff] %v1234
  %1447 = vst [vmem:[%s3 + $0x78] sm:$0xff] %v1237
  %1448 = vst [vmem:[%s3 + $0x80] sm:$0xff] %v1242
  %1449 = vst [vmem:[%s3 + $0x88] sm:$0xff] %v1245
  %1450 = vst [vmem:[%s3 + $0x90] sm:$0xff] %v1250
  %1451 = vst [vmem:[%s3 + $0x98] sm:$0xff] %v1253
  %1452 = vst [vmem:[%s3 + $0xa0] sm:$0xff] %v1258
  %1453 = vst [vmem:[%s3 + $0xa8] sm:$0xff] %v1261
  %1454 = vst [vmem:[%s3 + $0xb0] sm:$0xff] %v1266
  %1455 = vst [vmem:[%s3 + $0xb8] sm:$0xff] %v1269
  %1456 = vst [vmem:[%s3 + $0xc0] sm:$0xff] %v1274
  %1457 = vst [vmem:[%s3 + $0xc8] sm:$0xff] %v1277
  %1458 = vst [vmem:[%s3 + $0xd0] sm:$0xff] %v1282
  %1459 = vst [vmem:[%s3 + $0xd8] sm:$0xff] %v1285
  %1460 = vst [vmem:[%s3 + $0xe0] sm:$0xff] %v1290
  %1461 = vst [vmem:[%s3 + $0xe8] sm:$0xff] %v1293
  %1462 = vst [vmem:[%s3 + $0xf0] sm:$0xff] %v1298
  %1463 = vst [vmem:[%s3 + $0xf8] sm:$0xff] %v1301
  %1464 = vst [vmem:[%s3 + $0x100] sm:$0xff] %v1306
  %1465 = vst [vmem:[%s3 + $0x108] sm:$0xff] %v1309
  %1466 = vst [vmem:[%s3 + $0x110] sm:$0xff] %v1314
  %1467 = vst [vmem:[%s3 + $0x118] sm:$0xff] %v1317
  %1468 = vst [vmem:[%s3 + $0x120] sm:$0xff] %v1322
  %1469 = vst [vmem:[%s3 + $0x128] sm:$0xff] %v1325
  %1470 = vst [vmem:[%s3 + $0x130] sm:$0xff] %v1330
  %1471 = vst [vmem:[%s3 + $0x138] sm:$0xff] %v1333
  %1472 = vst [vmem:[%s3 + $0x140] sm:$0xff] %v1338
  %1473 = vst [vmem:[%s3 + $0x148] sm:$0xff] %v1341
  %1474 = vst [vmem:[%s3 + $0x150] sm:$0xff] %v1346
  %1475 = vst [vmem:[%s3 + $0x158] sm:$0xff] %v1349
  %1476 = vst [vmem:[%s3 + $0x160] sm:$0xff] %v1354
  %1477 = vst [vmem:[%s3 + $0x168] sm:$0xff] %v1357
  %1478 = vst [vmem:[%s3 + $0x170] sm:$0xff] %v1362
  %1479 = vst [vmem:[%s3 + $0x178] sm:$0xff] %v1365
  %1480 = vst [vmem:[%s3 + $0x180] sm:$0xff] %v1370
  %1481 = vst [vmem:[%s3 + $0x188] sm:$0xff] %v1373
  %1482 = vst [vmem:[%s3 + $0x190] sm:$0xff] %v1378
  %1483 = vst [vmem:[%s3 + $0x198] sm:$0xff] %v1381
  %1484 = vst [vmem:[%s3 + $0x1a0] sm:$0xff] %v1386
  %1485 = vst [vmem:[%s3 + $0x1a8] sm:$0xff] %v1389
  %1486 = vst [vmem:[%s3 + $0x1b0] sm:$0xff] %v1394
  %1487 = vst [vmem:[%s3 + $0x1b8] sm:$0xff] %v1397
  %1488 = vst [vmem:[%s3 + $0x1c0] sm:$0xff] %v1402
  %1489 = vst [vmem:[%s3 + $0x1c8] sm:$0xff] %v1405
  %1490 = vst [vmem:[%s3 + $0x1d0] sm:$0xff] %v1410
  %1491 = vst [vmem:[%s3 + $0x1d8] sm:$0xff] %v1413
  %1492 = vst [vmem:[%s3 + $0x1e0] sm:$0xff] %v1418
  %1493 = vst [vmem:[%s3 + $0x1e8] sm:$0xff] %v1421
  %1494 = vst [vmem:[%s3 + $0x1f0] sm:$0xff] %v1426
  %1495 = vst [vmem:[%s3 + $0x1f8] sm:$0xff] %v1429
  // Predicated region
  $region14: #{autoencoder_forward.33} parent=0 // pred_check
    _
  $region15: #{autoencoder_forward.33} parent=0 // pred_check_branch
    %1497 = sbr.rel (0) target = $region17
  $region16: #{autoencoder_forward.33} parent=0 // pred_region
    _
  $region17: #{autoencoder_forward.33} parent=0 // pred_fallthru
    _
  // Predicated region
  $region18: #{autoencoder_forward.33} parent=0 // pred_check
    _
  $region19: #{autoencoder_forward.33} parent=0 // pred_check_branch
    %1499 = sbr.rel (0) target = $region21
  $region20: #{autoencoder_forward.33} parent=0 // pred_region
    _
  $region21: #{autoencoder_forward.33} parent=0 // pred_fallthru
    _

</llo_original>
